<compile_context>
chip_gen: v5e
topology: v5e:2x2
jax: 0.10.0
libtpu: 0.0.40
codegen_flags: <defaults>
</compile_context>

<pallas_src>
import math
import jax
import jax.numpy as jnp
from jax.experimental import pallas as pl
from jax.experimental.pallas import tpu as pltpu

EPS = 1e-5            # PyTorch LayerNorm default eps
N_GRAPH_ITERS = 3


def _round8(v):
    return ((v + 7) // 8) * 8


# ----------------------------------------------------------------------------
# Parameter init (deterministic, PyTorch-default-like uniform bounds).
# Canonical orientation: weights (in, out); 1-D params reshaped to (1, out).
# ----------------------------------------------------------------------------
def init_params(key, din=3, H=8):
    params = {}
    state = [key]

    def nk():
        state[0], k = jax.random.split(state[0])
        return k

    def uni(shape, bound):
        return jax.random.uniform(nk(), shape, jnp.float32, -bound, bound)

    def linear(fan_in, fan_out):
        b = 1.0 / math.sqrt(fan_in)
        W = uni((fan_out, fan_in), b)
        bias = uni((fan_out,), b)
        return W.T, bias.reshape(1, fan_out)

    def lnorm(dim):
        return jnp.ones((1, dim), jnp.float32), jnp.zeros((1, dim), jnp.float32)

    # input_network: Linear(din, H) + LN + Tanh
    params['in_W'], params['in_b'] = linear(din, H)
    params['in_g'], params['in_be'] = lnorm(H)

    # vp_network: 3 x (Linear(H, H) + LN + Tanh)
    for l in range(3):
        params[f'vp{l}_W'], params[f'vp{l}_b'] = linear(H, H)
        params[f'vp{l}_g'], params[f'vp{l}_be'] = lnorm(H)

    # node_network: Linear(4H, H)+LN+Tanh, then 3 x (Linear(H,H)+LN+Tanh)
    params['nd0_W'], params['nd0_b'] = linear(4 * H, H)       # (4H, H)
    params['nd0_g'], params['nd0_be'] = lnorm(H)
    for l in range(1, 4):
        params[f'nd{l}_W'], params[f'nd{l}_b'] = linear(H, H)
        params[f'nd{l}_g'], params[f'nd{l}_be'] = lnorm(H)

    # edge_network: Conv1x1(3H+1, H)+Tanh, 3 x (Conv1x1(H,H)+Tanh), Conv1x1(H,1)
    We0, params['ed0_b'] = linear(3 * H + 1, H)               # (3H+1, H)
    params['ed0_Wm1'] = We0[0:H]             # channels of m1 (x[j])
    params['ed0_Wm2'] = We0[H:2 * H]         # channels of m2 (x[i])
    params['ed0_Wvp'] = We0[2 * H:3 * H]     # channels of vp
    params['ed0_WA'] = We0[3 * H:3 * H + 1]  # (1, H) — the A channel
    for l in range(1, 4):
        params[f'ed{l}_W'], params[f'ed{l}_b'] = linear(H, H)
    params['ed4_W'], params['ed4_b'] = linear(H, 1)           # (H,1), (1,1)
    return params


# ----------------------------------------------------------------------------
# Host-side packing of all parameters into one (rows, 128) f32 slab.
# Each param sits at an 8-row-aligned offset; edge-MLP weights/biases are
# pre-transposed to the channel-major orientation used inside the kernel.
# ----------------------------------------------------------------------------
def pack_params(params):
    H = params['in_W'].shape[1]
    entries = []

    def add(name, arr):
        entries.append((name, jnp.asarray(arr, jnp.float32)))

    for pre in ('in', 'vp0', 'vp1', 'vp2'):
        for s in ('W', 'b', 'g', 'be'):
            add(f'{pre}_{s}', params[f'{pre}_{s}'])

    # node network: split the (4H, H) first-layer weight by input block
    nd0 = params['nd0_W']
    add('nd0_Wmi', nd0[0:H])
    add('nd0_Wmo', nd0[H:2 * H])
    add('nd0_Wx', nd0[2 * H:3 * H])
    add('nd0_Wvp', nd0[3 * H:4 * H])
    for s in ('b', 'g', 'be'):
        add(f'nd0_{s}', params[f'nd0_{s}'])
    for pre in ('nd1', 'nd2', 'nd3'):
        for s in ('W', 'b', 'g', 'be'):
            add(f'{pre}_{s}', params[f'{pre}_{s}'])

    # edge network (kernel works channel-major -> pre-transpose here)
    add('ed0_Wm1', params['ed0_Wm1'])
    add('ed0_Wm2', params['ed0_Wm2'])
    add('ed0_Wvp', params['ed0_Wvp'])
    add('ed0_b', params['ed0_b'])
    add('ed0_WAc', params['ed0_WA'].T)               # (H, 1) column
    for l in range(1, 4):
        add(f'ed{l}_Wt', params[f'ed{l}_W'].T)       # (out, in)
        add(f'ed{l}_bc', params[f'ed{l}_b'].T)       # (H, 1) column
    add('ed4_Wr', params['ed4_W'].T)                 # (1, H) row
    add('ed4_b', params['ed4_b'])                    # (1, 1)

    offsets = {}
    blocks = []
    row = 0
    for name, arr in entries:
        r, c = arr.shape
        offsets[name] = (row, r, c)
        rp = _round8(r)
        blk = jnp.zeros((rp, 128), jnp.float32).at[:r, :c].set(arr)
        blocks.append(blk)
        row += rp
    slab = jnp.concatenate(blocks, axis=0)           # (row, 128)
    return slab, offsets


# ----------------------------------------------------------------------------
# One-hot / selection constants for the folded formulation, stacked into a
# single (CR, Bc*N*N) array (one resident DMA).
#   U[r, k] = 1 iff r == g*N + i   with k = g*N*N + i*N + j
#   V[r, k] = 1 iff r == g*N + j
#   W[j, k] = 1 iff j == k % N
#   P[g, r] = 1 iff r // N == g            (per-graph pooling / broadcast)
#   E2[j, l] = 1 iff l == H + j            (places A rows in output lanes)
# ----------------------------------------------------------------------------
def build_consts(Bc, N, H):
    NN = N * N
    BcN = Bc * N
    CL = Bc * NN
    assert CL >= 128 and CL % 128 == 0

    k = jnp.arange(CL)
    g = k // NN
    i = (k // N) % N
    j = k % N
    rows = jnp.arange(BcN)
    U = (rows[:, None] == (g * N + i)[None, :]).astype(jnp.float32)
    V = (rows[:, None] == (g * N + j)[None, :]).astype(jnp.float32)
    W = (jnp.arange(N)[:, None] == j[None, :]).astype(jnp.float32)
    P = (jnp.arange(Bc)[:, None] == (rows // N)[None, :]).astype(jnp.float32)
    E2 = jnp.zeros((N, 128), jnp.float32).at[:, H:H + N].set(jnp.eye(N))

    r_U = 0
    r_V = BcN
    r_W = 2 * BcN
    r_P = r_W + _round8(N)
    r_E2 = r_P + _round8(Bc)
    CR = r_E2 + _round8(N)

    cst = jnp.zeros((CR, CL), jnp.float32)
    cst = cst.at[r_U:r_U + BcN, :].set(U)
    cst = cst.at[r_V:r_V + BcN, :].set(V)
    cst = cst.at[r_W:r_W + N, :].set(W)
    cst = cst.at[r_P:r_P + Bc, 0:BcN].set(P)
    cst = cst.at[r_E2:r_E2 + N, 0:128].set(E2)
    offs = {'U': r_U, 'V': r_V, 'W': r_W, 'P': r_P, 'E2': r_E2}
    return cst, offs


# ----------------------------------------------------------------------------
# Pallas kernel: Bc graphs per grid step, whole forward in-kernel.
# Node features (Bc*N, H); edge features channel-major (H, Bc*N*N);
# adjacency carried both flattened (1, Bc*N*N) and block-diagonal (Bc*N, Bc*N).
# ----------------------------------------------------------------------------
def _make_kernel(p_off, c_off, N, Din, H, Bc, a_off, n_iters):
    BcN = Bc * N
    inv_n = 1.0 / N

    def kernel(in_ref, slab_ref, cst_ref, out_ref):
        # ---- point-of-use parameter loads from the packed slab ----
        def getp(name):
            r0, nr, nc = p_off[name]
            return slab_ref[r0:r0 + nr, 0:nc]

        def dot(a, b):
            return jnp.dot(a, b, preferred_element_type=jnp.float32)

        def dotT(a, b):          # a^T @ b (contract leading dims)
            return jax.lax.dot_general(
                a, b, (((0,), (0,)), ((), ())),
                preferred_element_type=jnp.float32)

        def dotL(a, b):          # a @ b^T (contract trailing / lane dims)
            return jax.lax.dot_general(
                a, b, (((1,), (1,)), ((), ())),
                preferred_element_type=jnp.float32)

        def layernorm(h, g, b):
            mu = jnp.mean(h, axis=-1, keepdims=True)
            var = jnp.mean((h - mu) ** 2, axis=-1, keepdims=True)
            return (h - mu) * jax.lax.rsqrt(var + EPS) * g + b

        def mlp_layer(h, pre):
            h = dot(h, getp(f'{pre}_W')) + getp(f'{pre}_b')
            return jnp.tanh(layernorm(h, getp(f'{pre}_g'), getp(f'{pre}_be')))

        def vp_net(v):                                   # v: (Bc, H)
            for l in range(3):
                v = mlp_layer(v, f'vp{l}')
            return v

        # ---- folded one-hot constants (resident, one small DMA) ----
        U = cst_ref[c_off['U']:c_off['U'] + BcN, :]        # (BcN, Bc*NN)
        V = cst_ref[c_off['V']:c_off['V'] + BcN, :]        # (BcN, Bc*NN)
        W = cst_ref[c_off['W']:c_off['W'] + N, :]          # (N,   Bc*NN)
        P = cst_ref[c_off['P']:c_off['P'] + Bc, 0:BcN]     # (Bc,  BcN)
        E2 = cst_ref[c_off['E2']:c_off['E2'] + N, 0:128]   # (N,   128)

        def node_net(x, A_bd, vp_nodes):
            mi = dotT(A_bd, x)                           # per-graph A^T @ x
            mo = dot(A_bd, x)                            # per-graph A   @ x
            h = (dot(mi, getp('nd0_Wmi')) + dot(mo, getp('nd0_Wmo'))
                 + dot(x, getp('nd0_Wx')) + dot(vp_nodes, getp('nd0_Wvp'))
                 + getp('nd0_b'))
            h = jnp.tanh(layernorm(h, getp('nd0_g'), getp('nd0_be')))
            for l in range(1, 4):
                h = mlp_layer(h, f'nd{l}')
            return h                                     # (BcN, H)

        def edge_net(x, a_flat, vp_nodes):
            # channel-major (H, Bc*NN) edge features; vp & bias folded into
            # the per-source-node term before the pair expansion.
            pi = (dot(x, getp('ed0_Wm2')) + dot(vp_nodes, getp('ed0_Wvp'))
                  + getp('ed0_b'))                       # (BcN, H)  x[i] term
            pj = dot(x, getp('ed0_Wm1'))                 # (BcN, H)  x[j] term
            h = jnp.tanh(dotT(pi, U) + dotT(pj, V)
                         + getp('ed0_WAc') * a_flat)     # (H, Bc*NN)
            for l in range(1, 4):                        # 1x1 convs, channel-major
                h = jnp.tanh(dot(getp(f'ed{l}_Wt'), h) + getp(f'ed{l}_bc'))
            e = dot(getp('ed4_Wr'), h) + getp('ed4_b')   # (1, Bc*NN)
            return jax.nn.sigmoid(e)                     # flattened new A

        # ---- unpack the lane-dense input slab ----
        x_in = in_ref[:, 0:Din]                          # (BcN, Din)
        A_pk = in_ref[:, a_off:a_off + N]                # (BcN, N) per-graph rows

        x = mlp_layer(x_in, 'in')                        # (BcN, H)
        # flatten input adjacency once: a_flat[k=g*NN+i*N+j] = A[g, i, j]
        a_flat = jnp.sum(U * dot(A_pk, W), axis=0, keepdims=True)  # (1, Bc*NN)
        A_bd = dotL(U * a_flat, V)                       # block-diag (BcN, BcN)
        vp = vp_net(dot(P, x) * inv_n)                   # per-graph vp (Bc, H)
        vp_nodes = dotT(P, vp)                           # per-node broadcast

        for it in range(n_iters):                        # unrolled graph iters
            x0 = x
            xn = node_net(x, A_bd, vp_nodes)
            sig = edge_net(xn, a_flat, vp_nodes)         # (1, Bc*NN)
            a_flat = sig                                 # carry; no re-flatten
            if it < n_iters - 1:
                A_bd = dotL(U * a_flat, V)               # next node_net only
                vp = vp_net(dot(P, xn) * inv_n)
                vp_nodes = dotT(P, vp)
            x = xn + x0

        # ---- packed writeback ----
        A_rows = dotL(U * a_flat, W)                     # (BcN, N) per-graph rows
        out_ref[...] = dot(A_rows, E2)   # full-lane store: zeros + A in [H, H+N)
        out_ref[:, 0:H] = x              # exact f32 node features in lanes [0, H)

    return kernel


def _choose_fold(B, max_fold=8):
    # Fold as many graphs per grid step as possible (tiny-op latency bound);
    # cap at 8 so the node tile is a 128-row MXU-friendly block.
    for bc in range(min(B, max_fold), 0, -1):
        if B % bc == 0:
            return bc
    return 1


def gnn_forward(x, A, params, graphs_per_step=None):
    B, N, Din = x.shape
    H = params['in_W'].shape[1]
    Bc = graphs_per_step if graphs_per_step is not None else _choose_fold(B)
    assert B % Bc == 0
    G = B // Bc          # on v7x with large B, keep G even so both TCs are used
    a_off = _round8(Din)
    assert a_off + N <= 128 and H + N <= 128 and (Bc * N) % 8 == 0

    slab, p_off = pack_params(params)
    R = slab.shape[0]
    cst, c_off = build_consts(Bc, N, H)
    CR, CL = cst.shape

    # one lane-dense input slab: row b*N+i holds [x[b,i] | A[b,i,:]]
    xin = jnp.zeros((B * N, 128), jnp.float32)
    xin = xin.at[:, 0:Din].set(x.reshape(B * N, Din).astype(jnp.float32))
    xin = xin.at[:, a_off:a_off + N].set(A.reshape(B * N, N).astype(jnp.float32))

    kernel = _make_kernel(p_off, c_off, N, Din, H, Bc, a_off, N_GRAPH_ITERS)
    out = pl.pallas_call(
        kernel,
        grid=(G,),
        in_specs=[
            pl.BlockSpec((Bc * N, 128), lambda b: (b, 0)),   # packed [x|A] rows
            pl.BlockSpec((R, 128), lambda b: (0, 0)),        # param slab (resident)
            pl.BlockSpec((CR, CL), lambda b: (0, 0)),        # one-hot constants
        ],
        out_specs=pl.BlockSpec((Bc * N, 128), lambda b: (b, 0)),
        out_shape=jax.ShapeDtypeStruct((B * N, 128), jnp.float32),
        compiler_params=pltpu.CompilerParams(
            dimension_semantics=("parallel",)),
    )(xin, slab, cst)

    x_out = out[:, 0:H].reshape(B, N, H)
    A_out = out[:, H:H + N].reshape(B, N, N)
    return x_out, A_out


# ----------------------------------------------------------------------------
# Pure-JAX reference (same math, batched) for verification.
# ----------------------------------------------------------------------------
def gnn_reference(x, A, params, n_iters=N_GRAPH_ITERS):
    p = params

    def ln(h, g, b):
        mu = jnp.mean(h, axis=-1, keepdims=True)
        var = jnp.mean((h - mu) ** 2, axis=-1, keepdims=True)
        return (h - mu) / jnp.sqrt(var + EPS) * g + b

    def mlp_layer(h, pre):
        return jnp.tanh(ln(h @ p[f'{pre}_W'] + p[f'{pre}_b'],
                           p[f'{pre}_g'], p[f'{pre}_be']))

    def vp_net(v):
        for l in range(3):
            v = mlp_layer(v, f'vp{l}')
        return v

    B, N, _ = x.shape
    H = p['in_W'].shape[1]

    x = mlp_layer(x, 'in')
    vp = vp_net(jnp.mean(x, axis=1))
    for _ in range(n_iters):
        x0 = x
        mi = jnp.einsum('bji,bjh->bih', A, x)
        mo = jnp.einsum('bij,bjh->bih', A, x)
        inp = jnp.concatenate(
            [mi, mo, x, jnp.broadcast_to(vp[:, None, :], (B, N, H))], axis=-1)
        h = jnp.tanh(ln(inp @ p['nd0_W'] + p['nd0_b'], p['nd0_g'], p['nd0_be']))
        for l in range(1, 4):
            h = mlp_layer(h, f'nd{l}')
        x = h
        pj = x @ p['ed0_Wm1']
        pi = x @ p['ed0_Wm2']
        pv = vp @ p['ed0_Wvp']
        e = (pi[:, :, None, :] + pj[:, None, :, :] + pv[:, None, None, :]
             + A[:, :, :, None] * p['ed0_WA'][None, None, :, :] + p['ed0_b'])
        e = jnp.tanh(e)
        for l in range(1, 4):
            e = jnp.tanh(e @ p[f'ed{l}_W'] + p[f'ed{l}_b'])
        E = jnp.squeeze(e @ p['ed4_W'], axis=-1) + p['ed4_b'][0, 0]
        A = jax.nn.sigmoid(E)
        vp = vp_net(jnp.mean(x, axis=1))
        x = x + x0
    return x, A


if __name__ == "__main__":
    B, N, Din, H = 2, 16, 3, 8
    key = jax.random.PRNGKey(0)
    kp, kx, ka = jax.random.split(key, 3)
    params = init_params(kp, Din, H)
    x = jax.random.normal(kx, (B, N, Din), dtype=jnp.float32)
    A = jax.nn.sigmoid(jax.random.normal(ka, (B, N, N), dtype=jnp.float32))

    x_out, A_out = gnn_forward(x, A, params)
    jax.block_until_ready((x_out, A_out))

    x_ref, A_ref = gnn_reference(x, A, params)
    assert jnp.max(jnp.abs(x_out - x_ref)) < 1e-2
    assert jnp.max(jnp.abs(A_out - A_ref)) < 1e-2
    print("KERNEL_OK")
</pallas_src>

<mosaic_0001>
module attributes {stable_mosaic.version = 11 : i64} {
  func.func @kernel(%arg0: i32, %arg1: memref<32x128xf32, #tpu.memory_space<vmem>>, %arg2: memref<384x128xf32, #tpu.memory_space<vmem>>, %arg3: memref<104x512xf32, #tpu.memory_space<vmem>>, %arg4: memref<32x128xf32, #tpu.memory_space<vmem>>) attributes {dimension_semantics = [#tpu.dimension_semantics<parallel>], iteration_bounds = array<i64: 1>, scalar_prefetch = 0 : i64, scratch_operands = 0 : i64, tpu.core_type = #tpu.core_type<tc>, window_params = [{transform_indices = @transform_0, window_bounds = array<i64: 32, 128>}, {pipeline_mode = #tpu.pipeline_mode<synchronous>, transform_indices = @transform_1, window_bounds = array<i64: 384, 128>}, {pipeline_mode = #tpu.pipeline_mode<synchronous>, transform_indices = @transform_2, window_bounds = array<i64: 104, 512>}, {transform_indices = @transform_3, window_bounds = array<i64: 32, 128>}]} {
    %c0 = arith.constant 0 : index
    %c0_0 = arith.constant 0 : index
    %0 = vector.load %arg3[%c0, %c0_0] : memref<104x512xf32, #tpu.memory_space<vmem>>, vector<32x512xf32>
    %c32 = arith.constant 32 : index
    %c0_1 = arith.constant 0 : index
    %1 = vector.load %arg3[%c32, %c0_1] : memref<104x512xf32, #tpu.memory_space<vmem>>, vector<32x512xf32>
    %c64 = arith.constant 64 : index
    %c0_2 = arith.constant 0 : index
    %2 = vector.load %arg3[%c64, %c0_2] : memref<104x512xf32, #tpu.memory_space<vmem>>, vector<16x512xf32>
    %c80 = arith.constant 80 : index
    %c0_3 = arith.constant 0 : index
    %3 = vector.load %arg3[%c80, %c0_3] : memref<104x512xf32, #tpu.memory_space<vmem>>, vector<2x32xf32>
    %c88 = arith.constant 88 : index
    %c0_4 = arith.constant 0 : index
    %4 = vector.load %arg3[%c88, %c0_4] : memref<104x512xf32, #tpu.memory_space<vmem>>, vector<16x128xf32>
    %c0_5 = arith.constant 0 : index
    %c0_6 = arith.constant 0 : index
    %5 = vector.load %arg1[%c0_5, %c0_6] : memref<32x128xf32, #tpu.memory_space<vmem>>, vector<32x3xf32>
    %c0_7 = arith.constant 0 : index
    %c8 = arith.constant 8 : index
    %6 = vector.load %arg1[%c0_7, %c8] : memref<32x128xf32, #tpu.memory_space<vmem>>, vector<32x16xf32>
    %c0_8 = arith.constant 0 : index
    %c0_9 = arith.constant 0 : index
    %7 = vector.load %arg2[%c0_8, %c0_9] : memref<384x128xf32, #tpu.memory_space<vmem>>, vector<3x8xf32>
    %cst = arith.constant dense<0.000000e+00> : vector<32x8xf32>
    %8 = tpu.matmul %5, %7, %cst {dimension_numbers = #tpu.dot_dimension_numbers<[1], [0], [0], [1], [0, 0, 1, 1], [], []>} : vector<32x3xf32>, vector<3x8xf32>, vector<32x8xf32> -> vector<32x8xf32>
    %c8_10 = arith.constant 8 : index
    %c0_11 = arith.constant 0 : index
    %9 = vector.load %arg2[%c8_10, %c0_11] : memref<384x128xf32, #tpu.memory_space<vmem>>, vector<1x8xf32>
    %10 = vector.broadcast %9 : vector<1x8xf32> to vector<32x8xf32>
    %11 = arith.addf %8, %10 : vector<32x8xf32>
    %c16 = arith.constant 16 : index
    %c0_12 = arith.constant 0 : index
    %12 = vector.load %arg2[%c16, %c0_12] : memref<384x128xf32, #tpu.memory_space<vmem>>, vector<1x8xf32>
    %c24 = arith.constant 24 : index
    %c0_13 = arith.constant 0 : index
    %13 = vector.load %arg2[%c24, %c0_13] : memref<384x128xf32, #tpu.memory_space<vmem>>, vector<1x8xf32>
    %cst_14 = arith.constant dense<0.000000e+00> : vector<32xf32>
    %14 = vector.multi_reduction <add>, %11, %cst_14 [1] : vector<32x8xf32> to vector<32xf32>
    %15 = vector.shape_cast %14 : vector<32xf32> to vector<32x1xf32>
    %cst_15 = arith.constant 8.000000e+00 : f32
    %16 = vector.broadcast %cst_15 : f32 to vector<32x1xf32>
    %17 = arith.divf %15, %16 : vector<32x1xf32>
    %18 = vector.broadcast %17 : vector<32x1xf32> to vector<32x8xf32>
    %19 = arith.subf %11, %18 : vector<32x8xf32>
    %20 = arith.mulf %19, %19 : vector<32x8xf32>
    %cst_16 = arith.constant dense<0.000000e+00> : vector<32xf32>
    %21 = vector.multi_reduction <add>, %20, %cst_16 [1] : vector<32x8xf32> to vector<32xf32>
    %22 = vector.shape_cast %21 : vector<32xf32> to vector<32x1xf32>
    %cst_17 = arith.constant 8.000000e+00 : f32
    %23 = vector.broadcast %cst_17 : f32 to vector<32x1xf32>
    %24 = arith.divf %22, %23 : vector<32x1xf32>
    %25 = vector.broadcast %17 : vector<32x1xf32> to vector<32x8xf32>
    %26 = arith.subf %11, %25 : vector<32x8xf32>
    %cst_18 = arith.constant 9.99999974E-6 : f32
    %27 = vector.broadcast %cst_18 : f32 to vector<32x1xf32>
    %28 = arith.addf %24, %27 : vector<32x1xf32>
    %29 = math.rsqrt %28 : vector<32x1xf32>
    %30 = vector.broadcast %29 : vector<32x1xf32> to vector<32x8xf32>
    %31 = arith.mulf %26, %30 : vector<32x8xf32>
    %32 = vector.broadcast %12 : vector<1x8xf32> to vector<32x8xf32>
    %33 = arith.mulf %31, %32 : vector<32x8xf32>
    %34 = vector.broadcast %13 : vector<1x8xf32> to vector<32x8xf32>
    %35 = arith.addf %33, %34 : vector<32x8xf32>
    %36 = math.tanh %35 : vector<32x8xf32>
    %cst_19 = arith.constant dense<0.000000e+00> : vector<32x512xf32>
    %37 = tpu.matmul %6, %2, %cst_19 {dimension_numbers = #tpu.dot_dimension_numbers<[1], [0], [0], [1], [0, 0, 1, 1], [], []>} : vector<32x16xf32>, vector<16x512xf32>, vector<32x512xf32> -> vector<32x512xf32>
    %38 = arith.mulf %0, %37 : vector<32x512xf32>
    %cst_20 = arith.constant dense<0.000000e+00> : vector<512xf32>
    %39 = vector.multi_reduction <add>, %38, %cst_20 [0] : vector<32x512xf32> to vector<512xf32>
    %40 = vector.shape_cast %39 : vector<512xf32> to vector<1x512xf32>
    %41 = vector.broadcast %40 : vector<1x512xf32> to vector<32x512xf32>
    %42 = arith.mulf %0, %41 : vector<32x512xf32>
    %cst_21 = arith.constant dense<0.000000e+00> : vector<32x32xf32>
    %43 = tpu.matmul %42, %1, %cst_21 {dimension_numbers = #tpu.dot_dimension_numbers<[1], [1], [0], [0], [0, 0, 1, 0], [], []>} : vector<32x512xf32>, vector<32x512xf32>, vector<32x32xf32> -> vector<32x32xf32>
    %cst_22 = arith.constant dense<0.000000e+00> : vector<2x8xf32>
    %44 = tpu.matmul %3, %36, %cst_22 {dimension_numbers = #tpu.dot_dimension_numbers<[1], [0], [0], [1], [0, 0, 1, 1], [], []>} : vector<2x32xf32>, vector<32x8xf32>, vector<2x8xf32> -> vector<2x8xf32>
    %cst_23 = arith.constant 6.250000e-02 : f32
    %45 = vector.broadcast %cst_23 : f32 to vector<2x8xf32>
    %46 = arith.mulf %44, %45 : vector<2x8xf32>
    %c32_24 = arith.constant 32 : index
    %c0_25 = arith.constant 0 : index
    %47 = vector.load %arg2[%c32_24, %c0_25] : memref<384x128xf32, #tpu.memory_space<vmem>>, vector<8x8xf32>
    %cst_26 = arith.constant dense<0.000000e+00> : vector<2x8xf32>
    %48 = tpu.matmul %46, %47, %cst_26 {dimension_numbers = #tpu.dot_dimension_numbers<[1], [0], [0], [1], [0, 0, 1, 1], [], []>} : vector<2x8xf32>, vector<8x8xf32>, vector<2x8xf32> -> vector<2x8xf32>
    %c40 = arith.constant 40 : index
    %c0_27 = arith.constant 0 : index
    %49 = vector.load %arg2[%c40, %c0_27] : memref<384x128xf32, #tpu.memory_space<vmem>>, vector<1x8xf32>
    %50 = vector.broadcast %49 : vector<1x8xf32> to vector<2x8xf32>
    %51 = arith.addf %48, %50 : vector<2x8xf32>
    %c48 = arith.constant 48 : index
    %c0_28 = arith.constant 0 : index
    %52 = vector.load %arg2[%c48, %c0_28] : memref<384x128xf32, #tpu.memory_space<vmem>>, vector<1x8xf32>
    %c56 = arith.constant 56 : index
    %c0_29 = arith.constant 0 : index
    %53 = vector.load %arg2[%c56, %c0_29] : memref<384x128xf32, #tpu.memory_space<vmem>>, vector<1x8xf32>
    %cst_30 = arith.constant dense<0.000000e+00> : vector<2xf32>
    %54 = vector.multi_reduction <add>, %51, %cst_30 [1] : vector<2x8xf32> to vector<2xf32>
    %55 = vector.shape_cast %54 : vector<2xf32> to vector<2x1xf32>
    %cst_31 = arith.constant 8.000000e+00 : f32
    %56 = vector.broadcast %cst_31 : f32 to vector<2x1xf32>
    %57 = arith.divf %55, %56 : vector<2x1xf32>
    %58 = vector.broadcast %57 : vector<2x1xf32> to vector<2x8xf32>
    %59 = arith.subf %51, %58 : vector<2x8xf32>
    %60 = arith.mulf %59, %59 : vector<2x8xf32>
    %cst_32 = arith.constant dense<0.000000e+00> : vector<2xf32>
    %61 = vector.multi_reduction <add>, %60, %cst_32 [1] : vector<2x8xf32> to vector<2xf32>
    %62 = vector.shape_cast %61 : vector<2xf32> to vector<2x1xf32>
    %cst_33 = arith.constant 8.000000e+00 : f32
    %63 = vector.broadcast %cst_33 : f32 to vector<2x1xf32>
    %64 = arith.divf %62, %63 : vector<2x1xf32>
    %65 = vector.broadcast %57 : vector<2x1xf32> to vector<2x8xf32>
    %66 = arith.subf %51, %65 : vector<2x8xf32>
    %cst_34 = arith.constant 9.99999974E-6 : f32
    %67 = vector.broadcast %cst_34 : f32 to vector<2x1xf32>
    %68 = arith.addf %64, %67 : vector<2x1xf32>
    %69 = math.rsqrt %68 : vector<2x1xf32>
    %70 = vector.broadcast %69 : vector<2x1xf32> to vector<2x8xf32>
    %71 = arith.mulf %66, %70 : vector<2x8xf32>
    %72 = vector.broadcast %52 : vector<1x8xf32> to vector<2x8xf32>
    %73 = arith.mulf %71, %72 : vector<2x8xf32>
    %74 = vector.broadcast %53 : vector<1x8xf32> to vector<2x8xf32>
    %75 = arith.addf %73, %74 : vector<2x8xf32>
    %76 = math.tanh %75 : vector<2x8xf32>
    %c64_35 = arith.constant 64 : index
    %c0_36 = arith.constant 0 : index
    %77 = vector.load %arg2[%c64_35, %c0_36] : memref<384x128xf32, #tpu.memory_space<vmem>>, vector<8x8xf32>
    %cst_37 = arith.constant dense<0.000000e+00> : vector<2x8xf32>
    %78 = tpu.matmul %76, %77, %cst_37 {dimension_numbers = #tpu.dot_dimension_numbers<[1], [0], [0], [1], [0, 0, 1, 1], [], []>} : vector<2x8xf32>, vector<8x8xf32>, vector<2x8xf32> -> vector<2x8xf32>
    %c72 = arith.constant 72 : index
    %c0_38 = arith.constant 0 : index
    %79 = vector.load %arg2[%c72, %c0_38] : memref<384x128xf32, #tpu.memory_space<vmem>>, vector<1x8xf32>
    %80 = vector.broadcast %79 : vector<1x8xf32> to vector<2x8xf32>
    %81 = arith.addf %78, %80 : vector<2x8xf32>
    %c80_39 = arith.constant 80 : index
    %c0_40 = arith.constant 0 : index
    %82 = vector.load %arg2[%c80_39, %c0_40] : memref<384x128xf32, #tpu.memory_space<vmem>>, vector<1x8xf32>
    %c88_41 = arith.constant 88 : index
    %c0_42 = arith.constant 0 : index
    %83 = vector.load %arg2[%c88_41, %c0_42] : memref<384x128xf32, #tpu.memory_space<vmem>>, vector<1x8xf32>
    %cst_43 = arith.constant dense<0.000000e+00> : vector<2xf32>
    %84 = vector.multi_reduction <add>, %81, %cst_43 [1] : vector<2x8xf32> to vector<2xf32>
    %85 = vector.shape_cast %84 : vector<2xf32> to vector<2x1xf32>
    %cst_44 = arith.constant 8.000000e+00 : f32
    %86 = vector.broadcast %cst_44 : f32 to vector<2x1xf32>
    %87 = arith.divf %85, %86 : vector<2x1xf32>
    %88 = vector.broadcast %87 : vector<2x1xf32> to vector<2x8xf32>
    %89 = arith.subf %81, %88 : vector<2x8xf32>
    %90 = arith.mulf %89, %89 : vector<2x8xf32>
    %cst_45 = arith.constant dense<0.000000e+00> : vector<2xf32>
    %91 = vector.multi_reduction <add>, %90, %cst_45 [1] : vector<2x8xf32> to vector<2xf32>
    %92 = vector.shape_cast %91 : vector<2xf32> to vector<2x1xf32>
    %cst_46 = arith.constant 8.000000e+00 : f32
    %93 = vector.broadcast %cst_46 : f32 to vector<2x1xf32>
    %94 = arith.divf %92, %93 : vector<2x1xf32>
    %95 = vector.broadcast %87 : vector<2x1xf32> to vector<2x8xf32>
    %96 = arith.subf %81, %95 : vector<2x8xf32>
    %cst_47 = arith.constant 9.99999974E-6 : f32
    %97 = vector.broadcast %cst_47 : f32 to vector<2x1xf32>
    %98 = arith.addf %94, %97 : vector<2x1xf32>
    %99 = math.rsqrt %98 : vector<2x1xf32>
    %100 = vector.broadcast %99 : vector<2x1xf32> to vector<2x8xf32>
    %101 = arith.mulf %96, %100 : vector<2x8xf32>
    %102 = vector.broadcast %82 : vector<1x8xf32> to vector<2x8xf32>
    %103 = arith.mulf %101, %102 : vector<2x8xf32>
    %104 = vector.broadcast %83 : vector<1x8xf32> to vector<2x8xf32>
    %105 = arith.addf %103, %104 : vector<2x8xf32>
    %106 = math.tanh %105 : vector<2x8xf32>
    %c96 = arith.constant 96 : index
    %c0_48 = arith.constant 0 : index
    %107 = vector.load %arg2[%c96, %c0_48] : memref<384x128xf32, #tpu.memory_space<vmem>>, vector<8x8xf32>
    %cst_49 = arith.constant dense<0.000000e+00> : vector<2x8xf32>
    %108 = tpu.matmul %106, %107, %cst_49 {dimension_numbers = #tpu.dot_dimension_numbers<[1], [0], [0], [1], [0, 0, 1, 1], [], []>} : vector<2x8xf32>, vector<8x8xf32>, vector<2x8xf32> -> vector<2x8xf32>
    %c104 = arith.constant 104 : index
    %c0_50 = arith.constant 0 : index
    %109 = vector.load %arg2[%c104, %c0_50] : memref<384x128xf32, #tpu.memory_space<vmem>>, vector<1x8xf32>
    %110 = vector.broadcast %109 : vector<1x8xf32> to vector<2x8xf32>
    %111 = arith.addf %108, %110 : vector<2x8xf32>
    %c112 = arith.constant 112 : index
    %c0_51 = arith.constant 0 : index
    %112 = vector.load %arg2[%c112, %c0_51] : memref<384x128xf32, #tpu.memory_space<vmem>>, vector<1x8xf32>
    %c120 = arith.constant 120 : index
    %c0_52 = arith.constant 0 : index
    %113 = vector.load %arg2[%c120, %c0_52] : memref<384x128xf32, #tpu.memory_space<vmem>>, vector<1x8xf32>
    %cst_53 = arith.constant dense<0.000000e+00> : vector<2xf32>
    %114 = vector.multi_reduction <add>, %111, %cst_53 [1] : vector<2x8xf32> to vector<2xf32>
    %115 = vector.shape_cast %114 : vector<2xf32> to vector<2x1xf32>
    %cst_54 = arith.constant 8.000000e+00 : f32
    %116 = vector.broadcast %cst_54 : f32 to vector<2x1xf32>
    %117 = arith.divf %115, %116 : vector<2x1xf32>
    %118 = vector.broadcast %117 : vector<2x1xf32> to vector<2x8xf32>
    %119 = arith.subf %111, %118 : vector<2x8xf32>
    %120 = arith.mulf %119, %119 : vector<2x8xf32>
    %cst_55 = arith.constant dense<0.000000e+00> : vector<2xf32>
    %121 = vector.multi_reduction <add>, %120, %cst_55 [1] : vector<2x8xf32> to vector<2xf32>
    %122 = vector.shape_cast %121 : vector<2xf32> to vector<2x1xf32>
    %cst_56 = arith.constant 8.000000e+00 : f32
    %123 = vector.broadcast %cst_56 : f32 to vector<2x1xf32>
    %124 = arith.divf %122, %123 : vector<2x1xf32>
    %125 = vector.broadcast %117 : vector<2x1xf32> to vector<2x8xf32>
    %126 = arith.subf %111, %125 : vector<2x8xf32>
    %cst_57 = arith.constant 9.99999974E-6 : f32
    %127 = vector.broadcast %cst_57 : f32 to vector<2x1xf32>
    %128 = arith.addf %124, %127 : vector<2x1xf32>
    %129 = math.rsqrt %128 : vector<2x1xf32>
    %130 = vector.broadcast %129 : vector<2x1xf32> to vector<2x8xf32>
    %131 = arith.mulf %126, %130 : vector<2x8xf32>
    %132 = vector.broadcast %112 : vector<1x8xf32> to vector<2x8xf32>
    %133 = arith.mulf %131, %132 : vector<2x8xf32>
    %134 = vector.broadcast %113 : vector<1x8xf32> to vector<2x8xf32>
    %135 = arith.addf %133, %134 : vector<2x8xf32>
    %136 = math.tanh %135 : vector<2x8xf32>
    %cst_58 = arith.constant dense<0.000000e+00> : vector<32x8xf32>
    %137 = tpu.matmul %3, %136, %cst_58 {dimension_numbers = #tpu.dot_dimension_numbers<[0], [0], [1], [1], [0, 1, 1, 1], [], []>} : vector<2x32xf32>, vector<2x8xf32>, vector<32x8xf32> -> vector<32x8xf32>
    %cst_59 = arith.constant dense<0.000000e+00> : vector<32x8xf32>
    %138 = tpu.matmul %43, %36, %cst_59 {dimension_numbers = #tpu.dot_dimension_numbers<[0], [0], [1], [1], [0, 1, 1, 1], [], []>} : vector<32x32xf32>, vector<32x8xf32>, vector<32x8xf32> -> vector<32x8xf32>
    %cst_60 = arith.constant dense<0.000000e+00> : vector<32x8xf32>
    %139 = tpu.matmul %43, %36, %cst_60 {dimension_numbers = #tpu.dot_dimension_numbers<[1], [0], [0], [1], [0, 0, 1, 1], [], []>} : vector<32x32xf32>, vector<32x8xf32>, vector<32x8xf32> -> vector<32x8xf32>
    %c128 = arith.constant 128 : index
    %c0_61 = arith.constant 0 : index
    %140 = vector.load %arg2[%c128, %c0_61] : memref<384x128xf32, #tpu.memory_space<vmem>>, vector<8x8xf32>
    %cst_62 = arith.constant dense<0.000000e+00> : vector<32x8xf32>
    %141 = tpu.matmul %138, %140, %cst_62 {dimension_numbers = #tpu.dot_dimension_numbers<[1], [0], [0], [1], [0, 0, 1, 1], [], []>} : vector<32x8xf32>, vector<8x8xf32>, vector<32x8xf32> -> vector<32x8xf32>
    %c136 = arith.constant 136 : index
    %c0_63 = arith.constant 0 : index
    %142 = vector.load %arg2[%c136, %c0_63] : memref<384x128xf32, #tpu.memory_space<vmem>>, vector<8x8xf32>
    %cst_64 = arith.constant dense<0.000000e+00> : vector<32x8xf32>
    %143 = tpu.matmul %139, %142, %cst_64 {dimension_numbers = #tpu.dot_dimension_numbers<[1], [0], [0], [1], [0, 0, 1, 1], [], []>} : vector<32x8xf32>, vector<8x8xf32>, vector<32x8xf32> -> vector<32x8xf32>
    %144 = arith.addf %141, %143 : vector<32x8xf32>
    %c144 = arith.constant 144 : index
    %c0_65 = arith.constant 0 : index
    %145 = vector.load %arg2[%c144, %c0_65] : memref<384x128xf32, #tpu.memory_space<vmem>>, vector<8x8xf32>
    %cst_66 = arith.constant dense<0.000000e+00> : vector<32x8xf32>
    %146 = tpu.matmul %36, %145, %cst_66 {dimension_numbers = #tpu.dot_dimension_numbers<[1], [0], [0], [1], [0, 0, 1, 1], [], []>} : vector<32x8xf32>, vector<8x8xf32>, vector<32x8xf32> -> vector<32x8xf32>
    %147 = arith.addf %144, %146 : vector<32x8xf32>
    %c152 = arith.constant 152 : index
    %c0_67 = arith.constant 0 : index
    %148 = vector.load %arg2[%c152, %c0_67] : memref<384x128xf32, #tpu.memory_space<vmem>>, vector<8x8xf32>
    %cst_68 = arith.constant dense<0.000000e+00> : vector<32x8xf32>
    %149 = tpu.matmul %137, %148, %cst_68 {dimension_numbers = #tpu.dot_dimension_numbers<[1], [0], [0], [1], [0, 0, 1, 1], [], []>} : vector<32x8xf32>, vector<8x8xf32>, vector<32x8xf32> -> vector<32x8xf32>
    %150 = arith.addf %147, %149 : vector<32x8xf32>
    %c160 = arith.constant 160 : index
    %c0_69 = arith.constant 0 : index
    %151 = vector.load %arg2[%c160, %c0_69] : memref<384x128xf32, #tpu.memory_space<vmem>>, vector<1x8xf32>
    %152 = vector.broadcast %151 : vector<1x8xf32> to vector<32x8xf32>
    %153 = arith.addf %150, %152 : vector<32x8xf32>
    %c168 = arith.constant 168 : index
    %c0_70 = arith.constant 0 : index
    %154 = vector.load %arg2[%c168, %c0_70] : memref<384x128xf32, #tpu.memory_space<vmem>>, vector<1x8xf32>
    %c176 = arith.constant 176 : index
    %c0_71 = arith.constant 0 : index
    %155 = vector.load %arg2[%c176, %c0_71] : memref<384x128xf32, #tpu.memory_space<vmem>>, vector<1x8xf32>
    %cst_72 = arith.constant dense<0.000000e+00> : vector<32xf32>
    %156 = vector.multi_reduction <add>, %153, %cst_72 [1] : vector<32x8xf32> to vector<32xf32>
    %157 = vector.shape_cast %156 : vector<32xf32> to vector<32x1xf32>
    %cst_73 = arith.constant 8.000000e+00 : f32
    %158 = vector.broadcast %cst_73 : f32 to vector<32x1xf32>
    %159 = arith.divf %157, %158 : vector<32x1xf32>
    %160 = vector.broadcast %159 : vector<32x1xf32> to vector<32x8xf32>
    %161 = arith.subf %153, %160 : vector<32x8xf32>
    %162 = arith.mulf %161, %161 : vector<32x8xf32>
    %cst_74 = arith.constant dense<0.000000e+00> : vector<32xf32>
    %163 = vector.multi_reduction <add>, %162, %cst_74 [1] : vector<32x8xf32> to vector<32xf32>
    %164 = vector.shape_cast %163 : vector<32xf32> to vector<32x1xf32>
    %cst_75 = arith.constant 8.000000e+00 : f32
    %165 = vector.broadcast %cst_75 : f32 to vector<32x1xf32>
    %166 = arith.divf %164, %165 : vector<32x1xf32>
    %167 = vector.broadcast %159 : vector<32x1xf32> to vector<32x8xf32>
    %168 = arith.subf %153, %167 : vector<32x8xf32>
    %cst_76 = arith.constant 9.99999974E-6 : f32
    %169 = vector.broadcast %cst_76 : f32 to vector<32x1xf32>
    %170 = arith.addf %166, %169 : vector<32x1xf32>
    %171 = math.rsqrt %170 : vector<32x1xf32>
    %172 = vector.broadcast %171 : vector<32x1xf32> to vector<32x8xf32>
    %173 = arith.mulf %168, %172 : vector<32x8xf32>
    %174 = vector.broadcast %154 : vector<1x8xf32> to vector<32x8xf32>
    %175 = arith.mulf %173, %174 : vector<32x8xf32>
    %176 = vector.broadcast %155 : vector<1x8xf32> to vector<32x8xf32>
    %177 = arith.addf %175, %176 : vector<32x8xf32>
    %178 = math.tanh %177 : vector<32x8xf32>
    %c184 = arith.constant 184 : index
    %c0_77 = arith.constant 0 : index
    %179 = vector.load %arg2[%c184, %c0_77] : memref<384x128xf32, #tpu.memory_space<vmem>>, vector<8x8xf32>
    %cst_78 = arith.constant dense<0.000000e+00> : vector<32x8xf32>
    %180 = tpu.matmul %178, %179, %cst_78 {dimension_numbers = #tpu.dot_dimension_numbers<[1], [0], [0], [1], [0, 0, 1, 1], [], []>} : vector<32x8xf32>, vector<8x8xf32>, vector<32x8xf32> -> vector<32x8xf32>
    %c192 = arith.constant 192 : index
    %c0_79 = arith.constant 0 : index
    %181 = vector.load %arg2[%c192, %c0_79] : memref<384x128xf32, #tpu.memory_space<vmem>>, vector<1x8xf32>
    %182 = vector.broadcast %181 : vector<1x8xf32> to vector<32x8xf32>
    %183 = arith.addf %180, %182 : vector<32x8xf32>
    %c200 = arith.constant 200 : index
    %c0_80 = arith.constant 0 : index
    %184 = vector.load %arg2[%c200, %c0_80] : memref<384x128xf32, #tpu.memory_space<vmem>>, vector<1x8xf32>
    %c208 = arith.constant 208 : index
    %c0_81 = arith.constant 0 : index
    %185 = vector.load %arg2[%c208, %c0_81] : memref<384x128xf32, #tpu.memory_space<vmem>>, vector<1x8xf32>
    %cst_82 = arith.constant dense<0.000000e+00> : vector<32xf32>
    %186 = vector.multi_reduction <add>, %183, %cst_82 [1] : vector<32x8xf32> to vector<32xf32>
    %187 = vector.shape_cast %186 : vector<32xf32> to vector<32x1xf32>
    %cst_83 = arith.constant 8.000000e+00 : f32
    %188 = vector.broadcast %cst_83 : f32 to vector<32x1xf32>
    %189 = arith.divf %187, %188 : vector<32x1xf32>
    %190 = vector.broadcast %189 : vector<32x1xf32> to vector<32x8xf32>
    %191 = arith.subf %183, %190 : vector<32x8xf32>
    %192 = arith.mulf %191, %191 : vector<32x8xf32>
    %cst_84 = arith.constant dense<0.000000e+00> : vector<32xf32>
    %193 = vector.multi_reduction <add>, %192, %cst_84 [1] : vector<32x8xf32> to vector<32xf32>
    %194 = vector.shape_cast %193 : vector<32xf32> to vector<32x1xf32>
    %cst_85 = arith.constant 8.000000e+00 : f32
    %195 = vector.broadcast %cst_85 : f32 to vector<32x1xf32>
    %196 = arith.divf %194, %195 : vector<32x1xf32>
    %197 = vector.broadcast %189 : vector<32x1xf32> to vector<32x8xf32>
    %198 = arith.subf %183, %197 : vector<32x8xf32>
    %cst_86 = arith.constant 9.99999974E-6 : f32
    %199 = vector.broadcast %cst_86 : f32 to vector<32x1xf32>
    %200 = arith.addf %196, %199 : vector<32x1xf32>
    %201 = math.rsqrt %200 : vector<32x1xf32>
    %202 = vector.broadcast %201 : vector<32x1xf32> to vector<32x8xf32>
    %203 = arith.mulf %198, %202 : vector<32x8xf32>
    %204 = vector.broadcast %184 : vector<1x8xf32> to vector<32x8xf32>
    %205 = arith.mulf %203, %204 : vector<32x8xf32>
    %206 = vector.broadcast %185 : vector<1x8xf32> to vector<32x8xf32>
    %207 = arith.addf %205, %206 : vector<32x8xf32>
    %208 = math.tanh %207 : vector<32x8xf32>
    %c216 = arith.constant 216 : index
    %c0_87 = arith.constant 0 : index
    %209 = vector.load %arg2[%c216, %c0_87] : memref<384x128xf32, #tpu.memory_space<vmem>>, vector<8x8xf32>
    %cst_88 = arith.constant dense<0.000000e+00> : vector<32x8xf32>
    %210 = tpu.matmul %208, %209, %cst_88 {dimension_numbers = #tpu.dot_dimension_numbers<[1], [0], [0], [1], [0, 0, 1, 1], [], []>} : vector<32x8xf32>, vector<8x8xf32>, vector<32x8xf32> -> vector<32x8xf32>
    %c224 = arith.constant 224 : index
    %c0_89 = arith.constant 0 : index
    %211 = vector.load %arg2[%c224, %c0_89] : memref<384x128xf32, #tpu.memory_space<vmem>>, vector<1x8xf32>
    %212 = vector.broadcast %211 : vector<1x8xf32> to vector<32x8xf32>
    %213 = arith.addf %210, %212 : vector<32x8xf32>
    %c232 = arith.constant 232 : index
    %c0_90 = arith.constant 0 : index
    %214 = vector.load %arg2[%c232, %c0_90] : memref<384x128xf32, #tpu.memory_space<vmem>>, vector<1x8xf32>
    %c240 = arith.constant 240 : index
    %c0_91 = arith.constant 0 : index
    %215 = vector.load %arg2[%c240, %c0_91] : memref<384x128xf32, #tpu.memory_space<vmem>>, vector<1x8xf32>
    %cst_92 = arith.constant dense<0.000000e+00> : vector<32xf32>
    %216 = vector.multi_reduction <add>, %213, %cst_92 [1] : vector<32x8xf32> to vector<32xf32>
    %217 = vector.shape_cast %216 : vector<32xf32> to vector<32x1xf32>
    %cst_93 = arith.constant 8.000000e+00 : f32
    %218 = vector.broadcast %cst_93 : f32 to vector<32x1xf32>
    %219 = arith.divf %217, %218 : vector<32x1xf32>
    %220 = vector.broadcast %219 : vector<32x1xf32> to vector<32x8xf32>
    %221 = arith.subf %213, %220 : vector<32x8xf32>
    %222 = arith.mulf %221, %221 : vector<32x8xf32>
    %cst_94 = arith.constant dense<0.000000e+00> : vector<32xf32>
    %223 = vector.multi_reduction <add>, %222, %cst_94 [1] : vector<32x8xf32> to vector<32xf32>
    %224 = vector.shape_cast %223 : vector<32xf32> to vector<32x1xf32>
    %cst_95 = arith.constant 8.000000e+00 : f32
    %225 = vector.broadcast %cst_95 : f32 to vector<32x1xf32>
    %226 = arith.divf %224, %225 : vector<32x1xf32>
    %227 = vector.broadcast %219 : vector<32x1xf32> to vector<32x8xf32>
    %228 = arith.subf %213, %227 : vector<32x8xf32>
    %cst_96 = arith.constant 9.99999974E-6 : f32
    %229 = vector.broadcast %cst_96 : f32 to vector<32x1xf32>
    %230 = arith.addf %226, %229 : vector<32x1xf32>
    %231 = math.rsqrt %230 : vector<32x1xf32>
    %232 = vector.broadcast %231 : vector<32x1xf32> to vector<32x8xf32>
    %233 = arith.mulf %228, %232 : vector<32x8xf32>
    %234 = vector.broadcast %214 : vector<1x8xf32> to vector<32x8xf32>
    %235 = arith.mulf %233, %234 : vector<32x8xf32>
    %236 = vector.broadcast %215 : vector<1x8xf32> to vector<32x8xf32>
    %237 = arith.addf %235, %236 : vector<32x8xf32>
    %238 = math.tanh %237 : vector<32x8xf32>
    %c248 = arith.constant 248 : index
    %c0_97 = arith.constant 0 : index
    %239 = vector.load %arg2[%c248, %c0_97] : memref<384x128xf32, #tpu.memory_space<vmem>>, vector<8x8xf32>
    %cst_98 = arith.constant dense<0.000000e+00> : vector<32x8xf32>
    %240 = tpu.matmul %238, %239, %cst_98 {dimension_numbers = #tpu.dot_dimension_numbers<[1], [0], [0], [1], [0, 0, 1, 1], [], []>} : vector<32x8xf32>, vector<8x8xf32>, vector<32x8xf32> -> vector<32x8xf32>
    %c256 = arith.constant 256 : index
    %c0_99 = arith.constant 0 : index
    %241 = vector.load %arg2[%c256, %c0_99] : memref<384x128xf32, #tpu.memory_space<vmem>>, vector<1x8xf32>
    %242 = vector.broadcast %241 : vector<1x8xf32> to vector<32x8xf32>
    %243 = arith.addf %240, %242 : vector<32x8xf32>
    %c264 = arith.constant 264 : index
    %c0_100 = arith.constant 0 : index
    %244 = vector.load %arg2[%c264, %c0_100] : memref<384x128xf32, #tpu.memory_space<vmem>>, vector<1x8xf32>
    %c272 = arith.constant 272 : index
    %c0_101 = arith.constant 0 : index
    %245 = vector.load %arg2[%c272, %c0_101] : memref<384x128xf32, #tpu.memory_space<vmem>>, vector<1x8xf32>
    %cst_102 = arith.constant dense<0.000000e+00> : vector<32xf32>
    %246 = vector.multi_reduction <add>, %243, %cst_102 [1] : vector<32x8xf32> to vector<32xf32>
    %247 = vector.shape_cast %246 : vector<32xf32> to vector<32x1xf32>
    %cst_103 = arith.constant 8.000000e+00 : f32
    %248 = vector.broadcast %cst_103 : f32 to vector<32x1xf32>
    %249 = arith.divf %247, %248 : vector<32x1xf32>
    %250 = vector.broadcast %249 : vector<32x1xf32> to vector<32x8xf32>
    %251 = arith.subf %243, %250 : vector<32x8xf32>
    %252 = arith.mulf %251, %251 : vector<32x8xf32>
    %cst_104 = arith.constant dense<0.000000e+00> : vector<32xf32>
    %253 = vector.multi_reduction <add>, %252, %cst_104 [1] : vector<32x8xf32> to vector<32xf32>
    %254 = vector.shape_cast %253 : vector<32xf32> to vector<32x1xf32>
    %cst_105 = arith.constant 8.000000e+00 : f32
    %255 = vector.broadcast %cst_105 : f32 to vector<32x1xf32>
    %256 = arith.divf %254, %255 : vector<32x1xf32>
    %257 = vector.broadcast %249 : vector<32x1xf32> to vector<32x8xf32>
    %258 = arith.subf %243, %257 : vector<32x8xf32>
    %cst_106 = arith.constant 9.99999974E-6 : f32
    %259 = vector.broadcast %cst_106 : f32 to vector<32x1xf32>
    %260 = arith.addf %256, %259 : vector<32x1xf32>
    %261 = math.rsqrt %260 : vector<32x1xf32>
    %262 = vector.broadcast %261 : vector<32x1xf32> to vector<32x8xf32>
    %263 = arith.mulf %258, %262 : vector<32x8xf32>
    %264 = vector.broadcast %244 : vector<1x8xf32> to vector<32x8xf32>
    %265 = arith.mulf %263, %264 : vector<32x8xf32>
    %266 = vector.broadcast %245 : vector<1x8xf32> to vector<32x8xf32>
    %267 = arith.addf %265, %266 : vector<32x8xf32>
    %268 = math.tanh %267 : vector<32x8xf32>
    %c288 = arith.constant 288 : index
    %c0_107 = arith.constant 0 : index
    %269 = vector.load %arg2[%c288, %c0_107] : memref<384x128xf32, #tpu.memory_space<vmem>>, vector<8x8xf32>
    %cst_108 = arith.constant dense<0.000000e+00> : vector<32x8xf32>
    %270 = tpu.matmul %268, %269, %cst_108 {dimension_numbers = #tpu.dot_dimension_numbers<[1], [0], [0], [1], [0, 0, 1, 1], [], []>} : vector<32x8xf32>, vector<8x8xf32>, vector<32x8xf32> -> vector<32x8xf32>
    %c296 = arith.constant 296 : index
    %c0_109 = arith.constant 0 : index
    %271 = vector.load %arg2[%c296, %c0_109] : memref<384x128xf32, #tpu.memory_space<vmem>>, vector<8x8xf32>
    %cst_110 = arith.constant dense<0.000000e+00> : vector<32x8xf32>
    %272 = tpu.matmul %137, %271, %cst_110 {dimension_numbers = #tpu.dot_dimension_numbers<[1], [0], [0], [1], [0, 0, 1, 1], [], []>} : vector<32x8xf32>, vector<8x8xf32>, vector<32x8xf32> -> vector<32x8xf32>
    %273 = arith.addf %270, %272 : vector<32x8xf32>
    %c304 = arith.constant 304 : index
    %c0_111 = arith.constant 0 : index
    %274 = vector.load %arg2[%c304, %c0_111] : memref<384x128xf32, #tpu.memory_space<vmem>>, vector<1x8xf32>
    %275 = vector.broadcast %274 : vector<1x8xf32> to vector<32x8xf32>
    %276 = arith.addf %273, %275 : vector<32x8xf32>
    %c280 = arith.constant 280 : index
    %c0_112 = arith.constant 0 : index
    %277 = vector.load %arg2[%c280, %c0_112] : memref<384x128xf32, #tpu.memory_space<vmem>>, vector<8x8xf32>
    %cst_113 = arith.constant dense<0.000000e+00> : vector<32x8xf32>
    %278 = tpu.matmul %268, %277, %cst_113 {dimension_numbers = #tpu.dot_dimension_numbers<[1], [0], [0], [1], [0, 0, 1, 1], [], []>} : vector<32x8xf32>, vector<8x8xf32>, vector<32x8xf32> -> vector<32x8xf32>
    %cst_114 = arith.constant dense<0.000000e+00> : vector<8x512xf32>
    %279 = tpu.matmul %276, %0, %cst_114 {dimension_numbers = #tpu.dot_dimension_numbers<[0], [0], [1], [1], [0, 1, 1, 1], [], []>} : vector<32x8xf32>, vector<32x512xf32>, vector<8x512xf32> -> vector<8x512xf32>
    %cst_115 = arith.constant dense<0.000000e+00> : vector<8x512xf32>
    %280 = tpu.matmul %278, %1, %cst_115 {dimension_numbers = #tpu.dot_dimension_numbers<[0], [0], [1], [1], [0, 1, 1, 1], [], []>} : vector<32x8xf32>, vector<32x512xf32>, vector<8x512xf32> -> vector<8x512xf32>
    %281 = arith.addf %279, %280 : vector<8x512xf32>
    %c312 = arith.constant 312 : index
    %c0_116 = arith.constant 0 : index
    %282 = vector.load %arg2[%c312, %c0_116] : memref<384x128xf32, #tpu.memory_space<vmem>>, vector<8x1xf32>
    %283 = vector.broadcast %282 : vector<8x1xf32> to vector<8x512xf32>
    %284 = vector.broadcast %40 : vector<1x512xf32> to vector<8x512xf32>
    %285 = arith.mulf %283, %284 : vector<8x512xf32>
    %286 = arith.addf %281, %285 : vector<8x512xf32>
    %287 = math.tanh %286 : vector<8x512xf32>
    %c320 = arith.constant 320 : index
    %c0_117 = arith.constant 0 : index
    %288 = vector.load %arg2[%c320, %c0_117] : memref<384x128xf32, #tpu.memory_space<vmem>>, vector<8x8xf32>
    %cst_118 = arith.constant dense<0.000000e+00> : vector<8x512xf32>
    %289 = tpu.matmul %288, %287, %cst_118 {dimension_numbers = #tpu.dot_dimension_numbers<[1], [0], [0], [1], [0, 0, 1, 1], [], []>} : vector<8x8xf32>, vector<8x512xf32>, vector<8x512xf32> -> vector<8x512xf32>
    %c328 = arith.constant 328 : index
    %c0_119 = arith.constant 0 : index
    %290 = vector.load %arg2[%c328, %c0_119] : memref<384x128xf32, #tpu.memory_space<vmem>>, vector<8x1xf32>
    %291 = vector.broadcast %290 : vector<8x1xf32> to vector<8x512xf32>
    %292 = arith.addf %289, %291 : vector<8x512xf32>
    %293 = math.tanh %292 : vector<8x512xf32>
    %c336 = arith.constant 336 : index
    %c0_120 = arith.constant 0 : index
    %294 = vector.load %arg2[%c336, %c0_120] : memref<384x128xf32, #tpu.memory_space<vmem>>, vector<8x8xf32>
    %cst_121 = arith.constant dense<0.000000e+00> : vector<8x512xf32>
    %295 = tpu.matmul %294, %293, %cst_121 {dimension_numbers = #tpu.dot_dimension_numbers<[1], [0], [0], [1], [0, 0, 1, 1], [], []>} : vector<8x8xf32>, vector<8x512xf32>, vector<8x512xf32> -> vector<8x512xf32>
    %c344 = arith.constant 344 : index
    %c0_122 = arith.constant 0 : index
    %296 = vector.load %arg2[%c344, %c0_122] : memref<384x128xf32, #tpu.memory_space<vmem>>, vector<8x1xf32>
    %297 = vector.broadcast %296 : vector<8x1xf32> to vector<8x512xf32>
    %298 = arith.addf %295, %297 : vector<8x512xf32>
    %299 = math.tanh %298 : vector<8x512xf32>
    %c352 = arith.constant 352 : index
    %c0_123 = arith.constant 0 : index
    %300 = vector.load %arg2[%c352, %c0_123] : memref<384x128xf32, #tpu.memory_space<vmem>>, vector<8x8xf32>
    %cst_124 = arith.constant dense<0.000000e+00> : vector<8x512xf32>
    %301 = tpu.matmul %300, %299, %cst_124 {dimension_numbers = #tpu.dot_dimension_numbers<[1], [0], [0], [1], [0, 0, 1, 1], [], []>} : vector<8x8xf32>, vector<8x512xf32>, vector<8x512xf32> -> vector<8x512xf32>
    %c360 = arith.constant 360 : index
    %c0_125 = arith.constant 0 : index
    %302 = vector.load %arg2[%c360, %c0_125] : memref<384x128xf32, #tpu.memory_space<vmem>>, vector<8x1xf32>
    %303 = vector.broadcast %302 : vector<8x1xf32> to vector<8x512xf32>
    %304 = arith.addf %301, %303 : vector<8x512xf32>
    %305 = math.tanh %304 : vector<8x512xf32>
    %c368 = arith.constant 368 : index
    %c0_126 = arith.constant 0 : index
    %306 = vector.load %arg2[%c368, %c0_126] : memref<384x128xf32, #tpu.memory_space<vmem>>, vector<1x8xf32>
    %cst_127 = arith.constant dense<0.000000e+00> : vector<1x512xf32>
    %307 = tpu.matmul %306, %305, %cst_127 {dimension_numbers = #tpu.dot_dimension_numbers<[1], [0], [0], [1], [0, 0, 1, 1], [], []>} : vector<1x8xf32>, vector<8x512xf32>, vector<1x512xf32> -> vector<1x512xf32>
    %c376 = arith.constant 376 : index
    %c0_128 = arith.constant 0 : index
    %308 = vector.load %arg2[%c376, %c0_128] : memref<384x128xf32, #tpu.memory_space<vmem>>, vector<1x1xf32>
    %309 = vector.broadcast %308 : vector<1x1xf32> to vector<1x512xf32>
    %310 = arith.addf %307, %309 : vector<1x512xf32>
    %311 = arith.negf %310 : vector<1x512xf32>
    %312 = math.exp %311 : vector<1x512xf32>
    %cst_129 = arith.constant 1.000000e+00 : f32
    %313 = vector.broadcast %cst_129 : f32 to vector<1x512xf32>
    %314 = arith.addf %313, %312 : vector<1x512xf32>
    %315 = arith.divf %313, %314 : vector<1x512xf32>
    %316 = vector.broadcast %315 : vector<1x512xf32> to vector<32x512xf32>
    %317 = arith.mulf %0, %316 : vector<32x512xf32>
    %cst_130 = arith.constant dense<0.000000e+00> : vector<32x32xf32>
    %318 = tpu.matmul %317, %1, %cst_130 {dimension_numbers = #tpu.dot_dimension_numbers<[1], [1], [0], [0], [0, 0, 1, 0], [], []>} : vector<32x512xf32>, vector<32x512xf32>, vector<32x32xf32> -> vector<32x32xf32>
    %cst_131 = arith.constant dense<0.000000e+00> : vector<2x8xf32>
    %319 = tpu.matmul %3, %268, %cst_131 {dimension_numbers = #tpu.dot_dimension_numbers<[1], [0], [0], [1], [0, 0, 1, 1], [], []>} : vector<2x32xf32>, vector<32x8xf32>, vector<2x8xf32> -> vector<2x8xf32>
    %cst_132 = arith.constant 6.250000e-02 : f32
    %320 = vector.broadcast %cst_132 : f32 to vector<2x8xf32>
    %321 = arith.mulf %319, %320 : vector<2x8xf32>
    %c32_133 = arith.constant 32 : index
    %c0_134 = arith.constant 0 : index
    %322 = vector.load %arg2[%c32_133, %c0_134] : memref<384x128xf32, #tpu.memory_space<vmem>>, vector<8x8xf32>
    %cst_135 = arith.constant dense<0.000000e+00> : vector<2x8xf32>
    %323 = tpu.matmul %321, %322, %cst_135 {dimension_numbers = #tpu.dot_dimension_numbers<[1], [0], [0], [1], [0, 0, 1, 1], [], []>} : vector<2x8xf32>, vector<8x8xf32>, vector<2x8xf32> -> vector<2x8xf32>
    %c40_136 = arith.constant 40 : index
    %c0_137 = arith.constant 0 : index
    %324 = vector.load %arg2[%c40_136, %c0_137] : memref<384x128xf32, #tpu.memory_space<vmem>>, vector<1x8xf32>
    %325 = vector.broadcast %324 : vector<1x8xf32> to vector<2x8xf32>
    %326 = arith.addf %323, %325 : vector<2x8xf32>
    %c48_138 = arith.constant 48 : index
    %c0_139 = arith.constant 0 : index
    %327 = vector.load %arg2[%c48_138, %c0_139] : memref<384x128xf32, #tpu.memory_space<vmem>>, vector<1x8xf32>
    %c56_140 = arith.constant 56 : index
    %c0_141 = arith.constant 0 : index
    %328 = vector.load %arg2[%c56_140, %c0_141] : memref<384x128xf32, #tpu.memory_space<vmem>>, vector<1x8xf32>
    %cst_142 = arith.constant dense<0.000000e+00> : vector<2xf32>
    %329 = vector.multi_reduction <add>, %326, %cst_142 [1] : vector<2x8xf32> to vector<2xf32>
    %330 = vector.shape_cast %329 : vector<2xf32> to vector<2x1xf32>
    %cst_143 = arith.constant 8.000000e+00 : f32
    %331 = vector.broadcast %cst_143 : f32 to vector<2x1xf32>
    %332 = arith.divf %330, %331 : vector<2x1xf32>
    %333 = vector.broadcast %332 : vector<2x1xf32> to vector<2x8xf32>
    %334 = arith.subf %326, %333 : vector<2x8xf32>
    %335 = arith.mulf %334, %334 : vector<2x8xf32>
    %cst_144 = arith.constant dense<0.000000e+00> : vector<2xf32>
    %336 = vector.multi_reduction <add>, %335, %cst_144 [1] : vector<2x8xf32> to vector<2xf32>
    %337 = vector.shape_cast %336 : vector<2xf32> to vector<2x1xf32>
    %cst_145 = arith.constant 8.000000e+00 : f32
    %338 = vector.broadcast %cst_145 : f32 to vector<2x1xf32>
    %339 = arith.divf %337, %338 : vector<2x1xf32>
    %340 = vector.broadcast %332 : vector<2x1xf32> to vector<2x8xf32>
    %341 = arith.subf %326, %340 : vector<2x8xf32>
    %cst_146 = arith.constant 9.99999974E-6 : f32
    %342 = vector.broadcast %cst_146 : f32 to vector<2x1xf32>
    %343 = arith.addf %339, %342 : vector<2x1xf32>
    %344 = math.rsqrt %343 : vector<2x1xf32>
    %345 = vector.broadcast %344 : vector<2x1xf32> to vector<2x8xf32>
    %346 = arith.mulf %341, %345 : vector<2x8xf32>
    %347 = vector.broadcast %327 : vector<1x8xf32> to vector<2x8xf32>
    %348 = arith.mulf %346, %347 : vector<2x8xf32>
    %349 = vector.broadcast %328 : vector<1x8xf32> to vector<2x8xf32>
    %350 = arith.addf %348, %349 : vector<2x8xf32>
    %351 = math.tanh %350 : vector<2x8xf32>
    %c64_147 = arith.constant 64 : index
    %c0_148 = arith.constant 0 : index
    %352 = vector.load %arg2[%c64_147, %c0_148] : memref<384x128xf32, #tpu.memory_space<vmem>>, vector<8x8xf32>
    %cst_149 = arith.constant dense<0.000000e+00> : vector<2x8xf32>
    %353 = tpu.matmul %351, %352, %cst_149 {dimension_numbers = #tpu.dot_dimension_numbers<[1], [0], [0], [1], [0, 0, 1, 1], [], []>} : vector<2x8xf32>, vector<8x8xf32>, vector<2x8xf32> -> vector<2x8xf32>
    %c72_150 = arith.constant 72 : index
    %c0_151 = arith.constant 0 : index
    %354 = vector.load %arg2[%c72_150, %c0_151] : memref<384x128xf32, #tpu.memory_space<vmem>>, vector<1x8xf32>
    %355 = vector.broadcast %354 : vector<1x8xf32> to vector<2x8xf32>
    %356 = arith.addf %353, %355 : vector<2x8xf32>
    %c80_152 = arith.constant 80 : index
    %c0_153 = arith.constant 0 : index
    %357 = vector.load %arg2[%c80_152, %c0_153] : memref<384x128xf32, #tpu.memory_space<vmem>>, vector<1x8xf32>
    %c88_154 = arith.constant 88 : index
    %c0_155 = arith.constant 0 : index
    %358 = vector.load %arg2[%c88_154, %c0_155] : memref<384x128xf32, #tpu.memory_space<vmem>>, vector<1x8xf32>
    %cst_156 = arith.constant dense<0.000000e+00> : vector<2xf32>
    %359 = vector.multi_reduction <add>, %356, %cst_156 [1] : vector<2x8xf32> to vector<2xf32>
    %360 = vector.shape_cast %359 : vector<2xf32> to vector<2x1xf32>
    %cst_157 = arith.constant 8.000000e+00 : f32
    %361 = vector.broadcast %cst_157 : f32 to vector<2x1xf32>
    %362 = arith.divf %360, %361 : vector<2x1xf32>
    %363 = vector.broadcast %362 : vector<2x1xf32> to vector<2x8xf32>
    %364 = arith.subf %356, %363 : vector<2x8xf32>
    %365 = arith.mulf %364, %364 : vector<2x8xf32>
    %cst_158 = arith.constant dense<0.000000e+00> : vector<2xf32>
    %366 = vector.multi_reduction <add>, %365, %cst_158 [1] : vector<2x8xf32> to vector<2xf32>
    %367 = vector.shape_cast %366 : vector<2xf32> to vector<2x1xf32>
    %cst_159 = arith.constant 8.000000e+00 : f32
    %368 = vector.broadcast %cst_159 : f32 to vector<2x1xf32>
    %369 = arith.divf %367, %368 : vector<2x1xf32>
    %370 = vector.broadcast %362 : vector<2x1xf32> to vector<2x8xf32>
    %371 = arith.subf %356, %370 : vector<2x8xf32>
    %cst_160 = arith.constant 9.99999974E-6 : f32
    %372 = vector.broadcast %cst_160 : f32 to vector<2x1xf32>
    %373 = arith.addf %369, %372 : vector<2x1xf32>
    %374 = math.rsqrt %373 : vector<2x1xf32>
    %375 = vector.broadcast %374 : vector<2x1xf32> to vector<2x8xf32>
    %376 = arith.mulf %371, %375 : vector<2x8xf32>
    %377 = vector.broadcast %357 : vector<1x8xf32> to vector<2x8xf32>
    %378 = arith.mulf %376, %377 : vector<2x8xf32>
    %379 = vector.broadcast %358 : vector<1x8xf32> to vector<2x8xf32>
    %380 = arith.addf %378, %379 : vector<2x8xf32>
    %381 = math.tanh %380 : vector<2x8xf32>
    %c96_161 = arith.constant 96 : index
    %c0_162 = arith.constant 0 : index
    %382 = vector.load %arg2[%c96_161, %c0_162] : memref<384x128xf32, #tpu.memory_space<vmem>>, vector<8x8xf32>
    %cst_163 = arith.constant dense<0.000000e+00> : vector<2x8xf32>
    %383 = tpu.matmul %381, %382, %cst_163 {dimension_numbers = #tpu.dot_dimension_numbers<[1], [0], [0], [1], [0, 0, 1, 1], [], []>} : vector<2x8xf32>, vector<8x8xf32>, vector<2x8xf32> -> vector<2x8xf32>
    %c104_164 = arith.constant 104 : index
    %c0_165 = arith.constant 0 : index
    %384 = vector.load %arg2[%c104_164, %c0_165] : memref<384x128xf32, #tpu.memory_space<vmem>>, vector<1x8xf32>
    %385 = vector.broadcast %384 : vector<1x8xf32> to vector<2x8xf32>
    %386 = arith.addf %383, %385 : vector<2x8xf32>
    %c112_166 = arith.constant 112 : index
    %c0_167 = arith.constant 0 : index
    %387 = vector.load %arg2[%c112_166, %c0_167] : memref<384x128xf32, #tpu.memory_space<vmem>>, vector<1x8xf32>
    %c120_168 = arith.constant 120 : index
    %c0_169 = arith.constant 0 : index
    %388 = vector.load %arg2[%c120_168, %c0_169] : memref<384x128xf32, #tpu.memory_space<vmem>>, vector<1x8xf32>
    %cst_170 = arith.constant dense<0.000000e+00> : vector<2xf32>
    %389 = vector.multi_reduction <add>, %386, %cst_170 [1] : vector<2x8xf32> to vector<2xf32>
    %390 = vector.shape_cast %389 : vector<2xf32> to vector<2x1xf32>
    %cst_171 = arith.constant 8.000000e+00 : f32
    %391 = vector.broadcast %cst_171 : f32 to vector<2x1xf32>
    %392 = arith.divf %390, %391 : vector<2x1xf32>
    %393 = vector.broadcast %392 : vector<2x1xf32> to vector<2x8xf32>
    %394 = arith.subf %386, %393 : vector<2x8xf32>
    %395 = arith.mulf %394, %394 : vector<2x8xf32>
    %cst_172 = arith.constant dense<0.000000e+00> : vector<2xf32>
    %396 = vector.multi_reduction <add>, %395, %cst_172 [1] : vector<2x8xf32> to vector<2xf32>
    %397 = vector.shape_cast %396 : vector<2xf32> to vector<2x1xf32>
    %cst_173 = arith.constant 8.000000e+00 : f32
    %398 = vector.broadcast %cst_173 : f32 to vector<2x1xf32>
    %399 = arith.divf %397, %398 : vector<2x1xf32>
    %400 = vector.broadcast %392 : vector<2x1xf32> to vector<2x8xf32>
    %401 = arith.subf %386, %400 : vector<2x8xf32>
    %cst_174 = arith.constant 9.99999974E-6 : f32
    %402 = vector.broadcast %cst_174 : f32 to vector<2x1xf32>
    %403 = arith.addf %399, %402 : vector<2x1xf32>
    %404 = math.rsqrt %403 : vector<2x1xf32>
    %405 = vector.broadcast %404 : vector<2x1xf32> to vector<2x8xf32>
    %406 = arith.mulf %401, %405 : vector<2x8xf32>
    %407 = vector.broadcast %387 : vector<1x8xf32> to vector<2x8xf32>
    %408 = arith.mulf %406, %407 : vector<2x8xf32>
    %409 = vector.broadcast %388 : vector<1x8xf32> to vector<2x8xf32>
    %410 = arith.addf %408, %409 : vector<2x8xf32>
    %411 = math.tanh %410 : vector<2x8xf32>
    %cst_175 = arith.constant dense<0.000000e+00> : vector<32x8xf32>
    %412 = tpu.matmul %3, %411, %cst_175 {dimension_numbers = #tpu.dot_dimension_numbers<[0], [0], [1], [1], [0, 1, 1, 1], [], []>} : vector<2x32xf32>, vector<2x8xf32>, vector<32x8xf32> -> vector<32x8xf32>
    %413 = arith.addf %268, %36 : vector<32x8xf32>
    %cst_176 = arith.constant dense<0.000000e+00> : vector<32x8xf32>
    %414 = tpu.matmul %318, %413, %cst_176 {dimension_numbers = #tpu.dot_dimension_numbers<[0], [0], [1], [1], [0, 1, 1, 1], [], []>} : vector<32x32xf32>, vector<32x8xf32>, vector<32x8xf32> -> vector<32x8xf32>
    %cst_177 = arith.constant dense<0.000000e+00> : vector<32x8xf32>
    %415 = tpu.matmul %318, %413, %cst_177 {dimension_numbers = #tpu.dot_dimension_numbers<[1], [0], [0], [1], [0, 0, 1, 1], [], []>} : vector<32x32xf32>, vector<32x8xf32>, vector<32x8xf32> -> vector<32x8xf32>
    %c128_178 = arith.constant 128 : index
    %c0_179 = arith.constant 0 : index
    %416 = vector.load %arg2[%c128_178, %c0_179] : memref<384x128xf32, #tpu.memory_space<vmem>>, vector<8x8xf32>
    %cst_180 = arith.constant dense<0.000000e+00> : vector<32x8xf32>
    %417 = tpu.matmul %414, %416, %cst_180 {dimension_numbers = #tpu.dot_dimension_numbers<[1], [0], [0], [1], [0, 0, 1, 1], [], []>} : vector<32x8xf32>, vector<8x8xf32>, vector<32x8xf32> -> vector<32x8xf32>
    %c136_181 = arith.constant 136 : index
    %c0_182 = arith.constant 0 : index
    %418 = vector.load %arg2[%c136_181, %c0_182] : memref<384x128xf32, #tpu.memory_space<vmem>>, vector<8x8xf32>
    %cst_183 = arith.constant dense<0.000000e+00> : vector<32x8xf32>
    %419 = tpu.matmul %415, %418, %cst_183 {dimension_numbers = #tpu.dot_dimension_numbers<[1], [0], [0], [1], [0, 0, 1, 1], [], []>} : vector<32x8xf32>, vector<8x8xf32>, vector<32x8xf32> -> vector<32x8xf32>
    %420 = arith.addf %417, %419 : vector<32x8xf32>
    %c144_184 = arith.constant 144 : index
    %c0_185 = arith.constant 0 : index
    %421 = vector.load %arg2[%c144_184, %c0_185] : memref<384x128xf32, #tpu.memory_space<vmem>>, vector<8x8xf32>
    %cst_186 = arith.constant dense<0.000000e+00> : vector<32x8xf32>
    %422 = tpu.matmul %413, %421, %cst_186 {dimension_numbers = #tpu.dot_dimension_numbers<[1], [0], [0], [1], [0, 0, 1, 1], [], []>} : vector<32x8xf32>, vector<8x8xf32>, vector<32x8xf32> -> vector<32x8xf32>
    %423 = arith.addf %420, %422 : vector<32x8xf32>
    %c152_187 = arith.constant 152 : index
    %c0_188 = arith.constant 0 : index
    %424 = vector.load %arg2[%c152_187, %c0_188] : memref<384x128xf32, #tpu.memory_space<vmem>>, vector<8x8xf32>
    %cst_189 = arith.constant dense<0.000000e+00> : vector<32x8xf32>
    %425 = tpu.matmul %412, %424, %cst_189 {dimension_numbers = #tpu.dot_dimension_numbers<[1], [0], [0], [1], [0, 0, 1, 1], [], []>} : vector<32x8xf32>, vector<8x8xf32>, vector<32x8xf32> -> vector<32x8xf32>
    %426 = arith.addf %423, %425 : vector<32x8xf32>
    %c160_190 = arith.constant 160 : index
    %c0_191 = arith.constant 0 : index
    %427 = vector.load %arg2[%c160_190, %c0_191] : memref<384x128xf32, #tpu.memory_space<vmem>>, vector<1x8xf32>
    %428 = vector.broadcast %427 : vector<1x8xf32> to vector<32x8xf32>
    %429 = arith.addf %426, %428 : vector<32x8xf32>
    %c168_192 = arith.constant 168 : index
    %c0_193 = arith.constant 0 : index
    %430 = vector.load %arg2[%c168_192, %c0_193] : memref<384x128xf32, #tpu.memory_space<vmem>>, vector<1x8xf32>
    %c176_194 = arith.constant 176 : index
    %c0_195 = arith.constant 0 : index
    %431 = vector.load %arg2[%c176_194, %c0_195] : memref<384x128xf32, #tpu.memory_space<vmem>>, vector<1x8xf32>
    %cst_196 = arith.constant dense<0.000000e+00> : vector<32xf32>
    %432 = vector.multi_reduction <add>, %429, %cst_196 [1] : vector<32x8xf32> to vector<32xf32>
    %433 = vector.shape_cast %432 : vector<32xf32> to vector<32x1xf32>
    %cst_197 = arith.constant 8.000000e+00 : f32
    %434 = vector.broadcast %cst_197 : f32 to vector<32x1xf32>
    %435 = arith.divf %433, %434 : vector<32x1xf32>
    %436 = vector.broadcast %435 : vector<32x1xf32> to vector<32x8xf32>
    %437 = arith.subf %429, %436 : vector<32x8xf32>
    %438 = arith.mulf %437, %437 : vector<32x8xf32>
    %cst_198 = arith.constant dense<0.000000e+00> : vector<32xf32>
    %439 = vector.multi_reduction <add>, %438, %cst_198 [1] : vector<32x8xf32> to vector<32xf32>
    %440 = vector.shape_cast %439 : vector<32xf32> to vector<32x1xf32>
    %cst_199 = arith.constant 8.000000e+00 : f32
    %441 = vector.broadcast %cst_199 : f32 to vector<32x1xf32>
    %442 = arith.divf %440, %441 : vector<32x1xf32>
    %443 = vector.broadcast %435 : vector<32x1xf32> to vector<32x8xf32>
    %444 = arith.subf %429, %443 : vector<32x8xf32>
    %cst_200 = arith.constant 9.99999974E-6 : f32
    %445 = vector.broadcast %cst_200 : f32 to vector<32x1xf32>
    %446 = arith.addf %442, %445 : vector<32x1xf32>
    %447 = math.rsqrt %446 : vector<32x1xf32>
    %448 = vector.broadcast %447 : vector<32x1xf32> to vector<32x8xf32>
    %449 = arith.mulf %444, %448 : vector<32x8xf32>
    %450 = vector.broadcast %430 : vector<1x8xf32> to vector<32x8xf32>
    %451 = arith.mulf %449, %450 : vector<32x8xf32>
    %452 = vector.broadcast %431 : vector<1x8xf32> to vector<32x8xf32>
    %453 = arith.addf %451, %452 : vector<32x8xf32>
    %454 = math.tanh %453 : vector<32x8xf32>
    %c184_201 = arith.constant 184 : index
    %c0_202 = arith.constant 0 : index
    %455 = vector.load %arg2[%c184_201, %c0_202] : memref<384x128xf32, #tpu.memory_space<vmem>>, vector<8x8xf32>
    %cst_203 = arith.constant dense<0.000000e+00> : vector<32x8xf32>
    %456 = tpu.matmul %454, %455, %cst_203 {dimension_numbers = #tpu.dot_dimension_numbers<[1], [0], [0], [1], [0, 0, 1, 1], [], []>} : vector<32x8xf32>, vector<8x8xf32>, vector<32x8xf32> -> vector<32x8xf32>
    %c192_204 = arith.constant 192 : index
    %c0_205 = arith.constant 0 : index
    %457 = vector.load %arg2[%c192_204, %c0_205] : memref<384x128xf32, #tpu.memory_space<vmem>>, vector<1x8xf32>
    %458 = vector.broadcast %457 : vector<1x8xf32> to vector<32x8xf32>
    %459 = arith.addf %456, %458 : vector<32x8xf32>
    %c200_206 = arith.constant 200 : index
    %c0_207 = arith.constant 0 : index
    %460 = vector.load %arg2[%c200_206, %c0_207] : memref<384x128xf32, #tpu.memory_space<vmem>>, vector<1x8xf32>
    %c208_208 = arith.constant 208 : index
    %c0_209 = arith.constant 0 : index
    %461 = vector.load %arg2[%c208_208, %c0_209] : memref<384x128xf32, #tpu.memory_space<vmem>>, vector<1x8xf32>
    %cst_210 = arith.constant dense<0.000000e+00> : vector<32xf32>
    %462 = vector.multi_reduction <add>, %459, %cst_210 [1] : vector<32x8xf32> to vector<32xf32>
    %463 = vector.shape_cast %462 : vector<32xf32> to vector<32x1xf32>
    %cst_211 = arith.constant 8.000000e+00 : f32
    %464 = vector.broadcast %cst_211 : f32 to vector<32x1xf32>
    %465 = arith.divf %463, %464 : vector<32x1xf32>
    %466 = vector.broadcast %465 : vector<32x1xf32> to vector<32x8xf32>
    %467 = arith.subf %459, %466 : vector<32x8xf32>
    %468 = arith.mulf %467, %467 : vector<32x8xf32>
    %cst_212 = arith.constant dense<0.000000e+00> : vector<32xf32>
    %469 = vector.multi_reduction <add>, %468, %cst_212 [1] : vector<32x8xf32> to vector<32xf32>
    %470 = vector.shape_cast %469 : vector<32xf32> to vector<32x1xf32>
    %cst_213 = arith.constant 8.000000e+00 : f32
    %471 = vector.broadcast %cst_213 : f32 to vector<32x1xf32>
    %472 = arith.divf %470, %471 : vector<32x1xf32>
    %473 = vector.broadcast %465 : vector<32x1xf32> to vector<32x8xf32>
    %474 = arith.subf %459, %473 : vector<32x8xf32>
    %cst_214 = arith.constant 9.99999974E-6 : f32
    %475 = vector.broadcast %cst_214 : f32 to vector<32x1xf32>
    %476 = arith.addf %472, %475 : vector<32x1xf32>
    %477 = math.rsqrt %476 : vector<32x1xf32>
    %478 = vector.broadcast %477 : vector<32x1xf32> to vector<32x8xf32>
    %479 = arith.mulf %474, %478 : vector<32x8xf32>
    %480 = vector.broadcast %460 : vector<1x8xf32> to vector<32x8xf32>
    %481 = arith.mulf %479, %480 : vector<32x8xf32>
    %482 = vector.broadcast %461 : vector<1x8xf32> to vector<32x8xf32>
    %483 = arith.addf %481, %482 : vector<32x8xf32>
    %484 = math.tanh %483 : vector<32x8xf32>
    %c216_215 = arith.constant 216 : index
    %c0_216 = arith.constant 0 : index
    %485 = vector.load %arg2[%c216_215, %c0_216] : memref<384x128xf32, #tpu.memory_space<vmem>>, vector<8x8xf32>
    %cst_217 = arith.constant dense<0.000000e+00> : vector<32x8xf32>
    %486 = tpu.matmul %484, %485, %cst_217 {dimension_numbers = #tpu.dot_dimension_numbers<[1], [0], [0], [1], [0, 0, 1, 1], [], []>} : vector<32x8xf32>, vector<8x8xf32>, vector<32x8xf32> -> vector<32x8xf32>
    %c224_218 = arith.constant 224 : index
    %c0_219 = arith.constant 0 : index
    %487 = vector.load %arg2[%c224_218, %c0_219] : memref<384x128xf32, #tpu.memory_space<vmem>>, vector<1x8xf32>
    %488 = vector.broadcast %487 : vector<1x8xf32> to vector<32x8xf32>
    %489 = arith.addf %486, %488 : vector<32x8xf32>
    %c232_220 = arith.constant 232 : index
    %c0_221 = arith.constant 0 : index
    %490 = vector.load %arg2[%c232_220, %c0_221] : memref<384x128xf32, #tpu.memory_space<vmem>>, vector<1x8xf32>
    %c240_222 = arith.constant 240 : index
    %c0_223 = arith.constant 0 : index
    %491 = vector.load %arg2[%c240_222, %c0_223] : memref<384x128xf32, #tpu.memory_space<vmem>>, vector<1x8xf32>
    %cst_224 = arith.constant dense<0.000000e+00> : vector<32xf32>
    %492 = vector.multi_reduction <add>, %489, %cst_224 [1] : vector<32x8xf32> to vector<32xf32>
    %493 = vector.shape_cast %492 : vector<32xf32> to vector<32x1xf32>
    %cst_225 = arith.constant 8.000000e+00 : f32
    %494 = vector.broadcast %cst_225 : f32 to vector<32x1xf32>
    %495 = arith.divf %493, %494 : vector<32x1xf32>
    %496 = vector.broadcast %495 : vector<32x1xf32> to vector<32x8xf32>
    %497 = arith.subf %489, %496 : vector<32x8xf32>
    %498 = arith.mulf %497, %497 : vector<32x8xf32>
    %cst_226 = arith.constant dense<0.000000e+00> : vector<32xf32>
    %499 = vector.multi_reduction <add>, %498, %cst_226 [1] : vector<32x8xf32> to vector<32xf32>
    %500 = vector.shape_cast %499 : vector<32xf32> to vector<32x1xf32>
    %cst_227 = arith.constant 8.000000e+00 : f32
    %501 = vector.broadcast %cst_227 : f32 to vector<32x1xf32>
    %502 = arith.divf %500, %501 : vector<32x1xf32>
    %503 = vector.broadcast %495 : vector<32x1xf32> to vector<32x8xf32>
    %504 = arith.subf %489, %503 : vector<32x8xf32>
    %cst_228 = arith.constant 9.99999974E-6 : f32
    %505 = vector.broadcast %cst_228 : f32 to vector<32x1xf32>
    %506 = arith.addf %502, %505 : vector<32x1xf32>
    %507 = math.rsqrt %506 : vector<32x1xf32>
    %508 = vector.broadcast %507 : vector<32x1xf32> to vector<32x8xf32>
    %509 = arith.mulf %504, %508 : vector<32x8xf32>
    %510 = vector.broadcast %490 : vector<1x8xf32> to vector<32x8xf32>
    %511 = arith.mulf %509, %510 : vector<32x8xf32>
    %512 = vector.broadcast %491 : vector<1x8xf32> to vector<32x8xf32>
    %513 = arith.addf %511, %512 : vector<32x8xf32>
    %514 = math.tanh %513 : vector<32x8xf32>
    %c248_229 = arith.constant 248 : index
    %c0_230 = arith.constant 0 : index
    %515 = vector.load %arg2[%c248_229, %c0_230] : memref<384x128xf32, #tpu.memory_space<vmem>>, vector<8x8xf32>
    %cst_231 = arith.constant dense<0.000000e+00> : vector<32x8xf32>
    %516 = tpu.matmul %514, %515, %cst_231 {dimension_numbers = #tpu.dot_dimension_numbers<[1], [0], [0], [1], [0, 0, 1, 1], [], []>} : vector<32x8xf32>, vector<8x8xf32>, vector<32x8xf32> -> vector<32x8xf32>
    %c256_232 = arith.constant 256 : index
    %c0_233 = arith.constant 0 : index
    %517 = vector.load %arg2[%c256_232, %c0_233] : memref<384x128xf32, #tpu.memory_space<vmem>>, vector<1x8xf32>
    %518 = vector.broadcast %517 : vector<1x8xf32> to vector<32x8xf32>
    %519 = arith.addf %516, %518 : vector<32x8xf32>
    %c264_234 = arith.constant 264 : index
    %c0_235 = arith.constant 0 : index
    %520 = vector.load %arg2[%c264_234, %c0_235] : memref<384x128xf32, #tpu.memory_space<vmem>>, vector<1x8xf32>
    %c272_236 = arith.constant 272 : index
    %c0_237 = arith.constant 0 : index
    %521 = vector.load %arg2[%c272_236, %c0_237] : memref<384x128xf32, #tpu.memory_space<vmem>>, vector<1x8xf32>
    %cst_238 = arith.constant dense<0.000000e+00> : vector<32xf32>
    %522 = vector.multi_reduction <add>, %519, %cst_238 [1] : vector<32x8xf32> to vector<32xf32>
    %523 = vector.shape_cast %522 : vector<32xf32> to vector<32x1xf32>
    %cst_239 = arith.constant 8.000000e+00 : f32
    %524 = vector.broadcast %cst_239 : f32 to vector<32x1xf32>
    %525 = arith.divf %523, %524 : vector<32x1xf32>
    %526 = vector.broadcast %525 : vector<32x1xf32> to vector<32x8xf32>
    %527 = arith.subf %519, %526 : vector<32x8xf32>
    %528 = arith.mulf %527, %527 : vector<32x8xf32>
    %cst_240 = arith.constant dense<0.000000e+00> : vector<32xf32>
    %529 = vector.multi_reduction <add>, %528, %cst_240 [1] : vector<32x8xf32> to vector<32xf32>
    %530 = vector.shape_cast %529 : vector<32xf32> to vector<32x1xf32>
    %cst_241 = arith.constant 8.000000e+00 : f32
    %531 = vector.broadcast %cst_241 : f32 to vector<32x1xf32>
    %532 = arith.divf %530, %531 : vector<32x1xf32>
    %533 = vector.broadcast %525 : vector<32x1xf32> to vector<32x8xf32>
    %534 = arith.subf %519, %533 : vector<32x8xf32>
    %cst_242 = arith.constant 9.99999974E-6 : f32
    %535 = vector.broadcast %cst_242 : f32 to vector<32x1xf32>
    %536 = arith.addf %532, %535 : vector<32x1xf32>
    %537 = math.rsqrt %536 : vector<32x1xf32>
    %538 = vector.broadcast %537 : vector<32x1xf32> to vector<32x8xf32>
    %539 = arith.mulf %534, %538 : vector<32x8xf32>
    %540 = vector.broadcast %520 : vector<1x8xf32> to vector<32x8xf32>
    %541 = arith.mulf %539, %540 : vector<32x8xf32>
    %542 = vector.broadcast %521 : vector<1x8xf32> to vector<32x8xf32>
    %543 = arith.addf %541, %542 : vector<32x8xf32>
    %544 = math.tanh %543 : vector<32x8xf32>
    %c288_243 = arith.constant 288 : index
    %c0_244 = arith.constant 0 : index
    %545 = vector.load %arg2[%c288_243, %c0_244] : memref<384x128xf32, #tpu.memory_space<vmem>>, vector<8x8xf32>
    %cst_245 = arith.constant dense<0.000000e+00> : vector<32x8xf32>
    %546 = tpu.matmul %544, %545, %cst_245 {dimension_numbers = #tpu.dot_dimension_numbers<[1], [0], [0], [1], [0, 0, 1, 1], [], []>} : vector<32x8xf32>, vector<8x8xf32>, vector<32x8xf32> -> vector<32x8xf32>
    %c296_246 = arith.constant 296 : index
    %c0_247 = arith.constant 0 : index
    %547 = vector.load %arg2[%c296_246, %c0_247] : memref<384x128xf32, #tpu.memory_space<vmem>>, vector<8x8xf32>
    %cst_248 = arith.constant dense<0.000000e+00> : vector<32x8xf32>
    %548 = tpu.matmul %412, %547, %cst_248 {dimension_numbers = #tpu.dot_dimension_numbers<[1], [0], [0], [1], [0, 0, 1, 1], [], []>} : vector<32x8xf32>, vector<8x8xf32>, vector<32x8xf32> -> vector<32x8xf32>
    %549 = arith.addf %546, %548 : vector<32x8xf32>
    %c304_249 = arith.constant 304 : index
    %c0_250 = arith.constant 0 : index
    %550 = vector.load %arg2[%c304_249, %c0_250] : memref<384x128xf32, #tpu.memory_space<vmem>>, vector<1x8xf32>
    %551 = vector.broadcast %550 : vector<1x8xf32> to vector<32x8xf32>
    %552 = arith.addf %549, %551 : vector<32x8xf32>
    %c280_251 = arith.constant 280 : index
    %c0_252 = arith.constant 0 : index
    %553 = vector.load %arg2[%c280_251, %c0_252] : memref<384x128xf32, #tpu.memory_space<vmem>>, vector<8x8xf32>
    %cst_253 = arith.constant dense<0.000000e+00> : vector<32x8xf32>
    %554 = tpu.matmul %544, %553, %cst_253 {dimension_numbers = #tpu.dot_dimension_numbers<[1], [0], [0], [1], [0, 0, 1, 1], [], []>} : vector<32x8xf32>, vector<8x8xf32>, vector<32x8xf32> -> vector<32x8xf32>
    %cst_254 = arith.constant dense<0.000000e+00> : vector<8x512xf32>
    %555 = tpu.matmul %552, %0, %cst_254 {dimension_numbers = #tpu.dot_dimension_numbers<[0], [0], [1], [1], [0, 1, 1, 1], [], []>} : vector<32x8xf32>, vector<32x512xf32>, vector<8x512xf32> -> vector<8x512xf32>
    %cst_255 = arith.constant dense<0.000000e+00> : vector<8x512xf32>
    %556 = tpu.matmul %554, %1, %cst_255 {dimension_numbers = #tpu.dot_dimension_numbers<[0], [0], [1], [1], [0, 1, 1, 1], [], []>} : vector<32x8xf32>, vector<32x512xf32>, vector<8x512xf32> -> vector<8x512xf32>
    %557 = arith.addf %555, %556 : vector<8x512xf32>
    %c312_256 = arith.constant 312 : index
    %c0_257 = arith.constant 0 : index
    %558 = vector.load %arg2[%c312_256, %c0_257] : memref<384x128xf32, #tpu.memory_space<vmem>>, vector<8x1xf32>
    %559 = vector.broadcast %558 : vector<8x1xf32> to vector<8x512xf32>
    %560 = vector.broadcast %315 : vector<1x512xf32> to vector<8x512xf32>
    %561 = arith.mulf %559, %560 : vector<8x512xf32>
    %562 = arith.addf %557, %561 : vector<8x512xf32>
    %563 = math.tanh %562 : vector<8x512xf32>
    %c320_258 = arith.constant 320 : index
    %c0_259 = arith.constant 0 : index
    %564 = vector.load %arg2[%c320_258, %c0_259] : memref<384x128xf32, #tpu.memory_space<vmem>>, vector<8x8xf32>
    %cst_260 = arith.constant dense<0.000000e+00> : vector<8x512xf32>
    %565 = tpu.matmul %564, %563, %cst_260 {dimension_numbers = #tpu.dot_dimension_numbers<[1], [0], [0], [1], [0, 0, 1, 1], [], []>} : vector<8x8xf32>, vector<8x512xf32>, vector<8x512xf32> -> vector<8x512xf32>
    %c328_261 = arith.constant 328 : index
    %c0_262 = arith.constant 0 : index
    %566 = vector.load %arg2[%c328_261, %c0_262] : memref<384x128xf32, #tpu.memory_space<vmem>>, vector<8x1xf32>
    %567 = vector.broadcast %566 : vector<8x1xf32> to vector<8x512xf32>
    %568 = arith.addf %565, %567 : vector<8x512xf32>
    %569 = math.tanh %568 : vector<8x512xf32>
    %c336_263 = arith.constant 336 : index
    %c0_264 = arith.constant 0 : index
    %570 = vector.load %arg2[%c336_263, %c0_264] : memref<384x128xf32, #tpu.memory_space<vmem>>, vector<8x8xf32>
    %cst_265 = arith.constant dense<0.000000e+00> : vector<8x512xf32>
    %571 = tpu.matmul %570, %569, %cst_265 {dimension_numbers = #tpu.dot_dimension_numbers<[1], [0], [0], [1], [0, 0, 1, 1], [], []>} : vector<8x8xf32>, vector<8x512xf32>, vector<8x512xf32> -> vector<8x512xf32>
    %c344_266 = arith.constant 344 : index
    %c0_267 = arith.constant 0 : index
    %572 = vector.load %arg2[%c344_266, %c0_267] : memref<384x128xf32, #tpu.memory_space<vmem>>, vector<8x1xf32>
    %573 = vector.broadcast %572 : vector<8x1xf32> to vector<8x512xf32>
    %574 = arith.addf %571, %573 : vector<8x512xf32>
    %575 = math.tanh %574 : vector<8x512xf32>
    %c352_268 = arith.constant 352 : index
    %c0_269 = arith.constant 0 : index
    %576 = vector.load %arg2[%c352_268, %c0_269] : memref<384x128xf32, #tpu.memory_space<vmem>>, vector<8x8xf32>
    %cst_270 = arith.constant dense<0.000000e+00> : vector<8x512xf32>
    %577 = tpu.matmul %576, %575, %cst_270 {dimension_numbers = #tpu.dot_dimension_numbers<[1], [0], [0], [1], [0, 0, 1, 1], [], []>} : vector<8x8xf32>, vector<8x512xf32>, vector<8x512xf32> -> vector<8x512xf32>
    %c360_271 = arith.constant 360 : index
    %c0_272 = arith.constant 0 : index
    %578 = vector.load %arg2[%c360_271, %c0_272] : memref<384x128xf32, #tpu.memory_space<vmem>>, vector<8x1xf32>
    %579 = vector.broadcast %578 : vector<8x1xf32> to vector<8x512xf32>
    %580 = arith.addf %577, %579 : vector<8x512xf32>
    %581 = math.tanh %580 : vector<8x512xf32>
    %c368_273 = arith.constant 368 : index
    %c0_274 = arith.constant 0 : index
    %582 = vector.load %arg2[%c368_273, %c0_274] : memref<384x128xf32, #tpu.memory_space<vmem>>, vector<1x8xf32>
    %cst_275 = arith.constant dense<0.000000e+00> : vector<1x512xf32>
    %583 = tpu.matmul %582, %581, %cst_275 {dimension_numbers = #tpu.dot_dimension_numbers<[1], [0], [0], [1], [0, 0, 1, 1], [], []>} : vector<1x8xf32>, vector<8x512xf32>, vector<1x512xf32> -> vector<1x512xf32>
    %c376_276 = arith.constant 376 : index
    %c0_277 = arith.constant 0 : index
    %584 = vector.load %arg2[%c376_276, %c0_277] : memref<384x128xf32, #tpu.memory_space<vmem>>, vector<1x1xf32>
    %585 = vector.broadcast %584 : vector<1x1xf32> to vector<1x512xf32>
    %586 = arith.addf %583, %585 : vector<1x512xf32>
    %587 = arith.negf %586 : vector<1x512xf32>
    %588 = math.exp %587 : vector<1x512xf32>
    %cst_278 = arith.constant 1.000000e+00 : f32
    %589 = vector.broadcast %cst_278 : f32 to vector<1x512xf32>
    %590 = arith.addf %589, %588 : vector<1x512xf32>
    %591 = arith.divf %589, %590 : vector<1x512xf32>
    %592 = vector.broadcast %591 : vector<1x512xf32> to vector<32x512xf32>
    %593 = arith.mulf %0, %592 : vector<32x512xf32>
    %cst_279 = arith.constant dense<0.000000e+00> : vector<32x32xf32>
    %594 = tpu.matmul %593, %1, %cst_279 {dimension_numbers = #tpu.dot_dimension_numbers<[1], [1], [0], [0], [0, 0, 1, 0], [], []>} : vector<32x512xf32>, vector<32x512xf32>, vector<32x32xf32> -> vector<32x32xf32>
    %cst_280 = arith.constant dense<0.000000e+00> : vector<2x8xf32>
    %595 = tpu.matmul %3, %544, %cst_280 {dimension_numbers = #tpu.dot_dimension_numbers<[1], [0], [0], [1], [0, 0, 1, 1], [], []>} : vector<2x32xf32>, vector<32x8xf32>, vector<2x8xf32> -> vector<2x8xf32>
    %cst_281 = arith.constant 6.250000e-02 : f32
    %596 = vector.broadcast %cst_281 : f32 to vector<2x8xf32>
    %597 = arith.mulf %595, %596 : vector<2x8xf32>
    %c32_282 = arith.constant 32 : index
    %c0_283 = arith.constant 0 : index
    %598 = vector.load %arg2[%c32_282, %c0_283] : memref<384x128xf32, #tpu.memory_space<vmem>>, vector<8x8xf32>
    %cst_284 = arith.constant dense<0.000000e+00> : vector<2x8xf32>
    %599 = tpu.matmul %597, %598, %cst_284 {dimension_numbers = #tpu.dot_dimension_numbers<[1], [0], [0], [1], [0, 0, 1, 1], [], []>} : vector<2x8xf32>, vector<8x8xf32>, vector<2x8xf32> -> vector<2x8xf32>
    %c40_285 = arith.constant 40 : index
    %c0_286 = arith.constant 0 : index
    %600 = vector.load %arg2[%c40_285, %c0_286] : memref<384x128xf32, #tpu.memory_space<vmem>>, vector<1x8xf32>
    %601 = vector.broadcast %600 : vector<1x8xf32> to vector<2x8xf32>
    %602 = arith.addf %599, %601 : vector<2x8xf32>
    %c48_287 = arith.constant 48 : index
    %c0_288 = arith.constant 0 : index
    %603 = vector.load %arg2[%c48_287, %c0_288] : memref<384x128xf32, #tpu.memory_space<vmem>>, vector<1x8xf32>
    %c56_289 = arith.constant 56 : index
    %c0_290 = arith.constant 0 : index
    %604 = vector.load %arg2[%c56_289, %c0_290] : memref<384x128xf32, #tpu.memory_space<vmem>>, vector<1x8xf32>
    %cst_291 = arith.constant dense<0.000000e+00> : vector<2xf32>
    %605 = vector.multi_reduction <add>, %602, %cst_291 [1] : vector<2x8xf32> to vector<2xf32>
    %606 = vector.shape_cast %605 : vector<2xf32> to vector<2x1xf32>
    %cst_292 = arith.constant 8.000000e+00 : f32
    %607 = vector.broadcast %cst_292 : f32 to vector<2x1xf32>
    %608 = arith.divf %606, %607 : vector<2x1xf32>
    %609 = vector.broadcast %608 : vector<2x1xf32> to vector<2x8xf32>
    %610 = arith.subf %602, %609 : vector<2x8xf32>
    %611 = arith.mulf %610, %610 : vector<2x8xf32>
    %cst_293 = arith.constant dense<0.000000e+00> : vector<2xf32>
    %612 = vector.multi_reduction <add>, %611, %cst_293 [1] : vector<2x8xf32> to vector<2xf32>
    %613 = vector.shape_cast %612 : vector<2xf32> to vector<2x1xf32>
    %cst_294 = arith.constant 8.000000e+00 : f32
    %614 = vector.broadcast %cst_294 : f32 to vector<2x1xf32>
    %615 = arith.divf %613, %614 : vector<2x1xf32>
    %616 = vector.broadcast %608 : vector<2x1xf32> to vector<2x8xf32>
    %617 = arith.subf %602, %616 : vector<2x8xf32>
    %cst_295 = arith.constant 9.99999974E-6 : f32
    %618 = vector.broadcast %cst_295 : f32 to vector<2x1xf32>
    %619 = arith.addf %615, %618 : vector<2x1xf32>
    %620 = math.rsqrt %619 : vector<2x1xf32>
    %621 = vector.broadcast %620 : vector<2x1xf32> to vector<2x8xf32>
    %622 = arith.mulf %617, %621 : vector<2x8xf32>
    %623 = vector.broadcast %603 : vector<1x8xf32> to vector<2x8xf32>
    %624 = arith.mulf %622, %623 : vector<2x8xf32>
    %625 = vector.broadcast %604 : vector<1x8xf32> to vector<2x8xf32>
    %626 = arith.addf %624, %625 : vector<2x8xf32>
    %627 = math.tanh %626 : vector<2x8xf32>
    %c64_296 = arith.constant 64 : index
    %c0_297 = arith.constant 0 : index
    %628 = vector.load %arg2[%c64_296, %c0_297] : memref<384x128xf32, #tpu.memory_space<vmem>>, vector<8x8xf32>
    %cst_298 = arith.constant dense<0.000000e+00> : vector<2x8xf32>
    %629 = tpu.matmul %627, %628, %cst_298 {dimension_numbers = #tpu.dot_dimension_numbers<[1], [0], [0], [1], [0, 0, 1, 1], [], []>} : vector<2x8xf32>, vector<8x8xf32>, vector<2x8xf32> -> vector<2x8xf32>
    %c72_299 = arith.constant 72 : index
    %c0_300 = arith.constant 0 : index
    %630 = vector.load %arg2[%c72_299, %c0_300] : memref<384x128xf32, #tpu.memory_space<vmem>>, vector<1x8xf32>
    %631 = vector.broadcast %630 : vector<1x8xf32> to vector<2x8xf32>
    %632 = arith.addf %629, %631 : vector<2x8xf32>
    %c80_301 = arith.constant 80 : index
    %c0_302 = arith.constant 0 : index
    %633 = vector.load %arg2[%c80_301, %c0_302] : memref<384x128xf32, #tpu.memory_space<vmem>>, vector<1x8xf32>
    %c88_303 = arith.constant 88 : index
    %c0_304 = arith.constant 0 : index
    %634 = vector.load %arg2[%c88_303, %c0_304] : memref<384x128xf32, #tpu.memory_space<vmem>>, vector<1x8xf32>
    %cst_305 = arith.constant dense<0.000000e+00> : vector<2xf32>
    %635 = vector.multi_reduction <add>, %632, %cst_305 [1] : vector<2x8xf32> to vector<2xf32>
    %636 = vector.shape_cast %635 : vector<2xf32> to vector<2x1xf32>
    %cst_306 = arith.constant 8.000000e+00 : f32
    %637 = vector.broadcast %cst_306 : f32 to vector<2x1xf32>
    %638 = arith.divf %636, %637 : vector<2x1xf32>
    %639 = vector.broadcast %638 : vector<2x1xf32> to vector<2x8xf32>
    %640 = arith.subf %632, %639 : vector<2x8xf32>
    %641 = arith.mulf %640, %640 : vector<2x8xf32>
    %cst_307 = arith.constant dense<0.000000e+00> : vector<2xf32>
    %642 = vector.multi_reduction <add>, %641, %cst_307 [1] : vector<2x8xf32> to vector<2xf32>
    %643 = vector.shape_cast %642 : vector<2xf32> to vector<2x1xf32>
    %cst_308 = arith.constant 8.000000e+00 : f32
    %644 = vector.broadcast %cst_308 : f32 to vector<2x1xf32>
    %645 = arith.divf %643, %644 : vector<2x1xf32>
    %646 = vector.broadcast %638 : vector<2x1xf32> to vector<2x8xf32>
    %647 = arith.subf %632, %646 : vector<2x8xf32>
    %cst_309 = arith.constant 9.99999974E-6 : f32
    %648 = vector.broadcast %cst_309 : f32 to vector<2x1xf32>
    %649 = arith.addf %645, %648 : vector<2x1xf32>
    %650 = math.rsqrt %649 : vector<2x1xf32>
    %651 = vector.broadcast %650 : vector<2x1xf32> to vector<2x8xf32>
    %652 = arith.mulf %647, %651 : vector<2x8xf32>
    %653 = vector.broadcast %633 : vector<1x8xf32> to vector<2x8xf32>
    %654 = arith.mulf %652, %653 : vector<2x8xf32>
    %655 = vector.broadcast %634 : vector<1x8xf32> to vector<2x8xf32>
    %656 = arith.addf %654, %655 : vector<2x8xf32>
    %657 = math.tanh %656 : vector<2x8xf32>
    %c96_310 = arith.constant 96 : index
    %c0_311 = arith.constant 0 : index
    %658 = vector.load %arg2[%c96_310, %c0_311] : memref<384x128xf32, #tpu.memory_space<vmem>>, vector<8x8xf32>
    %cst_312 = arith.constant dense<0.000000e+00> : vector<2x8xf32>
    %659 = tpu.matmul %657, %658, %cst_312 {dimension_numbers = #tpu.dot_dimension_numbers<[1], [0], [0], [1], [0, 0, 1, 1], [], []>} : vector<2x8xf32>, vector<8x8xf32>, vector<2x8xf32> -> vector<2x8xf32>
    %c104_313 = arith.constant 104 : index
    %c0_314 = arith.constant 0 : index
    %660 = vector.load %arg2[%c104_313, %c0_314] : memref<384x128xf32, #tpu.memory_space<vmem>>, vector<1x8xf32>
    %661 = vector.broadcast %660 : vector<1x8xf32> to vector<2x8xf32>
    %662 = arith.addf %659, %661 : vector<2x8xf32>
    %c112_315 = arith.constant 112 : index
    %c0_316 = arith.constant 0 : index
    %663 = vector.load %arg2[%c112_315, %c0_316] : memref<384x128xf32, #tpu.memory_space<vmem>>, vector<1x8xf32>
    %c120_317 = arith.constant 120 : index
    %c0_318 = arith.constant 0 : index
    %664 = vector.load %arg2[%c120_317, %c0_318] : memref<384x128xf32, #tpu.memory_space<vmem>>, vector<1x8xf32>
    %cst_319 = arith.constant dense<0.000000e+00> : vector<2xf32>
    %665 = vector.multi_reduction <add>, %662, %cst_319 [1] : vector<2x8xf32> to vector<2xf32>
    %666 = vector.shape_cast %665 : vector<2xf32> to vector<2x1xf32>
    %cst_320 = arith.constant 8.000000e+00 : f32
    %667 = vector.broadcast %cst_320 : f32 to vector<2x1xf32>
    %668 = arith.divf %666, %667 : vector<2x1xf32>
    %669 = vector.broadcast %668 : vector<2x1xf32> to vector<2x8xf32>
    %670 = arith.subf %662, %669 : vector<2x8xf32>
    %671 = arith.mulf %670, %670 : vector<2x8xf32>
    %cst_321 = arith.constant dense<0.000000e+00> : vector<2xf32>
    %672 = vector.multi_reduction <add>, %671, %cst_321 [1] : vector<2x8xf32> to vector<2xf32>
    %673 = vector.shape_cast %672 : vector<2xf32> to vector<2x1xf32>
    %cst_322 = arith.constant 8.000000e+00 : f32
    %674 = vector.broadcast %cst_322 : f32 to vector<2x1xf32>
    %675 = arith.divf %673, %674 : vector<2x1xf32>
    %676 = vector.broadcast %668 : vector<2x1xf32> to vector<2x8xf32>
    %677 = arith.subf %662, %676 : vector<2x8xf32>
    %cst_323 = arith.constant 9.99999974E-6 : f32
    %678 = vector.broadcast %cst_323 : f32 to vector<2x1xf32>
    %679 = arith.addf %675, %678 : vector<2x1xf32>
    %680 = math.rsqrt %679 : vector<2x1xf32>
    %681 = vector.broadcast %680 : vector<2x1xf32> to vector<2x8xf32>
    %682 = arith.mulf %677, %681 : vector<2x8xf32>
    %683 = vector.broadcast %663 : vector<1x8xf32> to vector<2x8xf32>
    %684 = arith.mulf %682, %683 : vector<2x8xf32>
    %685 = vector.broadcast %664 : vector<1x8xf32> to vector<2x8xf32>
    %686 = arith.addf %684, %685 : vector<2x8xf32>
    %687 = math.tanh %686 : vector<2x8xf32>
    %cst_324 = arith.constant dense<0.000000e+00> : vector<32x8xf32>
    %688 = tpu.matmul %3, %687, %cst_324 {dimension_numbers = #tpu.dot_dimension_numbers<[0], [0], [1], [1], [0, 1, 1, 1], [], []>} : vector<2x32xf32>, vector<2x8xf32>, vector<32x8xf32> -> vector<32x8xf32>
    %689 = arith.addf %544, %413 : vector<32x8xf32>
    %cst_325 = arith.constant dense<0.000000e+00> : vector<32x8xf32>
    %690 = tpu.matmul %594, %689, %cst_325 {dimension_numbers = #tpu.dot_dimension_numbers<[0], [0], [1], [1], [0, 1, 1, 1], [], []>} : vector<32x32xf32>, vector<32x8xf32>, vector<32x8xf32> -> vector<32x8xf32>
    %cst_326 = arith.constant dense<0.000000e+00> : vector<32x8xf32>
    %691 = tpu.matmul %594, %689, %cst_326 {dimension_numbers = #tpu.dot_dimension_numbers<[1], [0], [0], [1], [0, 0, 1, 1], [], []>} : vector<32x32xf32>, vector<32x8xf32>, vector<32x8xf32> -> vector<32x8xf32>
    %c128_327 = arith.constant 128 : index
    %c0_328 = arith.constant 0 : index
    %692 = vector.load %arg2[%c128_327, %c0_328] : memref<384x128xf32, #tpu.memory_space<vmem>>, vector<8x8xf32>
    %cst_329 = arith.constant dense<0.000000e+00> : vector<32x8xf32>
    %693 = tpu.matmul %690, %692, %cst_329 {dimension_numbers = #tpu.dot_dimension_numbers<[1], [0], [0], [1], [0, 0, 1, 1], [], []>} : vector<32x8xf32>, vector<8x8xf32>, vector<32x8xf32> -> vector<32x8xf32>
    %c136_330 = arith.constant 136 : index
    %c0_331 = arith.constant 0 : index
    %694 = vector.load %arg2[%c136_330, %c0_331] : memref<384x128xf32, #tpu.memory_space<vmem>>, vector<8x8xf32>
    %cst_332 = arith.constant dense<0.000000e+00> : vector<32x8xf32>
    %695 = tpu.matmul %691, %694, %cst_332 {dimension_numbers = #tpu.dot_dimension_numbers<[1], [0], [0], [1], [0, 0, 1, 1], [], []>} : vector<32x8xf32>, vector<8x8xf32>, vector<32x8xf32> -> vector<32x8xf32>
    %696 = arith.addf %693, %695 : vector<32x8xf32>
    %c144_333 = arith.constant 144 : index
    %c0_334 = arith.constant 0 : index
    %697 = vector.load %arg2[%c144_333, %c0_334] : memref<384x128xf32, #tpu.memory_space<vmem>>, vector<8x8xf32>
    %cst_335 = arith.constant dense<0.000000e+00> : vector<32x8xf32>
    %698 = tpu.matmul %689, %697, %cst_335 {dimension_numbers = #tpu.dot_dimension_numbers<[1], [0], [0], [1], [0, 0, 1, 1], [], []>} : vector<32x8xf32>, vector<8x8xf32>, vector<32x8xf32> -> vector<32x8xf32>
    %699 = arith.addf %696, %698 : vector<32x8xf32>
    %c152_336 = arith.constant 152 : index
    %c0_337 = arith.constant 0 : index
    %700 = vector.load %arg2[%c152_336, %c0_337] : memref<384x128xf32, #tpu.memory_space<vmem>>, vector<8x8xf32>
    %cst_338 = arith.constant dense<0.000000e+00> : vector<32x8xf32>
    %701 = tpu.matmul %688, %700, %cst_338 {dimension_numbers = #tpu.dot_dimension_numbers<[1], [0], [0], [1], [0, 0, 1, 1], [], []>} : vector<32x8xf32>, vector<8x8xf32>, vector<32x8xf32> -> vector<32x8xf32>
    %702 = arith.addf %699, %701 : vector<32x8xf32>
    %c160_339 = arith.constant 160 : index
    %c0_340 = arith.constant 0 : index
    %703 = vector.load %arg2[%c160_339, %c0_340] : memref<384x128xf32, #tpu.memory_space<vmem>>, vector<1x8xf32>
    %704 = vector.broadcast %703 : vector<1x8xf32> to vector<32x8xf32>
    %705 = arith.addf %702, %704 : vector<32x8xf32>
    %c168_341 = arith.constant 168 : index
    %c0_342 = arith.constant 0 : index
    %706 = vector.load %arg2[%c168_341, %c0_342] : memref<384x128xf32, #tpu.memory_space<vmem>>, vector<1x8xf32>
    %c176_343 = arith.constant 176 : index
    %c0_344 = arith.constant 0 : index
    %707 = vector.load %arg2[%c176_343, %c0_344] : memref<384x128xf32, #tpu.memory_space<vmem>>, vector<1x8xf32>
    %cst_345 = arith.constant dense<0.000000e+00> : vector<32xf32>
    %708 = vector.multi_reduction <add>, %705, %cst_345 [1] : vector<32x8xf32> to vector<32xf32>
    %709 = vector.shape_cast %708 : vector<32xf32> to vector<32x1xf32>
    %cst_346 = arith.constant 8.000000e+00 : f32
    %710 = vector.broadcast %cst_346 : f32 to vector<32x1xf32>
    %711 = arith.divf %709, %710 : vector<32x1xf32>
    %712 = vector.broadcast %711 : vector<32x1xf32> to vector<32x8xf32>
    %713 = arith.subf %705, %712 : vector<32x8xf32>
    %714 = arith.mulf %713, %713 : vector<32x8xf32>
    %cst_347 = arith.constant dense<0.000000e+00> : vector<32xf32>
    %715 = vector.multi_reduction <add>, %714, %cst_347 [1] : vector<32x8xf32> to vector<32xf32>
    %716 = vector.shape_cast %715 : vector<32xf32> to vector<32x1xf32>
    %cst_348 = arith.constant 8.000000e+00 : f32
    %717 = vector.broadcast %cst_348 : f32 to vector<32x1xf32>
    %718 = arith.divf %716, %717 : vector<32x1xf32>
    %719 = vector.broadcast %711 : vector<32x1xf32> to vector<32x8xf32>
    %720 = arith.subf %705, %719 : vector<32x8xf32>
    %cst_349 = arith.constant 9.99999974E-6 : f32
    %721 = vector.broadcast %cst_349 : f32 to vector<32x1xf32>
    %722 = arith.addf %718, %721 : vector<32x1xf32>
    %723 = math.rsqrt %722 : vector<32x1xf32>
    %724 = vector.broadcast %723 : vector<32x1xf32> to vector<32x8xf32>
    %725 = arith.mulf %720, %724 : vector<32x8xf32>
    %726 = vector.broadcast %706 : vector<1x8xf32> to vector<32x8xf32>
    %727 = arith.mulf %725, %726 : vector<32x8xf32>
    %728 = vector.broadcast %707 : vector<1x8xf32> to vector<32x8xf32>
    %729 = arith.addf %727, %728 : vector<32x8xf32>
    %730 = math.tanh %729 : vector<32x8xf32>
    %c184_350 = arith.constant 184 : index
    %c0_351 = arith.constant 0 : index
    %731 = vector.load %arg2[%c184_350, %c0_351] : memref<384x128xf32, #tpu.memory_space<vmem>>, vector<8x8xf32>
    %cst_352 = arith.constant dense<0.000000e+00> : vector<32x8xf32>
    %732 = tpu.matmul %730, %731, %cst_352 {dimension_numbers = #tpu.dot_dimension_numbers<[1], [0], [0], [1], [0, 0, 1, 1], [], []>} : vector<32x8xf32>, vector<8x8xf32>, vector<32x8xf32> -> vector<32x8xf32>
    %c192_353 = arith.constant 192 : index
    %c0_354 = arith.constant 0 : index
    %733 = vector.load %arg2[%c192_353, %c0_354] : memref<384x128xf32, #tpu.memory_space<vmem>>, vector<1x8xf32>
    %734 = vector.broadcast %733 : vector<1x8xf32> to vector<32x8xf32>
    %735 = arith.addf %732, %734 : vector<32x8xf32>
    %c200_355 = arith.constant 200 : index
    %c0_356 = arith.constant 0 : index
    %736 = vector.load %arg2[%c200_355, %c0_356] : memref<384x128xf32, #tpu.memory_space<vmem>>, vector<1x8xf32>
    %c208_357 = arith.constant 208 : index
    %c0_358 = arith.constant 0 : index
    %737 = vector.load %arg2[%c208_357, %c0_358] : memref<384x128xf32, #tpu.memory_space<vmem>>, vector<1x8xf32>
    %cst_359 = arith.constant dense<0.000000e+00> : vector<32xf32>
    %738 = vector.multi_reduction <add>, %735, %cst_359 [1] : vector<32x8xf32> to vector<32xf32>
    %739 = vector.shape_cast %738 : vector<32xf32> to vector<32x1xf32>
    %cst_360 = arith.constant 8.000000e+00 : f32
    %740 = vector.broadcast %cst_360 : f32 to vector<32x1xf32>
    %741 = arith.divf %739, %740 : vector<32x1xf32>
    %742 = vector.broadcast %741 : vector<32x1xf32> to vector<32x8xf32>
    %743 = arith.subf %735, %742 : vector<32x8xf32>
    %744 = arith.mulf %743, %743 : vector<32x8xf32>
    %cst_361 = arith.constant dense<0.000000e+00> : vector<32xf32>
    %745 = vector.multi_reduction <add>, %744, %cst_361 [1] : vector<32x8xf32> to vector<32xf32>
    %746 = vector.shape_cast %745 : vector<32xf32> to vector<32x1xf32>
    %cst_362 = arith.constant 8.000000e+00 : f32
    %747 = vector.broadcast %cst_362 : f32 to vector<32x1xf32>
    %748 = arith.divf %746, %747 : vector<32x1xf32>
    %749 = vector.broadcast %741 : vector<32x1xf32> to vector<32x8xf32>
    %750 = arith.subf %735, %749 : vector<32x8xf32>
    %cst_363 = arith.constant 9.99999974E-6 : f32
    %751 = vector.broadcast %cst_363 : f32 to vector<32x1xf32>
    %752 = arith.addf %748, %751 : vector<32x1xf32>
    %753 = math.rsqrt %752 : vector<32x1xf32>
    %754 = vector.broadcast %753 : vector<32x1xf32> to vector<32x8xf32>
    %755 = arith.mulf %750, %754 : vector<32x8xf32>
    %756 = vector.broadcast %736 : vector<1x8xf32> to vector<32x8xf32>
    %757 = arith.mulf %755, %756 : vector<32x8xf32>
    %758 = vector.broadcast %737 : vector<1x8xf32> to vector<32x8xf32>
    %759 = arith.addf %757, %758 : vector<32x8xf32>
    %760 = math.tanh %759 : vector<32x8xf32>
    %c216_364 = arith.constant 216 : index
    %c0_365 = arith.constant 0 : index
    %761 = vector.load %arg2[%c216_364, %c0_365] : memref<384x128xf32, #tpu.memory_space<vmem>>, vector<8x8xf32>
    %cst_366 = arith.constant dense<0.000000e+00> : vector<32x8xf32>
    %762 = tpu.matmul %760, %761, %cst_366 {dimension_numbers = #tpu.dot_dimension_numbers<[1], [0], [0], [1], [0, 0, 1, 1], [], []>} : vector<32x8xf32>, vector<8x8xf32>, vector<32x8xf32> -> vector<32x8xf32>
    %c224_367 = arith.constant 224 : index
    %c0_368 = arith.constant 0 : index
    %763 = vector.load %arg2[%c224_367, %c0_368] : memref<384x128xf32, #tpu.memory_space<vmem>>, vector<1x8xf32>
    %764 = vector.broadcast %763 : vector<1x8xf32> to vector<32x8xf32>
    %765 = arith.addf %762, %764 : vector<32x8xf32>
    %c232_369 = arith.constant 232 : index
    %c0_370 = arith.constant 0 : index
    %766 = vector.load %arg2[%c232_369, %c0_370] : memref<384x128xf32, #tpu.memory_space<vmem>>, vector<1x8xf32>
    %c240_371 = arith.constant 240 : index
    %c0_372 = arith.constant 0 : index
    %767 = vector.load %arg2[%c240_371, %c0_372] : memref<384x128xf32, #tpu.memory_space<vmem>>, vector<1x8xf32>
    %cst_373 = arith.constant dense<0.000000e+00> : vector<32xf32>
    %768 = vector.multi_reduction <add>, %765, %cst_373 [1] : vector<32x8xf32> to vector<32xf32>
    %769 = vector.shape_cast %768 : vector<32xf32> to vector<32x1xf32>
    %cst_374 = arith.constant 8.000000e+00 : f32
    %770 = vector.broadcast %cst_374 : f32 to vector<32x1xf32>
    %771 = arith.divf %769, %770 : vector<32x1xf32>
    %772 = vector.broadcast %771 : vector<32x1xf32> to vector<32x8xf32>
    %773 = arith.subf %765, %772 : vector<32x8xf32>
    %774 = arith.mulf %773, %773 : vector<32x8xf32>
    %cst_375 = arith.constant dense<0.000000e+00> : vector<32xf32>
    %775 = vector.multi_reduction <add>, %774, %cst_375 [1] : vector<32x8xf32> to vector<32xf32>
    %776 = vector.shape_cast %775 : vector<32xf32> to vector<32x1xf32>
    %cst_376 = arith.constant 8.000000e+00 : f32
    %777 = vector.broadcast %cst_376 : f32 to vector<32x1xf32>
    %778 = arith.divf %776, %777 : vector<32x1xf32>
    %779 = vector.broadcast %771 : vector<32x1xf32> to vector<32x8xf32>
    %780 = arith.subf %765, %779 : vector<32x8xf32>
    %cst_377 = arith.constant 9.99999974E-6 : f32
    %781 = vector.broadcast %cst_377 : f32 to vector<32x1xf32>
    %782 = arith.addf %778, %781 : vector<32x1xf32>
    %783 = math.rsqrt %782 : vector<32x1xf32>
    %784 = vector.broadcast %783 : vector<32x1xf32> to vector<32x8xf32>
    %785 = arith.mulf %780, %784 : vector<32x8xf32>
    %786 = vector.broadcast %766 : vector<1x8xf32> to vector<32x8xf32>
    %787 = arith.mulf %785, %786 : vector<32x8xf32>
    %788 = vector.broadcast %767 : vector<1x8xf32> to vector<32x8xf32>
    %789 = arith.addf %787, %788 : vector<32x8xf32>
    %790 = math.tanh %789 : vector<32x8xf32>
    %c248_378 = arith.constant 248 : index
    %c0_379 = arith.constant 0 : index
    %791 = vector.load %arg2[%c248_378, %c0_379] : memref<384x128xf32, #tpu.memory_space<vmem>>, vector<8x8xf32>
    %cst_380 = arith.constant dense<0.000000e+00> : vector<32x8xf32>
    %792 = tpu.matmul %790, %791, %cst_380 {dimension_numbers = #tpu.dot_dimension_numbers<[1], [0], [0], [1], [0, 0, 1, 1], [], []>} : vector<32x8xf32>, vector<8x8xf32>, vector<32x8xf32> -> vector<32x8xf32>
    %c256_381 = arith.constant 256 : index
    %c0_382 = arith.constant 0 : index
    %793 = vector.load %arg2[%c256_381, %c0_382] : memref<384x128xf32, #tpu.memory_space<vmem>>, vector<1x8xf32>
    %794 = vector.broadcast %793 : vector<1x8xf32> to vector<32x8xf32>
    %795 = arith.addf %792, %794 : vector<32x8xf32>
    %c264_383 = arith.constant 264 : index
    %c0_384 = arith.constant 0 : index
    %796 = vector.load %arg2[%c264_383, %c0_384] : memref<384x128xf32, #tpu.memory_space<vmem>>, vector<1x8xf32>
    %c272_385 = arith.constant 272 : index
    %c0_386 = arith.constant 0 : index
    %797 = vector.load %arg2[%c272_385, %c0_386] : memref<384x128xf32, #tpu.memory_space<vmem>>, vector<1x8xf32>
    %cst_387 = arith.constant dense<0.000000e+00> : vector<32xf32>
    %798 = vector.multi_reduction <add>, %795, %cst_387 [1] : vector<32x8xf32> to vector<32xf32>
    %799 = vector.shape_cast %798 : vector<32xf32> to vector<32x1xf32>
    %cst_388 = arith.constant 8.000000e+00 : f32
    %800 = vector.broadcast %cst_388 : f32 to vector<32x1xf32>
    %801 = arith.divf %799, %800 : vector<32x1xf32>
    %802 = vector.broadcast %801 : vector<32x1xf32> to vector<32x8xf32>
    %803 = arith.subf %795, %802 : vector<32x8xf32>
    %804 = arith.mulf %803, %803 : vector<32x8xf32>
    %cst_389 = arith.constant dense<0.000000e+00> : vector<32xf32>
    %805 = vector.multi_reduction <add>, %804, %cst_389 [1] : vector<32x8xf32> to vector<32xf32>
    %806 = vector.shape_cast %805 : vector<32xf32> to vector<32x1xf32>
    %cst_390 = arith.constant 8.000000e+00 : f32
    %807 = vector.broadcast %cst_390 : f32 to vector<32x1xf32>
    %808 = arith.divf %806, %807 : vector<32x1xf32>
    %809 = vector.broadcast %801 : vector<32x1xf32> to vector<32x8xf32>
    %810 = arith.subf %795, %809 : vector<32x8xf32>
    %cst_391 = arith.constant 9.99999974E-6 : f32
    %811 = vector.broadcast %cst_391 : f32 to vector<32x1xf32>
    %812 = arith.addf %808, %811 : vector<32x1xf32>
    %813 = math.rsqrt %812 : vector<32x1xf32>
    %814 = vector.broadcast %813 : vector<32x1xf32> to vector<32x8xf32>
    %815 = arith.mulf %810, %814 : vector<32x8xf32>
    %816 = vector.broadcast %796 : vector<1x8xf32> to vector<32x8xf32>
    %817 = arith.mulf %815, %816 : vector<32x8xf32>
    %818 = vector.broadcast %797 : vector<1x8xf32> to vector<32x8xf32>
    %819 = arith.addf %817, %818 : vector<32x8xf32>
    %820 = math.tanh %819 : vector<32x8xf32>
    %c288_392 = arith.constant 288 : index
    %c0_393 = arith.constant 0 : index
    %821 = vector.load %arg2[%c288_392, %c0_393] : memref<384x128xf32, #tpu.memory_space<vmem>>, vector<8x8xf32>
    %cst_394 = arith.constant dense<0.000000e+00> : vector<32x8xf32>
    %822 = tpu.matmul %820, %821, %cst_394 {dimension_numbers = #tpu.dot_dimension_numbers<[1], [0], [0], [1], [0, 0, 1, 1], [], []>} : vector<32x8xf32>, vector<8x8xf32>, vector<32x8xf32> -> vector<32x8xf32>
    %c296_395 = arith.constant 296 : index
    %c0_396 = arith.constant 0 : index
    %823 = vector.load %arg2[%c296_395, %c0_396] : memref<384x128xf32, #tpu.memory_space<vmem>>, vector<8x8xf32>
    %cst_397 = arith.constant dense<0.000000e+00> : vector<32x8xf32>
    %824 = tpu.matmul %688, %823, %cst_397 {dimension_numbers = #tpu.dot_dimension_numbers<[1], [0], [0], [1], [0, 0, 1, 1], [], []>} : vector<32x8xf32>, vector<8x8xf32>, vector<32x8xf32> -> vector<32x8xf32>
    %825 = arith.addf %822, %824 : vector<32x8xf32>
    %c304_398 = arith.constant 304 : index
    %c0_399 = arith.constant 0 : index
    %826 = vector.load %arg2[%c304_398, %c0_399] : memref<384x128xf32, #tpu.memory_space<vmem>>, vector<1x8xf32>
    %827 = vector.broadcast %826 : vector<1x8xf32> to vector<32x8xf32>
    %828 = arith.addf %825, %827 : vector<32x8xf32>
    %c280_400 = arith.constant 280 : index
    %c0_401 = arith.constant 0 : index
    %829 = vector.load %arg2[%c280_400, %c0_401] : memref<384x128xf32, #tpu.memory_space<vmem>>, vector<8x8xf32>
    %cst_402 = arith.constant dense<0.000000e+00> : vector<32x8xf32>
    %830 = tpu.matmul %820, %829, %cst_402 {dimension_numbers = #tpu.dot_dimension_numbers<[1], [0], [0], [1], [0, 0, 1, 1], [], []>} : vector<32x8xf32>, vector<8x8xf32>, vector<32x8xf32> -> vector<32x8xf32>
    %cst_403 = arith.constant dense<0.000000e+00> : vector<8x512xf32>
    %831 = tpu.matmul %828, %0, %cst_403 {dimension_numbers = #tpu.dot_dimension_numbers<[0], [0], [1], [1], [0, 1, 1, 1], [], []>} : vector<32x8xf32>, vector<32x512xf32>, vector<8x512xf32> -> vector<8x512xf32>
    %cst_404 = arith.constant dense<0.000000e+00> : vector<8x512xf32>
    %832 = tpu.matmul %830, %1, %cst_404 {dimension_numbers = #tpu.dot_dimension_numbers<[0], [0], [1], [1], [0, 1, 1, 1], [], []>} : vector<32x8xf32>, vector<32x512xf32>, vector<8x512xf32> -> vector<8x512xf32>
    %833 = arith.addf %831, %832 : vector<8x512xf32>
    %c312_405 = arith.constant 312 : index
    %c0_406 = arith.constant 0 : index
    %834 = vector.load %arg2[%c312_405, %c0_406] : memref<384x128xf32, #tpu.memory_space<vmem>>, vector<8x1xf32>
    %835 = vector.broadcast %834 : vector<8x1xf32> to vector<8x512xf32>
    %836 = vector.broadcast %591 : vector<1x512xf32> to vector<8x512xf32>
    %837 = arith.mulf %835, %836 : vector<8x512xf32>
    %838 = arith.addf %833, %837 : vector<8x512xf32>
    %839 = math.tanh %838 : vector<8x512xf32>
    %c320_407 = arith.constant 320 : index
    %c0_408 = arith.constant 0 : index
    %840 = vector.load %arg2[%c320_407, %c0_408] : memref<384x128xf32, #tpu.memory_space<vmem>>, vector<8x8xf32>
    %cst_409 = arith.constant dense<0.000000e+00> : vector<8x512xf32>
    %841 = tpu.matmul %840, %839, %cst_409 {dimension_numbers = #tpu.dot_dimension_numbers<[1], [0], [0], [1], [0, 0, 1, 1], [], []>} : vector<8x8xf32>, vector<8x512xf32>, vector<8x512xf32> -> vector<8x512xf32>
    %c328_410 = arith.constant 328 : index
    %c0_411 = arith.constant 0 : index
    %842 = vector.load %arg2[%c328_410, %c0_411] : memref<384x128xf32, #tpu.memory_space<vmem>>, vector<8x1xf32>
    %843 = vector.broadcast %842 : vector<8x1xf32> to vector<8x512xf32>
    %844 = arith.addf %841, %843 : vector<8x512xf32>
    %845 = math.tanh %844 : vector<8x512xf32>
    %c336_412 = arith.constant 336 : index
    %c0_413 = arith.constant 0 : index
    %846 = vector.load %arg2[%c336_412, %c0_413] : memref<384x128xf32, #tpu.memory_space<vmem>>, vector<8x8xf32>
    %cst_414 = arith.constant dense<0.000000e+00> : vector<8x512xf32>
    %847 = tpu.matmul %846, %845, %cst_414 {dimension_numbers = #tpu.dot_dimension_numbers<[1], [0], [0], [1], [0, 0, 1, 1], [], []>} : vector<8x8xf32>, vector<8x512xf32>, vector<8x512xf32> -> vector<8x512xf32>
    %c344_415 = arith.constant 344 : index
    %c0_416 = arith.constant 0 : index
    %848 = vector.load %arg2[%c344_415, %c0_416] : memref<384x128xf32, #tpu.memory_space<vmem>>, vector<8x1xf32>
    %849 = vector.broadcast %848 : vector<8x1xf32> to vector<8x512xf32>
    %850 = arith.addf %847, %849 : vector<8x512xf32>
    %851 = math.tanh %850 : vector<8x512xf32>
    %c352_417 = arith.constant 352 : index
    %c0_418 = arith.constant 0 : index
    %852 = vector.load %arg2[%c352_417, %c0_418] : memref<384x128xf32, #tpu.memory_space<vmem>>, vector<8x8xf32>
    %cst_419 = arith.constant dense<0.000000e+00> : vector<8x512xf32>
    %853 = tpu.matmul %852, %851, %cst_419 {dimension_numbers = #tpu.dot_dimension_numbers<[1], [0], [0], [1], [0, 0, 1, 1], [], []>} : vector<8x8xf32>, vector<8x512xf32>, vector<8x512xf32> -> vector<8x512xf32>
    %c360_420 = arith.constant 360 : index
    %c0_421 = arith.constant 0 : index
    %854 = vector.load %arg2[%c360_420, %c0_421] : memref<384x128xf32, #tpu.memory_space<vmem>>, vector<8x1xf32>
    %855 = vector.broadcast %854 : vector<8x1xf32> to vector<8x512xf32>
    %856 = arith.addf %853, %855 : vector<8x512xf32>
    %857 = math.tanh %856 : vector<8x512xf32>
    %c368_422 = arith.constant 368 : index
    %c0_423 = arith.constant 0 : index
    %858 = vector.load %arg2[%c368_422, %c0_423] : memref<384x128xf32, #tpu.memory_space<vmem>>, vector<1x8xf32>
    %cst_424 = arith.constant dense<0.000000e+00> : vector<1x512xf32>
    %859 = tpu.matmul %858, %857, %cst_424 {dimension_numbers = #tpu.dot_dimension_numbers<[1], [0], [0], [1], [0, 0, 1, 1], [], []>} : vector<1x8xf32>, vector<8x512xf32>, vector<1x512xf32> -> vector<1x512xf32>
    %c376_425 = arith.constant 376 : index
    %c0_426 = arith.constant 0 : index
    %860 = vector.load %arg2[%c376_425, %c0_426] : memref<384x128xf32, #tpu.memory_space<vmem>>, vector<1x1xf32>
    %861 = vector.broadcast %860 : vector<1x1xf32> to vector<1x512xf32>
    %862 = arith.addf %859, %861 : vector<1x512xf32>
    %863 = arith.negf %862 : vector<1x512xf32>
    %864 = math.exp %863 : vector<1x512xf32>
    %cst_427 = arith.constant 1.000000e+00 : f32
    %865 = vector.broadcast %cst_427 : f32 to vector<1x512xf32>
    %866 = arith.addf %865, %864 : vector<1x512xf32>
    %867 = arith.divf %865, %866 : vector<1x512xf32>
    %868 = arith.addf %820, %689 : vector<32x8xf32>
    %869 = vector.broadcast %867 : vector<1x512xf32> to vector<32x512xf32>
    %870 = arith.mulf %0, %869 : vector<32x512xf32>
    %cst_428 = arith.constant dense<0.000000e+00> : vector<32x16xf32>
    %871 = tpu.matmul %870, %2, %cst_428 {dimension_numbers = #tpu.dot_dimension_numbers<[1], [1], [0], [0], [0, 0, 1, 0], [], []>} : vector<32x512xf32>, vector<16x512xf32>, vector<32x16xf32> -> vector<32x16xf32>
    %cst_429 = arith.constant dense<0.000000e+00> : vector<32x128xf32>
    %872 = tpu.matmul %871, %4, %cst_429 {dimension_numbers = #tpu.dot_dimension_numbers<[1], [0], [0], [1], [0, 0, 1, 1], [], []>} : vector<32x16xf32>, vector<16x128xf32>, vector<32x128xf32> -> vector<32x128xf32>
    %c0_430 = arith.constant 0 : index
    %c0_431 = arith.constant 0 : index
    %873 = vector.load %arg4[%c0_430, %c0_431] : memref<32x128xf32, #tpu.memory_space<vmem>>, vector<32x128xf32>
    tpu.vector_store %arg4[%c0_430, %c0_431], %872 {strides = array<i32>} : memref<32x128xf32, #tpu.memory_space<vmem>>, vector<32x128xf32>,
    %c0_432 = arith.constant 0 : index
    %c0_433 = arith.constant 0 : index
    %874 = vector.load %arg4[%c0_432, %c0_433] : memref<32x128xf32, #tpu.memory_space<vmem>>, vector<32x8xf32>
    tpu.vector_store %arg4[%c0_432, %c0_433], %868 {strides = array<i32>} : memref<32x128xf32, #tpu.memory_space<vmem>>, vector<32x8xf32>,
    return
  }
  func.func @transform_0(%arg0: i32) -> (i32, i32) {
    %c0_i32 = arith.constant 0 : i32
    %c0_i32_0 = arith.constant 0 : i32
    return %arg0, %c0_i32 : i32, i32
  }
  func.func @transform_1(%arg0: i32) -> (i32, i32) {
    %c0_i32 = arith.constant 0 : i32
    %c0_i32_0 = arith.constant 0 : i32
    %c0_i32_1 = arith.constant 0 : i32
    return %c0_i32, %c0_i32_0 : i32, i32
  }
  func.func @transform_2(%arg0: i32) -> (i32, i32) {
    %c0_i32 = arith.constant 0 : i32
    %c0_i32_0 = arith.constant 0 : i32
    %c0_i32_1 = arith.constant 0 : i32
    return %c0_i32, %c0_i32_0 : i32, i32
  }
  func.func @transform_3(%arg0: i32) -> (i32, i32) {
    %c0_i32 = arith.constant 0 : i32
    %c0_i32_0 = arith.constant 0 : i32
    return %arg0, %c0_i32 : i32, i32
  }
}

</mosaic_0001>

<llo_original>
// kernel: tpu_custom_call.1
$region0: #{tpu_custom_call.1}
  #allocation0 [shape = 'u32[]', space=smem, size = 0x4, offset = 0x4, fixed_abs, tag = 'smem constant byte address 0x4 - core index']
  #allocation1 [shape = 'u32[72,128]{1,0:T(1,128)}', space=vmem, size = 0x9000, scoped, tag = 'internal scratch']
  %s0 = inlined_call_operand.hbm [shape: f32[32,128], index: 0, kind: input, shape index: {}]
  %s1 = inlined_call_operand.hbm [shape: f32[384,128], index: 1, kind: input, shape index: {}]
  %s2 = inlined_call_operand.hbm [shape: f32[104,512], index: 2, kind: input, shape index: {}]
  %s3 = inlined_call_operand.hbm [shape: f32[32,128], index: 3, kind: output, shape index: {}]
  %s4 = sld [smem:[#allocation0]]
  $region34: #{tpu_custom_call.1} parent=0
    _
  %s6 = ssub.s32 1, %s4
  %s7 = scalar_select 0, %s6, %s4
  $region1: #{tpu_custom_call.1} parent=0
    #allocation2 [shape = 'u8[16384]{0}', space=vmem, size = 0x4000, scoped, tag = 'input window, operand 0, single buffered']
    #allocation3 [shape = 's32[1]{0}', space=sflag, size = 0x4, scoped, tag = 'scoped memory for tpu_custom_call.1']
    #allocation4 [shape = 's32[1]{0}', space=sflag, size = 0x4, scoped, tag = 'scoped memory for tpu_custom_call.1']
    #allocation5 [shape = 'u8[196608]{0}', space=vmem, size = 0x30000, scoped, tag = 'input window, operand 1, single buffered']
    #allocation6 [shape = 's32[1]{0}', space=sflag, size = 0x4, scoped, tag = 'scoped memory for tpu_custom_call.1']
    #allocation7 [shape = 'u8[212992]{0}', space=vmem, size = 0x34000, scoped, tag = 'input window, operand 2, single buffered']
    #allocation8 [shape = 'u8[16384]{0}', space=vmem, size = 0x4000, scoped, tag = 'output window, operand 0, single buffered']
    %8 = vsyncpa [#allocation3], 0
    %9 = vsyncpa [#allocation6], 0
    %10 = vsyncpa [#allocation4], 0
    // Predicated region
    $region2: #{tpu_custom_call.1} parent=1 // pred_check
      _
    $region3: #{tpu_custom_call.1} parent=1 // pred_check_branch
      %12 = sbr.rel (0) target = $region5
    $region4: #{tpu_custom_call.1} parent=1 // pred_region
      %14 = vsyncadd [#allocation3], 0
      %s15 = sshll.u32 %s0, 4
      %s16 = int_to_ptr.hbm [resolvable:$true] %s15
      %s17 = sshll.u32 [#allocation2], 4
      %s18 = int_to_ptr.vmem [resolvable:$true] %s17
      %23 = dma.hbm_to_vmem [thread:$0]  %s16, 512, %s18, [#allocation3], 128, 128, 8
    $region5: #{tpu_custom_call.1} parent=1 // pred_fallthru
      _
    // Predicated region
    $region6: #{tpu_custom_call.1} parent=1 // pred_check
      _
    $region7: #{tpu_custom_call.1} parent=1 // pred_check_branch
      %25 = sbr.rel (0) target = $region9
    $region8: #{tpu_custom_call.1} parent=1 // pred_region
      %27 = vsyncadd [#allocation6], 0
      %s28 = sshll.u32 %s1, 4
      %s29 = int_to_ptr.hbm [resolvable:$true] %s28
      %s30 = sshll.u32 [#allocation5], 4
      %s31 = int_to_ptr.vmem [resolvable:$true] %s30
      %36 = dma.hbm_to_vmem [thread:$0]  %s29, 6144, %s31, [#allocation6], 128, 128, 8
    $region9: #{tpu_custom_call.1} parent=1 // pred_fallthru
      _
    // Predicated region
    $region10: #{tpu_custom_call.1} parent=1 // pred_check
      _
    $region11: #{tpu_custom_call.1} parent=1 // pred_check_branch
      %38 = sbr.rel (0) target = $region13
    $region12: #{tpu_custom_call.1} parent=1 // pred_region
      %40 = vsyncadd [#allocation6], 0
      %s41 = sshll.u32 %s2, 4
      %s42 = int_to_ptr.hbm [resolvable:$true] %s41
      %s43 = sshll.u32 [#allocation7], 4
      %s44 = int_to_ptr.vmem [resolvable:$true] %s43
      %49 = dma.hbm_to_vmem [thread:$0]  %s42, 6656, %s44, [#allocation6], 512, 512, 32
    $region13: #{tpu_custom_call.1} parent=1 // pred_fallthru
      _
    // Predicated region
    $region14: #{tpu_custom_call.1} parent=1 // pred_check
      _
    $region15: #{tpu_custom_call.1} parent=1 // pred_check_branch
      %51 = sbr.rel (0) target = $region17
    $region16: #{tpu_custom_call.1} parent=1 // pred_region
      %53 = dma.done [#allocation3], 512
    $region17: #{tpu_custom_call.1} parent=1 // pred_fallthru
      _
    // Predicated region
    $region18: #{tpu_custom_call.1} parent=1 // pred_check
      _
    $region19: #{tpu_custom_call.1} parent=1 // pred_check_branch
      %55 = sbr.rel (0) target = $region21
    $region20: #{tpu_custom_call.1} parent=1 // pred_region
      %57 = dma.done [#allocation6], 6144
    $region21: #{tpu_custom_call.1} parent=1 // pred_fallthru
      _
    // Predicated region
    $region22: #{tpu_custom_call.1} parent=1 // pred_check
      _
    $region23: #{tpu_custom_call.1} parent=1 // pred_check_branch
      %59 = sbr.rel (0) target = $region25
    $region24: #{tpu_custom_call.1} parent=1 // pred_region
      %61 = dma.done [#allocation6], 6656
    $region25: #{tpu_custom_call.1} parent=1 // pred_fallthru
      _
    %v62 = vld [vmem:[#allocation7] sm:$0xff]
    %v63 = vld [vmem:[#allocation7 + $0x8] sm:$0xff]
    %v64 = vld [vmem:[#allocation7 + $0x10] sm:$0xff]
    %v65 = vld [vmem:[#allocation7 + $0x18] sm:$0xff]
    %v66 = vld [vmem:[#allocation7 + $0x20] sm:$0xff]
    %v67 = vld [vmem:[#allocation7 + $0x28] sm:$0xff]
    %v68 = vld [vmem:[#allocation7 + $0x30] sm:$0xff]
    %v69 = vld [vmem:[#allocation7 + $0x38] sm:$0xff]
    %v70 = vld [vmem:[#allocation7 + $0x40] sm:$0xff]
    %v71 = vld [vmem:[#allocation7 + $0x48] sm:$0xff]
    %v72 = vld [vmem:[#allocation7 + $0x50] sm:$0xff]
    %v73 = vld [vmem:[#allocation7 + $0x58] sm:$0xff]
    %v74 = vld [vmem:[#allocation7 + $0x60] sm:$0xff]
    %v75 = vld [vmem:[#allocation7 + $0x68] sm:$0xff]
    %v76 = vld [vmem:[#allocation7 + $0x70] sm:$0xff]
    %v77 = vld [vmem:[#allocation7 + $0x78] sm:$0xff]
    %v78 = vld [vmem:[#allocation7 + $0x80] sm:$0xff]
    %v79 = vld [vmem:[#allocation7 + $0x88] sm:$0xff]
    %v80 = vld [vmem:[#allocation7 + $0x90] sm:$0xff]
    %v81 = vld [vmem:[#allocation7 + $0x98] sm:$0xff]
    %v82 = vld [vmem:[#allocation7 + $0xa0] sm:$0xff]
    %v83 = vld [vmem:[#allocation7 + $0xa8] sm:$0xff]
    %v84 = vld [vmem:[#allocation7 + $0xb0] sm:$0xff]
    %v85 = vld [vmem:[#allocation7 + $0xb8] sm:$0xff]
    %v86 = vld [vmem:[#allocation7 + $0xc0] sm:$0xff]
    %v87 = vld [vmem:[#allocation7 + $0xc8] sm:$0xff]
    %v88 = vld [vmem:[#allocation7 + $0xd0] sm:$0xff]
    %v89 = vld [vmem:[#allocation7 + $0xd8] sm:$0xff]
    %v90 = vld [vmem:[#allocation7 + $0xe0] sm:$0xff]
    %v91 = vld [vmem:[#allocation7 + $0xe8] sm:$0xff]
    %v92 = vld [vmem:[#allocation7 + $0xf0] sm:$0xff]
    %v93 = vld [vmem:[#allocation7 + $0xf8] sm:$0xff]
    %v94 = vld [vmem:[#allocation7 + $0x100] sm:$0xff]
    %v95 = vld [vmem:[#allocation7 + $0x108] sm:$0xff]
    %v96 = vld [vmem:[#allocation7 + $0x110] sm:$0xff]
    %v97 = vld [vmem:[#allocation7 + $0x118] sm:$0xff]
    %v98 = vld [vmem:[#allocation7 + $0x120] sm:$0xff]
    %v99 = vld [vmem:[#allocation7 + $0x128] sm:$0xff]
    %v100 = vld [vmem:[#allocation7 + $0x130] sm:$0xff]
    %v101 = vld [vmem:[#allocation7 + $0x138] sm:$0xff]
    %v102 = vld [vmem:[#allocation7 + $0x140] sm:$0x3]
    %v103 = vld [vmem:[#allocation7 + $0x160] sm:$0xff]
    %v104 = vld [vmem:[#allocation7 + $0x180] sm:$0xff]
    %v105 = vld [vmem:[#allocation2] sm:$0xff]
    %v106 = vld [vmem:[#allocation2 + $0x8] sm:$0xff]
    %v107 = vld [vmem:[#allocation2 + $0x10] sm:$0xff]
    %v108 = vld [vmem:[#allocation2 + $0x18] sm:$0xff]
    %v109 = vld [vmem:[#allocation5] sm:$0x7]
    %v110 = vld [vmem:[#allocation5 + $0x8] sm:$0x1]
    %v111 = vperm.slane %v110, 0
    %vm112 = vcmask 23552
    %v114 = vsel %vm112, %v105, 0
    %v117 = vsel %vm112, %v106, 0
    %v120 = vsel %vm112, %v107, 0
    %v123 = vsel %vm112, %v108, 0
    %vm125 = vcmask 1042432
    %v127 = vsel %vm125, %v109, 0
    %129 = vmatpush.msra.mxu0 0.0
    %130 = vmatpush.msra.mxu0 0.0
    %131 = vmatpush.msra.mxu0 0.0
    %132 = vmatpush.msra.mxu0 0.0
    %133 = vmatpush.msra.mxu0 0.0
    %134 = vmatpush.msra.mxu0 0.0
    %135 = vmatpush.msra.mxu0 0.0
    %136 = vmatpush.msra.mxu0 0.0
    %137 = vmatpush.msra.mxu0 0.0
    %138 = vmatpush.msra.mxu0 0.0
    %139 = vmatpush.msra.mxu0 0.0
    %140 = vmatpush.msra.mxu0 0.0
    %141 = vmatpush.msra.mxu0 0.0
    %142 = vmatpush.msra.mxu0 0.0
    %143 = vmatpush.msra.mxu0 0.0
    %144 = vmatpush.msra.mxu0 %v127
    %145 = vmatmul.f32.gmra.mxu0 %v114
    %v146 = vpop.f32.mrf.mxu0
    %v147 = vadd.f32 %v111, %v146
    %148 = vmatmul.f32.gmra.mxu0 %v117
    %v149 = vpop.f32.mrf.mxu0
    %v150 = vadd.f32 %v111, %v149
    %151 = vmatmul.f32.gmra.mxu0 %v120
    %v152 = vpop.f32.mrf.mxu0
    %v153 = vadd.f32 %v111, %v152
    %154 = vmatmul.f32.gmra.mxu0 %v123
    %v155 = vpop.f32.mrf.mxu0
    %v156 = vadd.f32 %v111, %v155
    %157 = vdwg.mxu0
    %v158 = vld [vmem:[#allocation5 + $0x10] sm:$0x1]
    %v159 = vld [vmem:[#allocation5 + $0x18] sm:$0x1]
    %vm160 = vcmask 64512
    %v161 = vsel %vm160, %v147, 0.0
    %162 = vadd.xlane.f32.xlu0 %v161
    %v163 = vpop.xlane.xlu0 %162
    %v164 = vsel %vm160, %v150, 0.0
    %165 = vadd.xlane.f32.xlu0 %v164
    %v166 = vpop.xlane.xlu0 %165
    %v167 = vsel %vm160, %v153, 0.0
    %168 = vadd.xlane.f32.xlu0 %v167
    %v169 = vpop.xlane.xlu0 %168
    %v170 = vsel %vm160, %v156, 0.0
    %171 = vadd.xlane.f32.xlu0 %v170
    %v172 = vpop.xlane.xlu0 %171
    %v173 = vrcp.pop 8.0
    %v174 = vmul.f32 8.0, %v173
    %v175 = vsub.f32 1.0, %v174
    %v176 = vmul.f32 %v173, %v175
    %v177 = vadd.f32 %v173, %v176
    %vm178 = vweird.f32 %v173
    %v179 = vsel %vm178, %v173, %v177
    %v180 = vmul.f32 %v163, %v179
    %v181 = vmul.f32 %v166, %v179
    %v182 = vmul.f32 %v169, %v179
    %v183 = vmul.f32 %v172, %v179
    %v184 = vsub.f32 %v147, %v180
    %v185 = vsub.f32 %v150, %v181
    %v186 = vsub.f32 %v153, %v182
    %v187 = vsub.f32 %v156, %v183
    %v188 = vmul.f32 %v184, %v184
    %v189 = vmul.f32 %v185, %v185
    %v190 = vmul.f32 %v186, %v186
    %v191 = vmul.f32 %v187, %v187
    %v192 = vsel %vm160, %v188, 0.0
    %193 = vadd.xlane.f32.xlu0 %v192
    %v194 = vpop.xlane.xlu0 %193
    %v195 = vsel %vm160, %v189, 0.0
    %196 = vadd.xlane.f32.xlu0 %v195
    %v197 = vpop.xlane.xlu0 %196
    %v198 = vsel %vm160, %v190, 0.0
    %199 = vadd.xlane.f32.xlu0 %v198
    %v200 = vpop.xlane.xlu0 %199
    %v201 = vsel %vm160, %v191, 0.0
    %202 = vadd.xlane.f32.xlu0 %v201
    %v203 = vpop.xlane.xlu0 %202
    %v204 = vmul.f32 %v194, %v179
    %v205 = vmul.f32 %v197, %v179
    %v206 = vmul.f32 %v200, %v179
    %v207 = vmul.f32 %v203, %v179
    %v208 = vadd.f32 %v204, 1e-05
    %v209 = vadd.f32 %v205, 1e-05
    %v210 = vadd.f32 %v206, 1e-05
    %v211 = vadd.f32 %v207, 1e-05
    %v212 = vrsqrt.pop %v208
    %v213 = vmul.f32 %v212, %v208
    %v214 = vmul.f32 %v213, %v212
    %v215 = vmul.f32 0.5, %v214
    %v216 = vsub.f32 1.5, %v215
    %v217 = vmul.f32 %v212, %v216
    %vm218 = vweird.f32 %v208
    %vm219 = vweird.f32 %v212
    %vm220 = vmor %vm218, %vm219
    %v221 = vsel %vm220, %v212, %v217
    %v222 = vrsqrt.pop %v209
    %v223 = vmul.f32 %v222, %v209
    %v224 = vmul.f32 %v223, %v222
    %v225 = vmul.f32 0.5, %v224
    %v226 = vsub.f32 1.5, %v225
    %v227 = vmul.f32 %v222, %v226
    %vm228 = vweird.f32 %v209
    %vm229 = vweird.f32 %v222
    %vm230 = vmor %vm228, %vm229
    %v231 = vsel %vm230, %v222, %v227
    %v232 = vrsqrt.pop %v210
    %v233 = vmul.f32 %v232, %v210
    %v234 = vmul.f32 %v233, %v232
    %v235 = vmul.f32 0.5, %v234
    %v236 = vsub.f32 1.5, %v235
    %v237 = vmul.f32 %v232, %v236
    %vm238 = vweird.f32 %v210
    %vm239 = vweird.f32 %v232
    %vm240 = vmor %vm238, %vm239
    %v241 = vsel %vm240, %v232, %v237
    %v242 = vrsqrt.pop %v211
    %v243 = vmul.f32 %v242, %v211
    %v244 = vmul.f32 %v243, %v242
    %v245 = vmul.f32 0.5, %v244
    %v246 = vsub.f32 1.5, %v245
    %v247 = vmul.f32 %v242, %v246
    %vm248 = vweird.f32 %v211
    %vm249 = vweird.f32 %v242
    %vm250 = vmor %vm248, %vm249
    %v251 = vsel %vm250, %v242, %v247
    %v252 = vmul.f32 %v184, %v221
    %v253 = vmul.f32 %v185, %v231
    %v254 = vmul.f32 %v186, %v241
    %v255 = vmul.f32 %v187, %v251
    %v256 = vperm.slane %v158, 0
    %v257 = vmul.f32 %v252, %v256
    %v258 = vmul.f32 %v253, %v256
    %v259 = vmul.f32 %v254, %v256
    %v260 = vmul.f32 %v255, %v256
    %v261 = vperm.slane %v159, 0
    %v262 = vadd.f32 %v257, %v261
    %v263 = vadd.f32 %v258, %v261
    %v264 = vadd.f32 %v259, %v261
    %v265 = vadd.f32 %v260, %v261
    %v266 = vtanh.pop %v262
    %v267 = vtanh.pop %v263
    %v268 = vtanh.pop %v264
    %v269 = vtanh.pop %v265
    %270 = vrot.lane.b32.xlu0 %v105, 120
    %v271 = vpop.permute.xlu0 %270
    %272 = vrot.lane.b32.xlu0 %v106, 120
    %v273 = vpop.permute.xlu0 %272
    %274 = vrot.lane.b32.xlu0 %v107, 120
    %v275 = vpop.permute.xlu0 %274
    %276 = vrot.lane.b32.xlu0 %v108, 120
    %v277 = vpop.permute.xlu0 %276
    %vm278 = vcmask 130048
    %v279 = vsel %vm278, %v271, 0
    %v281 = vsel %vm278, %v273, 0
    %v283 = vsel %vm278, %v275, 0
    %v285 = vsel %vm278, %v277, 0
    %287 = vmatpush.msra.mxu0 0.0
    %288 = vmatpush.msra.mxu0 0.0
    %289 = vmatpush.msra.mxu0 0.0
    %290 = vmatpush.msra.mxu0 0.0
    %291 = vmatpush.msra.mxu0 0.0
    %292 = vmatpush.msra.mxu0 0.0
    %293 = vmatpush.msra.mxu0 0.0
    %294 = vmatpush.msra.mxu0 0.0
    %295 = vmatpush.msra.mxu0 0.0
    %296 = vmatpush.msra.mxu0 0.0
    %297 = vmatpush.msra.mxu0 0.0
    %298 = vmatpush.msra.mxu0 0.0
    %299 = vmatpush.msra.mxu0 0.0
    %300 = vmatpush.msra.mxu0 0.0
    %301 = vmatpush.msra.mxu0 %v98
    %302 = vmatpush.msra.mxu0 %v94
    %303 = vmatmul.f32.gmra.mxu0 %v279
    %v304 = vpop.f32.mrf.mxu0
    %v305 = vadd.f32 0.0, %v304
    %306 = vmatmul.f32.gmra.mxu0 %v281
    %v307 = vpop.f32.mrf.mxu0
    %v308 = vadd.f32 0.0, %v307
    %309 = vmatmul.f32.gmra.mxu0 %v283
    %v310 = vpop.f32.mrf.mxu0
    %v311 = vadd.f32 0.0, %v310
    %312 = vmatmul.f32.gmra.mxu0 %v285
    %v313 = vpop.f32.mrf.mxu0
    %v314 = vadd.f32 0.0, %v313
    %315 = vdwg.mxu0
    %316 = vmatpush.msra.mxu0 0.0
    %317 = vmatpush.msra.mxu0 0.0
    %318 = vmatpush.msra.mxu0 0.0
    %319 = vmatpush.msra.mxu0 0.0
    %320 = vmatpush.msra.mxu0 0.0
    %321 = vmatpush.msra.mxu0 0.0
    %322 = vmatpush.msra.mxu0 0.0
    %323 = vmatpush.msra.mxu0 0.0
    %324 = vmatpush.msra.mxu0 0.0
    %325 = vmatpush.msra.mxu0 0.0
    %326 = vmatpush.msra.mxu0 0.0
    %327 = vmatpush.msra.mxu0 0.0
    %328 = vmatpush.msra.mxu0 0.0
    %329 = vmatpush.msra.mxu0 0.0
    %330 = vmatpush.msra.mxu0 %v99
    %331 = vmatpush.msra.mxu0 %v95
    %332 = vmatmul.f32.gmra.mxu0 %v279
    %v333 = vpop.f32.mrf.mxu0
    %v334 = vadd.f32 0.0, %v333
    %335 = vmatmul.f32.gmra.mxu0 %v281
    %v336 = vpop.f32.mrf.mxu0
    %v337 = vadd.f32 0.0, %v336
    %338 = vmatmul.f32.gmra.mxu0 %v283
    %v339 = vpop.f32.mrf.mxu0
    %v340 = vadd.f32 0.0, %v339
    %341 = vmatmul.f32.gmra.mxu0 %v285
    %v342 = vpop.f32.mrf.mxu0
    %v343 = vadd.f32 0.0, %v342
    %344 = vdwg.mxu0
    %345 = vmatpush.msra.mxu0 0.0
    %346 = vmatpush.msra.mxu0 0.0
    %347 = vmatpush.msra.mxu0 0.0
    %348 = vmatpush.msra.mxu0 0.0
    %349 = vmatpush.msra.mxu0 0.0
    %350 = vmatpush.msra.mxu0 0.0
    %351 = vmatpush.msra.mxu0 0.0
    %352 = vmatpush.msra.mxu0 0.0
    %353 = vmatpush.msra.mxu0 0.0
    %354 = vmatpush.msra.mxu0 0.0
    %355 = vmatpush.msra.mxu0 0.0
    %356 = vmatpush.msra.mxu0 0.0
    %357 = vmatpush.msra.mxu0 0.0
    %358 = vmatpush.msra.mxu0 0.0
    %359 = vmatpush.msra.mxu0 %v100
    %360 = vmatpush.msra.mxu0 %v96
    %361 = vmatmul.f32.gmra.mxu0 %v279
    %v362 = vpop.f32.mrf.mxu0
    %v363 = vadd.f32 0.0, %v362
    %364 = vmatmul.f32.gmra.mxu0 %v281
    %v365 = vpop.f32.mrf.mxu0
    %v366 = vadd.f32 0.0, %v365
    %367 = vmatmul.f32.gmra.mxu0 %v283
    %v368 = vpop.f32.mrf.mxu0
    %v369 = vadd.f32 0.0, %v368
    %370 = vmatmul.f32.gmra.mxu0 %v285
    %v371 = vpop.f32.mrf.mxu0
    %v372 = vadd.f32 0.0, %v371
    %373 = vdwg.mxu0
    %374 = vmatpush.msra.mxu0 0.0
    %375 = vmatpush.msra.mxu0 0.0
    %376 = vmatpush.msra.mxu0 0.0
    %377 = vmatpush.msra.mxu0 0.0
    %378 = vmatpush.msra.mxu0 0.0
    %379 = vmatpush.msra.mxu0 0.0
    %380 = vmatpush.msra.mxu0 0.0
    %381 = vmatpush.msra.mxu0 0.0
    %382 = vmatpush.msra.mxu0 0.0
    %383 = vmatpush.msra.mxu0 0.0
    %384 = vmatpush.msra.mxu0 0.0
    %385 = vmatpush.msra.mxu0 0.0
    %386 = vmatpush.msra.mxu0 0.0
    %387 = vmatpush.msra.mxu0 0.0
    %388 = vmatpush.msra.mxu0 %v101
    %389 = vmatpush.msra.mxu0 %v97
    %390 = vmatmul.f32.gmra.mxu0 %v279
    %v391 = vpop.f32.mrf.mxu0
    %v392 = vadd.f32 0.0, %v391
    %393 = vmatmul.f32.gmra.mxu0 %v281
    %v394 = vpop.f32.mrf.mxu0
    %v395 = vadd.f32 0.0, %v394
    %396 = vmatmul.f32.gmra.mxu0 %v283
    %v397 = vpop.f32.mrf.mxu0
    %v398 = vadd.f32 0.0, %v397
    %399 = vmatmul.f32.gmra.mxu0 %v285
    %v400 = vpop.f32.mrf.mxu0
    %v401 = vadd.f32 0.0, %v400
    %402 = vdwg.mxu0
    %v403 = vmul.f32 %v62, %v305
    %v404 = vmul.f32 %v63, %v334
    %v405 = vmul.f32 %v64, %v363
    %v406 = vmul.f32 %v65, %v392
    %v407 = vmul.f32 %v66, %v308
    %v408 = vmul.f32 %v67, %v337
    %v409 = vmul.f32 %v68, %v366
    %v410 = vmul.f32 %v69, %v395
    %v411 = vmul.f32 %v70, %v311
    %v412 = vmul.f32 %v71, %v340
    %v413 = vmul.f32 %v72, %v369
    %v414 = vmul.f32 %v73, %v398
    %v415 = vmul.f32 %v74, %v314
    %v416 = vmul.f32 %v75, %v343
    %v417 = vmul.f32 %v76, %v372
    %v418 = vmul.f32 %v77, %v401
    %v419 = vadd.f32 %v403, %v407
    %v420 = vadd.f32 %v419, %v411
    %v421 = vadd.f32 %v420, %v415
    %v422 = vrot.slane %v421, 4
    %v423 = vadd.f32 %v421, %v422
    %v424 = vrot.slane %v423, 2
    %v425 = vadd.f32 %v423, %v424
    %v426 = vrot.slane %v425, 1
    %v427 = vadd.f32 %v425, %v426
    %v428 = vadd.f32 %v404, %v408
    %v429 = vadd.f32 %v428, %v412
    %v430 = vadd.f32 %v429, %v416
    %v431 = vrot.slane %v430, 4
    %v432 = vadd.f32 %v430, %v431
    %v433 = vrot.slane %v432, 2
    %v434 = vadd.f32 %v432, %v433
    %v435 = vrot.slane %v434, 1
    %v436 = vadd.f32 %v434, %v435
    %v437 = vadd.f32 %v405, %v409
    %v438 = vadd.f32 %v437, %v413
    %v439 = vadd.f32 %v438, %v417
    %v440 = vrot.slane %v439, 4
    %v441 = vadd.f32 %v439, %v440
    %v442 = vrot.slane %v441, 2
    %v443 = vadd.f32 %v441, %v442
    %v444 = vrot.slane %v443, 1
    %v445 = vadd.f32 %v443, %v444
    %v446 = vadd.f32 %v406, %v410
    %v447 = vadd.f32 %v446, %v414
    %v448 = vadd.f32 %v447, %v418
    %v449 = vrot.slane %v448, 4
    %v450 = vadd.f32 %v448, %v449
    %v451 = vrot.slane %v450, 2
    %v452 = vadd.f32 %v450, %v451
    %v453 = vrot.slane %v452, 1
    %v454 = vadd.f32 %v452, %v453
    %v455 = vmul.f32 %v62, %v427
    %v456 = vmul.f32 %v63, %v436
    %v457 = vmul.f32 %v64, %v445
    %v458 = vmul.f32 %v65, %v454
    %v459 = vmul.f32 %v66, %v427
    %v460 = vmul.f32 %v67, %v436
    %v461 = vmul.f32 %v68, %v445
    %v462 = vmul.f32 %v69, %v454
    %v463 = vmul.f32 %v70, %v427
    %v464 = vmul.f32 %v71, %v436
    %v465 = vmul.f32 %v72, %v445
    %v466 = vmul.f32 %v73, %v454
    %v467 = vmul.f32 %v74, %v427
    %v468 = vmul.f32 %v75, %v436
    %v469 = vmul.f32 %v76, %v445
    %v470 = vmul.f32 %v77, %v454
    %471 = vmatpush.xpose.msra.mxu0 0.0
    %472 = vmatpush.xpose.msra.mxu0 0.0
    %473 = vmatpush.xpose.msra.mxu0 0.0
    %474 = vmatpush.xpose.msra.mxu0 0.0
    %475 = vmatpush.xpose.msra.mxu0 0.0
    %476 = vmatpush.xpose.msra.mxu0 0.0
    %477 = vmatpush.xpose.msra.mxu0 0.0
    %478 = vmatpush.xpose.msra.mxu0 0.0
    %479 = vmatpush.xpose.msra.mxu0 0.0
    %480 = vmatpush.xpose.msra.mxu0 0.0
    %481 = vmatpush.xpose.msra.mxu0 0.0
    %482 = vmatpush.xpose.msra.mxu0 0.0
    %483 = vmatpush.xpose.msra.mxu0 %v90
    %484 = vmatpush.xpose.msra.mxu0 %v86
    %485 = vmatpush.xpose.msra.mxu0 %v82
    %486 = vmatpush.xpose.msra.mxu0 %v78
    %487 = vmatmul.f32.gmra.mxu0 %v455
    %v488 = vpop.f32.mrf.mxu0
    %v489 = vadd.f32 0.0, %v488
    %490 = vmatmul.f32.gmra.mxu0 %v459
    %v491 = vpop.f32.mrf.mxu0
    %v492 = vadd.f32 0.0, %v491
    %493 = vmatmul.f32.gmra.mxu0 %v463
    %v494 = vpop.f32.mrf.mxu0
    %v495 = vadd.f32 0.0, %v494
    %496 = vmatmul.f32.gmra.mxu0 %v467
    %v497 = vpop.f32.mrf.mxu0
    %v498 = vadd.f32 0.0, %v497
    %499 = vdwg.mxu0
    %500 = vmatpush.xpose.msra.mxu0 0.0
    %501 = vmatpush.xpose.msra.mxu0 0.0
    %502 = vmatpush.xpose.msra.mxu0 0.0
    %503 = vmatpush.xpose.msra.mxu0 0.0
    %504 = vmatpush.xpose.msra.mxu0 0.0
    %505 = vmatpush.xpose.msra.mxu0 0.0
    %506 = vmatpush.xpose.msra.mxu0 0.0
    %507 = vmatpush.xpose.msra.mxu0 0.0
    %508 = vmatpush.xpose.msra.mxu0 0.0
    %509 = vmatpush.xpose.msra.mxu0 0.0
    %510 = vmatpush.xpose.msra.mxu0 0.0
    %511 = vmatpush.xpose.msra.mxu0 0.0
    %512 = vmatpush.xpose.msra.mxu0 %v91
    %513 = vmatpush.xpose.msra.mxu0 %v87
    %514 = vmatpush.xpose.msra.mxu0 %v83
    %515 = vmatpush.xpose.msra.mxu0 %v79
    %516 = vmatmul.f32.gmra.mxu0 %v456
    %v517 = vpop.f32.mrf.mxu0
    %v518 = vadd.f32 %v489, %v517
    %519 = vmatmul.f32.gmra.mxu0 %v460
    %v520 = vpop.f32.mrf.mxu0
    %v521 = vadd.f32 %v492, %v520
    %522 = vmatmul.f32.gmra.mxu0 %v464
    %v523 = vpop.f32.mrf.mxu0
    %v524 = vadd.f32 %v495, %v523
    %525 = vmatmul.f32.gmra.mxu0 %v468
    %v526 = vpop.f32.mrf.mxu0
    %v527 = vadd.f32 %v498, %v526
    %528 = vdwg.mxu0
    %529 = vmatpush.xpose.msra.mxu0 0.0
    %530 = vmatpush.xpose.msra.mxu0 0.0
    %531 = vmatpush.xpose.msra.mxu0 0.0
    %532 = vmatpush.xpose.msra.mxu0 0.0
    %533 = vmatpush.xpose.msra.mxu0 0.0
    %534 = vmatpush.xpose.msra.mxu0 0.0
    %535 = vmatpush.xpose.msra.mxu0 0.0
    %536 = vmatpush.xpose.msra.mxu0 0.0
    %537 = vmatpush.xpose.msra.mxu0 0.0
    %538 = vmatpush.xpose.msra.mxu0 0.0
    %539 = vmatpush.xpose.msra.mxu0 0.0
    %540 = vmatpush.xpose.msra.mxu0 0.0
    %541 = vmatpush.xpose.msra.mxu0 %v92
    %542 = vmatpush.xpose.msra.mxu0 %v88
    %543 = vmatpush.xpose.msra.mxu0 %v84
    %544 = vmatpush.xpose.msra.mxu0 %v80
    %545 = vmatmul.f32.gmra.mxu0 %v457
    %v546 = vpop.f32.mrf.mxu0
    %v547 = vadd.f32 %v518, %v546
    %548 = vmatmul.f32.gmra.mxu0 %v461
    %v549 = vpop.f32.mrf.mxu0
    %v550 = vadd.f32 %v521, %v549
    %551 = vmatmul.f32.gmra.mxu0 %v465
    %v552 = vpop.f32.mrf.mxu0
    %v553 = vadd.f32 %v524, %v552
    %554 = vmatmul.f32.gmra.mxu0 %v469
    %v555 = vpop.f32.mrf.mxu0
    %v556 = vadd.f32 %v527, %v555
    %557 = vdwg.mxu0
    %558 = vmatpush.xpose.msra.mxu0 0.0
    %559 = vmatpush.xpose.msra.mxu0 0.0
    %560 = vmatpush.xpose.msra.mxu0 0.0
    %561 = vmatpush.xpose.msra.mxu0 0.0
    %562 = vmatpush.xpose.msra.mxu0 0.0
    %563 = vmatpush.xpose.msra.mxu0 0.0
    %564 = vmatpush.xpose.msra.mxu0 0.0
    %565 = vmatpush.xpose.msra.mxu0 0.0
    %566 = vmatpush.xpose.msra.mxu0 0.0
    %567 = vmatpush.xpose.msra.mxu0 0.0
    %568 = vmatpush.xpose.msra.mxu0 0.0
    %569 = vmatpush.xpose.msra.mxu0 0.0
    %570 = vmatpush.xpose.msra.mxu0 %v93
    %571 = vmatpush.xpose.msra.mxu0 %v89
    %572 = vmatpush.xpose.msra.mxu0 %v85
    %573 = vmatpush.xpose.msra.mxu0 %v81
    %574 = vmatmul.f32.gmra.mxu0 %v458
    %v575 = vpop.f32.mrf.mxu0
    %v576 = vadd.f32 %v547, %v575
    %577 = vmatmul.f32.gmra.mxu0 %v462
    %v578 = vpop.f32.mrf.mxu0
    %v579 = vadd.f32 %v550, %v578
    %580 = vmatmul.f32.gmra.mxu0 %v466
    %v581 = vpop.f32.mrf.mxu0
    %v582 = vadd.f32 %v553, %v581
    %583 = vmatmul.f32.gmra.mxu0 %v470
    %v584 = vpop.f32.mrf.mxu0
    %v585 = vadd.f32 %v556, %v584
    %586 = vdwg.mxu0
    %vm587 = vcmask 261120
    %v589 = vsel %vm587, %v102, 0
    %591 = vmatpush.msra.mxu0 0.0
    %592 = vmatpush.msra.mxu0 0.0
    %593 = vmatpush.msra.mxu0 0.0
    %594 = vmatpush.msra.mxu0 0.0
    %595 = vmatpush.msra.mxu0 0.0
    %596 = vmatpush.msra.mxu0 0.0
    %597 = vmatpush.msra.mxu0 0.0
    %598 = vmatpush.msra.mxu0 0.0
    %599 = vmatpush.msra.mxu0 0.0
    %600 = vmatpush.msra.mxu0 0.0
    %601 = vmatpush.msra.mxu0 0.0
    %602 = vmatpush.msra.mxu0 0.0
    %603 = vmatpush.msra.mxu0 %v269
    %604 = vmatpush.msra.mxu0 %v268
    %605 = vmatpush.msra.mxu0 %v267
    %606 = vmatpush.msra.mxu0 %v266
    %607 = vmatmul.f32.gmra.mxu0 %v589
    %v608 = vpop.f32.mrf.mxu0
    %v609 = vadd.f32 0.0, %v608
    %610 = vdwg.mxu0
    %v611 = vmul.f32 %v609, 0.0625
    %v612 = vld [vmem:[#allocation5 + $0x20] sm:$0xff]
    %v613 = vld [vmem:[#allocation5 + $0x28] sm:$0x1]
    %v614 = vperm.slane %v613, 0
    %v616 = vsel %vm160, %v611, 0
    %618 = vmatpush.msra.mxu0 0.0
    %619 = vmatpush.msra.mxu0 0.0
    %620 = vmatpush.msra.mxu0 0.0
    %621 = vmatpush.msra.mxu0 0.0
    %622 = vmatpush.msra.mxu0 0.0
    %623 = vmatpush.msra.mxu0 0.0
    %624 = vmatpush.msra.mxu0 0.0
    %625 = vmatpush.msra.mxu0 0.0
    %626 = vmatpush.msra.mxu0 0.0
    %627 = vmatpush.msra.mxu0 0.0
    %628 = vmatpush.msra.mxu0 0.0
    %629 = vmatpush.msra.mxu0 0.0
    %630 = vmatpush.msra.mxu0 0.0
    %631 = vmatpush.msra.mxu0 0.0
    %632 = vmatpush.msra.mxu0 0.0
    %633 = vmatpush.msra.mxu0 %v612
    %634 = vmatmul.f32.gmra.mxu0 %v616
    %v635 = vpop.f32.mrf.mxu0
    %v636 = vadd.f32 %v614, %v635
    %637 = vdwg.mxu0
    %v638 = vld [vmem:[#allocation5 + $0x30] sm:$0x1]
    %v639 = vld [vmem:[#allocation5 + $0x38] sm:$0x1]
    %vm640 = vcmask 58368
    %v641 = vsel %vm640, %v636, 0.0
    %642 = vadd.xlane.f32.xlu0 %v641
    %v643 = vpop.xlane.xlu0 %642
    %v644 = vmul.f32 %v643, %v179
    %v645 = vsub.f32 %v636, %v644
    %v646 = vmul.f32 %v645, %v645
    %v647 = vsel %vm640, %v646, 0.0
    %648 = vadd.xlane.f32.xlu0 %v647
    %v649 = vpop.xlane.xlu0 %648
    %v650 = vmul.f32 %v649, %v179
    %v651 = vadd.f32 %v650, 1e-05
    %v652 = vrsqrt.pop %v651
    %v653 = vmul.f32 %v652, %v651
    %v654 = vmul.f32 %v653, %v652
    %v655 = vmul.f32 0.5, %v654
    %v656 = vsub.f32 1.5, %v655
    %v657 = vmul.f32 %v652, %v656
    %vm658 = vweird.f32 %v651
    %vm659 = vweird.f32 %v652
    %vm660 = vmor %vm658, %vm659
    %v661 = vsel %vm660, %v652, %v657
    %v662 = vmul.f32 %v645, %v661
    %v663 = vperm.slane %v638, 0
    %v664 = vmul.f32 %v662, %v663
    %v665 = vperm.slane %v639, 0
    %v666 = vadd.f32 %v664, %v665
    %v667 = vtanh.pop %v666
    %v668 = vld [vmem:[#allocation5 + $0x40] sm:$0xff]
    %v669 = vld [vmem:[#allocation5 + $0x48] sm:$0x1]
    %v670 = vperm.slane %v669, 0
    %v672 = vsel %vm160, %v667, 0
    %674 = vmatpush.msra.mxu0 0.0
    %675 = vmatpush.msra.mxu0 0.0
    %676 = vmatpush.msra.mxu0 0.0
    %677 = vmatpush.msra.mxu0 0.0
    %678 = vmatpush.msra.mxu0 0.0
    %679 = vmatpush.msra.mxu0 0.0
    %680 = vmatpush.msra.mxu0 0.0
    %681 = vmatpush.msra.mxu0 0.0
    %682 = vmatpush.msra.mxu0 0.0
    %683 = vmatpush.msra.mxu0 0.0
    %684 = vmatpush.msra.mxu0 0.0
    %685 = vmatpush.msra.mxu0 0.0
    %686 = vmatpush.msra.mxu0 0.0
    %687 = vmatpush.msra.mxu0 0.0
    %688 = vmatpush.msra.mxu0 0.0
    %689 = vmatpush.msra.mxu0 %v668
    %690 = vmatmul.f32.gmra.mxu0 %v672
    %v691 = vpop.f32.mrf.mxu0
    %v692 = vadd.f32 %v670, %v691
    %693 = vdwg.mxu0
    %v694 = vld [vmem:[#allocation5 + $0x50] sm:$0x1]
    %v695 = vld [vmem:[#allocation5 + $0x58] sm:$0x1]
    %v696 = vsel %vm640, %v692, 0.0
    %697 = vadd.xlane.f32.xlu0 %v696
    %v698 = vpop.xlane.xlu0 %697
    %v699 = vmul.f32 %v698, %v179
    %v700 = vsub.f32 %v692, %v699
    %v701 = vmul.f32 %v700, %v700
    %v702 = vsel %vm640, %v701, 0.0
    %703 = vadd.xlane.f32.xlu0 %v702
    %v704 = vpop.xlane.xlu0 %703
    %v705 = vmul.f32 %v704, %v179
    %v706 = vadd.f32 %v705, 1e-05
    %v707 = vrsqrt.pop %v706
    %v708 = vmul.f32 %v707, %v706
    %v709 = vmul.f32 %v708, %v707
    %v710 = vmul.f32 0.5, %v709
    %v711 = vsub.f32 1.5, %v710
    %v712 = vmul.f32 %v707, %v711
    %vm713 = vweird.f32 %v706
    %vm714 = vweird.f32 %v707
    %vm715 = vmor %vm713, %vm714
    %v716 = vsel %vm715, %v707, %v712
    %v717 = vmul.f32 %v700, %v716
    %v718 = vperm.slane %v694, 0
    %v719 = vmul.f32 %v717, %v718
    %v720 = vperm.slane %v695, 0
    %v721 = vadd.f32 %v719, %v720
    %v722 = vtanh.pop %v721
    %v723 = vld [vmem:[#allocation5 + $0x60] sm:$0xff]
    %v724 = vld [vmem:[#allocation5 + $0x68] sm:$0x1]
    %v725 = vperm.slane %v724, 0
    %v727 = vsel %vm160, %v722, 0
    %729 = vmatpush.msra.mxu0 0.0
    %730 = vmatpush.msra.mxu0 0.0
    %731 = vmatpush.msra.mxu0 0.0
    %732 = vmatpush.msra.mxu0 0.0
    %733 = vmatpush.msra.mxu0 0.0
    %734 = vmatpush.msra.mxu0 0.0
    %735 = vmatpush.msra.mxu0 0.0
    %736 = vmatpush.msra.mxu0 0.0
    %737 = vmatpush.msra.mxu0 0.0
    %738 = vmatpush.msra.mxu0 0.0
    %739 = vmatpush.msra.mxu0 0.0
    %740 = vmatpush.msra.mxu0 0.0
    %741 = vmatpush.msra.mxu0 0.0
    %742 = vmatpush.msra.mxu0 0.0
    %743 = vmatpush.msra.mxu0 0.0
    %744 = vmatpush.msra.mxu0 %v723
    %745 = vmatmul.f32.gmra.mxu0 %v727
    %v746 = vpop.f32.mrf.mxu0
    %v747 = vadd.f32 %v725, %v746
    %748 = vdwg.mxu0
    %v749 = vld [vmem:[#allocation5 + $0x70] sm:$0x1]
    %v750 = vld [vmem:[#allocation5 + $0x78] sm:$0x1]
    %v751 = vsel %vm640, %v747, 0.0
    %752 = vadd.xlane.f32.xlu0 %v751
    %v753 = vpop.xlane.xlu0 %752
    %v754 = vmul.f32 %v753, %v179
    %v755 = vsub.f32 %v747, %v754
    %v756 = vmul.f32 %v755, %v755
    %v757 = vsel %vm640, %v756, 0.0
    %758 = vadd.xlane.f32.xlu0 %v757
    %v759 = vpop.xlane.xlu0 %758
    %v760 = vmul.f32 %v759, %v179
    %v761 = vadd.f32 %v760, 1e-05
    %v762 = vrsqrt.pop %v761
    %v763 = vmul.f32 %v762, %v761
    %v764 = vmul.f32 %v763, %v762
    %v765 = vmul.f32 0.5, %v764
    %v766 = vsub.f32 1.5, %v765
    %v767 = vmul.f32 %v762, %v766
    %vm768 = vweird.f32 %v761
    %vm769 = vweird.f32 %v762
    %vm770 = vmor %vm768, %vm769
    %v771 = vsel %vm770, %v762, %v767
    %v772 = vmul.f32 %v755, %v771
    %v773 = vperm.slane %v749, 0
    %v774 = vmul.f32 %v772, %v773
    %v775 = vperm.slane %v750, 0
    %v776 = vadd.f32 %v774, %v775
    %v777 = vtanh.pop %v776
    %778 = vxpose.xlu0.b32.start [1/16] %v102, 128
    %779 = vxpose.xlu0.b32.cont [2/16] 0.0, 128
    %780 = vxpose.xlu0.b32.cont [3/16] 0.0, 128
    %781 = vxpose.xlu0.b32.cont [4/16] 0.0, 128
    %782 = vxpose.xlu0.b32.cont [5/16] 0.0, 128
    %783 = vxpose.xlu0.b32.cont [6/16] 0.0, 128
    %784 = vxpose.xlu0.b32.cont [7/16] 0.0, 128
    %785 = vxpose.xlu0.b32.cont [8/16] 0.0, 128
    %786 = vxpose.xlu0.b32.cont [9/16] 0.0, 128
    %787 = vxpose.xlu0.b32.cont [10/16] 0.0, 128
    %788 = vxpose.xlu0.b32.cont [11/16] 0.0, 128
    %789 = vxpose.xlu0.b32.cont [12/16] 0.0, 128
    %790 = vxpose.xlu0.b32.cont [13/16] 0.0, 128
    %791 = vxpose.xlu0.b32.cont [14/16] 0.0, 128
    %792 = vxpose.xlu0.b32.cont [15/16] 0.0, 128
    %793 = vxpose.xlu0.b32.end [16/16] 0.0, 128
    %v794 = vpop.trf.xlu0
    %v795 = vpop.trf.xlu0
    %v796 = vpop.trf.xlu0
    %v797 = vpop.trf.xlu0
    %v798 = vpop.trf.xlu0
    %v799 = vpop.trf.xlu0
    %v800 = vpop.trf.xlu0
    %v801 = vpop.trf.xlu0
    %v802 = vpop.trf.xlu0
    %v803 = vpop.trf.xlu0
    %v804 = vpop.trf.xlu0
    %v805 = vpop.trf.xlu0
    %v806 = vpop.trf.xlu0
    %v807 = vpop.trf.xlu0
    %v808 = vpop.trf.xlu0
    %v809 = vpop.trf.xlu0
    %vm810 = vcmask 15360
    %v812 = vsel %vm810, %v794, 0
    %v815 = vsel %vm810, %v795, 0
    %v818 = vsel %vm810, %v796, 0
    %v821 = vsel %vm810, %v797, 0
    %vm823 = vcmask 1041408
    %v825 = vsel %vm823, %v777, 0
    %827 = vmatpush.msra.mxu0 0.0
    %828 = vmatpush.msra.mxu0 0.0
    %829 = vmatpush.msra.mxu0 0.0
    %830 = vmatpush.msra.mxu0 0.0
    %831 = vmatpush.msra.mxu0 0.0
    %832 = vmatpush.msra.mxu0 0.0
    %833 = vmatpush.msra.mxu0 0.0
    %834 = vmatpush.msra.mxu0 0.0
    %835 = vmatpush.msra.mxu0 0.0
    %836 = vmatpush.msra.mxu0 0.0
    %837 = vmatpush.msra.mxu0 0.0
    %838 = vmatpush.msra.mxu0 0.0
    %839 = vmatpush.msra.mxu0 0.0
    %840 = vmatpush.msra.mxu0 0.0
    %841 = vmatpush.msra.mxu0 0.0
    %842 = vmatpush.msra.mxu0 %v825
    %843 = vmatmul.f32.gmra.mxu0 %v812
    %v844 = vpop.f32.mrf.mxu0
    %v845 = vadd.f32 0.0, %v844
    %846 = vmatmul.f32.gmra.mxu0 %v815
    %v847 = vpop.f32.mrf.mxu0
    %v848 = vadd.f32 0.0, %v847
    %849 = vmatmul.f32.gmra.mxu0 %v818
    %v850 = vpop.f32.mrf.mxu0
    %v851 = vadd.f32 0.0, %v850
    %852 = vmatmul.f32.gmra.mxu0 %v821
    %v853 = vpop.f32.mrf.mxu0
    %v854 = vadd.f32 0.0, %v853
    %855 = vdwg.mxu0
    %856 = vxpose.xlu0.b32.start [1/16] %v576, 128
    %857 = vxpose.xlu0.b32.cont [2/16] %v579, 128
    %858 = vxpose.xlu0.b32.cont [3/16] %v582, 128
    %859 = vxpose.xlu0.b32.cont [4/16] %v585, 128
    %860 = vxpose.xlu0.b32.cont [5/16] 0.0, 128
    %861 = vxpose.xlu0.b32.cont [6/16] 0.0, 128
    %862 = vxpose.xlu0.b32.cont [7/16] 0.0, 128
    %863 = vxpose.xlu0.b32.cont [8/16] 0.0, 128
    %864 = vxpose.xlu0.b32.cont [9/16] 0.0, 128
    %865 = vxpose.xlu0.b32.cont [10/16] 0.0, 128
    %866 = vxpose.xlu0.b32.cont [11/16] 0.0, 128
    %867 = vxpose.xlu0.b32.cont [12/16] 0.0, 128
    %868 = vxpose.xlu0.b32.cont [13/16] 0.0, 128
    %869 = vxpose.xlu0.b32.cont [14/16] 0.0, 128
    %870 = vxpose.xlu0.b32.cont [15/16] 0.0, 128
    %871 = vxpose.xlu0.b32.end [16/16] 0.0, 128
    %v872 = vpop.trf.xlu0
    %v873 = vpop.trf.xlu0
    %v874 = vpop.trf.xlu0
    %v875 = vpop.trf.xlu0
    %v876 = vpop.trf.xlu0
    %v877 = vpop.trf.xlu0
    %v878 = vpop.trf.xlu0
    %v879 = vpop.trf.xlu0
    %v880 = vpop.trf.xlu0
    %v881 = vpop.trf.xlu0
    %v882 = vpop.trf.xlu0
    %v883 = vpop.trf.xlu0
    %v884 = vpop.trf.xlu0
    %v885 = vpop.trf.xlu0
    %v886 = vpop.trf.xlu0
    %v887 = vpop.trf.xlu0
    %v889 = vsel %vm587, %v872, 0
    %v892 = vsel %vm587, %v873, 0
    %v895 = vsel %vm587, %v874, 0
    %v898 = vsel %vm587, %v875, 0
    %900 = vmatpush.msra.mxu0 0.0
    %901 = vmatpush.msra.mxu0 0.0
    %902 = vmatpush.msra.mxu0 0.0
    %903 = vmatpush.msra.mxu0 0.0
    %904 = vmatpush.msra.mxu0 0.0
    %905 = vmatpush.msra.mxu0 0.0
    %906 = vmatpush.msra.mxu0 0.0
    %907 = vmatpush.msra.mxu0 0.0
    %908 = vmatpush.msra.mxu0 0.0
    %909 = vmatpush.msra.mxu0 0.0
    %910 = vmatpush.msra.mxu0 0.0
    %911 = vmatpush.msra.mxu0 0.0
    %912 = vmatpush.msra.mxu0 %v269
    %913 = vmatpush.msra.mxu0 %v268
    %914 = vmatpush.msra.mxu0 %v267
    %915 = vmatpush.msra.mxu0 %v266
    %916 = vmatmul.f32.gmra.mxu0 %v889
    %v917 = vpop.f32.mrf.mxu0
    %v918 = vadd.f32 0.0, %v917
    %919 = vmatmul.f32.gmra.mxu0 %v892
    %v920 = vpop.f32.mrf.mxu0
    %v921 = vadd.f32 0.0, %v920
    %922 = vmatmul.f32.gmra.mxu0 %v895
    %v923 = vpop.f32.mrf.mxu0
    %v924 = vadd.f32 0.0, %v923
    %925 = vmatmul.f32.gmra.mxu0 %v898
    %v926 = vpop.f32.mrf.mxu0
    %v927 = vadd.f32 0.0, %v926
    %928 = vdwg.mxu0
    %v930 = vsel %vm587, %v576, 0
    %v933 = vsel %vm587, %v579, 0
    %v936 = vsel %vm587, %v582, 0
    %v939 = vsel %vm587, %v585, 0
    %941 = vmatpush.msra.mxu0 0.0
    %942 = vmatpush.msra.mxu0 0.0
    %943 = vmatpush.msra.mxu0 0.0
    %944 = vmatpush.msra.mxu0 0.0
    %945 = vmatpush.msra.mxu0 0.0
    %946 = vmatpush.msra.mxu0 0.0
    %947 = vmatpush.msra.mxu0 0.0
    %948 = vmatpush.msra.mxu0 0.0
    %949 = vmatpush.msra.mxu0 0.0
    %950 = vmatpush.msra.mxu0 0.0
    %951 = vmatpush.msra.mxu0 0.0
    %952 = vmatpush.msra.mxu0 0.0
    %953 = vmatpush.msra.mxu0 %v269
    %954 = vmatpush.msra.mxu0 %v268
    %955 = vmatpush.msra.mxu0 %v267
    %956 = vmatpush.msra.mxu0 %v266
    %957 = vmatmul.f32.gmra.mxu0 %v930
    %v958 = vpop.f32.mrf.mxu0
    %v959 = vadd.f32 0.0, %v958
    %960 = vmatmul.f32.gmra.mxu0 %v933
    %v961 = vpop.f32.mrf.mxu0
    %v962 = vadd.f32 0.0, %v961
    %963 = vmatmul.f32.gmra.mxu0 %v936
    %v964 = vpop.f32.mrf.mxu0
    %v965 = vadd.f32 0.0, %v964
    %966 = vmatmul.f32.gmra.mxu0 %v939
    %v967 = vpop.f32.mrf.mxu0
    %v968 = vadd.f32 0.0, %v967
    %969 = vdwg.mxu0
    %v970 = vld [vmem:[#allocation5 + $0x80] sm:$0xff]
    %v971 = vld [vmem:[#allocation5 + $0x88] sm:$0xff]
    %v973 = vsel %vm160, %v959, 0
    %v976 = vsel %vm160, %v962, 0
    %v979 = vsel %vm160, %v965, 0
    %v982 = vsel %vm160, %v968, 0
    %984 = vmatpush.msra.mxu0 0.0
    %985 = vmatpush.msra.mxu0 0.0
    %986 = vmatpush.msra.mxu0 0.0
    %987 = vmatpush.msra.mxu0 0.0
    %988 = vmatpush.msra.mxu0 0.0
    %989 = vmatpush.msra.mxu0 0.0
    %990 = vmatpush.msra.mxu0 0.0
    %991 = vmatpush.msra.mxu0 0.0
    %992 = vmatpush.msra.mxu0 0.0
    %993 = vmatpush.msra.mxu0 0.0
    %994 = vmatpush.msra.mxu0 0.0
    %995 = vmatpush.msra.mxu0 0.0
    %996 = vmatpush.msra.mxu0 0.0
    %997 = vmatpush.msra.mxu0 0.0
    %998 = vmatpush.msra.mxu0 0.0
    %999 = vmatpush.msra.mxu0 %v971
    %1000 = vmatmul.f32.gmra.mxu0 %v973
    %v1001 = vpop.f32.mrf.mxu0
    %v1002 = vadd.f32 0.0, %v1001
    %1003 = vmatmul.f32.gmra.mxu0 %v976
    %v1004 = vpop.f32.mrf.mxu0
    %v1005 = vadd.f32 0.0, %v1004
    %1006 = vmatmul.f32.gmra.mxu0 %v979
    %v1007 = vpop.f32.mrf.mxu0
    %v1008 = vadd.f32 0.0, %v1007
    %1009 = vmatmul.f32.gmra.mxu0 %v982
    %v1010 = vpop.f32.mrf.mxu0
    %v1011 = vadd.f32 0.0, %v1010
    %1012 = vdwg.mxu0
    %v1014 = vsel %vm160, %v918, 0
    %v1017 = vsel %vm160, %v921, 0
    %v1020 = vsel %vm160, %v924, 0
    %v1023 = vsel %vm160, %v927, 0
    %1025 = vmatpush.msra.mxu0 0.0
    %1026 = vmatpush.msra.mxu0 0.0
    %1027 = vmatpush.msra.mxu0 0.0
    %1028 = vmatpush.msra.mxu0 0.0
    %1029 = vmatpush.msra.mxu0 0.0
    %1030 = vmatpush.msra.mxu0 0.0
    %1031 = vmatpush.msra.mxu0 0.0
    %1032 = vmatpush.msra.mxu0 0.0
    %1033 = vmatpush.msra.mxu0 0.0
    %1034 = vmatpush.msra.mxu0 0.0
    %1035 = vmatpush.msra.mxu0 0.0
    %1036 = vmatpush.msra.mxu0 0.0
    %1037 = vmatpush.msra.mxu0 0.0
    %1038 = vmatpush.msra.mxu0 0.0
    %1039 = vmatpush.msra.mxu0 0.0
    %1040 = vmatpush.msra.mxu0 %v970
    %1041 = vmatmul.f32.gmra.mxu0 %v1014
    %v1042 = vpop.f32.mrf.mxu0
    %v1043 = vadd.f32 %v1002, %v1042
    %1044 = vmatmul.f32.gmra.mxu0 %v1017
    %v1045 = vpop.f32.mrf.mxu0
    %v1046 = vadd.f32 %v1005, %v1045
    %1047 = vmatmul.f32.gmra.mxu0 %v1020
    %v1048 = vpop.f32.mrf.mxu0
    %v1049 = vadd.f32 %v1008, %v1048
    %1050 = vmatmul.f32.gmra.mxu0 %v1023
    %v1051 = vpop.f32.mrf.mxu0
    %v1052 = vadd.f32 %v1011, %v1051
    %1053 = vdwg.mxu0
    %v1054 = vld [vmem:[#allocation5 + $0x90] sm:$0xff]
    %v1056 = vsel %vm160, %v266, 0
    %v1059 = vsel %vm160, %v267, 0
    %v1062 = vsel %vm160, %v268, 0
    %v1065 = vsel %vm160, %v269, 0
    %1067 = vmatpush.msra.mxu0 0.0
    %1068 = vmatpush.msra.mxu0 0.0
    %1069 = vmatpush.msra.mxu0 0.0
    %1070 = vmatpush.msra.mxu0 0.0
    %1071 = vmatpush.msra.mxu0 0.0
    %1072 = vmatpush.msra.mxu0 0.0
    %1073 = vmatpush.msra.mxu0 0.0
    %1074 = vmatpush.msra.mxu0 0.0
    %1075 = vmatpush.msra.mxu0 0.0
    %1076 = vmatpush.msra.mxu0 0.0
    %1077 = vmatpush.msra.mxu0 0.0
    %1078 = vmatpush.msra.mxu0 0.0
    %1079 = vmatpush.msra.mxu0 0.0
    %1080 = vmatpush.msra.mxu0 0.0
    %1081 = vmatpush.msra.mxu0 0.0
    %1082 = vmatpush.msra.mxu0 %v1054
    %1083 = vmatmul.f32.gmra.mxu0 %v1056
    %v1084 = vpop.f32.mrf.mxu0
    %v1085 = vadd.f32 0.0, %v1084
    %1086 = vmatmul.f32.gmra.mxu0 %v1059
    %v1087 = vpop.f32.mrf.mxu0
    %v1088 = vadd.f32 0.0, %v1087
    %1089 = vmatmul.f32.gmra.mxu0 %v1062
    %v1090 = vpop.f32.mrf.mxu0
    %v1091 = vadd.f32 0.0, %v1090
    %1092 = vmatmul.f32.gmra.mxu0 %v1065
    %v1093 = vpop.f32.mrf.mxu0
    %v1094 = vadd.f32 0.0, %v1093
    %1095 = vdwg.mxu0
    %v1096 = vadd.f32 %v1043, %v1085
    %v1097 = vadd.f32 %v1046, %v1088
    %v1098 = vadd.f32 %v1049, %v1091
    %v1099 = vadd.f32 %v1052, %v1094
    %v1100 = vld [vmem:[#allocation5 + $0x98] sm:$0xff]
    %v1102 = vsel %vm160, %v845, 0
    %v1105 = vsel %vm160, %v848, 0
    %v1108 = vsel %vm160, %v851, 0
    %v1111 = vsel %vm160, %v854, 0
    %1113 = vmatpush.msra.mxu0 0.0
    %1114 = vmatpush.msra.mxu0 0.0
    %1115 = vmatpush.msra.mxu0 0.0
    %1116 = vmatpush.msra.mxu0 0.0
    %1117 = vmatpush.msra.mxu0 0.0
    %1118 = vmatpush.msra.mxu0 0.0
    %1119 = vmatpush.msra.mxu0 0.0
    %1120 = vmatpush.msra.mxu0 0.0
    %1121 = vmatpush.msra.mxu0 0.0
    %1122 = vmatpush.msra.mxu0 0.0
    %1123 = vmatpush.msra.mxu0 0.0
    %1124 = vmatpush.msra.mxu0 0.0
    %1125 = vmatpush.msra.mxu0 0.0
    %1126 = vmatpush.msra.mxu0 0.0
    %1127 = vmatpush.msra.mxu0 0.0
    %1128 = vmatpush.msra.mxu0 %v1100
    %1129 = vmatmul.f32.gmra.mxu0 %v1102
    %v1130 = vpop.f32.mrf.mxu0
    %v1131 = vadd.f32 0.0, %v1130
    %1132 = vmatmul.f32.gmra.mxu0 %v1105
    %v1133 = vpop.f32.mrf.mxu0
    %v1134 = vadd.f32 0.0, %v1133
    %1135 = vmatmul.f32.gmra.mxu0 %v1108
    %v1136 = vpop.f32.mrf.mxu0
    %v1137 = vadd.f32 0.0, %v1136
    %1138 = vmatmul.f32.gmra.mxu0 %v1111
    %v1139 = vpop.f32.mrf.mxu0
    %v1140 = vadd.f32 0.0, %v1139
    %1141 = vdwg.mxu0
    %v1142 = vadd.f32 %v1096, %v1131
    %v1143 = vadd.f32 %v1097, %v1134
    %v1144 = vadd.f32 %v1098, %v1137
    %v1145 = vadd.f32 %v1099, %v1140
    %v1146 = vld [vmem:[#allocation5 + $0xa0] sm:$0x1]
    %v1147 = vperm.slane %v1146, 0
    %v1148 = vadd.f32 %v1142, %v1147
    %v1149 = vadd.f32 %v1143, %v1147
    %v1150 = vadd.f32 %v1144, %v1147
    %v1151 = vadd.f32 %v1145, %v1147
    %v1152 = vld [vmem:[#allocation5 + $0xa8] sm:$0x1]
    %v1153 = vld [vmem:[#allocation5 + $0xb0] sm:$0x1]
    %v1154 = vsel %vm160, %v1148, 0.0
    %1155 = vadd.xlane.f32.xlu0 %v1154
    %v1156 = vpop.xlane.xlu0 %1155
    %v1157 = vsel %vm160, %v1149, 0.0
    %1158 = vadd.xlane.f32.xlu0 %v1157
    %v1159 = vpop.xlane.xlu0 %1158
    %v1160 = vsel %vm160, %v1150, 0.0
    %1161 = vadd.xlane.f32.xlu0 %v1160
    %v1162 = vpop.xlane.xlu0 %1161
    %v1163 = vsel %vm160, %v1151, 0.0
    %1164 = vadd.xlane.f32.xlu0 %v1163
    %v1165 = vpop.xlane.xlu0 %1164
    %v1166 = vmul.f32 %v1156, %v179
    %v1167 = vmul.f32 %v1159, %v179
    %v1168 = vmul.f32 %v1162, %v179
    %v1169 = vmul.f32 %v1165, %v179
    %v1170 = vsub.f32 %v1148, %v1166
    %v1171 = vsub.f32 %v1149, %v1167
    %v1172 = vsub.f32 %v1150, %v1168
    %v1173 = vsub.f32 %v1151, %v1169
    %v1174 = vmul.f32 %v1170, %v1170
    %v1175 = vmul.f32 %v1171, %v1171
    %v1176 = vmul.f32 %v1172, %v1172
    %v1177 = vmul.f32 %v1173, %v1173
    %v1178 = vsel %vm160, %v1174, 0.0
    %1179 = vadd.xlane.f32.xlu0 %v1178
    %v1180 = vpop.xlane.xlu0 %1179
    %v1181 = vsel %vm160, %v1175, 0.0
    %1182 = vadd.xlane.f32.xlu0 %v1181
    %v1183 = vpop.xlane.xlu0 %1182
    %v1184 = vsel %vm160, %v1176, 0.0
    %1185 = vadd.xlane.f32.xlu0 %v1184
    %v1186 = vpop.xlane.xlu0 %1185
    %v1187 = vsel %vm160, %v1177, 0.0
    %1188 = vadd.xlane.f32.xlu0 %v1187
    %v1189 = vpop.xlane.xlu0 %1188
    %v1190 = vmul.f32 %v1180, %v179
    %v1191 = vmul.f32 %v1183, %v179
    %v1192 = vmul.f32 %v1186, %v179
    %v1193 = vmul.f32 %v1189, %v179
    %v1194 = vadd.f32 %v1190, 1e-05
    %v1195 = vadd.f32 %v1191, 1e-05
    %v1196 = vadd.f32 %v1192, 1e-05
    %v1197 = vadd.f32 %v1193, 1e-05
    %v1198 = vrsqrt.pop %v1194
    %v1199 = vmul.f32 %v1198, %v1194
    %v1200 = vmul.f32 %v1199, %v1198
    %v1201 = vmul.f32 0.5, %v1200
    %v1202 = vsub.f32 1.5, %v1201
    %v1203 = vmul.f32 %v1198, %v1202
    %vm1204 = vweird.f32 %v1194
    %vm1205 = vweird.f32 %v1198
    %vm1206 = vmor %vm1204, %vm1205
    %v1207 = vsel %vm1206, %v1198, %v1203
    %v1208 = vrsqrt.pop %v1195
    %v1209 = vmul.f32 %v1208, %v1195
    %v1210 = vmul.f32 %v1209, %v1208
    %v1211 = vmul.f32 0.5, %v1210
    %v1212 = vsub.f32 1.5, %v1211
    %v1213 = vmul.f32 %v1208, %v1212
    %vm1214 = vweird.f32 %v1195
    %vm1215 = vweird.f32 %v1208
    %vm1216 = vmor %vm1214, %vm1215
    %v1217 = vsel %vm1216, %v1208, %v1213
    %v1218 = vrsqrt.pop %v1196
    %v1219 = vmul.f32 %v1218, %v1196
    %v1220 = vmul.f32 %v1219, %v1218
    %v1221 = vmul.f32 0.5, %v1220
    %v1222 = vsub.f32 1.5, %v1221
    %v1223 = vmul.f32 %v1218, %v1222
    %vm1224 = vweird.f32 %v1196
    %vm1225 = vweird.f32 %v1218
    %vm1226 = vmor %vm1224, %vm1225
    %v1227 = vsel %vm1226, %v1218, %v1223
    %v1228 = vrsqrt.pop %v1197
    %v1229 = vmul.f32 %v1228, %v1197
    %v1230 = vmul.f32 %v1229, %v1228
    %v1231 = vmul.f32 0.5, %v1230
    %v1232 = vsub.f32 1.5, %v1231
    %v1233 = vmul.f32 %v1228, %v1232
    %vm1234 = vweird.f32 %v1197
    %vm1235 = vweird.f32 %v1228
    %vm1236 = vmor %vm1234, %vm1235
    %v1237 = vsel %vm1236, %v1228, %v1233
    %v1238 = vmul.f32 %v1170, %v1207
    %v1239 = vmul.f32 %v1171, %v1217
    %v1240 = vmul.f32 %v1172, %v1227
    %v1241 = vmul.f32 %v1173, %v1237
    %v1242 = vperm.slane %v1152, 0
    %v1243 = vmul.f32 %v1238, %v1242
    %v1244 = vmul.f32 %v1239, %v1242
    %v1245 = vmul.f32 %v1240, %v1242
    %v1246 = vmul.f32 %v1241, %v1242
    %v1247 = vperm.slane %v1153, 0
    %v1248 = vadd.f32 %v1243, %v1247
    %v1249 = vadd.f32 %v1244, %v1247
    %v1250 = vadd.f32 %v1245, %v1247
    %v1251 = vadd.f32 %v1246, %v1247
    %v1252 = vtanh.pop %v1248
    %v1253 = vtanh.pop %v1249
    %v1254 = vtanh.pop %v1250
    %v1255 = vtanh.pop %v1251
    %v1256 = vld [vmem:[#allocation5 + $0xb8] sm:$0xff]
    %v1257 = vld [vmem:[#allocation5 + $0xc0] sm:$0x1]
    %v1258 = vperm.slane %v1257, 0
    %v1260 = vsel %vm160, %v1252, 0
    %v1263 = vsel %vm160, %v1253, 0
    %v1266 = vsel %vm160, %v1254, 0
    %v1269 = vsel %vm160, %v1255, 0
    %1271 = vmatpush.msra.mxu0 0.0
    %1272 = vmatpush.msra.mxu0 0.0
    %1273 = vmatpush.msra.mxu0 0.0
    %1274 = vmatpush.msra.mxu0 0.0
    %1275 = vmatpush.msra.mxu0 0.0
    %1276 = vmatpush.msra.mxu0 0.0
    %1277 = vmatpush.msra.mxu0 0.0
    %1278 = vmatpush.msra.mxu0 0.0
    %1279 = vmatpush.msra.mxu0 0.0
    %1280 = vmatpush.msra.mxu0 0.0
    %1281 = vmatpush.msra.mxu0 0.0
    %1282 = vmatpush.msra.mxu0 0.0
    %1283 = vmatpush.msra.mxu0 0.0
    %1284 = vmatpush.msra.mxu0 0.0
    %1285 = vmatpush.msra.mxu0 0.0
    %1286 = vmatpush.msra.mxu0 %v1256
    %1287 = vmatmul.f32.gmra.mxu0 %v1260
    %v1288 = vpop.f32.mrf.mxu0
    %v1289 = vadd.f32 %v1258, %v1288
    %1290 = vmatmul.f32.gmra.mxu0 %v1263
    %v1291 = vpop.f32.mrf.mxu0
    %v1292 = vadd.f32 %v1258, %v1291
    %1293 = vmatmul.f32.gmra.mxu0 %v1266
    %v1294 = vpop.f32.mrf.mxu0
    %v1295 = vadd.f32 %v1258, %v1294
    %1296 = vmatmul.f32.gmra.mxu0 %v1269
    %v1297 = vpop.f32.mrf.mxu0
    %v1298 = vadd.f32 %v1258, %v1297
    %1299 = vdwg.mxu0
    %v1300 = vld [vmem:[#allocation5 + $0xc8] sm:$0x1]
    %v1301 = vld [vmem:[#allocation5 + $0xd0] sm:$0x1]
    %v1302 = vsel %vm160, %v1289, 0.0
    %1303 = vadd.xlane.f32.xlu0 %v1302
    %v1304 = vpop.xlane.xlu0 %1303
    %v1305 = vsel %vm160, %v1292, 0.0
    %1306 = vadd.xlane.f32.xlu0 %v1305
    %v1307 = vpop.xlane.xlu0 %1306
    %v1308 = vsel %vm160, %v1295, 0.0
    %1309 = vadd.xlane.f32.xlu0 %v1308
    %v1310 = vpop.xlane.xlu0 %1309
    %v1311 = vsel %vm160, %v1298, 0.0
    %1312 = vadd.xlane.f32.xlu0 %v1311
    %v1313 = vpop.xlane.xlu0 %1312
    %v1314 = vmul.f32 %v1304, %v179
    %v1315 = vmul.f32 %v1307, %v179
    %v1316 = vmul.f32 %v1310, %v179
    %v1317 = vmul.f32 %v1313, %v179
    %v1318 = vsub.f32 %v1289, %v1314
    %v1319 = vsub.f32 %v1292, %v1315
    %v1320 = vsub.f32 %v1295, %v1316
    %v1321 = vsub.f32 %v1298, %v1317
    %v1322 = vmul.f32 %v1318, %v1318
    %v1323 = vmul.f32 %v1319, %v1319
    %v1324 = vmul.f32 %v1320, %v1320
    %v1325 = vmul.f32 %v1321, %v1321
    %v1326 = vsel %vm160, %v1322, 0.0
    %1327 = vadd.xlane.f32.xlu0 %v1326
    %v1328 = vpop.xlane.xlu0 %1327
    %v1329 = vsel %vm160, %v1323, 0.0
    %1330 = vadd.xlane.f32.xlu0 %v1329
    %v1331 = vpop.xlane.xlu0 %1330
    %v1332 = vsel %vm160, %v1324, 0.0
    %1333 = vadd.xlane.f32.xlu0 %v1332
    %v1334 = vpop.xlane.xlu0 %1333
    %v1335 = vsel %vm160, %v1325, 0.0
    %1336 = vadd.xlane.f32.xlu0 %v1335
    %v1337 = vpop.xlane.xlu0 %1336
    %v1338 = vmul.f32 %v1328, %v179
    %v1339 = vmul.f32 %v1331, %v179
    %v1340 = vmul.f32 %v1334, %v179
    %v1341 = vmul.f32 %v1337, %v179
    %v1342 = vadd.f32 %v1338, 1e-05
    %v1343 = vadd.f32 %v1339, 1e-05
    %v1344 = vadd.f32 %v1340, 1e-05
    %v1345 = vadd.f32 %v1341, 1e-05
    %v1346 = vrsqrt.pop %v1342
    %v1347 = vmul.f32 %v1346, %v1342
    %v1348 = vmul.f32 %v1347, %v1346
    %v1349 = vmul.f32 0.5, %v1348
    %v1350 = vsub.f32 1.5, %v1349
    %v1351 = vmul.f32 %v1346, %v1350
    %vm1352 = vweird.f32 %v1342
    %vm1353 = vweird.f32 %v1346
    %vm1354 = vmor %vm1352, %vm1353
    %v1355 = vsel %vm1354, %v1346, %v1351
    %v1356 = vrsqrt.pop %v1343
    %v1357 = vmul.f32 %v1356, %v1343
    %v1358 = vmul.f32 %v1357, %v1356
    %v1359 = vmul.f32 0.5, %v1358
    %v1360 = vsub.f32 1.5, %v1359
    %v1361 = vmul.f32 %v1356, %v1360
    %vm1362 = vweird.f32 %v1343
    %vm1363 = vweird.f32 %v1356
    %vm1364 = vmor %vm1362, %vm1363
    %v1365 = vsel %vm1364, %v1356, %v1361
    %v1366 = vrsqrt.pop %v1344
    %v1367 = vmul.f32 %v1366, %v1344
    %v1368 = vmul.f32 %v1367, %v1366
    %v1369 = vmul.f32 0.5, %v1368
    %v1370 = vsub.f32 1.5, %v1369
    %v1371 = vmul.f32 %v1366, %v1370
    %vm1372 = vweird.f32 %v1344
    %vm1373 = vweird.f32 %v1366
    %vm1374 = vmor %vm1372, %vm1373
    %v1375 = vsel %vm1374, %v1366, %v1371
    %v1376 = vrsqrt.pop %v1345
    %v1377 = vmul.f32 %v1376, %v1345
    %v1378 = vmul.f32 %v1377, %v1376
    %v1379 = vmul.f32 0.5, %v1378
    %v1380 = vsub.f32 1.5, %v1379
    %v1381 = vmul.f32 %v1376, %v1380
    %vm1382 = vweird.f32 %v1345
    %vm1383 = vweird.f32 %v1376
    %vm1384 = vmor %vm1382, %vm1383
    %v1385 = vsel %vm1384, %v1376, %v1381
    %v1386 = vmul.f32 %v1318, %v1355
    %v1387 = vmul.f32 %v1319, %v1365
    %v1388 = vmul.f32 %v1320, %v1375
    %v1389 = vmul.f32 %v1321, %v1385
    %v1390 = vperm.slane %v1300, 0
    %v1391 = vmul.f32 %v1386, %v1390
    %v1392 = vmul.f32 %v1387, %v1390
    %v1393 = vmul.f32 %v1388, %v1390
    %v1394 = vmul.f32 %v1389, %v1390
    %v1395 = vperm.slane %v1301, 0
    %v1396 = vadd.f32 %v1391, %v1395
    %v1397 = vadd.f32 %v1392, %v1395
    %v1398 = vadd.f32 %v1393, %v1395
    %v1399 = vadd.f32 %v1394, %v1395
    %v1400 = vtanh.pop %v1396
    %v1401 = vtanh.pop %v1397
    %v1402 = vtanh.pop %v1398
    %v1403 = vtanh.pop %v1399
    %v1404 = vld [vmem:[#allocation5 + $0xd8] sm:$0xff]
    %v1405 = vld [vmem:[#allocation5 + $0xe0] sm:$0x1]
    %v1406 = vperm.slane %v1405, 0
    %v1408 = vsel %vm160, %v1400, 0
    %v1411 = vsel %vm160, %v1401, 0
    %v1414 = vsel %vm160, %v1402, 0
    %v1417 = vsel %vm160, %v1403, 0
    %1419 = vmatpush.msra.mxu0 0.0
    %1420 = vmatpush.msra.mxu0 0.0
    %1421 = vmatpush.msra.mxu0 0.0
    %1422 = vmatpush.msra.mxu0 0.0
    %1423 = vmatpush.msra.mxu0 0.0
    %1424 = vmatpush.msra.mxu0 0.0
    %1425 = vmatpush.msra.mxu0 0.0
    %1426 = vmatpush.msra.mxu0 0.0
    %1427 = vmatpush.msra.mxu0 0.0
    %1428 = vmatpush.msra.mxu0 0.0
    %1429 = vmatpush.msra.mxu0 0.0
    %1430 = vmatpush.msra.mxu0 0.0
    %1431 = vmatpush.msra.mxu0 0.0
    %1432 = vmatpush.msra.mxu0 0.0
    %1433 = vmatpush.msra.mxu0 0.0
    %1434 = vmatpush.msra.mxu0 %v1404
    %1435 = vmatmul.f32.gmra.mxu0 %v1408
    %v1436 = vpop.f32.mrf.mxu0
    %v1437 = vadd.f32 %v1406, %v1436
    %1438 = vmatmul.f32.gmra.mxu0 %v1411
    %v1439 = vpop.f32.mrf.mxu0
    %v1440 = vadd.f32 %v1406, %v1439
    %1441 = vmatmul.f32.gmra.mxu0 %v1414
    %v1442 = vpop.f32.mrf.mxu0
    %v1443 = vadd.f32 %v1406, %v1442
    %1444 = vmatmul.f32.gmra.mxu0 %v1417
    %v1445 = vpop.f32.mrf.mxu0
    %v1446 = vadd.f32 %v1406, %v1445
    %1447 = vdwg.mxu0
    %v1448 = vld [vmem:[#allocation5 + $0xe8] sm:$0x1]
    %v1449 = vld [vmem:[#allocation5 + $0xf0] sm:$0x1]
    %v1450 = vsel %vm160, %v1437, 0.0
    %1451 = vadd.xlane.f32.xlu0 %v1450
    %v1452 = vpop.xlane.xlu0 %1451
    %v1453 = vsel %vm160, %v1440, 0.0
    %1454 = vadd.xlane.f32.xlu0 %v1453
    %v1455 = vpop.xlane.xlu0 %1454
    %v1456 = vsel %vm160, %v1443, 0.0
    %1457 = vadd.xlane.f32.xlu0 %v1456
    %v1458 = vpop.xlane.xlu0 %1457
    %v1459 = vsel %vm160, %v1446, 0.0
    %1460 = vadd.xlane.f32.xlu0 %v1459
    %v1461 = vpop.xlane.xlu0 %1460
    %v1462 = vmul.f32 %v1452, %v179
    %v1463 = vmul.f32 %v1455, %v179
    %v1464 = vmul.f32 %v1458, %v179
    %v1465 = vmul.f32 %v1461, %v179
    %v1466 = vsub.f32 %v1437, %v1462
    %v1467 = vsub.f32 %v1440, %v1463
    %v1468 = vsub.f32 %v1443, %v1464
    %v1469 = vsub.f32 %v1446, %v1465
    %v1470 = vmul.f32 %v1466, %v1466
    %v1471 = vmul.f32 %v1467, %v1467
    %v1472 = vmul.f32 %v1468, %v1468
    %v1473 = vmul.f32 %v1469, %v1469
    %v1474 = vsel %vm160, %v1470, 0.0
    %1475 = vadd.xlane.f32.xlu0 %v1474
    %v1476 = vpop.xlane.xlu0 %1475
    %v1477 = vsel %vm160, %v1471, 0.0
    %1478 = vadd.xlane.f32.xlu0 %v1477
    %v1479 = vpop.xlane.xlu0 %1478
    %v1480 = vsel %vm160, %v1472, 0.0
    %1481 = vadd.xlane.f32.xlu0 %v1480
    %v1482 = vpop.xlane.xlu0 %1481
    %v1483 = vsel %vm160, %v1473, 0.0
    %1484 = vadd.xlane.f32.xlu0 %v1483
    %v1485 = vpop.xlane.xlu0 %1484
    %v1486 = vmul.f32 %v1476, %v179
    %v1487 = vmul.f32 %v1479, %v179
    %v1488 = vmul.f32 %v1482, %v179
    %v1489 = vmul.f32 %v1485, %v179
    %v1490 = vadd.f32 %v1486, 1e-05
    %v1491 = vadd.f32 %v1487, 1e-05
    %v1492 = vadd.f32 %v1488, 1e-05
    %v1493 = vadd.f32 %v1489, 1e-05
    %v1494 = vrsqrt.pop %v1490
    %v1495 = vmul.f32 %v1494, %v1490
    %v1496 = vmul.f32 %v1495, %v1494
    %v1497 = vmul.f32 0.5, %v1496
    %v1498 = vsub.f32 1.5, %v1497
    %v1499 = vmul.f32 %v1494, %v1498
    %vm1500 = vweird.f32 %v1490
    %vm1501 = vweird.f32 %v1494
    %vm1502 = vmor %vm1500, %vm1501
    %v1503 = vsel %vm1502, %v1494, %v1499
    %v1504 = vrsqrt.pop %v1491
    %v1505 = vmul.f32 %v1504, %v1491
    %v1506 = vmul.f32 %v1505, %v1504
    %v1507 = vmul.f32 0.5, %v1506
    %v1508 = vsub.f32 1.5, %v1507
    %v1509 = vmul.f32 %v1504, %v1508
    %vm1510 = vweird.f32 %v1491
    %vm1511 = vweird.f32 %v1504
    %vm1512 = vmor %vm1510, %vm1511
    %v1513 = vsel %vm1512, %v1504, %v1509
    %v1514 = vrsqrt.pop %v1492
    %v1515 = vmul.f32 %v1514, %v1492
    %v1516 = vmul.f32 %v1515, %v1514
    %v1517 = vmul.f32 0.5, %v1516
    %v1518 = vsub.f32 1.5, %v1517
    %v1519 = vmul.f32 %v1514, %v1518
    %vm1520 = vweird.f32 %v1492
    %vm1521 = vweird.f32 %v1514
    %vm1522 = vmor %vm1520, %vm1521
    %v1523 = vsel %vm1522, %v1514, %v1519
    %v1524 = vrsqrt.pop %v1493
    %v1525 = vmul.f32 %v1524, %v1493
    %v1526 = vmul.f32 %v1525, %v1524
    %v1527 = vmul.f32 0.5, %v1526
    %v1528 = vsub.f32 1.5, %v1527
    %v1529 = vmul.f32 %v1524, %v1528
    %vm1530 = vweird.f32 %v1493
    %vm1531 = vweird.f32 %v1524
    %vm1532 = vmor %vm1530, %vm1531
    %v1533 = vsel %vm1532, %v1524, %v1529
    %v1534 = vmul.f32 %v1466, %v1503
    %v1535 = vmul.f32 %v1467, %v1513
    %v1536 = vmul.f32 %v1468, %v1523
    %v1537 = vmul.f32 %v1469, %v1533
    %v1538 = vperm.slane %v1448, 0
    %v1539 = vmul.f32 %v1534, %v1538
    %v1540 = vmul.f32 %v1535, %v1538
    %v1541 = vmul.f32 %v1536, %v1538
    %v1542 = vmul.f32 %v1537, %v1538
    %v1543 = vperm.slane %v1449, 0
    %v1544 = vadd.f32 %v1539, %v1543
    %v1545 = vadd.f32 %v1540, %v1543
    %v1546 = vadd.f32 %v1541, %v1543
    %v1547 = vadd.f32 %v1542, %v1543
    %v1548 = vtanh.pop %v1544
    %v1549 = vtanh.pop %v1545
    %v1550 = vtanh.pop %v1546
    %v1551 = vtanh.pop %v1547
    %v1552 = vld [vmem:[#allocation5 + $0xf8] sm:$0xff]
    %v1553 = vld [vmem:[#allocation5 + $0x100] sm:$0x1]
    %v1554 = vperm.slane %v1553, 0
    %v1556 = vsel %vm160, %v1548, 0
    %v1559 = vsel %vm160, %v1549, 0
    %v1562 = vsel %vm160, %v1550, 0
    %v1565 = vsel %vm160, %v1551, 0
    %1567 = vmatpush.msra.mxu0 0.0
    %1568 = vmatpush.msra.mxu0 0.0
    %1569 = vmatpush.msra.mxu0 0.0
    %1570 = vmatpush.msra.mxu0 0.0
    %1571 = vmatpush.msra.mxu0 0.0
    %1572 = vmatpush.msra.mxu0 0.0
    %1573 = vmatpush.msra.mxu0 0.0
    %1574 = vmatpush.msra.mxu0 0.0
    %1575 = vmatpush.msra.mxu0 0.0
    %1576 = vmatpush.msra.mxu0 0.0
    %1577 = vmatpush.msra.mxu0 0.0
    %1578 = vmatpush.msra.mxu0 0.0
    %1579 = vmatpush.msra.mxu0 0.0
    %1580 = vmatpush.msra.mxu0 0.0
    %1581 = vmatpush.msra.mxu0 0.0
    %1582 = vmatpush.msra.mxu0 %v1552
    %1583 = vmatmul.f32.gmra.mxu0 %v1556
    %v1584 = vpop.f32.mrf.mxu0
    %v1585 = vadd.f32 %v1554, %v1584
    %1586 = vmatmul.f32.gmra.mxu0 %v1559
    %v1587 = vpop.f32.mrf.mxu0
    %v1588 = vadd.f32 %v1554, %v1587
    %1589 = vmatmul.f32.gmra.mxu0 %v1562
    %v1590 = vpop.f32.mrf.mxu0
    %v1591 = vadd.f32 %v1554, %v1590
    %1592 = vmatmul.f32.gmra.mxu0 %v1565
    %v1593 = vpop.f32.mrf.mxu0
    %v1594 = vadd.f32 %v1554, %v1593
    %1595 = vdwg.mxu0
    %v1596 = vld [vmem:[#allocation5 + $0x108] sm:$0x1]
    %v1597 = vld [vmem:[#allocation5 + $0x110] sm:$0x1]
    %v1598 = vsel %vm160, %v1585, 0.0
    %1599 = vadd.xlane.f32.xlu0 %v1598
    %v1600 = vpop.xlane.xlu0 %1599
    %v1601 = vsel %vm160, %v1588, 0.0
    %1602 = vadd.xlane.f32.xlu0 %v1601
    %v1603 = vpop.xlane.xlu0 %1602
    %v1604 = vsel %vm160, %v1591, 0.0
    %1605 = vadd.xlane.f32.xlu0 %v1604
    %v1606 = vpop.xlane.xlu0 %1605
    %v1607 = vsel %vm160, %v1594, 0.0
    %1608 = vadd.xlane.f32.xlu0 %v1607
    %v1609 = vpop.xlane.xlu0 %1608
    %v1610 = vmul.f32 %v1600, %v179
    %v1611 = vmul.f32 %v1603, %v179
    %v1612 = vmul.f32 %v1606, %v179
    %v1613 = vmul.f32 %v1609, %v179
    %v1614 = vsub.f32 %v1585, %v1610
    %v1615 = vsub.f32 %v1588, %v1611
    %v1616 = vsub.f32 %v1591, %v1612
    %v1617 = vsub.f32 %v1594, %v1613
    %v1618 = vmul.f32 %v1614, %v1614
    %v1619 = vmul.f32 %v1615, %v1615
    %v1620 = vmul.f32 %v1616, %v1616
    %v1621 = vmul.f32 %v1617, %v1617
    %v1622 = vsel %vm160, %v1618, 0.0
    %1623 = vadd.xlane.f32.xlu0 %v1622
    %v1624 = vpop.xlane.xlu0 %1623
    %v1625 = vsel %vm160, %v1619, 0.0
    %1626 = vadd.xlane.f32.xlu0 %v1625
    %v1627 = vpop.xlane.xlu0 %1626
    %v1628 = vsel %vm160, %v1620, 0.0
    %1629 = vadd.xlane.f32.xlu0 %v1628
    %v1630 = vpop.xlane.xlu0 %1629
    %v1631 = vsel %vm160, %v1621, 0.0
    %1632 = vadd.xlane.f32.xlu0 %v1631
    %v1633 = vpop.xlane.xlu0 %1632
    %v1634 = vmul.f32 %v1624, %v179
    %v1635 = vmul.f32 %v1627, %v179
    %v1636 = vmul.f32 %v1630, %v179
    %v1637 = vmul.f32 %v1633, %v179
    %v1638 = vadd.f32 %v1634, 1e-05
    %v1639 = vadd.f32 %v1635, 1e-05
    %v1640 = vadd.f32 %v1636, 1e-05
    %v1641 = vadd.f32 %v1637, 1e-05
    %v1642 = vrsqrt.pop %v1638
    %v1643 = vmul.f32 %v1642, %v1638
    %v1644 = vmul.f32 %v1643, %v1642
    %v1645 = vmul.f32 0.5, %v1644
    %v1646 = vsub.f32 1.5, %v1645
    %v1647 = vmul.f32 %v1642, %v1646
    %vm1648 = vweird.f32 %v1638
    %vm1649 = vweird.f32 %v1642
    %vm1650 = vmor %vm1648, %vm1649
    %v1651 = vsel %vm1650, %v1642, %v1647
    %v1652 = vrsqrt.pop %v1639
    %v1653 = vmul.f32 %v1652, %v1639
    %v1654 = vmul.f32 %v1653, %v1652
    %v1655 = vmul.f32 0.5, %v1654
    %v1656 = vsub.f32 1.5, %v1655
    %v1657 = vmul.f32 %v1652, %v1656
    %vm1658 = vweird.f32 %v1639
    %vm1659 = vweird.f32 %v1652
    %vm1660 = vmor %vm1658, %vm1659
    %v1661 = vsel %vm1660, %v1652, %v1657
    %v1662 = vrsqrt.pop %v1640
    %v1663 = vmul.f32 %v1662, %v1640
    %v1664 = vmul.f32 %v1663, %v1662
    %v1665 = vmul.f32 0.5, %v1664
    %v1666 = vsub.f32 1.5, %v1665
    %v1667 = vmul.f32 %v1662, %v1666
    %vm1668 = vweird.f32 %v1640
    %vm1669 = vweird.f32 %v1662
    %vm1670 = vmor %vm1668, %vm1669
    %v1671 = vsel %vm1670, %v1662, %v1667
    %v1672 = vrsqrt.pop %v1641
    %v1673 = vmul.f32 %v1672, %v1641
    %v1674 = vmul.f32 %v1673, %v1672
    %v1675 = vmul.f32 0.5, %v1674
    %v1676 = vsub.f32 1.5, %v1675
    %v1677 = vmul.f32 %v1672, %v1676
    %vm1678 = vweird.f32 %v1641
    %vm1679 = vweird.f32 %v1672
    %vm1680 = vmor %vm1678, %vm1679
    %v1681 = vsel %vm1680, %v1672, %v1677
    %v1682 = vmul.f32 %v1614, %v1651
    %v1683 = vmul.f32 %v1615, %v1661
    %v1684 = vmul.f32 %v1616, %v1671
    %v1685 = vmul.f32 %v1617, %v1681
    %v1686 = vperm.slane %v1596, 0
    %v1687 = vmul.f32 %v1682, %v1686
    %v1688 = vmul.f32 %v1683, %v1686
    %v1689 = vmul.f32 %v1684, %v1686
    %v1690 = vmul.f32 %v1685, %v1686
    %v1691 = vperm.slane %v1597, 0
    %v1692 = vadd.f32 %v1687, %v1691
    %v1693 = vadd.f32 %v1688, %v1691
    %v1694 = vadd.f32 %v1689, %v1691
    %v1695 = vadd.f32 %v1690, %v1691
    %v1696 = vtanh.pop %v1692
    %v1697 = vtanh.pop %v1693
    %v1698 = vtanh.pop %v1694
    %v1699 = vtanh.pop %v1695
    %v1700 = vld [vmem:[#allocation5 + $0x120] sm:$0xff]
    %v1701 = vld [vmem:[#allocation5 + $0x128] sm:$0xff]
    %1702 = vmatpush.msra.mxu0 0.0
    %1703 = vmatpush.msra.mxu0 0.0
    %1704 = vmatpush.msra.mxu0 0.0
    %1705 = vmatpush.msra.mxu0 0.0
    %1706 = vmatpush.msra.mxu0 0.0
    %1707 = vmatpush.msra.mxu0 0.0
    %1708 = vmatpush.msra.mxu0 0.0
    %1709 = vmatpush.msra.mxu0 0.0
    %1710 = vmatpush.msra.mxu0 0.0
    %1711 = vmatpush.msra.mxu0 0.0
    %1712 = vmatpush.msra.mxu0 0.0
    %1713 = vmatpush.msra.mxu0 0.0
    %1714 = vmatpush.msra.mxu0 0.0
    %1715 = vmatpush.msra.mxu0 0.0
    %1716 = vmatpush.msra.mxu0 0.0
    %1717 = vmatpush.msra.mxu0 %v1701
    %1718 = vmatmul.f32.gmra.mxu0 %v1102
    %v1719 = vpop.f32.mrf.mxu0
    %v1720 = vadd.f32 0.0, %v1719
    %1721 = vmatmul.f32.gmra.mxu0 %v1105
    %v1722 = vpop.f32.mrf.mxu0
    %v1723 = vadd.f32 0.0, %v1722
    %1724 = vmatmul.f32.gmra.mxu0 %v1108
    %v1725 = vpop.f32.mrf.mxu0
    %v1726 = vadd.f32 0.0, %v1725
    %1727 = vmatmul.f32.gmra.mxu0 %v1111
    %v1728 = vpop.f32.mrf.mxu0
    %v1729 = vadd.f32 0.0, %v1728
    %1730 = vdwg.mxu0
    %v1732 = vsel %vm160, %v1696, 0
    %v1735 = vsel %vm160, %v1697, 0
    %v1738 = vsel %vm160, %v1698, 0
    %v1741 = vsel %vm160, %v1699, 0
    %1743 = vmatpush.msra.mxu0 0.0
    %1744 = vmatpush.msra.mxu0 0.0
    %1745 = vmatpush.msra.mxu0 0.0
    %1746 = vmatpush.msra.mxu0 0.0
    %1747 = vmatpush.msra.mxu0 0.0
    %1748 = vmatpush.msra.mxu0 0.0
    %1749 = vmatpush.msra.mxu0 0.0
    %1750 = vmatpush.msra.mxu0 0.0
    %1751 = vmatpush.msra.mxu0 0.0
    %1752 = vmatpush.msra.mxu0 0.0
    %1753 = vmatpush.msra.mxu0 0.0
    %1754 = vmatpush.msra.mxu0 0.0
    %1755 = vmatpush.msra.mxu0 0.0
    %1756 = vmatpush.msra.mxu0 0.0
    %1757 = vmatpush.msra.mxu0 0.0
    %1758 = vmatpush.msra.mxu0 %v1700
    %1759 = vmatmul.f32.gmra.mxu0 %v1732
    %v1760 = vpop.f32.mrf.mxu0
    %v1761 = vadd.f32 %v1720, %v1760
    %1762 = vmatmul.f32.gmra.mxu0 %v1735
    %v1763 = vpop.f32.mrf.mxu0
    %v1764 = vadd.f32 %v1723, %v1763
    %1765 = vmatmul.f32.gmra.mxu0 %v1738
    %v1766 = vpop.f32.mrf.mxu0
    %v1767 = vadd.f32 %v1726, %v1766
    %1768 = vmatmul.f32.gmra.mxu0 %v1741
    %v1769 = vpop.f32.mrf.mxu0
    %v1770 = vadd.f32 %v1729, %v1769
    %1771 = vdwg.mxu0
    %v1772 = vld [vmem:[#allocation5 + $0x130] sm:$0x1]
    %v1773 = vperm.slane %v1772, 0
    %v1774 = vadd.f32 %v1761, %v1773
    %v1775 = vadd.f32 %v1764, %v1773
    %v1776 = vadd.f32 %v1767, %v1773
    %v1777 = vadd.f32 %v1770, %v1773
    %v1778 = vld [vmem:[#allocation5 + $0x118] sm:$0xff]
    %1779 = vmatpush.msra.mxu0 0.0
    %1780 = vmatpush.msra.mxu0 0.0
    %1781 = vmatpush.msra.mxu0 0.0
    %1782 = vmatpush.msra.mxu0 0.0
    %1783 = vmatpush.msra.mxu0 0.0
    %1784 = vmatpush.msra.mxu0 0.0
    %1785 = vmatpush.msra.mxu0 0.0
    %1786 = vmatpush.msra.mxu0 0.0
    %1787 = vmatpush.msra.mxu0 0.0
    %1788 = vmatpush.msra.mxu0 0.0
    %1789 = vmatpush.msra.mxu0 0.0
    %1790 = vmatpush.msra.mxu0 0.0
    %1791 = vmatpush.msra.mxu0 0.0
    %1792 = vmatpush.msra.mxu0 0.0
    %1793 = vmatpush.msra.mxu0 0.0
    %1794 = vmatpush.msra.mxu0 %v1778
    %1795 = vmatmul.f32.gmra.mxu0 %v1732
    %v1796 = vpop.f32.mrf.mxu0
    %v1797 = vadd.f32 0.0, %v1796
    %1798 = vmatmul.f32.gmra.mxu0 %v1735
    %v1799 = vpop.f32.mrf.mxu0
    %v1800 = vadd.f32 0.0, %v1799
    %1801 = vmatmul.f32.gmra.mxu0 %v1738
    %v1802 = vpop.f32.mrf.mxu0
    %v1803 = vadd.f32 0.0, %v1802
    %1804 = vmatmul.f32.gmra.mxu0 %v1741
    %v1805 = vpop.f32.mrf.mxu0
    %v1806 = vadd.f32 0.0, %v1805
    %1807 = vdwg.mxu0
    %1808 = vxpose.xlu0.b32.start [1/16] %v1797, 128
    %1809 = vxpose.xlu0.b32.cont [2/16] %v1800, 128
    %1810 = vxpose.xlu0.b32.cont [3/16] %v1803, 128
    %1811 = vxpose.xlu0.b32.cont [4/16] %v1806, 128
    %1812 = vxpose.xlu0.b32.cont [5/16] 0.0, 128
    %1813 = vxpose.xlu0.b32.cont [6/16] 0.0, 128
    %1814 = vxpose.xlu0.b32.cont [7/16] 0.0, 128
    %1815 = vxpose.xlu0.b32.cont [8/16] 0.0, 128
    %1816 = vxpose.xlu0.b32.cont [9/16] 0.0, 128
    %1817 = vxpose.xlu0.b32.cont [10/16] 0.0, 128
    %1818 = vxpose.xlu0.b32.cont [11/16] 0.0, 128
    %1819 = vxpose.xlu0.b32.cont [12/16] 0.0, 128
    %1820 = vxpose.xlu0.b32.cont [13/16] 0.0, 128
    %1821 = vxpose.xlu0.b32.cont [14/16] 0.0, 128
    %1822 = vxpose.xlu0.b32.cont [15/16] 0.0, 128
    %1823 = vxpose.xlu0.b32.end [16/16] 0.0, 128
    %v1824 = vpop.trf.xlu0
    %v1825 = vpop.trf.xlu0
    %v1826 = vpop.trf.xlu0
    %v1827 = vpop.trf.xlu0
    %v1828 = vpop.trf.xlu0
    %v1829 = vpop.trf.xlu0
    %v1830 = vpop.trf.xlu0
    %v1831 = vpop.trf.xlu0
    %v1832 = vpop.trf.xlu0
    %v1833 = vpop.trf.xlu0
    %v1834 = vpop.trf.xlu0
    %v1835 = vpop.trf.xlu0
    %v1836 = vpop.trf.xlu0
    %v1837 = vpop.trf.xlu0
    %v1838 = vpop.trf.xlu0
    %v1839 = vpop.trf.xlu0
    %v1841 = vsel %vm587, %v1824, 0
    %1843 = vmatpush.msra.mxu0 0.0
    %1844 = vmatpush.msra.mxu0 0.0
    %1845 = vmatpush.msra.mxu0 0.0
    %1846 = vmatpush.msra.mxu0 0.0
    %1847 = vmatpush.msra.mxu0 0.0
    %1848 = vmatpush.msra.mxu0 0.0
    %1849 = vmatpush.msra.mxu0 0.0
    %1850 = vmatpush.msra.mxu0 0.0
    %1851 = vmatpush.msra.mxu0 0.0
    %1852 = vmatpush.msra.mxu0 0.0
    %1853 = vmatpush.msra.mxu0 0.0
    %1854 = vmatpush.msra.mxu0 0.0
    %1855 = vmatpush.msra.mxu0 %v90
    %1856 = vmatpush.msra.mxu0 %v86
    %1857 = vmatpush.msra.mxu0 %v82
    %1858 = vmatpush.msra.mxu0 %v78
    %1859 = vmatmul.f32.gmra.mxu0 %v1841
    %v1860 = vpop.f32.mrf.mxu0
    %v1861 = vadd.f32 0.0, %v1860
    %1862 = vdwg.mxu0
    %1863 = vmatpush.msra.mxu0 0.0
    %1864 = vmatpush.msra.mxu0 0.0
    %1865 = vmatpush.msra.mxu0 0.0
    %1866 = vmatpush.msra.mxu0 0.0
    %1867 = vmatpush.msra.mxu0 0.0
    %1868 = vmatpush.msra.mxu0 0.0
    %1869 = vmatpush.msra.mxu0 0.0
    %1870 = vmatpush.msra.mxu0 0.0
    %1871 = vmatpush.msra.mxu0 0.0
    %1872 = vmatpush.msra.mxu0 0.0
    %1873 = vmatpush.msra.mxu0 0.0
    %1874 = vmatpush.msra.mxu0 0.0
    %1875 = vmatpush.msra.mxu0 %v91
    %1876 = vmatpush.msra.mxu0 %v87
    %1877 = vmatpush.msra.mxu0 %v83
    %1878 = vmatpush.msra.mxu0 %v79
    %1879 = vmatmul.f32.gmra.mxu0 %v1841
    %v1880 = vpop.f32.mrf.mxu0
    %v1881 = vadd.f32 0.0, %v1880
    %1882 = vdwg.mxu0
    %1883 = vmatpush.msra.mxu0 0.0
    %1884 = vmatpush.msra.mxu0 0.0
    %1885 = vmatpush.msra.mxu0 0.0
    %1886 = vmatpush.msra.mxu0 0.0
    %1887 = vmatpush.msra.mxu0 0.0
    %1888 = vmatpush.msra.mxu0 0.0
    %1889 = vmatpush.msra.mxu0 0.0
    %1890 = vmatpush.msra.mxu0 0.0
    %1891 = vmatpush.msra.mxu0 0.0
    %1892 = vmatpush.msra.mxu0 0.0
    %1893 = vmatpush.msra.mxu0 0.0
    %1894 = vmatpush.msra.mxu0 0.0
    %1895 = vmatpush.msra.mxu0 %v92
    %1896 = vmatpush.msra.mxu0 %v88
    %1897 = vmatpush.msra.mxu0 %v84
    %1898 = vmatpush.msra.mxu0 %v80
    %1899 = vmatmul.f32.gmra.mxu0 %v1841
    %v1900 = vpop.f32.mrf.mxu0
    %v1901 = vadd.f32 0.0, %v1900
    %1902 = vdwg.mxu0
    %1903 = vmatpush.msra.mxu0 0.0
    %1904 = vmatpush.msra.mxu0 0.0
    %1905 = vmatpush.msra.mxu0 0.0
    %1906 = vmatpush.msra.mxu0 0.0
    %1907 = vmatpush.msra.mxu0 0.0
    %1908 = vmatpush.msra.mxu0 0.0
    %1909 = vmatpush.msra.mxu0 0.0
    %1910 = vmatpush.msra.mxu0 0.0
    %1911 = vmatpush.msra.mxu0 0.0
    %1912 = vmatpush.msra.mxu0 0.0
    %1913 = vmatpush.msra.mxu0 0.0
    %1914 = vmatpush.msra.mxu0 0.0
    %1915 = vmatpush.msra.mxu0 %v93
    %1916 = vmatpush.msra.mxu0 %v89
    %1917 = vmatpush.msra.mxu0 %v85
    %1918 = vmatpush.msra.mxu0 %v81
    %1919 = vmatmul.f32.gmra.mxu0 %v1841
    %v1920 = vpop.f32.mrf.mxu0
    %v1921 = vadd.f32 0.0, %v1920
    %1922 = vdwg.mxu0
    %1923 = vxpose.xlu0.b32.start [1/16] %v1774, 128
    %1924 = vxpose.xlu0.b32.cont [2/16] %v1775, 128
    %1925 = vxpose.xlu0.b32.cont [3/16] %v1776, 128
    %1926 = vxpose.xlu0.b32.cont [4/16] %v1777, 128
    %1927 = vxpose.xlu0.b32.cont [5/16] 0.0, 128
    %1928 = vxpose.xlu0.b32.cont [6/16] 0.0, 128
    %1929 = vxpose.xlu0.b32.cont [7/16] 0.0, 128
    %1930 = vxpose.xlu0.b32.cont [8/16] 0.0, 128
    %1931 = vxpose.xlu0.b32.cont [9/16] 0.0, 128
    %1932 = vxpose.xlu0.b32.cont [10/16] 0.0, 128
    %1933 = vxpose.xlu0.b32.cont [11/16] 0.0, 128
    %1934 = vxpose.xlu0.b32.cont [12/16] 0.0, 128
    %1935 = vxpose.xlu0.b32.cont [13/16] 0.0, 128
    %1936 = vxpose.xlu0.b32.cont [14/16] 0.0, 128
    %1937 = vxpose.xlu0.b32.cont [15/16] 0.0, 128
    %1938 = vxpose.xlu0.b32.end [16/16] 0.0, 128
    %v1939 = vpop.trf.xlu0
    %v1940 = vpop.trf.xlu0
    %v1941 = vpop.trf.xlu0
    %v1942 = vpop.trf.xlu0
    %v1943 = vpop.trf.xlu0
    %v1944 = vpop.trf.xlu0
    %v1945 = vpop.trf.xlu0
    %v1946 = vpop.trf.xlu0
    %v1947 = vpop.trf.xlu0
    %v1948 = vpop.trf.xlu0
    %v1949 = vpop.trf.xlu0
    %v1950 = vpop.trf.xlu0
    %v1951 = vpop.trf.xlu0
    %v1952 = vpop.trf.xlu0
    %v1953 = vpop.trf.xlu0
    %v1954 = vpop.trf.xlu0
    %v1956 = vsel %vm587, %v1939, 0
    %1958 = vmatpush.msra.mxu0 0.0
    %1959 = vmatpush.msra.mxu0 0.0
    %1960 = vmatpush.msra.mxu0 0.0
    %1961 = vmatpush.msra.mxu0 0.0
    %1962 = vmatpush.msra.mxu0 0.0
    %1963 = vmatpush.msra.mxu0 0.0
    %1964 = vmatpush.msra.mxu0 0.0
    %1965 = vmatpush.msra.mxu0 0.0
    %1966 = vmatpush.msra.mxu0 0.0
    %1967 = vmatpush.msra.mxu0 0.0
    %1968 = vmatpush.msra.mxu0 0.0
    %1969 = vmatpush.msra.mxu0 0.0
    %1970 = vmatpush.msra.mxu0 %v74
    %1971 = vmatpush.msra.mxu0 %v70
    %1972 = vmatpush.msra.mxu0 %v66
    %1973 = vmatpush.msra.mxu0 %v62
    %1974 = vmatmul.f32.gmra.mxu0 %v1956
    %v1975 = vpop.f32.mrf.mxu0
    %v1976 = vadd.f32 %v1861, %v1975
    %1977 = vdwg.mxu0
    %1978 = vmatpush.msra.mxu0 0.0
    %1979 = vmatpush.msra.mxu0 0.0
    %1980 = vmatpush.msra.mxu0 0.0
    %1981 = vmatpush.msra.mxu0 0.0
    %1982 = vmatpush.msra.mxu0 0.0
    %1983 = vmatpush.msra.mxu0 0.0
    %1984 = vmatpush.msra.mxu0 0.0
    %1985 = vmatpush.msra.mxu0 0.0
    %1986 = vmatpush.msra.mxu0 0.0
    %1987 = vmatpush.msra.mxu0 0.0
    %1988 = vmatpush.msra.mxu0 0.0
    %1989 = vmatpush.msra.mxu0 0.0
    %1990 = vmatpush.msra.mxu0 %v75
    %1991 = vmatpush.msra.mxu0 %v71
    %1992 = vmatpush.msra.mxu0 %v67
    %1993 = vmatpush.msra.mxu0 %v63
    %1994 = vmatmul.f32.gmra.mxu0 %v1956
    %v1995 = vpop.f32.mrf.mxu0
    %v1996 = vadd.f32 %v1881, %v1995
    %1997 = vdwg.mxu0
    %1998 = vmatpush.msra.mxu0 0.0
    %1999 = vmatpush.msra.mxu0 0.0
    %2000 = vmatpush.msra.mxu0 0.0
    %2001 = vmatpush.msra.mxu0 0.0
    %2002 = vmatpush.msra.mxu0 0.0
    %2003 = vmatpush.msra.mxu0 0.0
    %2004 = vmatpush.msra.mxu0 0.0
    %2005 = vmatpush.msra.mxu0 0.0
    %2006 = vmatpush.msra.mxu0 0.0
    %2007 = vmatpush.msra.mxu0 0.0
    %2008 = vmatpush.msra.mxu0 0.0
    %2009 = vmatpush.msra.mxu0 0.0
    %2010 = vmatpush.msra.mxu0 %v76
    %2011 = vmatpush.msra.mxu0 %v72
    %2012 = vmatpush.msra.mxu0 %v68
    %2013 = vmatpush.msra.mxu0 %v64
    %2014 = vmatmul.f32.gmra.mxu0 %v1956
    %v2015 = vpop.f32.mrf.mxu0
    %v2016 = vadd.f32 %v1901, %v2015
    %2017 = vdwg.mxu0
    %2018 = vmatpush.msra.mxu0 0.0
    %2019 = vmatpush.msra.mxu0 0.0
    %2020 = vmatpush.msra.mxu0 0.0
    %2021 = vmatpush.msra.mxu0 0.0
    %2022 = vmatpush.msra.mxu0 0.0
    %2023 = vmatpush.msra.mxu0 0.0
    %2024 = vmatpush.msra.mxu0 0.0
    %2025 = vmatpush.msra.mxu0 0.0
    %2026 = vmatpush.msra.mxu0 0.0
    %2027 = vmatpush.msra.mxu0 0.0
    %2028 = vmatpush.msra.mxu0 0.0
    %2029 = vmatpush.msra.mxu0 0.0
    %2030 = vmatpush.msra.mxu0 %v77
    %2031 = vmatpush.msra.mxu0 %v73
    %2032 = vmatpush.msra.mxu0 %v69
    %2033 = vmatpush.msra.mxu0 %v65
    %2034 = vmatmul.f32.gmra.mxu0 %v1956
    %v2035 = vpop.f32.mrf.mxu0
    %v2036 = vadd.f32 %v1921, %v2035
    %2037 = vdwg.mxu0
    %v2038 = vld [vmem:[#allocation5 + $0x138] sm:$0xff]
    %2040 = vset.pattern.permute.xlu0 0
    %2041 = vperm.xlu0 %2040, %v2038
    %v2042 = vpop.permute.xlu0 %2041
    %v2044 = vmul.f32 %v2042, %v427
    %v2045 = vmul.f32 %v2042, %v436
    %v2046 = vmul.f32 %v2042, %v445
    %v2047 = vmul.f32 %v2042, %v454
    %v2048 = vadd.f32 %v1976, %v2044
    %v2049 = vadd.f32 %v1996, %v2045
    %v2050 = vadd.f32 %v2016, %v2046
    %v2051 = vadd.f32 %v2036, %v2047
    %v2052 = vtanh.pop %v2048
    %v2053 = vtanh.pop %v2049
    %v2054 = vtanh.pop %v2050
    %v2055 = vtanh.pop %v2051
    %v2056 = vld [vmem:[#allocation5 + $0x140] sm:$0xff]
    %v2057 = vld [vmem:[#allocation5 + $0x148] sm:$0xff]
    %2059 = vset.pattern.permute.xlu0 0
    %2060 = vperm.xlu0 %2059, %v2057
    %v2061 = vpop.permute.xlu0 %2060
    %v2064 = vsel %vm160, %v2056, 0
    %2066 = vmatpush.msra.mxu0 0.0
    %2067 = vmatpush.msra.mxu0 0.0
    %2068 = vmatpush.msra.mxu0 0.0
    %2069 = vmatpush.msra.mxu0 0.0
    %2070 = vmatpush.msra.mxu0 0.0
    %2071 = vmatpush.msra.mxu0 0.0
    %2072 = vmatpush.msra.mxu0 0.0
    %2073 = vmatpush.msra.mxu0 0.0
    %2074 = vmatpush.msra.mxu0 0.0
    %2075 = vmatpush.msra.mxu0 0.0
    %2076 = vmatpush.msra.mxu0 0.0
    %2077 = vmatpush.msra.mxu0 0.0
    %2078 = vmatpush.msra.mxu0 0.0
    %2079 = vmatpush.msra.mxu0 0.0
    %2080 = vmatpush.msra.mxu0 0.0
    %2081 = vmatpush.msra.mxu0 %v2052
    %2082 = vmatmul.f32.gmra.mxu0 %v2064
    %v2083 = vpop.f32.mrf.mxu0
    %v2084 = vadd.f32 %v2061, %v2083
    %2085 = vdwg.mxu0
    %2086 = vmatpush.msra.mxu0 0.0
    %2087 = vmatpush.msra.mxu0 0.0
    %2088 = vmatpush.msra.mxu0 0.0
    %2089 = vmatpush.msra.mxu0 0.0
    %2090 = vmatpush.msra.mxu0 0.0
    %2091 = vmatpush.msra.mxu0 0.0
    %2092 = vmatpush.msra.mxu0 0.0
    %2093 = vmatpush.msra.mxu0 0.0
    %2094 = vmatpush.msra.mxu0 0.0
    %2095 = vmatpush.msra.mxu0 0.0
    %2096 = vmatpush.msra.mxu0 0.0
    %2097 = vmatpush.msra.mxu0 0.0
    %2098 = vmatpush.msra.mxu0 0.0
    %2099 = vmatpush.msra.mxu0 0.0
    %2100 = vmatpush.msra.mxu0 0.0
    %2101 = vmatpush.msra.mxu0 %v2053
    %2102 = vmatmul.f32.gmra.mxu0 %v2064
    %v2103 = vpop.f32.mrf.mxu0
    %v2104 = vadd.f32 %v2061, %v2103
    %2105 = vdwg.mxu0
    %2106 = vmatpush.msra.mxu0 0.0
    %2107 = vmatpush.msra.mxu0 0.0
    %2108 = vmatpush.msra.mxu0 0.0
    %2109 = vmatpush.msra.mxu0 0.0
    %2110 = vmatpush.msra.mxu0 0.0
    %2111 = vmatpush.msra.mxu0 0.0
    %2112 = vmatpush.msra.mxu0 0.0
    %2113 = vmatpush.msra.mxu0 0.0
    %2114 = vmatpush.msra.mxu0 0.0
    %2115 = vmatpush.msra.mxu0 0.0
    %2116 = vmatpush.msra.mxu0 0.0
    %2117 = vmatpush.msra.mxu0 0.0
    %2118 = vmatpush.msra.mxu0 0.0
    %2119 = vmatpush.msra.mxu0 0.0
    %2120 = vmatpush.msra.mxu0 0.0
    %2121 = vmatpush.msra.mxu0 %v2054
    %2122 = vmatmul.f32.gmra.mxu0 %v2064
    %v2123 = vpop.f32.mrf.mxu0
    %v2124 = vadd.f32 %v2061, %v2123
    %2125 = vdwg.mxu0
    %2126 = vmatpush.msra.mxu0 0.0
    %2127 = vmatpush.msra.mxu0 0.0
    %2128 = vmatpush.msra.mxu0 0.0
    %2129 = vmatpush.msra.mxu0 0.0
    %2130 = vmatpush.msra.mxu0 0.0
    %2131 = vmatpush.msra.mxu0 0.0
    %2132 = vmatpush.msra.mxu0 0.0
    %2133 = vmatpush.msra.mxu0 0.0
    %2134 = vmatpush.msra.mxu0 0.0
    %2135 = vmatpush.msra.mxu0 0.0
    %2136 = vmatpush.msra.mxu0 0.0
    %2137 = vmatpush.msra.mxu0 0.0
    %2138 = vmatpush.msra.mxu0 0.0
    %2139 = vmatpush.msra.mxu0 0.0
    %2140 = vmatpush.msra.mxu0 0.0
    %2141 = vmatpush.msra.mxu0 %v2055
    %2142 = vmatmul.f32.gmra.mxu0 %v2064
    %v2143 = vpop.f32.mrf.mxu0
    %v2144 = vadd.f32 %v2061, %v2143
    %2145 = vdwg.mxu0
    %v2146 = vtanh.pop %v2084
    %v2147 = vtanh.pop %v2104
    %v2148 = vtanh.pop %v2124
    %v2149 = vtanh.pop %v2144
    %v2150 = vld [vmem:[#allocation5 + $0x150] sm:$0xff]
    %v2151 = vld [vmem:[#allocation5 + $0x158] sm:$0xff]
    %2153 = vset.pattern.permute.xlu0 0
    %2154 = vperm.xlu0 %2153, %v2151
    %v2155 = vpop.permute.xlu0 %2154
    %v2158 = vsel %vm160, %v2150, 0
    %2160 = vmatpush.msra.mxu0 0.0
    %2161 = vmatpush.msra.mxu0 0.0
    %2162 = vmatpush.msra.mxu0 0.0
    %2163 = vmatpush.msra.mxu0 0.0
    %2164 = vmatpush.msra.mxu0 0.0
    %2165 = vmatpush.msra.mxu0 0.0
    %2166 = vmatpush.msra.mxu0 0.0
    %2167 = vmatpush.msra.mxu0 0.0
    %2168 = vmatpush.msra.mxu0 0.0
    %2169 = vmatpush.msra.mxu0 0.0
    %2170 = vmatpush.msra.mxu0 0.0
    %2171 = vmatpush.msra.mxu0 0.0
    %2172 = vmatpush.msra.mxu0 0.0
    %2173 = vmatpush.msra.mxu0 0.0
    %2174 = vmatpush.msra.mxu0 0.0
    %2175 = vmatpush.msra.mxu0 %v2146
    %2176 = vmatmul.f32.gmra.mxu0 %v2158
    %v2177 = vpop.f32.mrf.mxu0
    %v2178 = vadd.f32 %v2155, %v2177
    %2179 = vdwg.mxu0
    %2180 = vmatpush.msra.mxu0 0.0
    %2181 = vmatpush.msra.mxu0 0.0
    %2182 = vmatpush.msra.mxu0 0.0
    %2183 = vmatpush.msra.mxu0 0.0
    %2184 = vmatpush.msra.mxu0 0.0
    %2185 = vmatpush.msra.mxu0 0.0
    %2186 = vmatpush.msra.mxu0 0.0
    %2187 = vmatpush.msra.mxu0 0.0
    %2188 = vmatpush.msra.mxu0 0.0
    %2189 = vmatpush.msra.mxu0 0.0
    %2190 = vmatpush.msra.mxu0 0.0
    %2191 = vmatpush.msra.mxu0 0.0
    %2192 = vmatpush.msra.mxu0 0.0
    %2193 = vmatpush.msra.mxu0 0.0
    %2194 = vmatpush.msra.mxu0 0.0
    %2195 = vmatpush.msra.mxu0 %v2147
    %2196 = vmatmul.f32.gmra.mxu0 %v2158
    %v2197 = vpop.f32.mrf.mxu0
    %v2198 = vadd.f32 %v2155, %v2197
    %2199 = vdwg.mxu0
    %2200 = vmatpush.msra.mxu0 0.0
    %2201 = vmatpush.msra.mxu0 0.0
    %2202 = vmatpush.msra.mxu0 0.0
    %2203 = vmatpush.msra.mxu0 0.0
    %2204 = vmatpush.msra.mxu0 0.0
    %2205 = vmatpush.msra.mxu0 0.0
    %2206 = vmatpush.msra.mxu0 0.0
    %2207 = vmatpush.msra.mxu0 0.0
    %2208 = vmatpush.msra.mxu0 0.0
    %2209 = vmatpush.msra.mxu0 0.0
    %2210 = vmatpush.msra.mxu0 0.0
    %2211 = vmatpush.msra.mxu0 0.0
    %2212 = vmatpush.msra.mxu0 0.0
    %2213 = vmatpush.msra.mxu0 0.0
    %2214 = vmatpush.msra.mxu0 0.0
    %2215 = vmatpush.msra.mxu0 %v2148
    %2216 = vmatmul.f32.gmra.mxu0 %v2158
    %v2217 = vpop.f32.mrf.mxu0
    %v2218 = vadd.f32 %v2155, %v2217
    %2219 = vdwg.mxu0
    %2220 = vmatpush.msra.mxu0 0.0
    %2221 = vmatpush.msra.mxu0 0.0
    %2222 = vmatpush.msra.mxu0 0.0
    %2223 = vmatpush.msra.mxu0 0.0
    %2224 = vmatpush.msra.mxu0 0.0
    %2225 = vmatpush.msra.mxu0 0.0
    %2226 = vmatpush.msra.mxu0 0.0
    %2227 = vmatpush.msra.mxu0 0.0
    %2228 = vmatpush.msra.mxu0 0.0
    %2229 = vmatpush.msra.mxu0 0.0
    %2230 = vmatpush.msra.mxu0 0.0
    %2231 = vmatpush.msra.mxu0 0.0
    %2232 = vmatpush.msra.mxu0 0.0
    %2233 = vmatpush.msra.mxu0 0.0
    %2234 = vmatpush.msra.mxu0 0.0
    %2235 = vmatpush.msra.mxu0 %v2149
    %2236 = vmatmul.f32.gmra.mxu0 %v2158
    %v2237 = vpop.f32.mrf.mxu0
    %v2238 = vadd.f32 %v2155, %v2237
    %2239 = vdwg.mxu0
    %v2240 = vtanh.pop %v2178
    %v2241 = vtanh.pop %v2198
    %v2242 = vtanh.pop %v2218
    %v2243 = vtanh.pop %v2238
    %v2244 = vld [vmem:[#allocation5 + $0x160] sm:$0xff]
    %v2245 = vld [vmem:[#allocation5 + $0x168] sm:$0xff]
    %2247 = vset.pattern.permute.xlu0 0
    %2248 = vperm.xlu0 %2247, %v2245
    %v2249 = vpop.permute.xlu0 %2248
    %v2252 = vsel %vm160, %v2244, 0
    %2254 = vmatpush.msra.mxu0 0.0
    %2255 = vmatpush.msra.mxu0 0.0
    %2256 = vmatpush.msra.mxu0 0.0
    %2257 = vmatpush.msra.mxu0 0.0
    %2258 = vmatpush.msra.mxu0 0.0
    %2259 = vmatpush.msra.mxu0 0.0
    %2260 = vmatpush.msra.mxu0 0.0
    %2261 = vmatpush.msra.mxu0 0.0
    %2262 = vmatpush.msra.mxu0 0.0
    %2263 = vmatpush.msra.mxu0 0.0
    %2264 = vmatpush.msra.mxu0 0.0
    %2265 = vmatpush.msra.mxu0 0.0
    %2266 = vmatpush.msra.mxu0 0.0
    %2267 = vmatpush.msra.mxu0 0.0
    %2268 = vmatpush.msra.mxu0 0.0
    %2269 = vmatpush.msra.mxu0 %v2240
    %2270 = vmatmul.f32.gmra.mxu0 %v2252
    %v2271 = vpop.f32.mrf.mxu0
    %v2272 = vadd.f32 %v2249, %v2271
    %2273 = vdwg.mxu0
    %2274 = vmatpush.msra.mxu0 0.0
    %2275 = vmatpush.msra.mxu0 0.0
    %2276 = vmatpush.msra.mxu0 0.0
    %2277 = vmatpush.msra.mxu0 0.0
    %2278 = vmatpush.msra.mxu0 0.0
    %2279 = vmatpush.msra.mxu0 0.0
    %2280 = vmatpush.msra.mxu0 0.0
    %2281 = vmatpush.msra.mxu0 0.0
    %2282 = vmatpush.msra.mxu0 0.0
    %2283 = vmatpush.msra.mxu0 0.0
    %2284 = vmatpush.msra.mxu0 0.0
    %2285 = vmatpush.msra.mxu0 0.0
    %2286 = vmatpush.msra.mxu0 0.0
    %2287 = vmatpush.msra.mxu0 0.0
    %2288 = vmatpush.msra.mxu0 0.0
    %2289 = vmatpush.msra.mxu0 %v2241
    %2290 = vmatmul.f32.gmra.mxu0 %v2252
    %v2291 = vpop.f32.mrf.mxu0
    %v2292 = vadd.f32 %v2249, %v2291
    %2293 = vdwg.mxu0
    %2294 = vmatpush.msra.mxu0 0.0
    %2295 = vmatpush.msra.mxu0 0.0
    %2296 = vmatpush.msra.mxu0 0.0
    %2297 = vmatpush.msra.mxu0 0.0
    %2298 = vmatpush.msra.mxu0 0.0
    %2299 = vmatpush.msra.mxu0 0.0
    %2300 = vmatpush.msra.mxu0 0.0
    %2301 = vmatpush.msra.mxu0 0.0
    %2302 = vmatpush.msra.mxu0 0.0
    %2303 = vmatpush.msra.mxu0 0.0
    %2304 = vmatpush.msra.mxu0 0.0
    %2305 = vmatpush.msra.mxu0 0.0
    %2306 = vmatpush.msra.mxu0 0.0
    %2307 = vmatpush.msra.mxu0 0.0
    %2308 = vmatpush.msra.mxu0 0.0
    %2309 = vmatpush.msra.mxu0 %v2242
    %2310 = vmatmul.f32.gmra.mxu0 %v2252
    %v2311 = vpop.f32.mrf.mxu0
    %v2312 = vadd.f32 %v2249, %v2311
    %2313 = vdwg.mxu0
    %2314 = vmatpush.msra.mxu0 0.0
    %2315 = vmatpush.msra.mxu0 0.0
    %2316 = vmatpush.msra.mxu0 0.0
    %2317 = vmatpush.msra.mxu0 0.0
    %2318 = vmatpush.msra.mxu0 0.0
    %2319 = vmatpush.msra.mxu0 0.0
    %2320 = vmatpush.msra.mxu0 0.0
    %2321 = vmatpush.msra.mxu0 0.0
    %2322 = vmatpush.msra.mxu0 0.0
    %2323 = vmatpush.msra.mxu0 0.0
    %2324 = vmatpush.msra.mxu0 0.0
    %2325 = vmatpush.msra.mxu0 0.0
    %2326 = vmatpush.msra.mxu0 0.0
    %2327 = vmatpush.msra.mxu0 0.0
    %2328 = vmatpush.msra.mxu0 0.0
    %2329 = vmatpush.msra.mxu0 %v2243
    %2330 = vmatmul.f32.gmra.mxu0 %v2252
    %v2331 = vpop.f32.mrf.mxu0
    %v2332 = vadd.f32 %v2249, %v2331
    %2333 = vdwg.mxu0
    %v2334 = vtanh.pop %v2272
    %v2335 = vtanh.pop %v2292
    %v2336 = vtanh.pop %v2312
    %v2337 = vtanh.pop %v2332
    %v2338 = vld [vmem:[#allocation5 + $0x170] sm:$0x1]
    %v2339 = vld [vmem:[#allocation5 + $0x178] sm:$0x1]
    %2341 = vset.pattern.permute.xlu0 0
    %2342 = vperm.xlu0 %2341, %v2339
    %v2343 = vpop.permute.xlu0 %2342
    %v2346 = vsel %vm160, %v2338, 0
    %2348 = vmatpush.msra.mxu0 0.0
    %2349 = vmatpush.msra.mxu0 0.0
    %2350 = vmatpush.msra.mxu0 0.0
    %2351 = vmatpush.msra.mxu0 0.0
    %2352 = vmatpush.msra.mxu0 0.0
    %2353 = vmatpush.msra.mxu0 0.0
    %2354 = vmatpush.msra.mxu0 0.0
    %2355 = vmatpush.msra.mxu0 0.0
    %2356 = vmatpush.msra.mxu0 0.0
    %2357 = vmatpush.msra.mxu0 0.0
    %2358 = vmatpush.msra.mxu0 0.0
    %2359 = vmatpush.msra.mxu0 0.0
    %2360 = vmatpush.msra.mxu0 0.0
    %2361 = vmatpush.msra.mxu0 0.0
    %2362 = vmatpush.msra.mxu0 0.0
    %2363 = vmatpush.msra.mxu0 %v2334
    %2364 = vmatmul.f32.gmra.mxu0 %v2346
    %v2365 = vpop.f32.mrf.mxu0
    %v2366 = vadd.f32 %v2343, %v2365
    %2367 = vdwg.mxu0
    %2368 = vmatpush.msra.mxu0 0.0
    %2369 = vmatpush.msra.mxu0 0.0
    %2370 = vmatpush.msra.mxu0 0.0
    %2371 = vmatpush.msra.mxu0 0.0
    %2372 = vmatpush.msra.mxu0 0.0
    %2373 = vmatpush.msra.mxu0 0.0
    %2374 = vmatpush.msra.mxu0 0.0
    %2375 = vmatpush.msra.mxu0 0.0
    %2376 = vmatpush.msra.mxu0 0.0
    %2377 = vmatpush.msra.mxu0 0.0
    %2378 = vmatpush.msra.mxu0 0.0
    %2379 = vmatpush.msra.mxu0 0.0
    %2380 = vmatpush.msra.mxu0 0.0
    %2381 = vmatpush.msra.mxu0 0.0
    %2382 = vmatpush.msra.mxu0 0.0
    %2383 = vmatpush.msra.mxu0 %v2335
    %2384 = vmatmul.f32.gmra.mxu0 %v2346
    %v2385 = vpop.f32.mrf.mxu0
    %v2386 = vadd.f32 %v2343, %v2385
    %2387 = vdwg.mxu0
    %2388 = vmatpush.msra.mxu0 0.0
    %2389 = vmatpush.msra.mxu0 0.0
    %2390 = vmatpush.msra.mxu0 0.0
    %2391 = vmatpush.msra.mxu0 0.0
    %2392 = vmatpush.msra.mxu0 0.0
    %2393 = vmatpush.msra.mxu0 0.0
    %2394 = vmatpush.msra.mxu0 0.0
    %2395 = vmatpush.msra.mxu0 0.0
    %2396 = vmatpush.msra.mxu0 0.0
    %2397 = vmatpush.msra.mxu0 0.0
    %2398 = vmatpush.msra.mxu0 0.0
    %2399 = vmatpush.msra.mxu0 0.0
    %2400 = vmatpush.msra.mxu0 0.0
    %2401 = vmatpush.msra.mxu0 0.0
    %2402 = vmatpush.msra.mxu0 0.0
    %2403 = vmatpush.msra.mxu0 %v2336
    %2404 = vmatmul.f32.gmra.mxu0 %v2346
    %v2405 = vpop.f32.mrf.mxu0
    %v2406 = vadd.f32 %v2343, %v2405
    %2407 = vdwg.mxu0
    %2408 = vmatpush.msra.mxu0 0.0
    %2409 = vmatpush.msra.mxu0 0.0
    %2410 = vmatpush.msra.mxu0 0.0
    %2411 = vmatpush.msra.mxu0 0.0
    %2412 = vmatpush.msra.mxu0 0.0
    %2413 = vmatpush.msra.mxu0 0.0
    %2414 = vmatpush.msra.mxu0 0.0
    %2415 = vmatpush.msra.mxu0 0.0
    %2416 = vmatpush.msra.mxu0 0.0
    %2417 = vmatpush.msra.mxu0 0.0
    %2418 = vmatpush.msra.mxu0 0.0
    %2419 = vmatpush.msra.mxu0 0.0
    %2420 = vmatpush.msra.mxu0 0.0
    %2421 = vmatpush.msra.mxu0 0.0
    %2422 = vmatpush.msra.mxu0 0.0
    %2423 = vmatpush.msra.mxu0 %v2337
    %2424 = vmatmul.f32.gmra.mxu0 %v2346
    %v2425 = vpop.f32.mrf.mxu0
    %v2426 = vadd.f32 %v2343, %v2425
    %2427 = vdwg.mxu0
    %v2428 = vxor.u32 %v2366, 2147483648
    %v2429 = vxor.u32 %v2386, 2147483648
    %v2430 = vxor.u32 %v2406, 2147483648
    %v2431 = vxor.u32 %v2426, 2147483648
    %v2432 = vmul.f32 %v2428, 1.442695
    %v2433 = vpow.pop %v2432
    %v2434 = vmul.f32 %v2429, 1.442695
    %v2435 = vpow.pop %v2434
    %v2436 = vmul.f32 %v2430, 1.442695
    %v2437 = vpow.pop %v2436
    %v2438 = vmul.f32 %v2431, 1.442695
    %v2439 = vpow.pop %v2438
    %v2440 = vadd.f32 %v2433, 1.0
    %v2441 = vadd.f32 %v2435, 1.0
    %v2442 = vadd.f32 %v2437, 1.0
    %v2443 = vadd.f32 %v2439, 1.0
    %v2444 = vrcp.pop %v2440
    %v2445 = vmul.f32 %v2440, %v2444
    %v2446 = vsub.f32 1.0, %v2445
    %v2447 = vmul.f32 %v2444, %v2446
    %v2448 = vadd.f32 %v2444, %v2447
    %vm2449 = vweird.f32 %v2440
    %vm2450 = vweird.f32 %v2444
    %vm2451 = vmor %vm2449, %vm2450
    %v2452 = vsel %vm2451, %v2444, %v2448
    %v2453 = vand.u32 2147483647, %v2440
    %vm2454 = vcmp.eq.f32.partialorder %v2453, 8.507059e+37
    %v2455 = vand.u32 %v2440, 2147483648
    %v2456 = vor.u32 1.1754944e-38, %v2455
    %v2457 = vsel %vm2454, %v2456, %v2452
    %v2458 = vmul.f32 1.0, %v2457
    %v2459 = vrcp.pop %v2441
    %v2460 = vmul.f32 %v2441, %v2459
    %v2461 = vsub.f32 1.0, %v2460
    %v2462 = vmul.f32 %v2459, %v2461
    %v2463 = vadd.f32 %v2459, %v2462
    %vm2464 = vweird.f32 %v2441
    %vm2465 = vweird.f32 %v2459
    %vm2466 = vmor %vm2464, %vm2465
    %v2467 = vsel %vm2466, %v2459, %v2463
    %v2468 = vand.u32 2147483647, %v2441
    %vm2469 = vcmp.eq.f32.partialorder %v2468, 8.507059e+37
    %v2470 = vand.u32 %v2441, 2147483648
    %v2471 = vor.u32 1.1754944e-38, %v2470
    %v2472 = vsel %vm2469, %v2471, %v2467
    %v2473 = vmul.f32 1.0, %v2472
    %v2474 = vrcp.pop %v2442
    %v2475 = vmul.f32 %v2442, %v2474
    %v2476 = vsub.f32 1.0, %v2475
    %v2477 = vmul.f32 %v2474, %v2476
    %v2478 = vadd.f32 %v2474, %v2477
    %vm2479 = vweird.f32 %v2442
    %vm2480 = vweird.f32 %v2474
    %vm2481 = vmor %vm2479, %vm2480
    %v2482 = vsel %vm2481, %v2474, %v2478
    %v2483 = vand.u32 2147483647, %v2442
    %vm2484 = vcmp.eq.f32.partialorder %v2483, 8.507059e+37
    %v2485 = vand.u32 %v2442, 2147483648
    %v2486 = vor.u32 1.1754944e-38, %v2485
    %v2487 = vsel %vm2484, %v2486, %v2482
    %v2488 = vmul.f32 1.0, %v2487
    %v2489 = vrcp.pop %v2443
    %v2490 = vmul.f32 %v2443, %v2489
    %v2491 = vsub.f32 1.0, %v2490
    %v2492 = vmul.f32 %v2489, %v2491
    %v2493 = vadd.f32 %v2489, %v2492
    %vm2494 = vweird.f32 %v2443
    %vm2495 = vweird.f32 %v2489
    %vm2496 = vmor %vm2494, %vm2495
    %v2497 = vsel %vm2496, %v2489, %v2493
    %v2498 = vand.u32 2147483647, %v2443
    %vm2499 = vcmp.eq.f32.partialorder %v2498, 8.507059e+37
    %v2500 = vand.u32 %v2443, 2147483648
    %v2501 = vor.u32 1.1754944e-38, %v2500
    %v2502 = vsel %vm2499, %v2501, %v2497
    %v2503 = vmul.f32 1.0, %v2502
    %v2504 = vperm.slane %v2458, 0
    %v2505 = vperm.slane %v2473, 0
    %v2506 = vperm.slane %v2488, 0
    %v2507 = vperm.slane %v2503, 0
    %v2508 = vmul.f32 %v62, %v2504
    %v2509 = vmul.f32 %v63, %v2505
    %v2510 = vmul.f32 %v64, %v2506
    %v2511 = vmul.f32 %v65, %v2507
    %v2512 = vmul.f32 %v66, %v2504
    %v2513 = vmul.f32 %v67, %v2505
    %v2514 = vmul.f32 %v68, %v2506
    %v2515 = vmul.f32 %v69, %v2507
    %v2516 = vmul.f32 %v70, %v2504
    %v2517 = vmul.f32 %v71, %v2505
    %v2518 = vmul.f32 %v72, %v2506
    %v2519 = vmul.f32 %v73, %v2507
    %v2520 = vmul.f32 %v74, %v2504
    %v2521 = vmul.f32 %v75, %v2505
    %v2522 = vmul.f32 %v76, %v2506
    %v2523 = vmul.f32 %v77, %v2507
    %2524 = vmatpush.xpose.msra.mxu0 0.0
    %2525 = vmatpush.xpose.msra.mxu0 0.0
    %2526 = vmatpush.xpose.msra.mxu0 0.0
    %2527 = vmatpush.xpose.msra.mxu0 0.0
    %2528 = vmatpush.xpose.msra.mxu0 0.0
    %2529 = vmatpush.xpose.msra.mxu0 0.0
    %2530 = vmatpush.xpose.msra.mxu0 0.0
    %2531 = vmatpush.xpose.msra.mxu0 0.0
    %2532 = vmatpush.xpose.msra.mxu0 0.0
    %2533 = vmatpush.xpose.msra.mxu0 0.0
    %2534 = vmatpush.xpose.msra.mxu0 0.0
    %2535 = vmatpush.xpose.msra.mxu0 0.0
    %2536 = vmatpush.xpose.msra.mxu0 %v90
    %2537 = vmatpush.xpose.msra.mxu0 %v86
    %2538 = vmatpush.xpose.msra.mxu0 %v82
    %2539 = vmatpush.xpose.msra.mxu0 %v78
    %2540 = vmatmul.f32.gmra.mxu0 %v2508
    %v2541 = vpop.f32.mrf.mxu0
    %v2542 = vadd.f32 0.0, %v2541
    %2543 = vmatmul.f32.gmra.mxu0 %v2512
    %v2544 = vpop.f32.mrf.mxu0
    %v2545 = vadd.f32 0.0, %v2544
    %2546 = vmatmul.f32.gmra.mxu0 %v2516
    %v2547 = vpop.f32.mrf.mxu0
    %v2548 = vadd.f32 0.0, %v2547
    %2549 = vmatmul.f32.gmra.mxu0 %v2520
    %v2550 = vpop.f32.mrf.mxu0
    %v2551 = vadd.f32 0.0, %v2550
    %2552 = vdwg.mxu0
    %2553 = vmatpush.xpose.msra.mxu0 0.0
    %2554 = vmatpush.xpose.msra.mxu0 0.0
    %2555 = vmatpush.xpose.msra.mxu0 0.0
    %2556 = vmatpush.xpose.msra.mxu0 0.0
    %2557 = vmatpush.xpose.msra.mxu0 0.0
    %2558 = vmatpush.xpose.msra.mxu0 0.0
    %2559 = vmatpush.xpose.msra.mxu0 0.0
    %2560 = vmatpush.xpose.msra.mxu0 0.0
    %2561 = vmatpush.xpose.msra.mxu0 0.0
    %2562 = vmatpush.xpose.msra.mxu0 0.0
    %2563 = vmatpush.xpose.msra.mxu0 0.0
    %2564 = vmatpush.xpose.msra.mxu0 0.0
    %2565 = vmatpush.xpose.msra.mxu0 %v91
    %2566 = vmatpush.xpose.msra.mxu0 %v87
    %2567 = vmatpush.xpose.msra.mxu0 %v83
    %2568 = vmatpush.xpose.msra.mxu0 %v79
    %2569 = vmatmul.f32.gmra.mxu0 %v2509
    %v2570 = vpop.f32.mrf.mxu0
    %v2571 = vadd.f32 %v2542, %v2570
    %2572 = vmatmul.f32.gmra.mxu0 %v2513
    %v2573 = vpop.f32.mrf.mxu0
    %v2574 = vadd.f32 %v2545, %v2573
    %2575 = vmatmul.f32.gmra.mxu0 %v2517
    %v2576 = vpop.f32.mrf.mxu0
    %v2577 = vadd.f32 %v2548, %v2576
    %2578 = vmatmul.f32.gmra.mxu0 %v2521
    %v2579 = vpop.f32.mrf.mxu0
    %v2580 = vadd.f32 %v2551, %v2579
    %2581 = vdwg.mxu0
    %2582 = vmatpush.xpose.msra.mxu0 0.0
    %2583 = vmatpush.xpose.msra.mxu0 0.0
    %2584 = vmatpush.xpose.msra.mxu0 0.0
    %2585 = vmatpush.xpose.msra.mxu0 0.0
    %2586 = vmatpush.xpose.msra.mxu0 0.0
    %2587 = vmatpush.xpose.msra.mxu0 0.0
    %2588 = vmatpush.xpose.msra.mxu0 0.0
    %2589 = vmatpush.xpose.msra.mxu0 0.0
    %2590 = vmatpush.xpose.msra.mxu0 0.0
    %2591 = vmatpush.xpose.msra.mxu0 0.0
    %2592 = vmatpush.xpose.msra.mxu0 0.0
    %2593 = vmatpush.xpose.msra.mxu0 0.0
    %2594 = vmatpush.xpose.msra.mxu0 %v92
    %2595 = vmatpush.xpose.msra.mxu0 %v88
    %2596 = vmatpush.xpose.msra.mxu0 %v84
    %2597 = vmatpush.xpose.msra.mxu0 %v80
    %2598 = vmatmul.f32.gmra.mxu0 %v2510
    %v2599 = vpop.f32.mrf.mxu0
    %v2600 = vadd.f32 %v2571, %v2599
    %2601 = vmatmul.f32.gmra.mxu0 %v2514
    %v2602 = vpop.f32.mrf.mxu0
    %v2603 = vadd.f32 %v2574, %v2602
    %2604 = vmatmul.f32.gmra.mxu0 %v2518
    %v2605 = vpop.f32.mrf.mxu0
    %v2606 = vadd.f32 %v2577, %v2605
    %2607 = vmatmul.f32.gmra.mxu0 %v2522
    %v2608 = vpop.f32.mrf.mxu0
    %v2609 = vadd.f32 %v2580, %v2608
    %2610 = vdwg.mxu0
    %2611 = vmatpush.xpose.msra.mxu0 0.0
    %2612 = vmatpush.xpose.msra.mxu0 0.0
    %2613 = vmatpush.xpose.msra.mxu0 0.0
    %2614 = vmatpush.xpose.msra.mxu0 0.0
    %2615 = vmatpush.xpose.msra.mxu0 0.0
    %2616 = vmatpush.xpose.msra.mxu0 0.0
    %2617 = vmatpush.xpose.msra.mxu0 0.0
    %2618 = vmatpush.xpose.msra.mxu0 0.0
    %2619 = vmatpush.xpose.msra.mxu0 0.0
    %2620 = vmatpush.xpose.msra.mxu0 0.0
    %2621 = vmatpush.xpose.msra.mxu0 0.0
    %2622 = vmatpush.xpose.msra.mxu0 0.0
    %2623 = vmatpush.xpose.msra.mxu0 %v93
    %2624 = vmatpush.xpose.msra.mxu0 %v89
    %2625 = vmatpush.xpose.msra.mxu0 %v85
    %2626 = vmatpush.xpose.msra.mxu0 %v81
    %2627 = vmatmul.f32.gmra.mxu0 %v2511
    %v2628 = vpop.f32.mrf.mxu0
    %v2629 = vadd.f32 %v2600, %v2628
    %2630 = vmatmul.f32.gmra.mxu0 %v2515
    %v2631 = vpop.f32.mrf.mxu0
    %v2632 = vadd.f32 %v2603, %v2631
    %2633 = vmatmul.f32.gmra.mxu0 %v2519
    %v2634 = vpop.f32.mrf.mxu0
    %v2635 = vadd.f32 %v2606, %v2634
    %2636 = vmatmul.f32.gmra.mxu0 %v2523
    %v2637 = vpop.f32.mrf.mxu0
    %v2638 = vadd.f32 %v2609, %v2637
    %2639 = vdwg.mxu0
    %2640 = vmatpush.msra.mxu0 0.0
    %2641 = vmatpush.msra.mxu0 0.0
    %2642 = vmatpush.msra.mxu0 0.0
    %2643 = vmatpush.msra.mxu0 0.0
    %2644 = vmatpush.msra.mxu0 0.0
    %2645 = vmatpush.msra.mxu0 0.0
    %2646 = vmatpush.msra.mxu0 0.0
    %2647 = vmatpush.msra.mxu0 0.0
    %2648 = vmatpush.msra.mxu0 0.0
    %2649 = vmatpush.msra.mxu0 0.0
    %2650 = vmatpush.msra.mxu0 0.0
    %2651 = vmatpush.msra.mxu0 0.0
    %2652 = vmatpush.msra.mxu0 %v1699
    %2653 = vmatpush.msra.mxu0 %v1698
    %2654 = vmatpush.msra.mxu0 %v1697
    %2655 = vmatpush.msra.mxu0 %v1696
    %2656 = vmatmul.f32.gmra.mxu0 %v589
    %v2657 = vpop.f32.mrf.mxu0
    %v2658 = vadd.f32 0.0, %v2657
    %2659 = vdwg.mxu0
    %v2660 = vmul.f32 %v2658, 0.0625
    %v2662 = vsel %vm160, %v2660, 0
    %2664 = vmatpush.msra.mxu0 0.0
    %2665 = vmatpush.msra.mxu0 0.0
    %2666 = vmatpush.msra.mxu0 0.0
    %2667 = vmatpush.msra.mxu0 0.0
    %2668 = vmatpush.msra.mxu0 0.0
    %2669 = vmatpush.msra.mxu0 0.0
    %2670 = vmatpush.msra.mxu0 0.0
    %2671 = vmatpush.msra.mxu0 0.0
    %2672 = vmatpush.msra.mxu0 0.0
    %2673 = vmatpush.msra.mxu0 0.0
    %2674 = vmatpush.msra.mxu0 0.0
    %2675 = vmatpush.msra.mxu0 0.0
    %2676 = vmatpush.msra.mxu0 0.0
    %2677 = vmatpush.msra.mxu0 0.0
    %2678 = vmatpush.msra.mxu0 0.0
    %2679 = vmatpush.msra.mxu0 %v612
    %2680 = vmatmul.f32.gmra.mxu0 %v2662
    %v2681 = vpop.f32.mrf.mxu0
    %v2682 = vadd.f32 %v614, %v2681
    %2683 = vdwg.mxu0
    %v2684 = vsel %vm640, %v2682, 0.0
    %2685 = vadd.xlane.f32.xlu0 %v2684
    %v2686 = vpop.xlane.xlu0 %2685
    %v2687 = vmul.f32 %v2686, %v179
    %v2688 = vsub.f32 %v2682, %v2687
    %v2689 = vmul.f32 %v2688, %v2688
    %v2690 = vsel %vm640, %v2689, 0.0
    %2691 = vadd.xlane.f32.xlu0 %v2690
    %v2692 = vpop.xlane.xlu0 %2691
    %v2693 = vmul.f32 %v2692, %v179
    %v2694 = vadd.f32 %v2693, 1e-05
    %v2695 = vrsqrt.pop %v2694
    %v2696 = vmul.f32 %v2695, %v2694
    %v2697 = vmul.f32 %v2696, %v2695
    %v2698 = vmul.f32 0.5, %v2697
    %v2699 = vsub.f32 1.5, %v2698
    %v2700 = vmul.f32 %v2695, %v2699
    %vm2701 = vweird.f32 %v2694
    %vm2702 = vweird.f32 %v2695
    %vm2703 = vmor %vm2701, %vm2702
    %v2704 = vsel %vm2703, %v2695, %v2700
    %v2705 = vmul.f32 %v2688, %v2704
    %v2706 = vmul.f32 %v2705, %v663
    %v2707 = vadd.f32 %v2706, %v665
    %v2708 = vtanh.pop %v2707
    %v2710 = vsel %vm160, %v2708, 0
    %2712 = vmatpush.msra.mxu0 0.0
    %2713 = vmatpush.msra.mxu0 0.0
    %2714 = vmatpush.msra.mxu0 0.0
    %2715 = vmatpush.msra.mxu0 0.0
    %2716 = vmatpush.msra.mxu0 0.0
    %2717 = vmatpush.msra.mxu0 0.0
    %2718 = vmatpush.msra.mxu0 0.0
    %2719 = vmatpush.msra.mxu0 0.0
    %2720 = vmatpush.msra.mxu0 0.0
    %2721 = vmatpush.msra.mxu0 0.0
    %2722 = vmatpush.msra.mxu0 0.0
    %2723 = vmatpush.msra.mxu0 0.0
    %2724 = vmatpush.msra.mxu0 0.0
    %2725 = vmatpush.msra.mxu0 0.0
    %2726 = vmatpush.msra.mxu0 0.0
    %2727 = vmatpush.msra.mxu0 %v668
    %2728 = vmatmul.f32.gmra.mxu0 %v2710
    %v2729 = vpop.f32.mrf.mxu0
    %v2730 = vadd.f32 %v670, %v2729
    %2731 = vdwg.mxu0
    %v2732 = vsel %vm640, %v2730, 0.0
    %2733 = vadd.xlane.f32.xlu0 %v2732
    %v2734 = vpop.xlane.xlu0 %2733
    %v2735 = vmul.f32 %v2734, %v179
    %v2736 = vsub.f32 %v2730, %v2735
    %v2737 = vmul.f32 %v2736, %v2736
    %v2738 = vsel %vm640, %v2737, 0.0
    %2739 = vadd.xlane.f32.xlu0 %v2738
    %v2740 = vpop.xlane.xlu0 %2739
    %v2741 = vmul.f32 %v2740, %v179
    %v2742 = vadd.f32 %v2741, 1e-05
    %v2743 = vrsqrt.pop %v2742
    %v2744 = vmul.f32 %v2743, %v2742
    %v2745 = vmul.f32 %v2744, %v2743
    %v2746 = vmul.f32 0.5, %v2745
    %v2747 = vsub.f32 1.5, %v2746
    %v2748 = vmul.f32 %v2743, %v2747
    %vm2749 = vweird.f32 %v2742
    %vm2750 = vweird.f32 %v2743
    %vm2751 = vmor %vm2749, %vm2750
    %v2752 = vsel %vm2751, %v2743, %v2748
    %v2753 = vmul.f32 %v2736, %v2752
    %v2754 = vmul.f32 %v2753, %v718
    %v2755 = vadd.f32 %v2754, %v720
    %v2756 = vtanh.pop %v2755
    %v2758 = vsel %vm160, %v2756, 0
    %2760 = vmatpush.msra.mxu0 0.0
    %2761 = vmatpush.msra.mxu0 0.0
    %2762 = vmatpush.msra.mxu0 0.0
    %2763 = vmatpush.msra.mxu0 0.0
    %2764 = vmatpush.msra.mxu0 0.0
    %2765 = vmatpush.msra.mxu0 0.0
    %2766 = vmatpush.msra.mxu0 0.0
    %2767 = vmatpush.msra.mxu0 0.0
    %2768 = vmatpush.msra.mxu0 0.0
    %2769 = vmatpush.msra.mxu0 0.0
    %2770 = vmatpush.msra.mxu0 0.0
    %2771 = vmatpush.msra.mxu0 0.0
    %2772 = vmatpush.msra.mxu0 0.0
    %2773 = vmatpush.msra.mxu0 0.0
    %2774 = vmatpush.msra.mxu0 0.0
    %2775 = vmatpush.msra.mxu0 %v723
    %2776 = vmatmul.f32.gmra.mxu0 %v2758
    %v2777 = vpop.f32.mrf.mxu0
    %v2778 = vadd.f32 %v725, %v2777
    %2779 = vdwg.mxu0
    %v2780 = vsel %vm640, %v2778, 0.0
    %2781 = vadd.xlane.f32.xlu0 %v2780
    %v2782 = vpop.xlane.xlu0 %2781
    %v2783 = vmul.f32 %v2782, %v179
    %v2784 = vsub.f32 %v2778, %v2783
    %v2785 = vmul.f32 %v2784, %v2784
    %v2786 = vsel %vm640, %v2785, 0.0
    %2787 = vadd.xlane.f32.xlu0 %v2786
    %v2788 = vpop.xlane.xlu0 %2787
    %v2789 = vmul.f32 %v2788, %v179
    %v2790 = vadd.f32 %v2789, 1e-05
    %v2791 = vrsqrt.pop %v2790
    %v2792 = vmul.f32 %v2791, %v2790
    %v2793 = vmul.f32 %v2792, %v2791
    %v2794 = vmul.f32 0.5, %v2793
    %v2795 = vsub.f32 1.5, %v2794
    %v2796 = vmul.f32 %v2791, %v2795
    %vm2797 = vweird.f32 %v2790
    %vm2798 = vweird.f32 %v2791
    %vm2799 = vmor %vm2797, %vm2798
    %v2800 = vsel %vm2799, %v2791, %v2796
    %v2801 = vmul.f32 %v2784, %v2800
    %v2802 = vmul.f32 %v2801, %v773
    %v2803 = vadd.f32 %v2802, %v775
    %v2804 = vtanh.pop %v2803
    %v2806 = vsel %vm823, %v2804, 0
    %2808 = vmatpush.msra.mxu0 0.0
    %2809 = vmatpush.msra.mxu0 0.0
    %2810 = vmatpush.msra.mxu0 0.0
    %2811 = vmatpush.msra.mxu0 0.0
    %2812 = vmatpush.msra.mxu0 0.0
    %2813 = vmatpush.msra.mxu0 0.0
    %2814 = vmatpush.msra.mxu0 0.0
    %2815 = vmatpush.msra.mxu0 0.0
    %2816 = vmatpush.msra.mxu0 0.0
    %2817 = vmatpush.msra.mxu0 0.0
    %2818 = vmatpush.msra.mxu0 0.0
    %2819 = vmatpush.msra.mxu0 0.0
    %2820 = vmatpush.msra.mxu0 0.0
    %2821 = vmatpush.msra.mxu0 0.0
    %2822 = vmatpush.msra.mxu0 0.0
    %2823 = vmatpush.msra.mxu0 %v2806
    %2824 = vmatmul.f32.gmra.mxu0 %v812
    %v2825 = vpop.f32.mrf.mxu0
    %v2826 = vadd.f32 0.0, %v2825
    %2827 = vmatmul.f32.gmra.mxu0 %v815
    %v2828 = vpop.f32.mrf.mxu0
    %v2829 = vadd.f32 0.0, %v2828
    %2830 = vmatmul.f32.gmra.mxu0 %v818
    %v2831 = vpop.f32.mrf.mxu0
    %v2832 = vadd.f32 0.0, %v2831
    %2833 = vmatmul.f32.gmra.mxu0 %v821
    %v2834 = vpop.f32.mrf.mxu0
    %v2835 = vadd.f32 0.0, %v2834
    %2836 = vdwg.mxu0
    %v2837 = vadd.f32 %v1696, %v266
    %v2838 = vadd.f32 %v1697, %v267
    %v2839 = vadd.f32 %v1698, %v268
    %v2840 = vadd.f32 %v1699, %v269
    %2841 = vxpose.xlu0.b32.start [1/16] %v2629, 128
    %2842 = vxpose.xlu0.b32.cont [2/16] %v2632, 128
    %2843 = vxpose.xlu0.b32.cont [3/16] %v2635, 128
    %2844 = vxpose.xlu0.b32.cont [4/16] %v2638, 128
    %2845 = vxpose.xlu0.b32.cont [5/16] 0.0, 128
    %2846 = vxpose.xlu0.b32.cont [6/16] 0.0, 128
    %2847 = vxpose.xlu0.b32.cont [7/16] 0.0, 128
    %2848 = vxpose.xlu0.b32.cont [8/16] 0.0, 128
    %2849 = vxpose.xlu0.b32.cont [9/16] 0.0, 128
    %2850 = vxpose.xlu0.b32.cont [10/16] 0.0, 128
    %2851 = vxpose.xlu0.b32.cont [11/16] 0.0, 128
    %2852 = vxpose.xlu0.b32.cont [12/16] 0.0, 128
    %2853 = vxpose.xlu0.b32.cont [13/16] 0.0, 128
    %2854 = vxpose.xlu0.b32.cont [14/16] 0.0, 128
    %2855 = vxpose.xlu0.b32.cont [15/16] 0.0, 128
    %2856 = vxpose.xlu0.b32.end [16/16] 0.0, 128
    %v2857 = vpop.trf.xlu0
    %v2858 = vpop.trf.xlu0
    %v2859 = vpop.trf.xlu0
    %v2860 = vpop.trf.xlu0
    %v2861 = vpop.trf.xlu0
    %v2862 = vpop.trf.xlu0
    %v2863 = vpop.trf.xlu0
    %v2864 = vpop.trf.xlu0
    %v2865 = vpop.trf.xlu0
    %v2866 = vpop.trf.xlu0
    %v2867 = vpop.trf.xlu0
    %v2868 = vpop.trf.xlu0
    %v2869 = vpop.trf.xlu0
    %v2870 = vpop.trf.xlu0
    %v2871 = vpop.trf.xlu0
    %v2872 = vpop.trf.xlu0
    %v2874 = vsel %vm587, %v2857, 0
    %v2877 = vsel %vm587, %v2858, 0
    %v2880 = vsel %vm587, %v2859, 0
    %v2883 = vsel %vm587, %v2860, 0
    %2885 = vmatpush.msra.mxu0 0.0
    %2886 = vmatpush.msra.mxu0 0.0
    %2887 = vmatpush.msra.mxu0 0.0
    %2888 = vmatpush.msra.mxu0 0.0
    %2889 = vmatpush.msra.mxu0 0.0
    %2890 = vmatpush.msra.mxu0 0.0
    %2891 = vmatpush.msra.mxu0 0.0
    %2892 = vmatpush.msra.mxu0 0.0
    %2893 = vmatpush.msra.mxu0 0.0
    %2894 = vmatpush.msra.mxu0 0.0
    %2895 = vmatpush.msra.mxu0 0.0
    %2896 = vmatpush.msra.mxu0 0.0
    %2897 = vmatpush.msra.mxu0 %v2840
    %2898 = vmatpush.msra.mxu0 %v2839
    %2899 = vmatpush.msra.mxu0 %v2838
    %2900 = vmatpush.msra.mxu0 %v2837
    %2901 = vmatmul.f32.gmra.mxu0 %v2874
    %v2902 = vpop.f32.mrf.mxu0
    %v2903 = vadd.f32 0.0, %v2902
    %2904 = vmatmul.f32.gmra.mxu0 %v2877
    %v2905 = vpop.f32.mrf.mxu0
    %v2906 = vadd.f32 0.0, %v2905
    %2907 = vmatmul.f32.gmra.mxu0 %v2880
    %v2908 = vpop.f32.mrf.mxu0
    %v2909 = vadd.f32 0.0, %v2908
    %2910 = vmatmul.f32.gmra.mxu0 %v2883
    %v2911 = vpop.f32.mrf.mxu0
    %v2912 = vadd.f32 0.0, %v2911
    %2913 = vdwg.mxu0
    %v2915 = vsel %vm587, %v2629, 0
    %v2918 = vsel %vm587, %v2632, 0
    %v2921 = vsel %vm587, %v2635, 0
    %v2924 = vsel %vm587, %v2638, 0
    %2926 = vmatpush.msra.mxu0 0.0
    %2927 = vmatpush.msra.mxu0 0.0
    %2928 = vmatpush.msra.mxu0 0.0
    %2929 = vmatpush.msra.mxu0 0.0
    %2930 = vmatpush.msra.mxu0 0.0
    %2931 = vmatpush.msra.mxu0 0.0
    %2932 = vmatpush.msra.mxu0 0.0
    %2933 = vmatpush.msra.mxu0 0.0
    %2934 = vmatpush.msra.mxu0 0.0
    %2935 = vmatpush.msra.mxu0 0.0
    %2936 = vmatpush.msra.mxu0 0.0
    %2937 = vmatpush.msra.mxu0 0.0
    %2938 = vmatpush.msra.mxu0 %v2840
    %2939 = vmatpush.msra.mxu0 %v2839
    %2940 = vmatpush.msra.mxu0 %v2838
    %2941 = vmatpush.msra.mxu0 %v2837
    %2942 = vmatmul.f32.gmra.mxu0 %v2915
    %v2943 = vpop.f32.mrf.mxu0
    %v2944 = vadd.f32 0.0, %v2943
    %2945 = vmatmul.f32.gmra.mxu0 %v2918
    %v2946 = vpop.f32.mrf.mxu0
    %v2947 = vadd.f32 0.0, %v2946
    %2948 = vmatmul.f32.gmra.mxu0 %v2921
    %v2949 = vpop.f32.mrf.mxu0
    %v2950 = vadd.f32 0.0, %v2949
    %2951 = vmatmul.f32.gmra.mxu0 %v2924
    %v2952 = vpop.f32.mrf.mxu0
    %v2953 = vadd.f32 0.0, %v2952
    %2954 = vdwg.mxu0
    %v2956 = vsel %vm160, %v2944, 0
    %v2959 = vsel %vm160, %v2947, 0
    %v2962 = vsel %vm160, %v2950, 0
    %v2965 = vsel %vm160, %v2953, 0
    %2967 = vmatpush.msra.mxu0 0.0
    %2968 = vmatpush.msra.mxu0 0.0
    %2969 = vmatpush.msra.mxu0 0.0
    %2970 = vmatpush.msra.mxu0 0.0
    %2971 = vmatpush.msra.mxu0 0.0
    %2972 = vmatpush.msra.mxu0 0.0
    %2973 = vmatpush.msra.mxu0 0.0
    %2974 = vmatpush.msra.mxu0 0.0
    %2975 = vmatpush.msra.mxu0 0.0
    %2976 = vmatpush.msra.mxu0 0.0
    %2977 = vmatpush.msra.mxu0 0.0
    %2978 = vmatpush.msra.mxu0 0.0
    %2979 = vmatpush.msra.mxu0 0.0
    %2980 = vmatpush.msra.mxu0 0.0
    %2981 = vmatpush.msra.mxu0 0.0
    %2982 = vmatpush.msra.mxu0 %v971
    %2983 = vmatmul.f32.gmra.mxu0 %v2956
    %v2984 = vpop.f32.mrf.mxu0
    %v2985 = vadd.f32 0.0, %v2984
    %2986 = vmatmul.f32.gmra.mxu0 %v2959
    %v2987 = vpop.f32.mrf.mxu0
    %v2988 = vadd.f32 0.0, %v2987
    %2989 = vmatmul.f32.gmra.mxu0 %v2962
    %v2990 = vpop.f32.mrf.mxu0
    %v2991 = vadd.f32 0.0, %v2990
    %2992 = vmatmul.f32.gmra.mxu0 %v2965
    %v2993 = vpop.f32.mrf.mxu0
    %v2994 = vadd.f32 0.0, %v2993
    %2995 = vdwg.mxu0
    %v2997 = vsel %vm160, %v2903, 0
    %v3000 = vsel %vm160, %v2906, 0
    %v3003 = vsel %vm160, %v2909, 0
    %v3006 = vsel %vm160, %v2912, 0
    %3008 = vmatpush.msra.mxu0 0.0
    %3009 = vmatpush.msra.mxu0 0.0
    %3010 = vmatpush.msra.mxu0 0.0
    %3011 = vmatpush.msra.mxu0 0.0
    %3012 = vmatpush.msra.mxu0 0.0
    %3013 = vmatpush.msra.mxu0 0.0
    %3014 = vmatpush.msra.mxu0 0.0
    %3015 = vmatpush.msra.mxu0 0.0
    %3016 = vmatpush.msra.mxu0 0.0
    %3017 = vmatpush.msra.mxu0 0.0
    %3018 = vmatpush.msra.mxu0 0.0
    %3019 = vmatpush.msra.mxu0 0.0
    %3020 = vmatpush.msra.mxu0 0.0
    %3021 = vmatpush.msra.mxu0 0.0
    %3022 = vmatpush.msra.mxu0 0.0
    %3023 = vmatpush.msra.mxu0 %v970
    %3024 = vmatmul.f32.gmra.mxu0 %v2997
    %v3025 = vpop.f32.mrf.mxu0
    %v3026 = vadd.f32 %v2985, %v3025
    %3027 = vmatmul.f32.gmra.mxu0 %v3000
    %v3028 = vpop.f32.mrf.mxu0
    %v3029 = vadd.f32 %v2988, %v3028
    %3030 = vmatmul.f32.gmra.mxu0 %v3003
    %v3031 = vpop.f32.mrf.mxu0
    %v3032 = vadd.f32 %v2991, %v3031
    %3033 = vmatmul.f32.gmra.mxu0 %v3006
    %v3034 = vpop.f32.mrf.mxu0
    %v3035 = vadd.f32 %v2994, %v3034
    %3036 = vdwg.mxu0
    %v3038 = vsel %vm160, %v2837, 0
    %v3041 = vsel %vm160, %v2838, 0
    %v3044 = vsel %vm160, %v2839, 0
    %v3047 = vsel %vm160, %v2840, 0
    %3049 = vmatpush.msra.mxu0 0.0
    %3050 = vmatpush.msra.mxu0 0.0
    %3051 = vmatpush.msra.mxu0 0.0
    %3052 = vmatpush.msra.mxu0 0.0
    %3053 = vmatpush.msra.mxu0 0.0
    %3054 = vmatpush.msra.mxu0 0.0
    %3055 = vmatpush.msra.mxu0 0.0
    %3056 = vmatpush.msra.mxu0 0.0
    %3057 = vmatpush.msra.mxu0 0.0
    %3058 = vmatpush.msra.mxu0 0.0
    %3059 = vmatpush.msra.mxu0 0.0
    %3060 = vmatpush.msra.mxu0 0.0
    %3061 = vmatpush.msra.mxu0 0.0
    %3062 = vmatpush.msra.mxu0 0.0
    %3063 = vmatpush.msra.mxu0 0.0
    %3064 = vmatpush.msra.mxu0 %v1054
    %3065 = vmatmul.f32.gmra.mxu0 %v3038
    %v3066 = vpop.f32.mrf.mxu0
    %v3067 = vadd.f32 0.0, %v3066
    %3068 = vmatmul.f32.gmra.mxu0 %v3041
    %v3069 = vpop.f32.mrf.mxu0
    %v3070 = vadd.f32 0.0, %v3069
    %3071 = vmatmul.f32.gmra.mxu0 %v3044
    %v3072 = vpop.f32.mrf.mxu0
    %v3073 = vadd.f32 0.0, %v3072
    %3074 = vmatmul.f32.gmra.mxu0 %v3047
    %v3075 = vpop.f32.mrf.mxu0
    %v3076 = vadd.f32 0.0, %v3075
    %3077 = vdwg.mxu0
    %v3078 = vadd.f32 %v3026, %v3067
    %v3079 = vadd.f32 %v3029, %v3070
    %v3080 = vadd.f32 %v3032, %v3073
    %v3081 = vadd.f32 %v3035, %v3076
    %v3083 = vsel %vm160, %v2826, 0
    %v3086 = vsel %vm160, %v2829, 0
    %v3089 = vsel %vm160, %v2832, 0
    %v3092 = vsel %vm160, %v2835, 0
    %3094 = vmatpush.msra.mxu0 0.0
    %3095 = vmatpush.msra.mxu0 0.0
    %3096 = vmatpush.msra.mxu0 0.0
    %3097 = vmatpush.msra.mxu0 0.0
    %3098 = vmatpush.msra.mxu0 0.0
    %3099 = vmatpush.msra.mxu0 0.0
    %3100 = vmatpush.msra.mxu0 0.0
    %3101 = vmatpush.msra.mxu0 0.0
    %3102 = vmatpush.msra.mxu0 0.0
    %3103 = vmatpush.msra.mxu0 0.0
    %3104 = vmatpush.msra.mxu0 0.0
    %3105 = vmatpush.msra.mxu0 0.0
    %3106 = vmatpush.msra.mxu0 0.0
    %3107 = vmatpush.msra.mxu0 0.0
    %3108 = vmatpush.msra.mxu0 0.0
    %3109 = vmatpush.msra.mxu0 %v1100
    %3110 = vmatmul.f32.gmra.mxu0 %v3083
    %v3111 = vpop.f32.mrf.mxu0
    %v3112 = vadd.f32 0.0, %v3111
    %3113 = vmatmul.f32.gmra.mxu0 %v3086
    %v3114 = vpop.f32.mrf.mxu0
    %v3115 = vadd.f32 0.0, %v3114
    %3116 = vmatmul.f32.gmra.mxu0 %v3089
    %v3117 = vpop.f32.mrf.mxu0
    %v3118 = vadd.f32 0.0, %v3117
    %3119 = vmatmul.f32.gmra.mxu0 %v3092
    %v3120 = vpop.f32.mrf.mxu0
    %v3121 = vadd.f32 0.0, %v3120
    %3122 = vdwg.mxu0
    %v3123 = vadd.f32 %v3078, %v3112
    %v3124 = vadd.f32 %v3079, %v3115
    %v3125 = vadd.f32 %v3080, %v3118
    %v3126 = vadd.f32 %v3081, %v3121
    %v3127 = vadd.f32 %v3123, %v1147
    %v3128 = vadd.f32 %v3124, %v1147
    %v3129 = vadd.f32 %v3125, %v1147
    %v3130 = vadd.f32 %v3126, %v1147
    %v3131 = vsel %vm160, %v3127, 0.0
    %3132 = vadd.xlane.f32.xlu0 %v3131
    %v3133 = vpop.xlane.xlu0 %3132
    %v3134 = vsel %vm160, %v3128, 0.0
    %3135 = vadd.xlane.f32.xlu0 %v3134
    %v3136 = vpop.xlane.xlu0 %3135
    %v3137 = vsel %vm160, %v3129, 0.0
    %3138 = vadd.xlane.f32.xlu0 %v3137
    %v3139 = vpop.xlane.xlu0 %3138
    %v3140 = vsel %vm160, %v3130, 0.0
    %3141 = vadd.xlane.f32.xlu0 %v3140
    %v3142 = vpop.xlane.xlu0 %3141
    %v3143 = vmul.f32 %v3133, %v179
    %v3144 = vmul.f32 %v3136, %v179
    %v3145 = vmul.f32 %v3139, %v179
    %v3146 = vmul.f32 %v3142, %v179
    %v3147 = vsub.f32 %v3127, %v3143
    %v3148 = vsub.f32 %v3128, %v3144
    %v3149 = vsub.f32 %v3129, %v3145
    %v3150 = vsub.f32 %v3130, %v3146
    %v3151 = vmul.f32 %v3147, %v3147
    %v3152 = vmul.f32 %v3148, %v3148
    %v3153 = vmul.f32 %v3149, %v3149
    %v3154 = vmul.f32 %v3150, %v3150
    %v3155 = vsel %vm160, %v3151, 0.0
    %3156 = vadd.xlane.f32.xlu0 %v3155
    %v3157 = vpop.xlane.xlu0 %3156
    %v3158 = vsel %vm160, %v3152, 0.0
    %3159 = vadd.xlane.f32.xlu0 %v3158
    %v3160 = vpop.xlane.xlu0 %3159
    %v3161 = vsel %vm160, %v3153, 0.0
    %3162 = vadd.xlane.f32.xlu0 %v3161
    %v3163 = vpop.xlane.xlu0 %3162
    %v3164 = vsel %vm160, %v3154, 0.0
    %3165 = vadd.xlane.f32.xlu0 %v3164
    %v3166 = vpop.xlane.xlu0 %3165
    %v3167 = vmul.f32 %v3157, %v179
    %v3168 = vmul.f32 %v3160, %v179
    %v3169 = vmul.f32 %v3163, %v179
    %v3170 = vmul.f32 %v3166, %v179
    %v3171 = vadd.f32 %v3167, 1e-05
    %v3172 = vadd.f32 %v3168, 1e-05
    %v3173 = vadd.f32 %v3169, 1e-05
    %v3174 = vadd.f32 %v3170, 1e-05
    %v3175 = vrsqrt.pop %v3171
    %v3176 = vmul.f32 %v3175, %v3171
    %v3177 = vmul.f32 %v3176, %v3175
    %v3178 = vmul.f32 0.5, %v3177
    %v3179 = vsub.f32 1.5, %v3178
    %v3180 = vmul.f32 %v3175, %v3179
    %vm3181 = vweird.f32 %v3171
    %vm3182 = vweird.f32 %v3175
    %vm3183 = vmor %vm3181, %vm3182
    %v3184 = vsel %vm3183, %v3175, %v3180
    %v3185 = vrsqrt.pop %v3172
    %v3186 = vmul.f32 %v3185, %v3172
    %v3187 = vmul.f32 %v3186, %v3185
    %v3188 = vmul.f32 0.5, %v3187
    %v3189 = vsub.f32 1.5, %v3188
    %v3190 = vmul.f32 %v3185, %v3189
    %vm3191 = vweird.f32 %v3172
    %vm3192 = vweird.f32 %v3185
    %vm3193 = vmor %vm3191, %vm3192
    %v3194 = vsel %vm3193, %v3185, %v3190
    %v3195 = vrsqrt.pop %v3173
    %v3196 = vmul.f32 %v3195, %v3173
    %v3197 = vmul.f32 %v3196, %v3195
    %v3198 = vmul.f32 0.5, %v3197
    %v3199 = vsub.f32 1.5, %v3198
    %v3200 = vmul.f32 %v3195, %v3199
    %vm3201 = vweird.f32 %v3173
    %vm3202 = vweird.f32 %v3195
    %vm3203 = vmor %vm3201, %vm3202
    %v3204 = vsel %vm3203, %v3195, %v3200
    %v3205 = vrsqrt.pop %v3174
    %v3206 = vmul.f32 %v3205, %v3174
    %v3207 = vmul.f32 %v3206, %v3205
    %v3208 = vmul.f32 0.5, %v3207
    %v3209 = vsub.f32 1.5, %v3208
    %v3210 = vmul.f32 %v3205, %v3209
    %vm3211 = vweird.f32 %v3174
    %vm3212 = vweird.f32 %v3205
    %vm3213 = vmor %vm3211, %vm3212
    %v3214 = vsel %vm3213, %v3205, %v3210
    %v3215 = vmul.f32 %v3147, %v3184
    %v3216 = vmul.f32 %v3148, %v3194
    %v3217 = vmul.f32 %v3149, %v3204
    %v3218 = vmul.f32 %v3150, %v3214
    %v3219 = vmul.f32 %v3215, %v1242
    %v3220 = vmul.f32 %v3216, %v1242
    %v3221 = vmul.f32 %v3217, %v1242
    %v3222 = vmul.f32 %v3218, %v1242
    %v3223 = vadd.f32 %v3219, %v1247
    %v3224 = vadd.f32 %v3220, %v1247
    %v3225 = vadd.f32 %v3221, %v1247
    %v3226 = vadd.f32 %v3222, %v1247
    %v3227 = vtanh.pop %v3223
    %v3228 = vtanh.pop %v3224
    %v3229 = vtanh.pop %v3225
    %v3230 = vtanh.pop %v3226
    %v3232 = vsel %vm160, %v3227, 0
    %v3235 = vsel %vm160, %v3228, 0
    %v3238 = vsel %vm160, %v3229, 0
    %v3241 = vsel %vm160, %v3230, 0
    %3243 = vmatpush.msra.mxu0 0.0
    %3244 = vmatpush.msra.mxu0 0.0
    %3245 = vmatpush.msra.mxu0 0.0
    %3246 = vmatpush.msra.mxu0 0.0
    %3247 = vmatpush.msra.mxu0 0.0
    %3248 = vmatpush.msra.mxu0 0.0
    %3249 = vmatpush.msra.mxu0 0.0
    %3250 = vmatpush.msra.mxu0 0.0
    %3251 = vmatpush.msra.mxu0 0.0
    %3252 = vmatpush.msra.mxu0 0.0
    %3253 = vmatpush.msra.mxu0 0.0
    %3254 = vmatpush.msra.mxu0 0.0
    %3255 = vmatpush.msra.mxu0 0.0
    %3256 = vmatpush.msra.mxu0 0.0
    %3257 = vmatpush.msra.mxu0 0.0
    %3258 = vmatpush.msra.mxu0 %v1256
    %3259 = vmatmul.f32.gmra.mxu0 %v3232
    %v3260 = vpop.f32.mrf.mxu0
    %v3261 = vadd.f32 %v1258, %v3260
    %3262 = vmatmul.f32.gmra.mxu0 %v3235
    %v3263 = vpop.f32.mrf.mxu0
    %v3264 = vadd.f32 %v1258, %v3263
    %3265 = vmatmul.f32.gmra.mxu0 %v3238
    %v3266 = vpop.f32.mrf.mxu0
    %v3267 = vadd.f32 %v1258, %v3266
    %3268 = vmatmul.f32.gmra.mxu0 %v3241
    %v3269 = vpop.f32.mrf.mxu0
    %v3270 = vadd.f32 %v1258, %v3269
    %3271 = vdwg.mxu0
    %v3272 = vsel %vm160, %v3261, 0.0
    %3273 = vadd.xlane.f32.xlu0 %v3272
    %v3274 = vpop.xlane.xlu0 %3273
    %v3275 = vsel %vm160, %v3264, 0.0
    %3276 = vadd.xlane.f32.xlu0 %v3275
    %v3277 = vpop.xlane.xlu0 %3276
    %v3278 = vsel %vm160, %v3267, 0.0
    %3279 = vadd.xlane.f32.xlu0 %v3278
    %v3280 = vpop.xlane.xlu0 %3279
    %v3281 = vsel %vm160, %v3270, 0.0
    %3282 = vadd.xlane.f32.xlu0 %v3281
    %v3283 = vpop.xlane.xlu0 %3282
    %v3284 = vmul.f32 %v3274, %v179
    %v3285 = vmul.f32 %v3277, %v179
    %v3286 = vmul.f32 %v3280, %v179
    %v3287 = vmul.f32 %v3283, %v179
    %v3288 = vsub.f32 %v3261, %v3284
    %v3289 = vsub.f32 %v3264, %v3285
    %v3290 = vsub.f32 %v3267, %v3286
    %v3291 = vsub.f32 %v3270, %v3287
    %v3292 = vmul.f32 %v3288, %v3288
    %v3293 = vmul.f32 %v3289, %v3289
    %v3294 = vmul.f32 %v3290, %v3290
    %v3295 = vmul.f32 %v3291, %v3291
    %v3296 = vsel %vm160, %v3292, 0.0
    %3297 = vadd.xlane.f32.xlu0 %v3296
    %v3298 = vpop.xlane.xlu0 %3297
    %v3299 = vsel %vm160, %v3293, 0.0
    %3300 = vadd.xlane.f32.xlu0 %v3299
    %v3301 = vpop.xlane.xlu0 %3300
    %v3302 = vsel %vm160, %v3294, 0.0
    %3303 = vadd.xlane.f32.xlu0 %v3302
    %v3304 = vpop.xlane.xlu0 %3303
    %v3305 = vsel %vm160, %v3295, 0.0
    %3306 = vadd.xlane.f32.xlu0 %v3305
    %v3307 = vpop.xlane.xlu0 %3306
    %v3308 = vmul.f32 %v3298, %v179
    %v3309 = vmul.f32 %v3301, %v179
    %v3310 = vmul.f32 %v3304, %v179
    %v3311 = vmul.f32 %v3307, %v179
    %v3312 = vadd.f32 %v3308, 1e-05
    %v3313 = vadd.f32 %v3309, 1e-05
    %v3314 = vadd.f32 %v3310, 1e-05
    %v3315 = vadd.f32 %v3311, 1e-05
    %v3316 = vrsqrt.pop %v3312
    %v3317 = vmul.f32 %v3316, %v3312
    %v3318 = vmul.f32 %v3317, %v3316
    %v3319 = vmul.f32 0.5, %v3318
    %v3320 = vsub.f32 1.5, %v3319
    %v3321 = vmul.f32 %v3316, %v3320
    %vm3322 = vweird.f32 %v3312
    %vm3323 = vweird.f32 %v3316
    %vm3324 = vmor %vm3322, %vm3323
    %v3325 = vsel %vm3324, %v3316, %v3321
    %v3326 = vrsqrt.pop %v3313
    %v3327 = vmul.f32 %v3326, %v3313
    %v3328 = vmul.f32 %v3327, %v3326
    %v3329 = vmul.f32 0.5, %v3328
    %v3330 = vsub.f32 1.5, %v3329
    %v3331 = vmul.f32 %v3326, %v3330
    %vm3332 = vweird.f32 %v3313
    %vm3333 = vweird.f32 %v3326
    %vm3334 = vmor %vm3332, %vm3333
    %v3335 = vsel %vm3334, %v3326, %v3331
    %v3336 = vrsqrt.pop %v3314
    %v3337 = vmul.f32 %v3336, %v3314
    %v3338 = vmul.f32 %v3337, %v3336
    %v3339 = vmul.f32 0.5, %v3338
    %v3340 = vsub.f32 1.5, %v3339
    %v3341 = vmul.f32 %v3336, %v3340
    %vm3342 = vweird.f32 %v3314
    %vm3343 = vweird.f32 %v3336
    %vm3344 = vmor %vm3342, %vm3343
    %v3345 = vsel %vm3344, %v3336, %v3341
    %v3346 = vrsqrt.pop %v3315
    %v3347 = vmul.f32 %v3346, %v3315
    %v3348 = vmul.f32 %v3347, %v3346
    %v3349 = vmul.f32 0.5, %v3348
    %v3350 = vsub.f32 1.5, %v3349
    %v3351 = vmul.f32 %v3346, %v3350
    %vm3352 = vweird.f32 %v3315
    %vm3353 = vweird.f32 %v3346
    %vm3354 = vmor %vm3352, %vm3353
    %v3355 = vsel %vm3354, %v3346, %v3351
    %v3356 = vmul.f32 %v3288, %v3325
    %v3357 = vmul.f32 %v3289, %v3335
    %v3358 = vmul.f32 %v3290, %v3345
    %v3359 = vmul.f32 %v3291, %v3355
    %v3360 = vmul.f32 %v3356, %v1390
    %v3361 = vmul.f32 %v3357, %v1390
    %v3362 = vmul.f32 %v3358, %v1390
    %v3363 = vmul.f32 %v3359, %v1390
    %v3364 = vadd.f32 %v3360, %v1395
    %v3365 = vadd.f32 %v3361, %v1395
    %v3366 = vadd.f32 %v3362, %v1395
    %v3367 = vadd.f32 %v3363, %v1395
    %v3368 = vtanh.pop %v3364
    %v3369 = vtanh.pop %v3365
    %v3370 = vtanh.pop %v3366
    %v3371 = vtanh.pop %v3367
    %v3373 = vsel %vm160, %v3368, 0
    %v3376 = vsel %vm160, %v3369, 0
    %v3379 = vsel %vm160, %v3370, 0
    %v3382 = vsel %vm160, %v3371, 0
    %3384 = vmatpush.msra.mxu0 0.0
    %3385 = vmatpush.msra.mxu0 0.0
    %3386 = vmatpush.msra.mxu0 0.0
    %3387 = vmatpush.msra.mxu0 0.0
    %3388 = vmatpush.msra.mxu0 0.0
    %3389 = vmatpush.msra.mxu0 0.0
    %3390 = vmatpush.msra.mxu0 0.0
    %3391 = vmatpush.msra.mxu0 0.0
    %3392 = vmatpush.msra.mxu0 0.0
    %3393 = vmatpush.msra.mxu0 0.0
    %3394 = vmatpush.msra.mxu0 0.0
    %3395 = vmatpush.msra.mxu0 0.0
    %3396 = vmatpush.msra.mxu0 0.0
    %3397 = vmatpush.msra.mxu0 0.0
    %3398 = vmatpush.msra.mxu0 0.0
    %3399 = vmatpush.msra.mxu0 %v1404
    %3400 = vmatmul.f32.gmra.mxu0 %v3373
    %v3401 = vpop.f32.mrf.mxu0
    %v3402 = vadd.f32 %v1406, %v3401
    %3403 = vmatmul.f32.gmra.mxu0 %v3376
    %v3404 = vpop.f32.mrf.mxu0
    %v3405 = vadd.f32 %v1406, %v3404
    %3406 = vmatmul.f32.gmra.mxu0 %v3379
    %v3407 = vpop.f32.mrf.mxu0
    %v3408 = vadd.f32 %v1406, %v3407
    %3409 = vmatmul.f32.gmra.mxu0 %v3382
    %v3410 = vpop.f32.mrf.mxu0
    %v3411 = vadd.f32 %v1406, %v3410
    %3412 = vdwg.mxu0
    %v3413 = vsel %vm160, %v3402, 0.0
    %3414 = vadd.xlane.f32.xlu0 %v3413
    %v3415 = vpop.xlane.xlu0 %3414
    %v3416 = vsel %vm160, %v3405, 0.0
    %3417 = vadd.xlane.f32.xlu0 %v3416
    %v3418 = vpop.xlane.xlu0 %3417
    %v3419 = vsel %vm160, %v3408, 0.0
    %3420 = vadd.xlane.f32.xlu0 %v3419
    %v3421 = vpop.xlane.xlu0 %3420
    %v3422 = vsel %vm160, %v3411, 0.0
    %3423 = vadd.xlane.f32.xlu0 %v3422
    %v3424 = vpop.xlane.xlu0 %3423
    %v3425 = vmul.f32 %v3415, %v179
    %v3426 = vmul.f32 %v3418, %v179
    %v3427 = vmul.f32 %v3421, %v179
    %v3428 = vmul.f32 %v3424, %v179
    %v3429 = vsub.f32 %v3402, %v3425
    %v3430 = vsub.f32 %v3405, %v3426
    %v3431 = vsub.f32 %v3408, %v3427
    %v3432 = vsub.f32 %v3411, %v3428
    %v3433 = vmul.f32 %v3429, %v3429
    %v3434 = vmul.f32 %v3430, %v3430
    %v3435 = vmul.f32 %v3431, %v3431
    %v3436 = vmul.f32 %v3432, %v3432
    %v3437 = vsel %vm160, %v3433, 0.0
    %3438 = vadd.xlane.f32.xlu0 %v3437
    %v3439 = vpop.xlane.xlu0 %3438
    %v3440 = vsel %vm160, %v3434, 0.0
    %3441 = vadd.xlane.f32.xlu0 %v3440
    %v3442 = vpop.xlane.xlu0 %3441
    %v3443 = vsel %vm160, %v3435, 0.0
    %3444 = vadd.xlane.f32.xlu0 %v3443
    %v3445 = vpop.xlane.xlu0 %3444
    %v3446 = vsel %vm160, %v3436, 0.0
    %3447 = vadd.xlane.f32.xlu0 %v3446
    %v3448 = vpop.xlane.xlu0 %3447
    %v3449 = vmul.f32 %v3439, %v179
    %v3450 = vmul.f32 %v3442, %v179
    %v3451 = vmul.f32 %v3445, %v179
    %v3452 = vmul.f32 %v3448, %v179
    %v3453 = vadd.f32 %v3449, 1e-05
    %v3454 = vadd.f32 %v3450, 1e-05
    %v3455 = vadd.f32 %v3451, 1e-05
    %v3456 = vadd.f32 %v3452, 1e-05
    %v3457 = vrsqrt.pop %v3453
    %v3458 = vmul.f32 %v3457, %v3453
    %v3459 = vmul.f32 %v3458, %v3457
    %v3460 = vmul.f32 0.5, %v3459
    %v3461 = vsub.f32 1.5, %v3460
    %v3462 = vmul.f32 %v3457, %v3461
    %vm3463 = vweird.f32 %v3453
    %vm3464 = vweird.f32 %v3457
    %vm3465 = vmor %vm3463, %vm3464
    %v3466 = vsel %vm3465, %v3457, %v3462
    %v3467 = vrsqrt.pop %v3454
    %v3468 = vmul.f32 %v3467, %v3454
    %v3469 = vmul.f32 %v3468, %v3467
    %v3470 = vmul.f32 0.5, %v3469
    %v3471 = vsub.f32 1.5, %v3470
    %v3472 = vmul.f32 %v3467, %v3471
    %vm3473 = vweird.f32 %v3454
    %vm3474 = vweird.f32 %v3467
    %vm3475 = vmor %vm3473, %vm3474
    %v3476 = vsel %vm3475, %v3467, %v3472
    %v3477 = vrsqrt.pop %v3455
    %v3478 = vmul.f32 %v3477, %v3455
    %v3479 = vmul.f32 %v3478, %v3477
    %v3480 = vmul.f32 0.5, %v3479
    %v3481 = vsub.f32 1.5, %v3480
    %v3482 = vmul.f32 %v3477, %v3481
    %vm3483 = vweird.f32 %v3455
    %vm3484 = vweird.f32 %v3477
    %vm3485 = vmor %vm3483, %vm3484
    %v3486 = vsel %vm3485, %v3477, %v3482
    %v3487 = vrsqrt.pop %v3456
    %v3488 = vmul.f32 %v3487, %v3456
    %v3489 = vmul.f32 %v3488, %v3487
    %v3490 = vmul.f32 0.5, %v3489
    %v3491 = vsub.f32 1.5, %v3490
    %v3492 = vmul.f32 %v3487, %v3491
    %vm3493 = vweird.f32 %v3456
    %vm3494 = vweird.f32 %v3487
    %vm3495 = vmor %vm3493, %vm3494
    %v3496 = vsel %vm3495, %v3487, %v3492
    %v3497 = vmul.f32 %v3429, %v3466
    %v3498 = vmul.f32 %v3430, %v3476
    %v3499 = vmul.f32 %v3431, %v3486
    %v3500 = vmul.f32 %v3432, %v3496
    %v3501 = vmul.f32 %v3497, %v1538
    %v3502 = vmul.f32 %v3498, %v1538
    %v3503 = vmul.f32 %v3499, %v1538
    %v3504 = vmul.f32 %v3500, %v1538
    %v3505 = vadd.f32 %v3501, %v1543
    %v3506 = vadd.f32 %v3502, %v1543
    %v3507 = vadd.f32 %v3503, %v1543
    %v3508 = vadd.f32 %v3504, %v1543
    %v3509 = vtanh.pop %v3505
    %v3510 = vtanh.pop %v3506
    %v3511 = vtanh.pop %v3507
    %v3512 = vtanh.pop %v3508
    %v3514 = vsel %vm160, %v3509, 0
    %v3517 = vsel %vm160, %v3510, 0
    %v3520 = vsel %vm160, %v3511, 0
    %v3523 = vsel %vm160, %v3512, 0
    %3525 = vmatpush.msra.mxu0 0.0
    %3526 = vmatpush.msra.mxu0 0.0
    %3527 = vmatpush.msra.mxu0 0.0
    %3528 = vmatpush.msra.mxu0 0.0
    %3529 = vmatpush.msra.mxu0 0.0
    %3530 = vmatpush.msra.mxu0 0.0
    %3531 = vmatpush.msra.mxu0 0.0
    %3532 = vmatpush.msra.mxu0 0.0
    %3533 = vmatpush.msra.mxu0 0.0
    %3534 = vmatpush.msra.mxu0 0.0
    %3535 = vmatpush.msra.mxu0 0.0
    %3536 = vmatpush.msra.mxu0 0.0
    %3537 = vmatpush.msra.mxu0 0.0
    %3538 = vmatpush.msra.mxu0 0.0
    %3539 = vmatpush.msra.mxu0 0.0
    %3540 = vmatpush.msra.mxu0 %v1552
    %3541 = vmatmul.f32.gmra.mxu0 %v3514
    %v3542 = vpop.f32.mrf.mxu0
    %v3543 = vadd.f32 %v1554, %v3542
    %3544 = vmatmul.f32.gmra.mxu0 %v3517
    %v3545 = vpop.f32.mrf.mxu0
    %v3546 = vadd.f32 %v1554, %v3545
    %3547 = vmatmul.f32.gmra.mxu0 %v3520
    %v3548 = vpop.f32.mrf.mxu0
    %v3549 = vadd.f32 %v1554, %v3548
    %3550 = vmatmul.f32.gmra.mxu0 %v3523
    %v3551 = vpop.f32.mrf.mxu0
    %v3552 = vadd.f32 %v1554, %v3551
    %3553 = vdwg.mxu0
    %v3554 = vsel %vm160, %v3543, 0.0
    %3555 = vadd.xlane.f32.xlu0 %v3554
    %v3556 = vpop.xlane.xlu0 %3555
    %v3557 = vsel %vm160, %v3546, 0.0
    %3558 = vadd.xlane.f32.xlu0 %v3557
    %v3559 = vpop.xlane.xlu0 %3558
    %v3560 = vsel %vm160, %v3549, 0.0
    %3561 = vadd.xlane.f32.xlu0 %v3560
    %v3562 = vpop.xlane.xlu0 %3561
    %v3563 = vsel %vm160, %v3552, 0.0
    %3564 = vadd.xlane.f32.xlu0 %v3563
    %v3565 = vpop.xlane.xlu0 %3564
    %v3566 = vmul.f32 %v3556, %v179
    %v3567 = vmul.f32 %v3559, %v179
    %v3568 = vmul.f32 %v3562, %v179
    %v3569 = vmul.f32 %v3565, %v179
    %v3570 = vsub.f32 %v3543, %v3566
    %v3571 = vsub.f32 %v3546, %v3567
    %v3572 = vsub.f32 %v3549, %v3568
    %v3573 = vsub.f32 %v3552, %v3569
    %v3574 = vmul.f32 %v3570, %v3570
    %v3575 = vmul.f32 %v3571, %v3571
    %v3576 = vmul.f32 %v3572, %v3572
    %v3577 = vmul.f32 %v3573, %v3573
    %v3578 = vsel %vm160, %v3574, 0.0
    %3579 = vadd.xlane.f32.xlu0 %v3578
    %v3580 = vpop.xlane.xlu0 %3579
    %v3581 = vsel %vm160, %v3575, 0.0
    %3582 = vadd.xlane.f32.xlu0 %v3581
    %v3583 = vpop.xlane.xlu0 %3582
    %v3584 = vsel %vm160, %v3576, 0.0
    %3585 = vadd.xlane.f32.xlu0 %v3584
    %v3586 = vpop.xlane.xlu0 %3585
    %v3587 = vsel %vm160, %v3577, 0.0
    %3588 = vadd.xlane.f32.xlu0 %v3587
    %v3589 = vpop.xlane.xlu0 %3588
    %v3590 = vmul.f32 %v3580, %v179
    %v3591 = vmul.f32 %v3583, %v179
    %v3592 = vmul.f32 %v3586, %v179
    %v3593 = vmul.f32 %v3589, %v179
    %v3594 = vadd.f32 %v3590, 1e-05
    %v3595 = vadd.f32 %v3591, 1e-05
    %v3596 = vadd.f32 %v3592, 1e-05
    %v3597 = vadd.f32 %v3593, 1e-05
    %v3598 = vrsqrt.pop %v3594
    %v3599 = vmul.f32 %v3598, %v3594
    %v3600 = vmul.f32 %v3599, %v3598
    %v3601 = vmul.f32 0.5, %v3600
    %v3602 = vsub.f32 1.5, %v3601
    %v3603 = vmul.f32 %v3598, %v3602
    %vm3604 = vweird.f32 %v3594
    %vm3605 = vweird.f32 %v3598
    %vm3606 = vmor %vm3604, %vm3605
    %v3607 = vsel %vm3606, %v3598, %v3603
    %v3608 = vrsqrt.pop %v3595
    %v3609 = vmul.f32 %v3608, %v3595
    %v3610 = vmul.f32 %v3609, %v3608
    %v3611 = vmul.f32 0.5, %v3610
    %v3612 = vsub.f32 1.5, %v3611
    %v3613 = vmul.f32 %v3608, %v3612
    %vm3614 = vweird.f32 %v3595
    %vm3615 = vweird.f32 %v3608
    %vm3616 = vmor %vm3614, %vm3615
    %v3617 = vsel %vm3616, %v3608, %v3613
    %v3618 = vrsqrt.pop %v3596
    %v3619 = vmul.f32 %v3618, %v3596
    %v3620 = vmul.f32 %v3619, %v3618
    %v3621 = vmul.f32 0.5, %v3620
    %v3622 = vsub.f32 1.5, %v3621
    %v3623 = vmul.f32 %v3618, %v3622
    %vm3624 = vweird.f32 %v3596
    %vm3625 = vweird.f32 %v3618
    %vm3626 = vmor %vm3624, %vm3625
    %v3627 = vsel %vm3626, %v3618, %v3623
    %v3628 = vrsqrt.pop %v3597
    %v3629 = vmul.f32 %v3628, %v3597
    %v3630 = vmul.f32 %v3629, %v3628
    %v3631 = vmul.f32 0.5, %v3630
    %v3632 = vsub.f32 1.5, %v3631
    %v3633 = vmul.f32 %v3628, %v3632
    %vm3634 = vweird.f32 %v3597
    %vm3635 = vweird.f32 %v3628
    %vm3636 = vmor %vm3634, %vm3635
    %v3637 = vsel %vm3636, %v3628, %v3633
    %v3638 = vmul.f32 %v3570, %v3607
    %v3639 = vmul.f32 %v3571, %v3617
    %v3640 = vmul.f32 %v3572, %v3627
    %v3641 = vmul.f32 %v3573, %v3637
    %v3642 = vmul.f32 %v3638, %v1686
    %v3643 = vmul.f32 %v3639, %v1686
    %v3644 = vmul.f32 %v3640, %v1686
    %v3645 = vmul.f32 %v3641, %v1686
    %v3646 = vadd.f32 %v3642, %v1691
    %v3647 = vadd.f32 %v3643, %v1691
    %v3648 = vadd.f32 %v3644, %v1691
    %v3649 = vadd.f32 %v3645, %v1691
    %v3650 = vtanh.pop %v3646
    %v3651 = vtanh.pop %v3647
    %v3652 = vtanh.pop %v3648
    %v3653 = vtanh.pop %v3649
    %3654 = vmatpush.msra.mxu0 0.0
    %3655 = vmatpush.msra.mxu0 0.0
    %3656 = vmatpush.msra.mxu0 0.0
    %3657 = vmatpush.msra.mxu0 0.0
    %3658 = vmatpush.msra.mxu0 0.0
    %3659 = vmatpush.msra.mxu0 0.0
    %3660 = vmatpush.msra.mxu0 0.0
    %3661 = vmatpush.msra.mxu0 0.0
    %3662 = vmatpush.msra.mxu0 0.0
    %3663 = vmatpush.msra.mxu0 0.0
    %3664 = vmatpush.msra.mxu0 0.0
    %3665 = vmatpush.msra.mxu0 0.0
    %3666 = vmatpush.msra.mxu0 0.0
    %3667 = vmatpush.msra.mxu0 0.0
    %3668 = vmatpush.msra.mxu0 0.0
    %3669 = vmatpush.msra.mxu0 %v1701
    %3670 = vmatmul.f32.gmra.mxu0 %v3083
    %v3671 = vpop.f32.mrf.mxu0
    %v3672 = vadd.f32 0.0, %v3671
    %3673 = vmatmul.f32.gmra.mxu0 %v3086
    %v3674 = vpop.f32.mrf.mxu0
    %v3675 = vadd.f32 0.0, %v3674
    %3676 = vmatmul.f32.gmra.mxu0 %v3089
    %v3677 = vpop.f32.mrf.mxu0
    %v3678 = vadd.f32 0.0, %v3677
    %3679 = vmatmul.f32.gmra.mxu0 %v3092
    %v3680 = vpop.f32.mrf.mxu0
    %v3681 = vadd.f32 0.0, %v3680
    %3682 = vdwg.mxu0
    %v3684 = vsel %vm160, %v3650, 0
    %v3687 = vsel %vm160, %v3651, 0
    %v3690 = vsel %vm160, %v3652, 0
    %v3693 = vsel %vm160, %v3653, 0
    %3695 = vmatpush.msra.mxu0 0.0
    %3696 = vmatpush.msra.mxu0 0.0
    %3697 = vmatpush.msra.mxu0 0.0
    %3698 = vmatpush.msra.mxu0 0.0
    %3699 = vmatpush.msra.mxu0 0.0
    %3700 = vmatpush.msra.mxu0 0.0
    %3701 = vmatpush.msra.mxu0 0.0
    %3702 = vmatpush.msra.mxu0 0.0
    %3703 = vmatpush.msra.mxu0 0.0
    %3704 = vmatpush.msra.mxu0 0.0
    %3705 = vmatpush.msra.mxu0 0.0
    %3706 = vmatpush.msra.mxu0 0.0
    %3707 = vmatpush.msra.mxu0 0.0
    %3708 = vmatpush.msra.mxu0 0.0
    %3709 = vmatpush.msra.mxu0 0.0
    %3710 = vmatpush.msra.mxu0 %v1700
    %3711 = vmatmul.f32.gmra.mxu0 %v3684
    %v3712 = vpop.f32.mrf.mxu0
    %v3713 = vadd.f32 %v3672, %v3712
    %3714 = vmatmul.f32.gmra.mxu0 %v3687
    %v3715 = vpop.f32.mrf.mxu0
    %v3716 = vadd.f32 %v3675, %v3715
    %3717 = vmatmul.f32.gmra.mxu0 %v3690
    %v3718 = vpop.f32.mrf.mxu0
    %v3719 = vadd.f32 %v3678, %v3718
    %3720 = vmatmul.f32.gmra.mxu0 %v3693
    %v3721 = vpop.f32.mrf.mxu0
    %v3722 = vadd.f32 %v3681, %v3721
    %3723 = vdwg.mxu0
    %v3724 = vadd.f32 %v3713, %v1773
    %v3725 = vadd.f32 %v3716, %v1773
    %v3726 = vadd.f32 %v3719, %v1773
    %v3727 = vadd.f32 %v3722, %v1773
    %3728 = vmatpush.msra.mxu0 0.0
    %3729 = vmatpush.msra.mxu0 0.0
    %3730 = vmatpush.msra.mxu0 0.0
    %3731 = vmatpush.msra.mxu0 0.0
    %3732 = vmatpush.msra.mxu0 0.0
    %3733 = vmatpush.msra.mxu0 0.0
    %3734 = vmatpush.msra.mxu0 0.0
    %3735 = vmatpush.msra.mxu0 0.0
    %3736 = vmatpush.msra.mxu0 0.0
    %3737 = vmatpush.msra.mxu0 0.0
    %3738 = vmatpush.msra.mxu0 0.0
    %3739 = vmatpush.msra.mxu0 0.0
    %3740 = vmatpush.msra.mxu0 0.0
    %3741 = vmatpush.msra.mxu0 0.0
    %3742 = vmatpush.msra.mxu0 0.0
    %3743 = vmatpush.msra.mxu0 %v1778
    %3744 = vmatmul.f32.gmra.mxu0 %v3684
    %v3745 = vpop.f32.mrf.mxu0
    %v3746 = vadd.f32 0.0, %v3745
    %3747 = vmatmul.f32.gmra.mxu0 %v3687
    %v3748 = vpop.f32.mrf.mxu0
    %v3749 = vadd.f32 0.0, %v3748
    %3750 = vmatmul.f32.gmra.mxu0 %v3690
    %v3751 = vpop.f32.mrf.mxu0
    %v3752 = vadd.f32 0.0, %v3751
    %3753 = vmatmul.f32.gmra.mxu0 %v3693
    %v3754 = vpop.f32.mrf.mxu0
    %v3755 = vadd.f32 0.0, %v3754
    %3756 = vdwg.mxu0
    %3757 = vxpose.xlu0.b32.start [1/16] %v3746, 128
    %3758 = vxpose.xlu0.b32.cont [2/16] %v3749, 128
    %3759 = vxpose.xlu0.b32.cont [3/16] %v3752, 128
    %3760 = vxpose.xlu0.b32.cont [4/16] %v3755, 128
    %3761 = vxpose.xlu0.b32.cont [5/16] 0.0, 128
    %3762 = vxpose.xlu0.b32.cont [6/16] 0.0, 128
    %3763 = vxpose.xlu0.b32.cont [7/16] 0.0, 128
    %3764 = vxpose.xlu0.b32.cont [8/16] 0.0, 128
    %3765 = vxpose.xlu0.b32.cont [9/16] 0.0, 128
    %3766 = vxpose.xlu0.b32.cont [10/16] 0.0, 128
    %3767 = vxpose.xlu0.b32.cont [11/16] 0.0, 128
    %3768 = vxpose.xlu0.b32.cont [12/16] 0.0, 128
    %3769 = vxpose.xlu0.b32.cont [13/16] 0.0, 128
    %3770 = vxpose.xlu0.b32.cont [14/16] 0.0, 128
    %3771 = vxpose.xlu0.b32.cont [15/16] 0.0, 128
    %3772 = vxpose.xlu0.b32.end [16/16] 0.0, 128
    %v3773 = vpop.trf.xlu0
    %v3774 = vpop.trf.xlu0
    %v3775 = vpop.trf.xlu0
    %v3776 = vpop.trf.xlu0
    %v3777 = vpop.trf.xlu0
    %v3778 = vpop.trf.xlu0
    %v3779 = vpop.trf.xlu0
    %v3780 = vpop.trf.xlu0
    %v3781 = vpop.trf.xlu0
    %v3782 = vpop.trf.xlu0
    %v3783 = vpop.trf.xlu0
    %v3784 = vpop.trf.xlu0
    %v3785 = vpop.trf.xlu0
    %v3786 = vpop.trf.xlu0
    %v3787 = vpop.trf.xlu0
    %v3788 = vpop.trf.xlu0
    %v3790 = vsel %vm587, %v3773, 0
    %3792 = vmatpush.msra.mxu0 0.0
    %3793 = vmatpush.msra.mxu0 0.0
    %3794 = vmatpush.msra.mxu0 0.0
    %3795 = vmatpush.msra.mxu0 0.0
    %3796 = vmatpush.msra.mxu0 0.0
    %3797 = vmatpush.msra.mxu0 0.0
    %3798 = vmatpush.msra.mxu0 0.0
    %3799 = vmatpush.msra.mxu0 0.0
    %3800 = vmatpush.msra.mxu0 0.0
    %3801 = vmatpush.msra.mxu0 0.0
    %3802 = vmatpush.msra.mxu0 0.0
    %3803 = vmatpush.msra.mxu0 0.0
    %3804 = vmatpush.msra.mxu0 %v90
    %3805 = vmatpush.msra.mxu0 %v86
    %3806 = vmatpush.msra.mxu0 %v82
    %3807 = vmatpush.msra.mxu0 %v78
    %3808 = vmatmul.f32.gmra.mxu0 %v3790
    %v3809 = vpop.f32.mrf.mxu0
    %v3810 = vadd.f32 0.0, %v3809
    %3811 = vdwg.mxu0
    %3812 = vmatpush.msra.mxu0 0.0
    %3813 = vmatpush.msra.mxu0 0.0
    %3814 = vmatpush.msra.mxu0 0.0
    %3815 = vmatpush.msra.mxu0 0.0
    %3816 = vmatpush.msra.mxu0 0.0
    %3817 = vmatpush.msra.mxu0 0.0
    %3818 = vmatpush.msra.mxu0 0.0
    %3819 = vmatpush.msra.mxu0 0.0
    %3820 = vmatpush.msra.mxu0 0.0
    %3821 = vmatpush.msra.mxu0 0.0
    %3822 = vmatpush.msra.mxu0 0.0
    %3823 = vmatpush.msra.mxu0 0.0
    %3824 = vmatpush.msra.mxu0 %v91
    %3825 = vmatpush.msra.mxu0 %v87
    %3826 = vmatpush.msra.mxu0 %v83
    %3827 = vmatpush.msra.mxu0 %v79
    %3828 = vmatmul.f32.gmra.mxu0 %v3790
    %v3829 = vpop.f32.mrf.mxu0
    %v3830 = vadd.f32 0.0, %v3829
    %3831 = vdwg.mxu0
    %3832 = vmatpush.msra.mxu0 0.0
    %3833 = vmatpush.msra.mxu0 0.0
    %3834 = vmatpush.msra.mxu0 0.0
    %3835 = vmatpush.msra.mxu0 0.0
    %3836 = vmatpush.msra.mxu0 0.0
    %3837 = vmatpush.msra.mxu0 0.0
    %3838 = vmatpush.msra.mxu0 0.0
    %3839 = vmatpush.msra.mxu0 0.0
    %3840 = vmatpush.msra.mxu0 0.0
    %3841 = vmatpush.msra.mxu0 0.0
    %3842 = vmatpush.msra.mxu0 0.0
    %3843 = vmatpush.msra.mxu0 0.0
    %3844 = vmatpush.msra.mxu0 %v92
    %3845 = vmatpush.msra.mxu0 %v88
    %3846 = vmatpush.msra.mxu0 %v84
    %3847 = vmatpush.msra.mxu0 %v80
    %3848 = vmatmul.f32.gmra.mxu0 %v3790
    %v3849 = vpop.f32.mrf.mxu0
    %v3850 = vadd.f32 0.0, %v3849
    %3851 = vdwg.mxu0
    %3852 = vmatpush.msra.mxu0 0.0
    %3853 = vmatpush.msra.mxu0 0.0
    %3854 = vmatpush.msra.mxu0 0.0
    %3855 = vmatpush.msra.mxu0 0.0
    %3856 = vmatpush.msra.mxu0 0.0
    %3857 = vmatpush.msra.mxu0 0.0
    %3858 = vmatpush.msra.mxu0 0.0
    %3859 = vmatpush.msra.mxu0 0.0
    %3860 = vmatpush.msra.mxu0 0.0
    %3861 = vmatpush.msra.mxu0 0.0
    %3862 = vmatpush.msra.mxu0 0.0
    %3863 = vmatpush.msra.mxu0 0.0
    %3864 = vmatpush.msra.mxu0 %v93
    %3865 = vmatpush.msra.mxu0 %v89
    %3866 = vmatpush.msra.mxu0 %v85
    %3867 = vmatpush.msra.mxu0 %v81
    %3868 = vmatmul.f32.gmra.mxu0 %v3790
    %v3869 = vpop.f32.mrf.mxu0
    %v3870 = vadd.f32 0.0, %v3869
    %3871 = vdwg.mxu0
    %3872 = vxpose.xlu0.b32.start [1/16] %v3724, 128
    %3873 = vxpose.xlu0.b32.cont [2/16] %v3725, 128
    %3874 = vxpose.xlu0.b32.cont [3/16] %v3726, 128
    %3875 = vxpose.xlu0.b32.cont [4/16] %v3727, 128
    %3876 = vxpose.xlu0.b32.cont [5/16] 0.0, 128
    %3877 = vxpose.xlu0.b32.cont [6/16] 0.0, 128
    %3878 = vxpose.xlu0.b32.cont [7/16] 0.0, 128
    %3879 = vxpose.xlu0.b32.cont [8/16] 0.0, 128
    %3880 = vxpose.xlu0.b32.cont [9/16] 0.0, 128
    %3881 = vxpose.xlu0.b32.cont [10/16] 0.0, 128
    %3882 = vxpose.xlu0.b32.cont [11/16] 0.0, 128
    %3883 = vxpose.xlu0.b32.cont [12/16] 0.0, 128
    %3884 = vxpose.xlu0.b32.cont [13/16] 0.0, 128
    %3885 = vxpose.xlu0.b32.cont [14/16] 0.0, 128
    %3886 = vxpose.xlu0.b32.cont [15/16] 0.0, 128
    %3887 = vxpose.xlu0.b32.end [16/16] 0.0, 128
    %v3888 = vpop.trf.xlu0
    %v3889 = vpop.trf.xlu0
    %v3890 = vpop.trf.xlu0
    %v3891 = vpop.trf.xlu0
    %v3892 = vpop.trf.xlu0
    %v3893 = vpop.trf.xlu0
    %v3894 = vpop.trf.xlu0
    %v3895 = vpop.trf.xlu0
    %v3896 = vpop.trf.xlu0
    %v3897 = vpop.trf.xlu0
    %v3898 = vpop.trf.xlu0
    %v3899 = vpop.trf.xlu0
    %v3900 = vpop.trf.xlu0
    %v3901 = vpop.trf.xlu0
    %v3902 = vpop.trf.xlu0
    %v3903 = vpop.trf.xlu0
    %v3905 = vsel %vm587, %v3888, 0
    %3907 = vmatpush.msra.mxu0 0.0
    %3908 = vmatpush.msra.mxu0 0.0
    %3909 = vmatpush.msra.mxu0 0.0
    %3910 = vmatpush.msra.mxu0 0.0
    %3911 = vmatpush.msra.mxu0 0.0
    %3912 = vmatpush.msra.mxu0 0.0
    %3913 = vmatpush.msra.mxu0 0.0
    %3914 = vmatpush.msra.mxu0 0.0
    %3915 = vmatpush.msra.mxu0 0.0
    %3916 = vmatpush.msra.mxu0 0.0
    %3917 = vmatpush.msra.mxu0 0.0
    %3918 = vmatpush.msra.mxu0 0.0
    %3919 = vmatpush.msra.mxu0 %v74
    %3920 = vmatpush.msra.mxu0 %v70
    %3921 = vmatpush.msra.mxu0 %v66
    %3922 = vmatpush.msra.mxu0 %v62
    %3923 = vmatmul.f32.gmra.mxu0 %v3905
    %v3924 = vpop.f32.mrf.mxu0
    %v3925 = vadd.f32 %v3810, %v3924
    %3926 = vdwg.mxu0
    %3927 = vmatpush.msra.mxu0 0.0
    %3928 = vmatpush.msra.mxu0 0.0
    %3929 = vmatpush.msra.mxu0 0.0
    %3930 = vmatpush.msra.mxu0 0.0
    %3931 = vmatpush.msra.mxu0 0.0
    %3932 = vmatpush.msra.mxu0 0.0
    %3933 = vmatpush.msra.mxu0 0.0
    %3934 = vmatpush.msra.mxu0 0.0
    %3935 = vmatpush.msra.mxu0 0.0
    %3936 = vmatpush.msra.mxu0 0.0
    %3937 = vmatpush.msra.mxu0 0.0
    %3938 = vmatpush.msra.mxu0 0.0
    %3939 = vmatpush.msra.mxu0 %v75
    %3940 = vmatpush.msra.mxu0 %v71
    %3941 = vmatpush.msra.mxu0 %v67
    %3942 = vmatpush.msra.mxu0 %v63
    %3943 = vmatmul.f32.gmra.mxu0 %v3905
    %v3944 = vpop.f32.mrf.mxu0
    %v3945 = vadd.f32 %v3830, %v3944
    %3946 = vdwg.mxu0
    %3947 = vmatpush.msra.mxu0 0.0
    %3948 = vmatpush.msra.mxu0 0.0
    %3949 = vmatpush.msra.mxu0 0.0
    %3950 = vmatpush.msra.mxu0 0.0
    %3951 = vmatpush.msra.mxu0 0.0
    %3952 = vmatpush.msra.mxu0 0.0
    %3953 = vmatpush.msra.mxu0 0.0
    %3954 = vmatpush.msra.mxu0 0.0
    %3955 = vmatpush.msra.mxu0 0.0
    %3956 = vmatpush.msra.mxu0 0.0
    %3957 = vmatpush.msra.mxu0 0.0
    %3958 = vmatpush.msra.mxu0 0.0
    %3959 = vmatpush.msra.mxu0 %v76
    %3960 = vmatpush.msra.mxu0 %v72
    %3961 = vmatpush.msra.mxu0 %v68
    %3962 = vmatpush.msra.mxu0 %v64
    %3963 = vmatmul.f32.gmra.mxu0 %v3905
    %v3964 = vpop.f32.mrf.mxu0
    %v3965 = vadd.f32 %v3850, %v3964
    %3966 = vdwg.mxu0
    %3967 = vmatpush.msra.mxu0 0.0
    %3968 = vmatpush.msra.mxu0 0.0
    %3969 = vmatpush.msra.mxu0 0.0
    %3970 = vmatpush.msra.mxu0 0.0
    %3971 = vmatpush.msra.mxu0 0.0
    %3972 = vmatpush.msra.mxu0 0.0
    %3973 = vmatpush.msra.mxu0 0.0
    %3974 = vmatpush.msra.mxu0 0.0
    %3975 = vmatpush.msra.mxu0 0.0
    %3976 = vmatpush.msra.mxu0 0.0
    %3977 = vmatpush.msra.mxu0 0.0
    %3978 = vmatpush.msra.mxu0 0.0
    %3979 = vmatpush.msra.mxu0 %v77
    %3980 = vmatpush.msra.mxu0 %v73
    %3981 = vmatpush.msra.mxu0 %v69
    %3982 = vmatpush.msra.mxu0 %v65
    %3983 = vmatmul.f32.gmra.mxu0 %v3905
    %v3984 = vpop.f32.mrf.mxu0
    %v3985 = vadd.f32 %v3870, %v3984
    %3986 = vdwg.mxu0
    %v3987 = vmul.f32 %v2042, %v2504
    %v3988 = vmul.f32 %v2042, %v2505
    %v3989 = vmul.f32 %v2042, %v2506
    %v3990 = vmul.f32 %v2042, %v2507
    %v3991 = vadd.f32 %v3925, %v3987
    %v3992 = vadd.f32 %v3945, %v3988
    %v3993 = vadd.f32 %v3965, %v3989
    %v3994 = vadd.f32 %v3985, %v3990
    %v3995 = vtanh.pop %v3991
    %v3996 = vtanh.pop %v3992
    %v3997 = vtanh.pop %v3993
    %v3998 = vtanh.pop %v3994
    %3999 = vmatpush.msra.mxu0 0.0
    %4000 = vmatpush.msra.mxu0 0.0
    %4001 = vmatpush.msra.mxu0 0.0
    %4002 = vmatpush.msra.mxu0 0.0
    %4003 = vmatpush.msra.mxu0 0.0
    %4004 = vmatpush.msra.mxu0 0.0
    %4005 = vmatpush.msra.mxu0 0.0
    %4006 = vmatpush.msra.mxu0 0.0
    %4007 = vmatpush.msra.mxu0 0.0
    %4008 = vmatpush.msra.mxu0 0.0
    %4009 = vmatpush.msra.mxu0 0.0
    %4010 = vmatpush.msra.mxu0 0.0
    %4011 = vmatpush.msra.mxu0 0.0
    %4012 = vmatpush.msra.mxu0 0.0
    %4013 = vmatpush.msra.mxu0 0.0
    %4014 = vmatpush.msra.mxu0 %v3995
    %4015 = vmatmul.f32.gmra.mxu0 %v2064
    %v4016 = vpop.f32.mrf.mxu0
    %v4017 = vadd.f32 %v2061, %v4016
    %4018 = vdwg.mxu0
    %4019 = vmatpush.msra.mxu0 0.0
    %4020 = vmatpush.msra.mxu0 0.0
    %4021 = vmatpush.msra.mxu0 0.0
    %4022 = vmatpush.msra.mxu0 0.0
    %4023 = vmatpush.msra.mxu0 0.0
    %4024 = vmatpush.msra.mxu0 0.0
    %4025 = vmatpush.msra.mxu0 0.0
    %4026 = vmatpush.msra.mxu0 0.0
    %4027 = vmatpush.msra.mxu0 0.0
    %4028 = vmatpush.msra.mxu0 0.0
    %4029 = vmatpush.msra.mxu0 0.0
    %4030 = vmatpush.msra.mxu0 0.0
    %4031 = vmatpush.msra.mxu0 0.0
    %4032 = vmatpush.msra.mxu0 0.0
    %4033 = vmatpush.msra.mxu0 0.0
    %4034 = vmatpush.msra.mxu0 %v3996
    %4035 = vmatmul.f32.gmra.mxu0 %v2064
    %v4036 = vpop.f32.mrf.mxu0
    %v4037 = vadd.f32 %v2061, %v4036
    %4038 = vdwg.mxu0
    %4039 = vmatpush.msra.mxu0 0.0
    %4040 = vmatpush.msra.mxu0 0.0
    %4041 = vmatpush.msra.mxu0 0.0
    %4042 = vmatpush.msra.mxu0 0.0
    %4043 = vmatpush.msra.mxu0 0.0
    %4044 = vmatpush.msra.mxu0 0.0
    %4045 = vmatpush.msra.mxu0 0.0
    %4046 = vmatpush.msra.mxu0 0.0
    %4047 = vmatpush.msra.mxu0 0.0
    %4048 = vmatpush.msra.mxu0 0.0
    %4049 = vmatpush.msra.mxu0 0.0
    %4050 = vmatpush.msra.mxu0 0.0
    %4051 = vmatpush.msra.mxu0 0.0
    %4052 = vmatpush.msra.mxu0 0.0
    %4053 = vmatpush.msra.mxu0 0.0
    %4054 = vmatpush.msra.mxu0 %v3997
    %4055 = vmatmul.f32.gmra.mxu0 %v2064
    %v4056 = vpop.f32.mrf.mxu0
    %v4057 = vadd.f32 %v2061, %v4056
    %4058 = vdwg.mxu0
    %4059 = vmatpush.msra.mxu0 0.0
    %4060 = vmatpush.msra.mxu0 0.0
    %4061 = vmatpush.msra.mxu0 0.0
    %4062 = vmatpush.msra.mxu0 0.0
    %4063 = vmatpush.msra.mxu0 0.0
    %4064 = vmatpush.msra.mxu0 0.0
    %4065 = vmatpush.msra.mxu0 0.0
    %4066 = vmatpush.msra.mxu0 0.0
    %4067 = vmatpush.msra.mxu0 0.0
    %4068 = vmatpush.msra.mxu0 0.0
    %4069 = vmatpush.msra.mxu0 0.0
    %4070 = vmatpush.msra.mxu0 0.0
    %4071 = vmatpush.msra.mxu0 0.0
    %4072 = vmatpush.msra.mxu0 0.0
    %4073 = vmatpush.msra.mxu0 0.0
    %4074 = vmatpush.msra.mxu0 %v3998
    %4075 = vmatmul.f32.gmra.mxu0 %v2064
    %v4076 = vpop.f32.mrf.mxu0
    %v4077 = vadd.f32 %v2061, %v4076
    %4078 = vdwg.mxu0
    %v4079 = vtanh.pop %v4017
    %v4080 = vtanh.pop %v4037
    %v4081 = vtanh.pop %v4057
    %v4082 = vtanh.pop %v4077
    %4083 = vmatpush.msra.mxu0 0.0
    %4084 = vmatpush.msra.mxu0 0.0
    %4085 = vmatpush.msra.mxu0 0.0
    %4086 = vmatpush.msra.mxu0 0.0
    %4087 = vmatpush.msra.mxu0 0.0
    %4088 = vmatpush.msra.mxu0 0.0
    %4089 = vmatpush.msra.mxu0 0.0
    %4090 = vmatpush.msra.mxu0 0.0
    %4091 = vmatpush.msra.mxu0 0.0
    %4092 = vmatpush.msra.mxu0 0.0
    %4093 = vmatpush.msra.mxu0 0.0
    %4094 = vmatpush.msra.mxu0 0.0
    %4095 = vmatpush.msra.mxu0 0.0
    %4096 = vmatpush.msra.mxu0 0.0
    %4097 = vmatpush.msra.mxu0 0.0
    %4098 = vmatpush.msra.mxu0 %v4079
    %4099 = vmatmul.f32.gmra.mxu0 %v2158
    %v4100 = vpop.f32.mrf.mxu0
    %v4101 = vadd.f32 %v2155, %v4100
    %4102 = vdwg.mxu0
    %4103 = vmatpush.msra.mxu0 0.0
    %4104 = vmatpush.msra.mxu0 0.0
    %4105 = vmatpush.msra.mxu0 0.0
    %4106 = vmatpush.msra.mxu0 0.0
    %4107 = vmatpush.msra.mxu0 0.0
    %4108 = vmatpush.msra.mxu0 0.0
    %4109 = vmatpush.msra.mxu0 0.0
    %4110 = vmatpush.msra.mxu0 0.0
    %4111 = vmatpush.msra.mxu0 0.0
    %4112 = vmatpush.msra.mxu0 0.0
    %4113 = vmatpush.msra.mxu0 0.0
    %4114 = vmatpush.msra.mxu0 0.0
    %4115 = vmatpush.msra.mxu0 0.0
    %4116 = vmatpush.msra.mxu0 0.0
    %4117 = vmatpush.msra.mxu0 0.0
    %4118 = vmatpush.msra.mxu0 %v4080
    %4119 = vmatmul.f32.gmra.mxu0 %v2158
    %v4120 = vpop.f32.mrf.mxu0
    %v4121 = vadd.f32 %v2155, %v4120
    %4122 = vdwg.mxu0
    %4123 = vmatpush.msra.mxu0 0.0
    %4124 = vmatpush.msra.mxu0 0.0
    %4125 = vmatpush.msra.mxu0 0.0
    %4126 = vmatpush.msra.mxu0 0.0
    %4127 = vmatpush.msra.mxu0 0.0
    %4128 = vmatpush.msra.mxu0 0.0
    %4129 = vmatpush.msra.mxu0 0.0
    %4130 = vmatpush.msra.mxu0 0.0
    %4131 = vmatpush.msra.mxu0 0.0
    %4132 = vmatpush.msra.mxu0 0.0
    %4133 = vmatpush.msra.mxu0 0.0
    %4134 = vmatpush.msra.mxu0 0.0
    %4135 = vmatpush.msra.mxu0 0.0
    %4136 = vmatpush.msra.mxu0 0.0
    %4137 = vmatpush.msra.mxu0 0.0
    %4138 = vmatpush.msra.mxu0 %v4081
    %4139 = vmatmul.f32.gmra.mxu0 %v2158
    %v4140 = vpop.f32.mrf.mxu0
    %v4141 = vadd.f32 %v2155, %v4140
    %4142 = vdwg.mxu0
    %4143 = vmatpush.msra.mxu0 0.0
    %4144 = vmatpush.msra.mxu0 0.0
    %4145 = vmatpush.msra.mxu0 0.0
    %4146 = vmatpush.msra.mxu0 0.0
    %4147 = vmatpush.msra.mxu0 0.0
    %4148 = vmatpush.msra.mxu0 0.0
    %4149 = vmatpush.msra.mxu0 0.0
    %4150 = vmatpush.msra.mxu0 0.0
    %4151 = vmatpush.msra.mxu0 0.0
    %4152 = vmatpush.msra.mxu0 0.0
    %4153 = vmatpush.msra.mxu0 0.0
    %4154 = vmatpush.msra.mxu0 0.0
    %4155 = vmatpush.msra.mxu0 0.0
    %4156 = vmatpush.msra.mxu0 0.0
    %4157 = vmatpush.msra.mxu0 0.0
    %4158 = vmatpush.msra.mxu0 %v4082
    %4159 = vmatmul.f32.gmra.mxu0 %v2158
    %v4160 = vpop.f32.mrf.mxu0
    %v4161 = vadd.f32 %v2155, %v4160
    %4162 = vdwg.mxu0
    %v4163 = vtanh.pop %v4101
    %v4164 = vtanh.pop %v4121
    %v4165 = vtanh.pop %v4141
    %v4166 = vtanh.pop %v4161
    %4167 = vmatpush.msra.mxu0 0.0
    %4168 = vmatpush.msra.mxu0 0.0
    %4169 = vmatpush.msra.mxu0 0.0
    %4170 = vmatpush.msra.mxu0 0.0
    %4171 = vmatpush.msra.mxu0 0.0
    %4172 = vmatpush.msra.mxu0 0.0
    %4173 = vmatpush.msra.mxu0 0.0
    %4174 = vmatpush.msra.mxu0 0.0
    %4175 = vmatpush.msra.mxu0 0.0
    %4176 = vmatpush.msra.mxu0 0.0
    %4177 = vmatpush.msra.mxu0 0.0
    %4178 = vmatpush.msra.mxu0 0.0
    %4179 = vmatpush.msra.mxu0 0.0
    %4180 = vmatpush.msra.mxu0 0.0
    %4181 = vmatpush.msra.mxu0 0.0
    %4182 = vmatpush.msra.mxu0 %v4163
    %4183 = vmatmul.f32.gmra.mxu0 %v2252
    %v4184 = vpop.f32.mrf.mxu0
    %v4185 = vadd.f32 %v2249, %v4184
    %4186 = vdwg.mxu0
    %4187 = vmatpush.msra.mxu0 0.0
    %4188 = vmatpush.msra.mxu0 0.0
    %4189 = vmatpush.msra.mxu0 0.0
    %4190 = vmatpush.msra.mxu0 0.0
    %4191 = vmatpush.msra.mxu0 0.0
    %4192 = vmatpush.msra.mxu0 0.0
    %4193 = vmatpush.msra.mxu0 0.0
    %4194 = vmatpush.msra.mxu0 0.0
    %4195 = vmatpush.msra.mxu0 0.0
    %4196 = vmatpush.msra.mxu0 0.0
    %4197 = vmatpush.msra.mxu0 0.0
    %4198 = vmatpush.msra.mxu0 0.0
    %4199 = vmatpush.msra.mxu0 0.0
    %4200 = vmatpush.msra.mxu0 0.0
    %4201 = vmatpush.msra.mxu0 0.0
    %4202 = vmatpush.msra.mxu0 %v4164
    %4203 = vmatmul.f32.gmra.mxu0 %v2252
    %v4204 = vpop.f32.mrf.mxu0
    %v4205 = vadd.f32 %v2249, %v4204
    %4206 = vdwg.mxu0
    %4207 = vmatpush.msra.mxu0 0.0
    %4208 = vmatpush.msra.mxu0 0.0
    %4209 = vmatpush.msra.mxu0 0.0
    %4210 = vmatpush.msra.mxu0 0.0
    %4211 = vmatpush.msra.mxu0 0.0
    %4212 = vmatpush.msra.mxu0 0.0
    %4213 = vmatpush.msra.mxu0 0.0
    %4214 = vmatpush.msra.mxu0 0.0
    %4215 = vmatpush.msra.mxu0 0.0
    %4216 = vmatpush.msra.mxu0 0.0
    %4217 = vmatpush.msra.mxu0 0.0
    %4218 = vmatpush.msra.mxu0 0.0
    %4219 = vmatpush.msra.mxu0 0.0
    %4220 = vmatpush.msra.mxu0 0.0
    %4221 = vmatpush.msra.mxu0 0.0
    %4222 = vmatpush.msra.mxu0 %v4165
    %4223 = vmatmul.f32.gmra.mxu0 %v2252
    %v4224 = vpop.f32.mrf.mxu0
    %v4225 = vadd.f32 %v2249, %v4224
    %4226 = vdwg.mxu0
    %4227 = vmatpush.msra.mxu0 0.0
    %4228 = vmatpush.msra.mxu0 0.0
    %4229 = vmatpush.msra.mxu0 0.0
    %4230 = vmatpush.msra.mxu0 0.0
    %4231 = vmatpush.msra.mxu0 0.0
    %4232 = vmatpush.msra.mxu0 0.0
    %4233 = vmatpush.msra.mxu0 0.0
    %4234 = vmatpush.msra.mxu0 0.0
    %4235 = vmatpush.msra.mxu0 0.0
    %4236 = vmatpush.msra.mxu0 0.0
    %4237 = vmatpush.msra.mxu0 0.0
    %4238 = vmatpush.msra.mxu0 0.0
    %4239 = vmatpush.msra.mxu0 0.0
    %4240 = vmatpush.msra.mxu0 0.0
    %4241 = vmatpush.msra.mxu0 0.0
    %4242 = vmatpush.msra.mxu0 %v4166
    %4243 = vmatmul.f32.gmra.mxu0 %v2252
    %v4244 = vpop.f32.mrf.mxu0
    %v4245 = vadd.f32 %v2249, %v4244
    %4246 = vdwg.mxu0
    %v4247 = vtanh.pop %v4185
    %v4248 = vtanh.pop %v4205
    %v4249 = vtanh.pop %v4225
    %v4250 = vtanh.pop %v4245
    %4251 = vmatpush.msra.mxu0 0.0
    %4252 = vmatpush.msra.mxu0 0.0
    %4253 = vmatpush.msra.mxu0 0.0
    %4254 = vmatpush.msra.mxu0 0.0
    %4255 = vmatpush.msra.mxu0 0.0
    %4256 = vmatpush.msra.mxu0 0.0
    %4257 = vmatpush.msra.mxu0 0.0
    %4258 = vmatpush.msra.mxu0 0.0
    %4259 = vmatpush.msra.mxu0 0.0
    %4260 = vmatpush.msra.mxu0 0.0
    %4261 = vmatpush.msra.mxu0 0.0
    %4262 = vmatpush.msra.mxu0 0.0
    %4263 = vmatpush.msra.mxu0 0.0
    %4264 = vmatpush.msra.mxu0 0.0
    %4265 = vmatpush.msra.mxu0 0.0
    %4266 = vmatpush.msra.mxu0 %v4247
    %4267 = vmatmul.f32.gmra.mxu0 %v2346
    %v4268 = vpop.f32.mrf.mxu0
    %v4269 = vadd.f32 %v2343, %v4268
    %4270 = vdwg.mxu0
    %4271 = vmatpush.msra.mxu0 0.0
    %4272 = vmatpush.msra.mxu0 0.0
    %4273 = vmatpush.msra.mxu0 0.0
    %4274 = vmatpush.msra.mxu0 0.0
    %4275 = vmatpush.msra.mxu0 0.0
    %4276 = vmatpush.msra.mxu0 0.0
    %4277 = vmatpush.msra.mxu0 0.0
    %4278 = vmatpush.msra.mxu0 0.0
    %4279 = vmatpush.msra.mxu0 0.0
    %4280 = vmatpush.msra.mxu0 0.0
    %4281 = vmatpush.msra.mxu0 0.0
    %4282 = vmatpush.msra.mxu0 0.0
    %4283 = vmatpush.msra.mxu0 0.0
    %4284 = vmatpush.msra.mxu0 0.0
    %4285 = vmatpush.msra.mxu0 0.0
    %4286 = vmatpush.msra.mxu0 %v4248
    %4287 = vmatmul.f32.gmra.mxu0 %v2346
    %v4288 = vpop.f32.mrf.mxu0
    %v4289 = vadd.f32 %v2343, %v4288
    %4290 = vdwg.mxu0
    %4291 = vmatpush.msra.mxu0 0.0
    %4292 = vmatpush.msra.mxu0 0.0
    %4293 = vmatpush.msra.mxu0 0.0
    %4294 = vmatpush.msra.mxu0 0.0
    %4295 = vmatpush.msra.mxu0 0.0
    %4296 = vmatpush.msra.mxu0 0.0
    %4297 = vmatpush.msra.mxu0 0.0
    %4298 = vmatpush.msra.mxu0 0.0
    %4299 = vmatpush.msra.mxu0 0.0
    %4300 = vmatpush.msra.mxu0 0.0
    %4301 = vmatpush.msra.mxu0 0.0
    %4302 = vmatpush.msra.mxu0 0.0
    %4303 = vmatpush.msra.mxu0 0.0
    %4304 = vmatpush.msra.mxu0 0.0
    %4305 = vmatpush.msra.mxu0 0.0
    %4306 = vmatpush.msra.mxu0 %v4249
    %4307 = vmatmul.f32.gmra.mxu0 %v2346
    %v4308 = vpop.f32.mrf.mxu0
    %v4309 = vadd.f32 %v2343, %v4308
    %4310 = vdwg.mxu0
    %4311 = vmatpush.msra.mxu0 0.0
    %4312 = vmatpush.msra.mxu0 0.0
    %4313 = vmatpush.msra.mxu0 0.0
    %4314 = vmatpush.msra.mxu0 0.0
    %4315 = vmatpush.msra.mxu0 0.0
    %4316 = vmatpush.msra.mxu0 0.0
    %4317 = vmatpush.msra.mxu0 0.0
    %4318 = vmatpush.msra.mxu0 0.0
    %4319 = vmatpush.msra.mxu0 0.0
    %4320 = vmatpush.msra.mxu0 0.0
    %4321 = vmatpush.msra.mxu0 0.0
    %4322 = vmatpush.msra.mxu0 0.0
    %4323 = vmatpush.msra.mxu0 0.0
    %4324 = vmatpush.msra.mxu0 0.0
    %4325 = vmatpush.msra.mxu0 0.0
    %4326 = vmatpush.msra.mxu0 %v4250
    %4327 = vmatmul.f32.gmra.mxu0 %v2346
    %v4328 = vpop.f32.mrf.mxu0
    %v4329 = vadd.f32 %v2343, %v4328
    %4330 = vdwg.mxu0
    %v4331 = vxor.u32 %v4269, 2147483648
    %v4332 = vxor.u32 %v4289, 2147483648
    %v4333 = vxor.u32 %v4309, 2147483648
    %v4334 = vxor.u32 %v4329, 2147483648
    %v4335 = vmul.f32 %v4331, 1.442695
    %v4336 = vpow.pop %v4335
    %v4337 = vmul.f32 %v4332, 1.442695
    %v4338 = vpow.pop %v4337
    %v4339 = vmul.f32 %v4333, 1.442695
    %v4340 = vpow.pop %v4339
    %v4341 = vmul.f32 %v4334, 1.442695
    %v4342 = vpow.pop %v4341
    %v4343 = vadd.f32 %v4336, 1.0
    %v4344 = vadd.f32 %v4338, 1.0
    %v4345 = vadd.f32 %v4340, 1.0
    %v4346 = vadd.f32 %v4342, 1.0
    %v4347 = vrcp.pop %v4343
    %v4348 = vmul.f32 %v4343, %v4347
    %v4349 = vsub.f32 1.0, %v4348
    %v4350 = vmul.f32 %v4347, %v4349
    %v4351 = vadd.f32 %v4347, %v4350
    %vm4352 = vweird.f32 %v4343
    %vm4353 = vweird.f32 %v4347
    %vm4354 = vmor %vm4352, %vm4353
    %v4355 = vsel %vm4354, %v4347, %v4351
    %v4356 = vand.u32 2147483647, %v4343
    %vm4357 = vcmp.eq.f32.partialorder %v4356, 8.507059e+37
    %v4358 = vand.u32 %v4343, 2147483648
    %v4359 = vor.u32 1.1754944e-38, %v4358
    %v4360 = vsel %vm4357, %v4359, %v4355
    %v4361 = vmul.f32 1.0, %v4360
    %v4362 = vrcp.pop %v4344
    %v4363 = vmul.f32 %v4344, %v4362
    %v4364 = vsub.f32 1.0, %v4363
    %v4365 = vmul.f32 %v4362, %v4364
    %v4366 = vadd.f32 %v4362, %v4365
    %vm4367 = vweird.f32 %v4344
    %vm4368 = vweird.f32 %v4362
    %vm4369 = vmor %vm4367, %vm4368
    %v4370 = vsel %vm4369, %v4362, %v4366
    %v4371 = vand.u32 2147483647, %v4344
    %vm4372 = vcmp.eq.f32.partialorder %v4371, 8.507059e+37
    %v4373 = vand.u32 %v4344, 2147483648
    %v4374 = vor.u32 1.1754944e-38, %v4373
    %v4375 = vsel %vm4372, %v4374, %v4370
    %v4376 = vmul.f32 1.0, %v4375
    %v4377 = vrcp.pop %v4345
    %v4378 = vmul.f32 %v4345, %v4377
    %v4379 = vsub.f32 1.0, %v4378
    %v4380 = vmul.f32 %v4377, %v4379
    %v4381 = vadd.f32 %v4377, %v4380
    %vm4382 = vweird.f32 %v4345
    %vm4383 = vweird.f32 %v4377
    %vm4384 = vmor %vm4382, %vm4383
    %v4385 = vsel %vm4384, %v4377, %v4381
    %v4386 = vand.u32 2147483647, %v4345
    %vm4387 = vcmp.eq.f32.partialorder %v4386, 8.507059e+37
    %v4388 = vand.u32 %v4345, 2147483648
    %v4389 = vor.u32 1.1754944e-38, %v4388
    %v4390 = vsel %vm4387, %v4389, %v4385
    %v4391 = vmul.f32 1.0, %v4390
    %v4392 = vrcp.pop %v4346
    %v4393 = vmul.f32 %v4346, %v4392
    %v4394 = vsub.f32 1.0, %v4393
    %v4395 = vmul.f32 %v4392, %v4394
    %v4396 = vadd.f32 %v4392, %v4395
    %vm4397 = vweird.f32 %v4346
    %vm4398 = vweird.f32 %v4392
    %vm4399 = vmor %vm4397, %vm4398
    %v4400 = vsel %vm4399, %v4392, %v4396
    %v4401 = vand.u32 2147483647, %v4346
    %vm4402 = vcmp.eq.f32.partialorder %v4401, 8.507059e+37
    %v4403 = vand.u32 %v4346, 2147483648
    %v4404 = vor.u32 1.1754944e-38, %v4403
    %v4405 = vsel %vm4402, %v4404, %v4400
    %v4406 = vmul.f32 1.0, %v4405
    %v4407 = vperm.slane %v4361, 0
    %v4408 = vperm.slane %v4376, 0
    %v4409 = vperm.slane %v4391, 0
    %v4410 = vperm.slane %v4406, 0
    %v4411 = vmul.f32 %v62, %v4407
    %v4412 = vmul.f32 %v63, %v4408
    %v4413 = vmul.f32 %v64, %v4409
    %v4414 = vmul.f32 %v65, %v4410
    %v4415 = vmul.f32 %v66, %v4407
    %v4416 = vmul.f32 %v67, %v4408
    %v4417 = vmul.f32 %v68, %v4409
    %v4418 = vmul.f32 %v69, %v4410
    %v4419 = vmul.f32 %v70, %v4407
    %v4420 = vmul.f32 %v71, %v4408
    %v4421 = vmul.f32 %v72, %v4409
    %v4422 = vmul.f32 %v73, %v4410
    %v4423 = vmul.f32 %v74, %v4407
    %v4424 = vmul.f32 %v75, %v4408
    %v4425 = vmul.f32 %v76, %v4409
    %v4426 = vmul.f32 %v77, %v4410
    %4427 = vmatpush.xpose.msra.mxu0 0.0
    %4428 = vmatpush.xpose.msra.mxu0 0.0
    %4429 = vmatpush.xpose.msra.mxu0 0.0
    %4430 = vmatpush.xpose.msra.mxu0 0.0
    %4431 = vmatpush.xpose.msra.mxu0 0.0
    %4432 = vmatpush.xpose.msra.mxu0 0.0
    %4433 = vmatpush.xpose.msra.mxu0 0.0
    %4434 = vmatpush.xpose.msra.mxu0 0.0
    %4435 = vmatpush.xpose.msra.mxu0 0.0
    %4436 = vmatpush.xpose.msra.mxu0 0.0
    %4437 = vmatpush.xpose.msra.mxu0 0.0
    %4438 = vmatpush.xpose.msra.mxu0 0.0
    %4439 = vmatpush.xpose.msra.mxu0 %v90
    %4440 = vmatpush.xpose.msra.mxu0 %v86
    %4441 = vmatpush.xpose.msra.mxu0 %v82
    %4442 = vmatpush.xpose.msra.mxu0 %v78
    %4443 = vmatmul.f32.gmra.mxu0 %v4411
    %v4444 = vpop.f32.mrf.mxu0
    %v4445 = vadd.f32 0.0, %v4444
    %4446 = vmatmul.f32.gmra.mxu0 %v4415
    %v4447 = vpop.f32.mrf.mxu0
    %v4448 = vadd.f32 0.0, %v4447
    %4449 = vmatmul.f32.gmra.mxu0 %v4419
    %v4450 = vpop.f32.mrf.mxu0
    %v4451 = vadd.f32 0.0, %v4450
    %4452 = vmatmul.f32.gmra.mxu0 %v4423
    %v4453 = vpop.f32.mrf.mxu0
    %v4454 = vadd.f32 0.0, %v4453
    %4455 = vdwg.mxu0
    %4456 = vmatpush.xpose.msra.mxu0 0.0
    %4457 = vmatpush.xpose.msra.mxu0 0.0
    %4458 = vmatpush.xpose.msra.mxu0 0.0
    %4459 = vmatpush.xpose.msra.mxu0 0.0
    %4460 = vmatpush.xpose.msra.mxu0 0.0
    %4461 = vmatpush.xpose.msra.mxu0 0.0
    %4462 = vmatpush.xpose.msra.mxu0 0.0
    %4463 = vmatpush.xpose.msra.mxu0 0.0
    %4464 = vmatpush.xpose.msra.mxu0 0.0
    %4465 = vmatpush.xpose.msra.mxu0 0.0
    %4466 = vmatpush.xpose.msra.mxu0 0.0
    %4467 = vmatpush.xpose.msra.mxu0 0.0
    %4468 = vmatpush.xpose.msra.mxu0 %v91
    %4469 = vmatpush.xpose.msra.mxu0 %v87
    %4470 = vmatpush.xpose.msra.mxu0 %v83
    %4471 = vmatpush.xpose.msra.mxu0 %v79
    %4472 = vmatmul.f32.gmra.mxu0 %v4412
    %v4473 = vpop.f32.mrf.mxu0
    %v4474 = vadd.f32 %v4445, %v4473
    %4475 = vmatmul.f32.gmra.mxu0 %v4416
    %v4476 = vpop.f32.mrf.mxu0
    %v4477 = vadd.f32 %v4448, %v4476
    %4478 = vmatmul.f32.gmra.mxu0 %v4420
    %v4479 = vpop.f32.mrf.mxu0
    %v4480 = vadd.f32 %v4451, %v4479
    %4481 = vmatmul.f32.gmra.mxu0 %v4424
    %v4482 = vpop.f32.mrf.mxu0
    %v4483 = vadd.f32 %v4454, %v4482
    %4484 = vdwg.mxu0
    %4485 = vmatpush.xpose.msra.mxu0 0.0
    %4486 = vmatpush.xpose.msra.mxu0 0.0
    %4487 = vmatpush.xpose.msra.mxu0 0.0
    %4488 = vmatpush.xpose.msra.mxu0 0.0
    %4489 = vmatpush.xpose.msra.mxu0 0.0
    %4490 = vmatpush.xpose.msra.mxu0 0.0
    %4491 = vmatpush.xpose.msra.mxu0 0.0
    %4492 = vmatpush.xpose.msra.mxu0 0.0
    %4493 = vmatpush.xpose.msra.mxu0 0.0
    %4494 = vmatpush.xpose.msra.mxu0 0.0
    %4495 = vmatpush.xpose.msra.mxu0 0.0
    %4496 = vmatpush.xpose.msra.mxu0 0.0
    %4497 = vmatpush.xpose.msra.mxu0 %v92
    %4498 = vmatpush.xpose.msra.mxu0 %v88
    %4499 = vmatpush.xpose.msra.mxu0 %v84
    %4500 = vmatpush.xpose.msra.mxu0 %v80
    %4501 = vmatmul.f32.gmra.mxu0 %v4413
    %v4502 = vpop.f32.mrf.mxu0
    %v4503 = vadd.f32 %v4474, %v4502
    %4504 = vmatmul.f32.gmra.mxu0 %v4417
    %v4505 = vpop.f32.mrf.mxu0
    %v4506 = vadd.f32 %v4477, %v4505
    %4507 = vmatmul.f32.gmra.mxu0 %v4421
    %v4508 = vpop.f32.mrf.mxu0
    %v4509 = vadd.f32 %v4480, %v4508
    %4510 = vmatmul.f32.gmra.mxu0 %v4425
    %v4511 = vpop.f32.mrf.mxu0
    %v4512 = vadd.f32 %v4483, %v4511
    %4513 = vdwg.mxu0
    %4514 = vmatpush.xpose.msra.mxu0 0.0
    %4515 = vmatpush.xpose.msra.mxu0 0.0
    %4516 = vmatpush.xpose.msra.mxu0 0.0
    %4517 = vmatpush.xpose.msra.mxu0 0.0
    %4518 = vmatpush.xpose.msra.mxu0 0.0
    %4519 = vmatpush.xpose.msra.mxu0 0.0
    %4520 = vmatpush.xpose.msra.mxu0 0.0
    %4521 = vmatpush.xpose.msra.mxu0 0.0
    %4522 = vmatpush.xpose.msra.mxu0 0.0
    %4523 = vmatpush.xpose.msra.mxu0 0.0
    %4524 = vmatpush.xpose.msra.mxu0 0.0
    %4525 = vmatpush.xpose.msra.mxu0 0.0
    %4526 = vmatpush.xpose.msra.mxu0 %v93
    %4527 = vmatpush.xpose.msra.mxu0 %v89
    %4528 = vmatpush.xpose.msra.mxu0 %v85
    %4529 = vmatpush.xpose.msra.mxu0 %v81
    %4530 = vmatmul.f32.gmra.mxu0 %v4414
    %v4531 = vpop.f32.mrf.mxu0
    %v4532 = vadd.f32 %v4503, %v4531
    %4533 = vmatmul.f32.gmra.mxu0 %v4418
    %v4534 = vpop.f32.mrf.mxu0
    %v4535 = vadd.f32 %v4506, %v4534
    %4536 = vmatmul.f32.gmra.mxu0 %v4422
    %v4537 = vpop.f32.mrf.mxu0
    %v4538 = vadd.f32 %v4509, %v4537
    %4539 = vmatmul.f32.gmra.mxu0 %v4426
    %v4540 = vpop.f32.mrf.mxu0
    %v4541 = vadd.f32 %v4512, %v4540
    %4542 = vdwg.mxu0
    %4543 = vmatpush.msra.mxu0 0.0
    %4544 = vmatpush.msra.mxu0 0.0
    %4545 = vmatpush.msra.mxu0 0.0
    %4546 = vmatpush.msra.mxu0 0.0
    %4547 = vmatpush.msra.mxu0 0.0
    %4548 = vmatpush.msra.mxu0 0.0
    %4549 = vmatpush.msra.mxu0 0.0
    %4550 = vmatpush.msra.mxu0 0.0
    %4551 = vmatpush.msra.mxu0 0.0
    %4552 = vmatpush.msra.mxu0 0.0
    %4553 = vmatpush.msra.mxu0 0.0
    %4554 = vmatpush.msra.mxu0 0.0
    %4555 = vmatpush.msra.mxu0 %v3653
    %4556 = vmatpush.msra.mxu0 %v3652
    %4557 = vmatpush.msra.mxu0 %v3651
    %4558 = vmatpush.msra.mxu0 %v3650
    %4559 = vmatmul.f32.gmra.mxu0 %v589
    %v4560 = vpop.f32.mrf.mxu0
    %v4561 = vadd.f32 0.0, %v4560
    %4562 = vdwg.mxu0
    %v4563 = vmul.f32 %v4561, 0.0625
    %v4565 = vsel %vm160, %v4563, 0
    %4567 = vmatpush.msra.mxu0 0.0
    %4568 = vmatpush.msra.mxu0 0.0
    %4569 = vmatpush.msra.mxu0 0.0
    %4570 = vmatpush.msra.mxu0 0.0
    %4571 = vmatpush.msra.mxu0 0.0
    %4572 = vmatpush.msra.mxu0 0.0
    %4573 = vmatpush.msra.mxu0 0.0
    %4574 = vmatpush.msra.mxu0 0.0
    %4575 = vmatpush.msra.mxu0 0.0
    %4576 = vmatpush.msra.mxu0 0.0
    %4577 = vmatpush.msra.mxu0 0.0
    %4578 = vmatpush.msra.mxu0 0.0
    %4579 = vmatpush.msra.mxu0 0.0
    %4580 = vmatpush.msra.mxu0 0.0
    %4581 = vmatpush.msra.mxu0 0.0
    %4582 = vmatpush.msra.mxu0 %v612
    %4583 = vmatmul.f32.gmra.mxu0 %v4565
    %v4584 = vpop.f32.mrf.mxu0
    %v4585 = vadd.f32 %v614, %v4584
    %4586 = vdwg.mxu0
    %v4587 = vsel %vm640, %v4585, 0.0
    %4588 = vadd.xlane.f32.xlu0 %v4587
    %v4589 = vpop.xlane.xlu0 %4588
    %v4590 = vmul.f32 %v4589, %v179
    %v4591 = vsub.f32 %v4585, %v4590
    %v4592 = vmul.f32 %v4591, %v4591
    %v4593 = vsel %vm640, %v4592, 0.0
    %4594 = vadd.xlane.f32.xlu0 %v4593
    %v4595 = vpop.xlane.xlu0 %4594
    %v4596 = vmul.f32 %v4595, %v179
    %v4597 = vadd.f32 %v4596, 1e-05
    %v4598 = vrsqrt.pop %v4597
    %v4599 = vmul.f32 %v4598, %v4597
    %v4600 = vmul.f32 %v4599, %v4598
    %v4601 = vmul.f32 0.5, %v4600
    %v4602 = vsub.f32 1.5, %v4601
    %v4603 = vmul.f32 %v4598, %v4602
    %vm4604 = vweird.f32 %v4597
    %vm4605 = vweird.f32 %v4598
    %vm4606 = vmor %vm4604, %vm4605
    %v4607 = vsel %vm4606, %v4598, %v4603
    %v4608 = vmul.f32 %v4591, %v4607
    %v4609 = vmul.f32 %v4608, %v663
    %v4610 = vadd.f32 %v4609, %v665
    %v4611 = vtanh.pop %v4610
    %v4613 = vsel %vm160, %v4611, 0
    %4615 = vmatpush.msra.mxu0 0.0
    %4616 = vmatpush.msra.mxu0 0.0
    %4617 = vmatpush.msra.mxu0 0.0
    %4618 = vmatpush.msra.mxu0 0.0
    %4619 = vmatpush.msra.mxu0 0.0
    %4620 = vmatpush.msra.mxu0 0.0
    %4621 = vmatpush.msra.mxu0 0.0
    %4622 = vmatpush.msra.mxu0 0.0
    %4623 = vmatpush.msra.mxu0 0.0
    %4624 = vmatpush.msra.mxu0 0.0
    %4625 = vmatpush.msra.mxu0 0.0
    %4626 = vmatpush.msra.mxu0 0.0
    %4627 = vmatpush.msra.mxu0 0.0
    %4628 = vmatpush.msra.mxu0 0.0
    %4629 = vmatpush.msra.mxu0 0.0
    %4630 = vmatpush.msra.mxu0 %v668
    %4631 = vmatmul.f32.gmra.mxu0 %v4613
    %v4632 = vpop.f32.mrf.mxu0
    %v4633 = vadd.f32 %v670, %v4632
    %4634 = vdwg.mxu0
    %v4635 = vsel %vm640, %v4633, 0.0
    %4636 = vadd.xlane.f32.xlu0 %v4635
    %v4637 = vpop.xlane.xlu0 %4636
    %v4638 = vmul.f32 %v4637, %v179
    %v4639 = vsub.f32 %v4633, %v4638
    %v4640 = vmul.f32 %v4639, %v4639
    %v4641 = vsel %vm640, %v4640, 0.0
    %4642 = vadd.xlane.f32.xlu0 %v4641
    %v4643 = vpop.xlane.xlu0 %4642
    %v4644 = vmul.f32 %v4643, %v179
    %v4645 = vadd.f32 %v4644, 1e-05
    %v4646 = vrsqrt.pop %v4645
    %v4647 = vmul.f32 %v4646, %v4645
    %v4648 = vmul.f32 %v4647, %v4646
    %v4649 = vmul.f32 0.5, %v4648
    %v4650 = vsub.f32 1.5, %v4649
    %v4651 = vmul.f32 %v4646, %v4650
    %vm4652 = vweird.f32 %v4645
    %vm4653 = vweird.f32 %v4646
    %vm4654 = vmor %vm4652, %vm4653
    %v4655 = vsel %vm4654, %v4646, %v4651
    %v4656 = vmul.f32 %v4639, %v4655
    %v4657 = vmul.f32 %v4656, %v718
    %v4658 = vadd.f32 %v4657, %v720
    %v4659 = vtanh.pop %v4658
    %v4661 = vsel %vm160, %v4659, 0
    %4663 = vmatpush.msra.mxu0 0.0
    %4664 = vmatpush.msra.mxu0 0.0
    %4665 = vmatpush.msra.mxu0 0.0
    %4666 = vmatpush.msra.mxu0 0.0
    %4667 = vmatpush.msra.mxu0 0.0
    %4668 = vmatpush.msra.mxu0 0.0
    %4669 = vmatpush.msra.mxu0 0.0
    %4670 = vmatpush.msra.mxu0 0.0
    %4671 = vmatpush.msra.mxu0 0.0
    %4672 = vmatpush.msra.mxu0 0.0
    %4673 = vmatpush.msra.mxu0 0.0
    %4674 = vmatpush.msra.mxu0 0.0
    %4675 = vmatpush.msra.mxu0 0.0
    %4676 = vmatpush.msra.mxu0 0.0
    %4677 = vmatpush.msra.mxu0 0.0
    %4678 = vmatpush.msra.mxu0 %v723
    %4679 = vmatmul.f32.gmra.mxu0 %v4661
    %v4680 = vpop.f32.mrf.mxu0
    %v4681 = vadd.f32 %v725, %v4680
    %4682 = vdwg.mxu0
    %v4683 = vsel %vm640, %v4681, 0.0
    %4684 = vadd.xlane.f32.xlu0 %v4683
    %v4685 = vpop.xlane.xlu0 %4684
    %v4686 = vmul.f32 %v4685, %v179
    %v4687 = vsub.f32 %v4681, %v4686
    %v4688 = vmul.f32 %v4687, %v4687
    %v4689 = vsel %vm640, %v4688, 0.0
    %4690 = vadd.xlane.f32.xlu0 %v4689
    %v4691 = vpop.xlane.xlu0 %4690
    %v4692 = vmul.f32 %v4691, %v179
    %v4693 = vadd.f32 %v4692, 1e-05
    %v4694 = vrsqrt.pop %v4693
    %v4695 = vmul.f32 %v4694, %v4693
    %v4696 = vmul.f32 %v4695, %v4694
    %v4697 = vmul.f32 0.5, %v4696
    %v4698 = vsub.f32 1.5, %v4697
    %v4699 = vmul.f32 %v4694, %v4698
    %vm4700 = vweird.f32 %v4693
    %vm4701 = vweird.f32 %v4694
    %vm4702 = vmor %vm4700, %vm4701
    %v4703 = vsel %vm4702, %v4694, %v4699
    %v4704 = vmul.f32 %v4687, %v4703
    %v4705 = vmul.f32 %v4704, %v773
    %v4706 = vadd.f32 %v4705, %v775
    %v4707 = vtanh.pop %v4706
    %v4709 = vsel %vm823, %v4707, 0
    %4711 = vmatpush.msra.mxu0 0.0
    %4712 = vmatpush.msra.mxu0 0.0
    %4713 = vmatpush.msra.mxu0 0.0
    %4714 = vmatpush.msra.mxu0 0.0
    %4715 = vmatpush.msra.mxu0 0.0
    %4716 = vmatpush.msra.mxu0 0.0
    %4717 = vmatpush.msra.mxu0 0.0
    %4718 = vmatpush.msra.mxu0 0.0
    %4719 = vmatpush.msra.mxu0 0.0
    %4720 = vmatpush.msra.mxu0 0.0
    %4721 = vmatpush.msra.mxu0 0.0
    %4722 = vmatpush.msra.mxu0 0.0
    %4723 = vmatpush.msra.mxu0 0.0
    %4724 = vmatpush.msra.mxu0 0.0
    %4725 = vmatpush.msra.mxu0 0.0
    %4726 = vmatpush.msra.mxu0 %v4709
    %4727 = vmatmul.f32.gmra.mxu0 %v812
    %v4728 = vpop.f32.mrf.mxu0
    %v4729 = vadd.f32 0.0, %v4728
    %4730 = vmatmul.f32.gmra.mxu0 %v815
    %v4731 = vpop.f32.mrf.mxu0
    %v4732 = vadd.f32 0.0, %v4731
    %4733 = vmatmul.f32.gmra.mxu0 %v818
    %v4734 = vpop.f32.mrf.mxu0
    %v4735 = vadd.f32 0.0, %v4734
    %4736 = vmatmul.f32.gmra.mxu0 %v821
    %v4737 = vpop.f32.mrf.mxu0
    %v4738 = vadd.f32 0.0, %v4737
    %4739 = vdwg.mxu0
    %v4740 = vadd.f32 %v3650, %v2837
    %v4741 = vadd.f32 %v3651, %v2838
    %v4742 = vadd.f32 %v3652, %v2839
    %v4743 = vadd.f32 %v3653, %v2840
    %4744 = vxpose.xlu0.b32.start [1/16] %v4532, 128
    %4745 = vxpose.xlu0.b32.cont [2/16] %v4535, 128
    %4746 = vxpose.xlu0.b32.cont [3/16] %v4538, 128
    %4747 = vxpose.xlu0.b32.cont [4/16] %v4541, 128
    %4748 = vxpose.xlu0.b32.cont [5/16] 0.0, 128
    %4749 = vxpose.xlu0.b32.cont [6/16] 0.0, 128
    %4750 = vxpose.xlu0.b32.cont [7/16] 0.0, 128
    %4751 = vxpose.xlu0.b32.cont [8/16] 0.0, 128
    %4752 = vxpose.xlu0.b32.cont [9/16] 0.0, 128
    %4753 = vxpose.xlu0.b32.cont [10/16] 0.0, 128
    %4754 = vxpose.xlu0.b32.cont [11/16] 0.0, 128
    %4755 = vxpose.xlu0.b32.cont [12/16] 0.0, 128
    %4756 = vxpose.xlu0.b32.cont [13/16] 0.0, 128
    %4757 = vxpose.xlu0.b32.cont [14/16] 0.0, 128
    %4758 = vxpose.xlu0.b32.cont [15/16] 0.0, 128
    %4759 = vxpose.xlu0.b32.end [16/16] 0.0, 128
    %v4760 = vpop.trf.xlu0
    %v4761 = vpop.trf.xlu0
    %v4762 = vpop.trf.xlu0
    %v4763 = vpop.trf.xlu0
    %v4764 = vpop.trf.xlu0
    %v4765 = vpop.trf.xlu0
    %v4766 = vpop.trf.xlu0
    %v4767 = vpop.trf.xlu0
    %v4768 = vpop.trf.xlu0
    %v4769 = vpop.trf.xlu0
    %v4770 = vpop.trf.xlu0
    %v4771 = vpop.trf.xlu0
    %v4772 = vpop.trf.xlu0
    %v4773 = vpop.trf.xlu0
    %v4774 = vpop.trf.xlu0
    %v4775 = vpop.trf.xlu0
    %v4777 = vsel %vm587, %v4760, 0
    %v4780 = vsel %vm587, %v4761, 0
    %v4783 = vsel %vm587, %v4762, 0
    %v4786 = vsel %vm587, %v4763, 0
    %4788 = vmatpush.msra.mxu0 0.0
    %4789 = vmatpush.msra.mxu0 0.0
    %4790 = vmatpush.msra.mxu0 0.0
    %4791 = vmatpush.msra.mxu0 0.0
    %4792 = vmatpush.msra.mxu0 0.0
    %4793 = vmatpush.msra.mxu0 0.0
    %4794 = vmatpush.msra.mxu0 0.0
    %4795 = vmatpush.msra.mxu0 0.0
    %4796 = vmatpush.msra.mxu0 0.0
    %4797 = vmatpush.msra.mxu0 0.0
    %4798 = vmatpush.msra.mxu0 0.0
    %4799 = vmatpush.msra.mxu0 0.0
    %4800 = vmatpush.msra.mxu0 %v4743
    %4801 = vmatpush.msra.mxu0 %v4742
    %4802 = vmatpush.msra.mxu0 %v4741
    %4803 = vmatpush.msra.mxu0 %v4740
    %4804 = vmatmul.f32.gmra.mxu0 %v4777
    %v4805 = vpop.f32.mrf.mxu0
    %v4806 = vadd.f32 0.0, %v4805
    %4807 = vmatmul.f32.gmra.mxu0 %v4780
    %v4808 = vpop.f32.mrf.mxu0
    %v4809 = vadd.f32 0.0, %v4808
    %4810 = vmatmul.f32.gmra.mxu0 %v4783
    %v4811 = vpop.f32.mrf.mxu0
    %v4812 = vadd.f32 0.0, %v4811
    %4813 = vmatmul.f32.gmra.mxu0 %v4786
    %v4814 = vpop.f32.mrf.mxu0
    %v4815 = vadd.f32 0.0, %v4814
    %4816 = vdwg.mxu0
    %v4818 = vsel %vm587, %v4532, 0
    %v4821 = vsel %vm587, %v4535, 0
    %v4824 = vsel %vm587, %v4538, 0
    %v4827 = vsel %vm587, %v4541, 0
    %4829 = vmatpush.msra.mxu0 0.0
    %4830 = vmatpush.msra.mxu0 0.0
    %4831 = vmatpush.msra.mxu0 0.0
    %4832 = vmatpush.msra.mxu0 0.0
    %4833 = vmatpush.msra.mxu0 0.0
    %4834 = vmatpush.msra.mxu0 0.0
    %4835 = vmatpush.msra.mxu0 0.0
    %4836 = vmatpush.msra.mxu0 0.0
    %4837 = vmatpush.msra.mxu0 0.0
    %4838 = vmatpush.msra.mxu0 0.0
    %4839 = vmatpush.msra.mxu0 0.0
    %4840 = vmatpush.msra.mxu0 0.0
    %4841 = vmatpush.msra.mxu0 %v4743
    %4842 = vmatpush.msra.mxu0 %v4742
    %4843 = vmatpush.msra.mxu0 %v4741
    %4844 = vmatpush.msra.mxu0 %v4740
    %4845 = vmatmul.f32.gmra.mxu0 %v4818
    %v4846 = vpop.f32.mrf.mxu0
    %v4847 = vadd.f32 0.0, %v4846
    %4848 = vmatmul.f32.gmra.mxu0 %v4821
    %v4849 = vpop.f32.mrf.mxu0
    %v4850 = vadd.f32 0.0, %v4849
    %4851 = vmatmul.f32.gmra.mxu0 %v4824
    %v4852 = vpop.f32.mrf.mxu0
    %v4853 = vadd.f32 0.0, %v4852
    %4854 = vmatmul.f32.gmra.mxu0 %v4827
    %v4855 = vpop.f32.mrf.mxu0
    %v4856 = vadd.f32 0.0, %v4855
    %4857 = vdwg.mxu0
    %v4859 = vsel %vm160, %v4847, 0
    %v4862 = vsel %vm160, %v4850, 0
    %v4865 = vsel %vm160, %v4853, 0
    %v4868 = vsel %vm160, %v4856, 0
    %4870 = vmatpush.msra.mxu0 0.0
    %4871 = vmatpush.msra.mxu0 0.0
    %4872 = vmatpush.msra.mxu0 0.0
    %4873 = vmatpush.msra.mxu0 0.0
    %4874 = vmatpush.msra.mxu0 0.0
    %4875 = vmatpush.msra.mxu0 0.0
    %4876 = vmatpush.msra.mxu0 0.0
    %4877 = vmatpush.msra.mxu0 0.0
    %4878 = vmatpush.msra.mxu0 0.0
    %4879 = vmatpush.msra.mxu0 0.0
    %4880 = vmatpush.msra.mxu0 0.0
    %4881 = vmatpush.msra.mxu0 0.0
    %4882 = vmatpush.msra.mxu0 0.0
    %4883 = vmatpush.msra.mxu0 0.0
    %4884 = vmatpush.msra.mxu0 0.0
    %4885 = vmatpush.msra.mxu0 %v971
    %4886 = vmatmul.f32.gmra.mxu0 %v4859
    %v4887 = vpop.f32.mrf.mxu0
    %v4888 = vadd.f32 0.0, %v4887
    %4889 = vmatmul.f32.gmra.mxu0 %v4862
    %v4890 = vpop.f32.mrf.mxu0
    %v4891 = vadd.f32 0.0, %v4890
    %4892 = vmatmul.f32.gmra.mxu0 %v4865
    %v4893 = vpop.f32.mrf.mxu0
    %v4894 = vadd.f32 0.0, %v4893
    %4895 = vmatmul.f32.gmra.mxu0 %v4868
    %v4896 = vpop.f32.mrf.mxu0
    %v4897 = vadd.f32 0.0, %v4896
    %4898 = vdwg.mxu0
    %v4900 = vsel %vm160, %v4806, 0
    %v4903 = vsel %vm160, %v4809, 0
    %v4906 = vsel %vm160, %v4812, 0
    %v4909 = vsel %vm160, %v4815, 0
    %4911 = vmatpush.msra.mxu0 0.0
    %4912 = vmatpush.msra.mxu0 0.0
    %4913 = vmatpush.msra.mxu0 0.0
    %4914 = vmatpush.msra.mxu0 0.0
    %4915 = vmatpush.msra.mxu0 0.0
    %4916 = vmatpush.msra.mxu0 0.0
    %4917 = vmatpush.msra.mxu0 0.0
    %4918 = vmatpush.msra.mxu0 0.0
    %4919 = vmatpush.msra.mxu0 0.0
    %4920 = vmatpush.msra.mxu0 0.0
    %4921 = vmatpush.msra.mxu0 0.0
    %4922 = vmatpush.msra.mxu0 0.0
    %4923 = vmatpush.msra.mxu0 0.0
    %4924 = vmatpush.msra.mxu0 0.0
    %4925 = vmatpush.msra.mxu0 0.0
    %4926 = vmatpush.msra.mxu0 %v970
    %4927 = vmatmul.f32.gmra.mxu0 %v4900
    %v4928 = vpop.f32.mrf.mxu0
    %v4929 = vadd.f32 %v4888, %v4928
    %4930 = vmatmul.f32.gmra.mxu0 %v4903
    %v4931 = vpop.f32.mrf.mxu0
    %v4932 = vadd.f32 %v4891, %v4931
    %4933 = vmatmul.f32.gmra.mxu0 %v4906
    %v4934 = vpop.f32.mrf.mxu0
    %v4935 = vadd.f32 %v4894, %v4934
    %4936 = vmatmul.f32.gmra.mxu0 %v4909
    %v4937 = vpop.f32.mrf.mxu0
    %v4938 = vadd.f32 %v4897, %v4937
    %4939 = vdwg.mxu0
    %v4941 = vsel %vm160, %v4740, 0
    %v4944 = vsel %vm160, %v4741, 0
    %v4947 = vsel %vm160, %v4742, 0
    %v4950 = vsel %vm160, %v4743, 0
    %4952 = vmatpush.msra.mxu0 0.0
    %4953 = vmatpush.msra.mxu0 0.0
    %4954 = vmatpush.msra.mxu0 0.0
    %4955 = vmatpush.msra.mxu0 0.0
    %4956 = vmatpush.msra.mxu0 0.0
    %4957 = vmatpush.msra.mxu0 0.0
    %4958 = vmatpush.msra.mxu0 0.0
    %4959 = vmatpush.msra.mxu0 0.0
    %4960 = vmatpush.msra.mxu0 0.0
    %4961 = vmatpush.msra.mxu0 0.0
    %4962 = vmatpush.msra.mxu0 0.0
    %4963 = vmatpush.msra.mxu0 0.0
    %4964 = vmatpush.msra.mxu0 0.0
    %4965 = vmatpush.msra.mxu0 0.0
    %4966 = vmatpush.msra.mxu0 0.0
    %4967 = vmatpush.msra.mxu0 %v1054
    %4968 = vmatmul.f32.gmra.mxu0 %v4941
    %v4969 = vpop.f32.mrf.mxu0
    %v4970 = vadd.f32 0.0, %v4969
    %4971 = vmatmul.f32.gmra.mxu0 %v4944
    %v4972 = vpop.f32.mrf.mxu0
    %v4973 = vadd.f32 0.0, %v4972
    %4974 = vmatmul.f32.gmra.mxu0 %v4947
    %v4975 = vpop.f32.mrf.mxu0
    %v4976 = vadd.f32 0.0, %v4975
    %4977 = vmatmul.f32.gmra.mxu0 %v4950
    %v4978 = vpop.f32.mrf.mxu0
    %v4979 = vadd.f32 0.0, %v4978
    %4980 = vdwg.mxu0
    %v4981 = vadd.f32 %v4929, %v4970
    %v4982 = vadd.f32 %v4932, %v4973
    %v4983 = vadd.f32 %v4935, %v4976
    %v4984 = vadd.f32 %v4938, %v4979
    %v4986 = vsel %vm160, %v4729, 0
    %v4989 = vsel %vm160, %v4732, 0
    %v4992 = vsel %vm160, %v4735, 0
    %v4995 = vsel %vm160, %v4738, 0
    %4997 = vmatpush.msra.mxu0 0.0
    %4998 = vmatpush.msra.mxu0 0.0
    %4999 = vmatpush.msra.mxu0 0.0
    %5000 = vmatpush.msra.mxu0 0.0
    %5001 = vmatpush.msra.mxu0 0.0
    %5002 = vmatpush.msra.mxu0 0.0
    %5003 = vmatpush.msra.mxu0 0.0
    %5004 = vmatpush.msra.mxu0 0.0
    %5005 = vmatpush.msra.mxu0 0.0
    %5006 = vmatpush.msra.mxu0 0.0
    %5007 = vmatpush.msra.mxu0 0.0
    %5008 = vmatpush.msra.mxu0 0.0
    %5009 = vmatpush.msra.mxu0 0.0
    %5010 = vmatpush.msra.mxu0 0.0
    %5011 = vmatpush.msra.mxu0 0.0
    %5012 = vmatpush.msra.mxu0 %v1100
    %5013 = vmatmul.f32.gmra.mxu0 %v4986
    %v5014 = vpop.f32.mrf.mxu0
    %v5015 = vadd.f32 0.0, %v5014
    %5016 = vmatmul.f32.gmra.mxu0 %v4989
    %v5017 = vpop.f32.mrf.mxu0
    %v5018 = vadd.f32 0.0, %v5017
    %5019 = vmatmul.f32.gmra.mxu0 %v4992
    %v5020 = vpop.f32.mrf.mxu0
    %v5021 = vadd.f32 0.0, %v5020
    %5022 = vmatmul.f32.gmra.mxu0 %v4995
    %v5023 = vpop.f32.mrf.mxu0
    %v5024 = vadd.f32 0.0, %v5023
    %5025 = vdwg.mxu0
    %v5026 = vadd.f32 %v4981, %v5015
    %v5027 = vadd.f32 %v4982, %v5018
    %v5028 = vadd.f32 %v4983, %v5021
    %v5029 = vadd.f32 %v4984, %v5024
    %v5030 = vadd.f32 %v5026, %v1147
    %v5031 = vadd.f32 %v5027, %v1147
    %v5032 = vadd.f32 %v5028, %v1147
    %v5033 = vadd.f32 %v5029, %v1147
    %v5034 = vsel %vm160, %v5030, 0.0
    %5035 = vadd.xlane.f32.xlu0 %v5034
    %v5036 = vpop.xlane.xlu0 %5035
    %v5037 = vsel %vm160, %v5031, 0.0
    %5038 = vadd.xlane.f32.xlu0 %v5037
    %v5039 = vpop.xlane.xlu0 %5038
    %v5040 = vsel %vm160, %v5032, 0.0
    %5041 = vadd.xlane.f32.xlu0 %v5040
    %v5042 = vpop.xlane.xlu0 %5041
    %v5043 = vsel %vm160, %v5033, 0.0
    %5044 = vadd.xlane.f32.xlu0 %v5043
    %v5045 = vpop.xlane.xlu0 %5044
    %v5046 = vmul.f32 %v5036, %v179
    %v5047 = vmul.f32 %v5039, %v179
    %v5048 = vmul.f32 %v5042, %v179
    %v5049 = vmul.f32 %v5045, %v179
    %v5050 = vsub.f32 %v5030, %v5046
    %v5051 = vsub.f32 %v5031, %v5047
    %v5052 = vsub.f32 %v5032, %v5048
    %v5053 = vsub.f32 %v5033, %v5049
    %v5054 = vmul.f32 %v5050, %v5050
    %v5055 = vmul.f32 %v5051, %v5051
    %v5056 = vmul.f32 %v5052, %v5052
    %v5057 = vmul.f32 %v5053, %v5053
    %v5058 = vsel %vm160, %v5054, 0.0
    %5059 = vadd.xlane.f32.xlu0 %v5058
    %v5060 = vpop.xlane.xlu0 %5059
    %v5061 = vsel %vm160, %v5055, 0.0
    %5062 = vadd.xlane.f32.xlu0 %v5061
    %v5063 = vpop.xlane.xlu0 %5062
    %v5064 = vsel %vm160, %v5056, 0.0
    %5065 = vadd.xlane.f32.xlu0 %v5064
    %v5066 = vpop.xlane.xlu0 %5065
    %v5067 = vsel %vm160, %v5057, 0.0
    %5068 = vadd.xlane.f32.xlu0 %v5067
    %v5069 = vpop.xlane.xlu0 %5068
    %v5070 = vmul.f32 %v5060, %v179
    %v5071 = vmul.f32 %v5063, %v179
    %v5072 = vmul.f32 %v5066, %v179
    %v5073 = vmul.f32 %v5069, %v179
    %v5074 = vadd.f32 %v5070, 1e-05
    %v5075 = vadd.f32 %v5071, 1e-05
    %v5076 = vadd.f32 %v5072, 1e-05
    %v5077 = vadd.f32 %v5073, 1e-05
    %v5078 = vrsqrt.pop %v5074
    %v5079 = vmul.f32 %v5078, %v5074
    %v5080 = vmul.f32 %v5079, %v5078
    %v5081 = vmul.f32 0.5, %v5080
    %v5082 = vsub.f32 1.5, %v5081
    %v5083 = vmul.f32 %v5078, %v5082
    %vm5084 = vweird.f32 %v5074
    %vm5085 = vweird.f32 %v5078
    %vm5086 = vmor %vm5084, %vm5085
    %v5087 = vsel %vm5086, %v5078, %v5083
    %v5088 = vrsqrt.pop %v5075
    %v5089 = vmul.f32 %v5088, %v5075
    %v5090 = vmul.f32 %v5089, %v5088
    %v5091 = vmul.f32 0.5, %v5090
    %v5092 = vsub.f32 1.5, %v5091
    %v5093 = vmul.f32 %v5088, %v5092
    %vm5094 = vweird.f32 %v5075
    %vm5095 = vweird.f32 %v5088
    %vm5096 = vmor %vm5094, %vm5095
    %v5097 = vsel %vm5096, %v5088, %v5093
    %v5098 = vrsqrt.pop %v5076
    %v5099 = vmul.f32 %v5098, %v5076
    %v5100 = vmul.f32 %v5099, %v5098
    %v5101 = vmul.f32 0.5, %v5100
    %v5102 = vsub.f32 1.5, %v5101
    %v5103 = vmul.f32 %v5098, %v5102
    %vm5104 = vweird.f32 %v5076
    %vm5105 = vweird.f32 %v5098
    %vm5106 = vmor %vm5104, %vm5105
    %v5107 = vsel %vm5106, %v5098, %v5103
    %v5108 = vrsqrt.pop %v5077
    %v5109 = vmul.f32 %v5108, %v5077
    %v5110 = vmul.f32 %v5109, %v5108
    %v5111 = vmul.f32 0.5, %v5110
    %v5112 = vsub.f32 1.5, %v5111
    %v5113 = vmul.f32 %v5108, %v5112
    %vm5114 = vweird.f32 %v5077
    %vm5115 = vweird.f32 %v5108
    %vm5116 = vmor %vm5114, %vm5115
    %v5117 = vsel %vm5116, %v5108, %v5113
    %v5118 = vmul.f32 %v5050, %v5087
    %v5119 = vmul.f32 %v5051, %v5097
    %v5120 = vmul.f32 %v5052, %v5107
    %v5121 = vmul.f32 %v5053, %v5117
    %v5122 = vmul.f32 %v5118, %v1242
    %v5123 = vmul.f32 %v5119, %v1242
    %v5124 = vmul.f32 %v5120, %v1242
    %v5125 = vmul.f32 %v5121, %v1242
    %v5126 = vadd.f32 %v5122, %v1247
    %v5127 = vadd.f32 %v5123, %v1247
    %v5128 = vadd.f32 %v5124, %v1247
    %v5129 = vadd.f32 %v5125, %v1247
    %v5130 = vtanh.pop %v5126
    %v5131 = vtanh.pop %v5127
    %v5132 = vtanh.pop %v5128
    %v5133 = vtanh.pop %v5129
    %v5135 = vsel %vm160, %v5130, 0
    %v5138 = vsel %vm160, %v5131, 0
    %v5141 = vsel %vm160, %v5132, 0
    %v5144 = vsel %vm160, %v5133, 0
    %5146 = vmatpush.msra.mxu0 0.0
    %5147 = vmatpush.msra.mxu0 0.0
    %5148 = vmatpush.msra.mxu0 0.0
    %5149 = vmatpush.msra.mxu0 0.0
    %5150 = vmatpush.msra.mxu0 0.0
    %5151 = vmatpush.msra.mxu0 0.0
    %5152 = vmatpush.msra.mxu0 0.0
    %5153 = vmatpush.msra.mxu0 0.0
    %5154 = vmatpush.msra.mxu0 0.0
    %5155 = vmatpush.msra.mxu0 0.0
    %5156 = vmatpush.msra.mxu0 0.0
    %5157 = vmatpush.msra.mxu0 0.0
    %5158 = vmatpush.msra.mxu0 0.0
    %5159 = vmatpush.msra.mxu0 0.0
    %5160 = vmatpush.msra.mxu0 0.0
    %5161 = vmatpush.msra.mxu0 %v1256
    %5162 = vmatmul.f32.gmra.mxu0 %v5135
    %v5163 = vpop.f32.mrf.mxu0
    %v5164 = vadd.f32 %v1258, %v5163
    %5165 = vmatmul.f32.gmra.mxu0 %v5138
    %v5166 = vpop.f32.mrf.mxu0
    %v5167 = vadd.f32 %v1258, %v5166
    %5168 = vmatmul.f32.gmra.mxu0 %v5141
    %v5169 = vpop.f32.mrf.mxu0
    %v5170 = vadd.f32 %v1258, %v5169
    %5171 = vmatmul.f32.gmra.mxu0 %v5144
    %v5172 = vpop.f32.mrf.mxu0
    %v5173 = vadd.f32 %v1258, %v5172
    %5174 = vdwg.mxu0
    %v5175 = vsel %vm160, %v5164, 0.0
    %5176 = vadd.xlane.f32.xlu0 %v5175
    %v5177 = vpop.xlane.xlu0 %5176
    %v5178 = vsel %vm160, %v5167, 0.0
    %5179 = vadd.xlane.f32.xlu0 %v5178
    %v5180 = vpop.xlane.xlu0 %5179
    %v5181 = vsel %vm160, %v5170, 0.0
    %5182 = vadd.xlane.f32.xlu0 %v5181
    %v5183 = vpop.xlane.xlu0 %5182
    %v5184 = vsel %vm160, %v5173, 0.0
    %5185 = vadd.xlane.f32.xlu0 %v5184
    %v5186 = vpop.xlane.xlu0 %5185
    %v5187 = vmul.f32 %v5177, %v179
    %v5188 = vmul.f32 %v5180, %v179
    %v5189 = vmul.f32 %v5183, %v179
    %v5190 = vmul.f32 %v5186, %v179
    %v5191 = vsub.f32 %v5164, %v5187
    %v5192 = vsub.f32 %v5167, %v5188
    %v5193 = vsub.f32 %v5170, %v5189
    %v5194 = vsub.f32 %v5173, %v5190
    %v5195 = vmul.f32 %v5191, %v5191
    %v5196 = vmul.f32 %v5192, %v5192
    %v5197 = vmul.f32 %v5193, %v5193
    %v5198 = vmul.f32 %v5194, %v5194
    %v5199 = vsel %vm160, %v5195, 0.0
    %5200 = vadd.xlane.f32.xlu0 %v5199
    %v5201 = vpop.xlane.xlu0 %5200
    %v5202 = vsel %vm160, %v5196, 0.0
    %5203 = vadd.xlane.f32.xlu0 %v5202
    %v5204 = vpop.xlane.xlu0 %5203
    %v5205 = vsel %vm160, %v5197, 0.0
    %5206 = vadd.xlane.f32.xlu0 %v5205
    %v5207 = vpop.xlane.xlu0 %5206
    %v5208 = vsel %vm160, %v5198, 0.0
    %5209 = vadd.xlane.f32.xlu0 %v5208
    %v5210 = vpop.xlane.xlu0 %5209
    %v5211 = vmul.f32 %v5201, %v179
    %v5212 = vmul.f32 %v5204, %v179
    %v5213 = vmul.f32 %v5207, %v179
    %v5214 = vmul.f32 %v5210, %v179
    %v5215 = vadd.f32 %v5211, 1e-05
    %v5216 = vadd.f32 %v5212, 1e-05
    %v5217 = vadd.f32 %v5213, 1e-05
    %v5218 = vadd.f32 %v5214, 1e-05
    %v5219 = vrsqrt.pop %v5215
    %v5220 = vmul.f32 %v5219, %v5215
    %v5221 = vmul.f32 %v5220, %v5219
    %v5222 = vmul.f32 0.5, %v5221
    %v5223 = vsub.f32 1.5, %v5222
    %v5224 = vmul.f32 %v5219, %v5223
    %vm5225 = vweird.f32 %v5215
    %vm5226 = vweird.f32 %v5219
    %vm5227 = vmor %vm5225, %vm5226
    %v5228 = vsel %vm5227, %v5219, %v5224
    %v5229 = vrsqrt.pop %v5216
    %v5230 = vmul.f32 %v5229, %v5216
    %v5231 = vmul.f32 %v5230, %v5229
    %v5232 = vmul.f32 0.5, %v5231
    %v5233 = vsub.f32 1.5, %v5232
    %v5234 = vmul.f32 %v5229, %v5233
    %vm5235 = vweird.f32 %v5216
    %vm5236 = vweird.f32 %v5229
    %vm5237 = vmor %vm5235, %vm5236
    %v5238 = vsel %vm5237, %v5229, %v5234
    %v5239 = vrsqrt.pop %v5217
    %v5240 = vmul.f32 %v5239, %v5217
    %v5241 = vmul.f32 %v5240, %v5239
    %v5242 = vmul.f32 0.5, %v5241
    %v5243 = vsub.f32 1.5, %v5242
    %v5244 = vmul.f32 %v5239, %v5243
    %vm5245 = vweird.f32 %v5217
    %vm5246 = vweird.f32 %v5239
    %vm5247 = vmor %vm5245, %vm5246
    %v5248 = vsel %vm5247, %v5239, %v5244
    %v5249 = vrsqrt.pop %v5218
    %v5250 = vmul.f32 %v5249, %v5218
    %v5251 = vmul.f32 %v5250, %v5249
    %v5252 = vmul.f32 0.5, %v5251
    %v5253 = vsub.f32 1.5, %v5252
    %v5254 = vmul.f32 %v5249, %v5253
    %vm5255 = vweird.f32 %v5218
    %vm5256 = vweird.f32 %v5249
    %vm5257 = vmor %vm5255, %vm5256
    %v5258 = vsel %vm5257, %v5249, %v5254
    %v5259 = vmul.f32 %v5191, %v5228
    %v5260 = vmul.f32 %v5192, %v5238
    %v5261 = vmul.f32 %v5193, %v5248
    %v5262 = vmul.f32 %v5194, %v5258
    %v5263 = vmul.f32 %v5259, %v1390
    %v5264 = vmul.f32 %v5260, %v1390
    %v5265 = vmul.f32 %v5261, %v1390
    %v5266 = vmul.f32 %v5262, %v1390
    %v5267 = vadd.f32 %v5263, %v1395
    %v5268 = vadd.f32 %v5264, %v1395
    %v5269 = vadd.f32 %v5265, %v1395
    %v5270 = vadd.f32 %v5266, %v1395
    %v5271 = vtanh.pop %v5267
    %v5272 = vtanh.pop %v5268
    %v5273 = vtanh.pop %v5269
    %v5274 = vtanh.pop %v5270
    %v5276 = vsel %vm160, %v5271, 0
    %v5279 = vsel %vm160, %v5272, 0
    %v5282 = vsel %vm160, %v5273, 0
    %v5285 = vsel %vm160, %v5274, 0
    %5287 = vmatpush.msra.mxu0 0.0
    %5288 = vmatpush.msra.mxu0 0.0
    %5289 = vmatpush.msra.mxu0 0.0
    %5290 = vmatpush.msra.mxu0 0.0
    %5291 = vmatpush.msra.mxu0 0.0
    %5292 = vmatpush.msra.mxu0 0.0
    %5293 = vmatpush.msra.mxu0 0.0
    %5294 = vmatpush.msra.mxu0 0.0
    %5295 = vmatpush.msra.mxu0 0.0
    %5296 = vmatpush.msra.mxu0 0.0
    %5297 = vmatpush.msra.mxu0 0.0
    %5298 = vmatpush.msra.mxu0 0.0
    %5299 = vmatpush.msra.mxu0 0.0
    %5300 = vmatpush.msra.mxu0 0.0
    %5301 = vmatpush.msra.mxu0 0.0
    %5302 = vmatpush.msra.mxu0 %v1404
    %5303 = vmatmul.f32.gmra.mxu0 %v5276
    %v5304 = vpop.f32.mrf.mxu0
    %v5305 = vadd.f32 %v1406, %v5304
    %5306 = vmatmul.f32.gmra.mxu0 %v5279
    %v5307 = vpop.f32.mrf.mxu0
    %v5308 = vadd.f32 %v1406, %v5307
    %5309 = vmatmul.f32.gmra.mxu0 %v5282
    %v5310 = vpop.f32.mrf.mxu0
    %v5311 = vadd.f32 %v1406, %v5310
    %5312 = vmatmul.f32.gmra.mxu0 %v5285
    %v5313 = vpop.f32.mrf.mxu0
    %v5314 = vadd.f32 %v1406, %v5313
    %5315 = vdwg.mxu0
    %v5316 = vsel %vm160, %v5305, 0.0
    %5317 = vadd.xlane.f32.xlu0 %v5316
    %v5318 = vpop.xlane.xlu0 %5317
    %v5319 = vsel %vm160, %v5308, 0.0
    %5320 = vadd.xlane.f32.xlu0 %v5319
    %v5321 = vpop.xlane.xlu0 %5320
    %v5322 = vsel %vm160, %v5311, 0.0
    %5323 = vadd.xlane.f32.xlu0 %v5322
    %v5324 = vpop.xlane.xlu0 %5323
    %v5325 = vsel %vm160, %v5314, 0.0
    %5326 = vadd.xlane.f32.xlu0 %v5325
    %v5327 = vpop.xlane.xlu0 %5326
    %v5328 = vmul.f32 %v5318, %v179
    %v5329 = vmul.f32 %v5321, %v179
    %v5330 = vmul.f32 %v5324, %v179
    %v5331 = vmul.f32 %v5327, %v179
    %v5332 = vsub.f32 %v5305, %v5328
    %v5333 = vsub.f32 %v5308, %v5329
    %v5334 = vsub.f32 %v5311, %v5330
    %v5335 = vsub.f32 %v5314, %v5331
    %v5336 = vmul.f32 %v5332, %v5332
    %v5337 = vmul.f32 %v5333, %v5333
    %v5338 = vmul.f32 %v5334, %v5334
    %v5339 = vmul.f32 %v5335, %v5335
    %v5340 = vsel %vm160, %v5336, 0.0
    %5341 = vadd.xlane.f32.xlu0 %v5340
    %v5342 = vpop.xlane.xlu0 %5341
    %v5343 = vsel %vm160, %v5337, 0.0
    %5344 = vadd.xlane.f32.xlu0 %v5343
    %v5345 = vpop.xlane.xlu0 %5344
    %v5346 = vsel %vm160, %v5338, 0.0
    %5347 = vadd.xlane.f32.xlu0 %v5346
    %v5348 = vpop.xlane.xlu0 %5347
    %v5349 = vsel %vm160, %v5339, 0.0
    %5350 = vadd.xlane.f32.xlu0 %v5349
    %v5351 = vpop.xlane.xlu0 %5350
    %v5352 = vmul.f32 %v5342, %v179
    %v5353 = vmul.f32 %v5345, %v179
    %v5354 = vmul.f32 %v5348, %v179
    %v5355 = vmul.f32 %v5351, %v179
    %v5356 = vadd.f32 %v5352, 1e-05
    %v5357 = vadd.f32 %v5353, 1e-05
    %v5358 = vadd.f32 %v5354, 1e-05
    %v5359 = vadd.f32 %v5355, 1e-05
    %v5360 = vrsqrt.pop %v5356
    %v5361 = vmul.f32 %v5360, %v5356
    %v5362 = vmul.f32 %v5361, %v5360
    %v5363 = vmul.f32 0.5, %v5362
    %v5364 = vsub.f32 1.5, %v5363
    %v5365 = vmul.f32 %v5360, %v5364
    %vm5366 = vweird.f32 %v5356
    %vm5367 = vweird.f32 %v5360
    %vm5368 = vmor %vm5366, %vm5367
    %v5369 = vsel %vm5368, %v5360, %v5365
    %v5370 = vrsqrt.pop %v5357
    %v5371 = vmul.f32 %v5370, %v5357
    %v5372 = vmul.f32 %v5371, %v5370
    %v5373 = vmul.f32 0.5, %v5372
    %v5374 = vsub.f32 1.5, %v5373
    %v5375 = vmul.f32 %v5370, %v5374
    %vm5376 = vweird.f32 %v5357
    %vm5377 = vweird.f32 %v5370
    %vm5378 = vmor %vm5376, %vm5377
    %v5379 = vsel %vm5378, %v5370, %v5375
    %v5380 = vrsqrt.pop %v5358
    %v5381 = vmul.f32 %v5380, %v5358
    %v5382 = vmul.f32 %v5381, %v5380
    %v5383 = vmul.f32 0.5, %v5382
    %v5384 = vsub.f32 1.5, %v5383
    %v5385 = vmul.f32 %v5380, %v5384
    %vm5386 = vweird.f32 %v5358
    %vm5387 = vweird.f32 %v5380
    %vm5388 = vmor %vm5386, %vm5387
    %v5389 = vsel %vm5388, %v5380, %v5385
    %v5390 = vrsqrt.pop %v5359
    %v5391 = vmul.f32 %v5390, %v5359
    %v5392 = vmul.f32 %v5391, %v5390
    %v5393 = vmul.f32 0.5, %v5392
    %v5394 = vsub.f32 1.5, %v5393
    %v5395 = vmul.f32 %v5390, %v5394
    %vm5396 = vweird.f32 %v5359
    %vm5397 = vweird.f32 %v5390
    %vm5398 = vmor %vm5396, %vm5397
    %v5399 = vsel %vm5398, %v5390, %v5395
    %v5400 = vmul.f32 %v5332, %v5369
    %v5401 = vmul.f32 %v5333, %v5379
    %v5402 = vmul.f32 %v5334, %v5389
    %v5403 = vmul.f32 %v5335, %v5399
    %v5404 = vmul.f32 %v5400, %v1538
    %v5405 = vmul.f32 %v5401, %v1538
    %v5406 = vmul.f32 %v5402, %v1538
    %v5407 = vmul.f32 %v5403, %v1538
    %v5408 = vadd.f32 %v5404, %v1543
    %v5409 = vadd.f32 %v5405, %v1543
    %v5410 = vadd.f32 %v5406, %v1543
    %v5411 = vadd.f32 %v5407, %v1543
    %v5412 = vtanh.pop %v5408
    %v5413 = vtanh.pop %v5409
    %v5414 = vtanh.pop %v5410
    %v5415 = vtanh.pop %v5411
    %v5417 = vsel %vm160, %v5412, 0
    %v5420 = vsel %vm160, %v5413, 0
    %v5423 = vsel %vm160, %v5414, 0
    %v5426 = vsel %vm160, %v5415, 0
    %5428 = vmatpush.msra.mxu0 0.0
    %5429 = vmatpush.msra.mxu0 0.0
    %5430 = vmatpush.msra.mxu0 0.0
    %5431 = vmatpush.msra.mxu0 0.0
    %5432 = vmatpush.msra.mxu0 0.0
    %5433 = vmatpush.msra.mxu0 0.0
    %5434 = vmatpush.msra.mxu0 0.0
    %5435 = vmatpush.msra.mxu0 0.0
    %5436 = vmatpush.msra.mxu0 0.0
    %5437 = vmatpush.msra.mxu0 0.0
    %5438 = vmatpush.msra.mxu0 0.0
    %5439 = vmatpush.msra.mxu0 0.0
    %5440 = vmatpush.msra.mxu0 0.0
    %5441 = vmatpush.msra.mxu0 0.0
    %5442 = vmatpush.msra.mxu0 0.0
    %5443 = vmatpush.msra.mxu0 %v1552
    %5444 = vmatmul.f32.gmra.mxu0 %v5417
    %v5445 = vpop.f32.mrf.mxu0
    %v5446 = vadd.f32 %v1554, %v5445
    %5447 = vmatmul.f32.gmra.mxu0 %v5420
    %v5448 = vpop.f32.mrf.mxu0
    %v5449 = vadd.f32 %v1554, %v5448
    %5450 = vmatmul.f32.gmra.mxu0 %v5423
    %v5451 = vpop.f32.mrf.mxu0
    %v5452 = vadd.f32 %v1554, %v5451
    %5453 = vmatmul.f32.gmra.mxu0 %v5426
    %v5454 = vpop.f32.mrf.mxu0
    %v5455 = vadd.f32 %v1554, %v5454
    %5456 = vdwg.mxu0
    %v5457 = vsel %vm160, %v5446, 0.0
    %5458 = vadd.xlane.f32.xlu0 %v5457
    %v5459 = vpop.xlane.xlu0 %5458
    %v5460 = vsel %vm160, %v5449, 0.0
    %5461 = vadd.xlane.f32.xlu0 %v5460
    %v5462 = vpop.xlane.xlu0 %5461
    %v5463 = vsel %vm160, %v5452, 0.0
    %5464 = vadd.xlane.f32.xlu0 %v5463
    %v5465 = vpop.xlane.xlu0 %5464
    %v5466 = vsel %vm160, %v5455, 0.0
    %5467 = vadd.xlane.f32.xlu0 %v5466
    %v5468 = vpop.xlane.xlu0 %5467
    %v5469 = vmul.f32 %v5459, %v179
    %v5470 = vmul.f32 %v5462, %v179
    %v5471 = vmul.f32 %v5465, %v179
    %v5472 = vmul.f32 %v5468, %v179
    %v5473 = vsub.f32 %v5446, %v5469
    %v5474 = vsub.f32 %v5449, %v5470
    %v5475 = vsub.f32 %v5452, %v5471
    %v5476 = vsub.f32 %v5455, %v5472
    %v5477 = vmul.f32 %v5473, %v5473
    %v5478 = vmul.f32 %v5474, %v5474
    %v5479 = vmul.f32 %v5475, %v5475
    %v5480 = vmul.f32 %v5476, %v5476
    %v5481 = vsel %vm160, %v5477, 0.0
    %5482 = vadd.xlane.f32.xlu0 %v5481
    %v5483 = vpop.xlane.xlu0 %5482
    %v5484 = vsel %vm160, %v5478, 0.0
    %5485 = vadd.xlane.f32.xlu0 %v5484
    %v5486 = vpop.xlane.xlu0 %5485
    %v5487 = vsel %vm160, %v5479, 0.0
    %5488 = vadd.xlane.f32.xlu0 %v5487
    %v5489 = vpop.xlane.xlu0 %5488
    %v5490 = vsel %vm160, %v5480, 0.0
    %5491 = vadd.xlane.f32.xlu0 %v5490
    %v5492 = vpop.xlane.xlu0 %5491
    %v5493 = vmul.f32 %v5483, %v179
    %v5494 = vmul.f32 %v5486, %v179
    %v5495 = vmul.f32 %v5489, %v179
    %v5496 = vmul.f32 %v5492, %v179
    %v5497 = vadd.f32 %v5493, 1e-05
    %v5498 = vadd.f32 %v5494, 1e-05
    %v5499 = vadd.f32 %v5495, 1e-05
    %v5500 = vadd.f32 %v5496, 1e-05
    %v5501 = vrsqrt.pop %v5497
    %v5502 = vmul.f32 %v5501, %v5497
    %v5503 = vmul.f32 %v5502, %v5501
    %v5504 = vmul.f32 0.5, %v5503
    %v5505 = vsub.f32 1.5, %v5504
    %v5506 = vmul.f32 %v5501, %v5505
    %vm5507 = vweird.f32 %v5497
    %vm5508 = vweird.f32 %v5501
    %vm5509 = vmor %vm5507, %vm5508
    %v5510 = vsel %vm5509, %v5501, %v5506
    %v5511 = vrsqrt.pop %v5498
    %v5512 = vmul.f32 %v5511, %v5498
    %v5513 = vmul.f32 %v5512, %v5511
    %v5514 = vmul.f32 0.5, %v5513
    %v5515 = vsub.f32 1.5, %v5514
    %v5516 = vmul.f32 %v5511, %v5515
    %vm5517 = vweird.f32 %v5498
    %vm5518 = vweird.f32 %v5511
    %vm5519 = vmor %vm5517, %vm5518
    %v5520 = vsel %vm5519, %v5511, %v5516
    %v5521 = vrsqrt.pop %v5499
    %v5522 = vmul.f32 %v5521, %v5499
    %v5523 = vmul.f32 %v5522, %v5521
    %v5524 = vmul.f32 0.5, %v5523
    %v5525 = vsub.f32 1.5, %v5524
    %v5526 = vmul.f32 %v5521, %v5525
    %vm5527 = vweird.f32 %v5499
    %vm5528 = vweird.f32 %v5521
    %vm5529 = vmor %vm5527, %vm5528
    %v5530 = vsel %vm5529, %v5521, %v5526
    %v5531 = vrsqrt.pop %v5500
    %v5532 = vmul.f32 %v5531, %v5500
    %v5533 = vmul.f32 %v5532, %v5531
    %v5534 = vmul.f32 0.5, %v5533
    %v5535 = vsub.f32 1.5, %v5534
    %v5536 = vmul.f32 %v5531, %v5535
    %vm5537 = vweird.f32 %v5500
    %vm5538 = vweird.f32 %v5531
    %vm5539 = vmor %vm5537, %vm5538
    %v5540 = vsel %vm5539, %v5531, %v5536
    %v5541 = vmul.f32 %v5473, %v5510
    %v5542 = vmul.f32 %v5474, %v5520
    %v5543 = vmul.f32 %v5475, %v5530
    %v5544 = vmul.f32 %v5476, %v5540
    %v5545 = vmul.f32 %v5541, %v1686
    %v5546 = vmul.f32 %v5542, %v1686
    %v5547 = vmul.f32 %v5543, %v1686
    %v5548 = vmul.f32 %v5544, %v1686
    %v5549 = vadd.f32 %v5545, %v1691
    %v5550 = vadd.f32 %v5546, %v1691
    %v5551 = vadd.f32 %v5547, %v1691
    %v5552 = vadd.f32 %v5548, %v1691
    %v5553 = vtanh.pop %v5549
    %v5554 = vtanh.pop %v5550
    %v5555 = vtanh.pop %v5551
    %v5556 = vtanh.pop %v5552
    %5557 = vmatpush.msra.mxu0 0.0
    %5558 = vmatpush.msra.mxu0 0.0
    %5559 = vmatpush.msra.mxu0 0.0
    %5560 = vmatpush.msra.mxu0 0.0
    %5561 = vmatpush.msra.mxu0 0.0
    %5562 = vmatpush.msra.mxu0 0.0
    %5563 = vmatpush.msra.mxu0 0.0
    %5564 = vmatpush.msra.mxu0 0.0
    %5565 = vmatpush.msra.mxu0 0.0
    %5566 = vmatpush.msra.mxu0 0.0
    %5567 = vmatpush.msra.mxu0 0.0
    %5568 = vmatpush.msra.mxu0 0.0
    %5569 = vmatpush.msra.mxu0 0.0
    %5570 = vmatpush.msra.mxu0 0.0
    %5571 = vmatpush.msra.mxu0 0.0
    %5572 = vmatpush.msra.mxu0 %v1701
    %5573 = vmatmul.f32.gmra.mxu0 %v4986
    %v5574 = vpop.f32.mrf.mxu0
    %v5575 = vadd.f32 0.0, %v5574
    %5576 = vmatmul.f32.gmra.mxu0 %v4989
    %v5577 = vpop.f32.mrf.mxu0
    %v5578 = vadd.f32 0.0, %v5577
    %5579 = vmatmul.f32.gmra.mxu0 %v4992
    %v5580 = vpop.f32.mrf.mxu0
    %v5581 = vadd.f32 0.0, %v5580
    %5582 = vmatmul.f32.gmra.mxu0 %v4995
    %v5583 = vpop.f32.mrf.mxu0
    %v5584 = vadd.f32 0.0, %v5583
    %5585 = vdwg.mxu0
    %v5587 = vsel %vm160, %v5553, 0
    %v5590 = vsel %vm160, %v5554, 0
    %v5593 = vsel %vm160, %v5555, 0
    %v5596 = vsel %vm160, %v5556, 0
    %5598 = vmatpush.msra.mxu0 0.0
    %5599 = vmatpush.msra.mxu0 0.0
    %5600 = vmatpush.msra.mxu0 0.0
    %5601 = vmatpush.msra.mxu0 0.0
    %5602 = vmatpush.msra.mxu0 0.0
    %5603 = vmatpush.msra.mxu0 0.0
    %5604 = vmatpush.msra.mxu0 0.0
    %5605 = vmatpush.msra.mxu0 0.0
    %5606 = vmatpush.msra.mxu0 0.0
    %5607 = vmatpush.msra.mxu0 0.0
    %5608 = vmatpush.msra.mxu0 0.0
    %5609 = vmatpush.msra.mxu0 0.0
    %5610 = vmatpush.msra.mxu0 0.0
    %5611 = vmatpush.msra.mxu0 0.0
    %5612 = vmatpush.msra.mxu0 0.0
    %5613 = vmatpush.msra.mxu0 %v1700
    %5614 = vmatmul.f32.gmra.mxu0 %v5587
    %v5615 = vpop.f32.mrf.mxu0
    %v5616 = vadd.f32 %v5575, %v5615
    %5617 = vmatmul.f32.gmra.mxu0 %v5590
    %v5618 = vpop.f32.mrf.mxu0
    %v5619 = vadd.f32 %v5578, %v5618
    %5620 = vmatmul.f32.gmra.mxu0 %v5593
    %v5621 = vpop.f32.mrf.mxu0
    %v5622 = vadd.f32 %v5581, %v5621
    %5623 = vmatmul.f32.gmra.mxu0 %v5596
    %v5624 = vpop.f32.mrf.mxu0
    %v5625 = vadd.f32 %v5584, %v5624
    %5626 = vdwg.mxu0
    %v5627 = vadd.f32 %v5616, %v1773
    %v5628 = vadd.f32 %v5619, %v1773
    %v5629 = vadd.f32 %v5622, %v1773
    %v5630 = vadd.f32 %v5625, %v1773
    %5631 = vmatpush.msra.mxu0 0.0
    %5632 = vmatpush.msra.mxu0 0.0
    %5633 = vmatpush.msra.mxu0 0.0
    %5634 = vmatpush.msra.mxu0 0.0
    %5635 = vmatpush.msra.mxu0 0.0
    %5636 = vmatpush.msra.mxu0 0.0
    %5637 = vmatpush.msra.mxu0 0.0
    %5638 = vmatpush.msra.mxu0 0.0
    %5639 = vmatpush.msra.mxu0 0.0
    %5640 = vmatpush.msra.mxu0 0.0
    %5641 = vmatpush.msra.mxu0 0.0
    %5642 = vmatpush.msra.mxu0 0.0
    %5643 = vmatpush.msra.mxu0 0.0
    %5644 = vmatpush.msra.mxu0 0.0
    %5645 = vmatpush.msra.mxu0 0.0
    %5646 = vmatpush.msra.mxu0 %v1778
    %5647 = vmatmul.f32.gmra.mxu0 %v5587
    %v5648 = vpop.f32.mrf.mxu0
    %v5649 = vadd.f32 0.0, %v5648
    %5650 = vmatmul.f32.gmra.mxu0 %v5590
    %v5651 = vpop.f32.mrf.mxu0
    %v5652 = vadd.f32 0.0, %v5651
    %5653 = vmatmul.f32.gmra.mxu0 %v5593
    %v5654 = vpop.f32.mrf.mxu0
    %v5655 = vadd.f32 0.0, %v5654
    %5656 = vmatmul.f32.gmra.mxu0 %v5596
    %v5657 = vpop.f32.mrf.mxu0
    %v5658 = vadd.f32 0.0, %v5657
    %5659 = vdwg.mxu0
    %5660 = vxpose.xlu0.b32.start [1/16] %v5649, 128
    %5661 = vxpose.xlu0.b32.cont [2/16] %v5652, 128
    %5662 = vxpose.xlu0.b32.cont [3/16] %v5655, 128
    %5663 = vxpose.xlu0.b32.cont [4/16] %v5658, 128
    %5664 = vxpose.xlu0.b32.cont [5/16] 0.0, 128
    %5665 = vxpose.xlu0.b32.cont [6/16] 0.0, 128
    %5666 = vxpose.xlu0.b32.cont [7/16] 0.0, 128
    %5667 = vxpose.xlu0.b32.cont [8/16] 0.0, 128
    %5668 = vxpose.xlu0.b32.cont [9/16] 0.0, 128
    %5669 = vxpose.xlu0.b32.cont [10/16] 0.0, 128
    %5670 = vxpose.xlu0.b32.cont [11/16] 0.0, 128
    %5671 = vxpose.xlu0.b32.cont [12/16] 0.0, 128
    %5672 = vxpose.xlu0.b32.cont [13/16] 0.0, 128
    %5673 = vxpose.xlu0.b32.cont [14/16] 0.0, 128
    %5674 = vxpose.xlu0.b32.cont [15/16] 0.0, 128
    %5675 = vxpose.xlu0.b32.end [16/16] 0.0, 128
    %v5676 = vpop.trf.xlu0
    %v5677 = vpop.trf.xlu0
    %v5678 = vpop.trf.xlu0
    %v5679 = vpop.trf.xlu0
    %v5680 = vpop.trf.xlu0
    %v5681 = vpop.trf.xlu0
    %v5682 = vpop.trf.xlu0
    %v5683 = vpop.trf.xlu0
    %v5684 = vpop.trf.xlu0
    %v5685 = vpop.trf.xlu0
    %v5686 = vpop.trf.xlu0
    %v5687 = vpop.trf.xlu0
    %v5688 = vpop.trf.xlu0
    %v5689 = vpop.trf.xlu0
    %v5690 = vpop.trf.xlu0
    %v5691 = vpop.trf.xlu0
    %v5693 = vsel %vm587, %v5676, 0
    %5695 = vmatpush.msra.mxu0 0.0
    %5696 = vmatpush.msra.mxu0 0.0
    %5697 = vmatpush.msra.mxu0 0.0
    %5698 = vmatpush.msra.mxu0 0.0
    %5699 = vmatpush.msra.mxu0 0.0
    %5700 = vmatpush.msra.mxu0 0.0
    %5701 = vmatpush.msra.mxu0 0.0
    %5702 = vmatpush.msra.mxu0 0.0
    %5703 = vmatpush.msra.mxu0 0.0
    %5704 = vmatpush.msra.mxu0 0.0
    %5705 = vmatpush.msra.mxu0 0.0
    %5706 = vmatpush.msra.mxu0 0.0
    %5707 = vmatpush.msra.mxu0 %v90
    %5708 = vmatpush.msra.mxu0 %v86
    %5709 = vmatpush.msra.mxu0 %v82
    %5710 = vmatpush.msra.mxu0 %v78
    %5711 = vmatmul.f32.gmra.mxu0 %v5693
    %v5712 = vpop.f32.mrf.mxu0
    %v5713 = vadd.f32 0.0, %v5712
    %5714 = vdwg.mxu0
    %5715 = vmatpush.msra.mxu0 0.0
    %5716 = vmatpush.msra.mxu0 0.0
    %5717 = vmatpush.msra.mxu0 0.0
    %5718 = vmatpush.msra.mxu0 0.0
    %5719 = vmatpush.msra.mxu0 0.0
    %5720 = vmatpush.msra.mxu0 0.0
    %5721 = vmatpush.msra.mxu0 0.0
    %5722 = vmatpush.msra.mxu0 0.0
    %5723 = vmatpush.msra.mxu0 0.0
    %5724 = vmatpush.msra.mxu0 0.0
    %5725 = vmatpush.msra.mxu0 0.0
    %5726 = vmatpush.msra.mxu0 0.0
    %5727 = vmatpush.msra.mxu0 %v91
    %5728 = vmatpush.msra.mxu0 %v87
    %5729 = vmatpush.msra.mxu0 %v83
    %5730 = vmatpush.msra.mxu0 %v79
    %5731 = vmatmul.f32.gmra.mxu0 %v5693
    %v5732 = vpop.f32.mrf.mxu0
    %v5733 = vadd.f32 0.0, %v5732
    %5734 = vdwg.mxu0
    %5735 = vmatpush.msra.mxu0 0.0
    %5736 = vmatpush.msra.mxu0 0.0
    %5737 = vmatpush.msra.mxu0 0.0
    %5738 = vmatpush.msra.mxu0 0.0
    %5739 = vmatpush.msra.mxu0 0.0
    %5740 = vmatpush.msra.mxu0 0.0
    %5741 = vmatpush.msra.mxu0 0.0
    %5742 = vmatpush.msra.mxu0 0.0
    %5743 = vmatpush.msra.mxu0 0.0
    %5744 = vmatpush.msra.mxu0 0.0
    %5745 = vmatpush.msra.mxu0 0.0
    %5746 = vmatpush.msra.mxu0 0.0
    %5747 = vmatpush.msra.mxu0 %v92
    %5748 = vmatpush.msra.mxu0 %v88
    %5749 = vmatpush.msra.mxu0 %v84
    %5750 = vmatpush.msra.mxu0 %v80
    %5751 = vmatmul.f32.gmra.mxu0 %v5693
    %v5752 = vpop.f32.mrf.mxu0
    %v5753 = vadd.f32 0.0, %v5752
    %5754 = vdwg.mxu0
    %5755 = vmatpush.msra.mxu0 0.0
    %5756 = vmatpush.msra.mxu0 0.0
    %5757 = vmatpush.msra.mxu0 0.0
    %5758 = vmatpush.msra.mxu0 0.0
    %5759 = vmatpush.msra.mxu0 0.0
    %5760 = vmatpush.msra.mxu0 0.0
    %5761 = vmatpush.msra.mxu0 0.0
    %5762 = vmatpush.msra.mxu0 0.0
    %5763 = vmatpush.msra.mxu0 0.0
    %5764 = vmatpush.msra.mxu0 0.0
    %5765 = vmatpush.msra.mxu0 0.0
    %5766 = vmatpush.msra.mxu0 0.0
    %5767 = vmatpush.msra.mxu0 %v93
    %5768 = vmatpush.msra.mxu0 %v89
    %5769 = vmatpush.msra.mxu0 %v85
    %5770 = vmatpush.msra.mxu0 %v81
    %5771 = vmatmul.f32.gmra.mxu0 %v5693
    %v5772 = vpop.f32.mrf.mxu0
    %v5773 = vadd.f32 0.0, %v5772
    %5774 = vdwg.mxu0
    %5775 = vxpose.xlu0.b32.start [1/16] %v5627, 128
    %5776 = vxpose.xlu0.b32.cont [2/16] %v5628, 128
    %5777 = vxpose.xlu0.b32.cont [3/16] %v5629, 128
    %5778 = vxpose.xlu0.b32.cont [4/16] %v5630, 128
    %5779 = vxpose.xlu0.b32.cont [5/16] 0.0, 128
    %5780 = vxpose.xlu0.b32.cont [6/16] 0.0, 128
    %5781 = vxpose.xlu0.b32.cont [7/16] 0.0, 128
    %5782 = vxpose.xlu0.b32.cont [8/16] 0.0, 128
    %5783 = vxpose.xlu0.b32.cont [9/16] 0.0, 128
    %5784 = vxpose.xlu0.b32.cont [10/16] 0.0, 128
    %5785 = vxpose.xlu0.b32.cont [11/16] 0.0, 128
    %5786 = vxpose.xlu0.b32.cont [12/16] 0.0, 128
    %5787 = vxpose.xlu0.b32.cont [13/16] 0.0, 128
    %5788 = vxpose.xlu0.b32.cont [14/16] 0.0, 128
    %5789 = vxpose.xlu0.b32.cont [15/16] 0.0, 128
    %5790 = vxpose.xlu0.b32.end [16/16] 0.0, 128
    %v5791 = vpop.trf.xlu0
    %v5792 = vpop.trf.xlu0
    %v5793 = vpop.trf.xlu0
    %v5794 = vpop.trf.xlu0
    %v5795 = vpop.trf.xlu0
    %v5796 = vpop.trf.xlu0
    %v5797 = vpop.trf.xlu0
    %v5798 = vpop.trf.xlu0
    %v5799 = vpop.trf.xlu0
    %v5800 = vpop.trf.xlu0
    %v5801 = vpop.trf.xlu0
    %v5802 = vpop.trf.xlu0
    %v5803 = vpop.trf.xlu0
    %v5804 = vpop.trf.xlu0
    %v5805 = vpop.trf.xlu0
    %v5806 = vpop.trf.xlu0
    %v5808 = vsel %vm587, %v5791, 0
    %5810 = vmatpush.msra.mxu0 0.0
    %5811 = vmatpush.msra.mxu0 0.0
    %5812 = vmatpush.msra.mxu0 0.0
    %5813 = vmatpush.msra.mxu0 0.0
    %5814 = vmatpush.msra.mxu0 0.0
    %5815 = vmatpush.msra.mxu0 0.0
    %5816 = vmatpush.msra.mxu0 0.0
    %5817 = vmatpush.msra.mxu0 0.0
    %5818 = vmatpush.msra.mxu0 0.0
    %5819 = vmatpush.msra.mxu0 0.0
    %5820 = vmatpush.msra.mxu0 0.0
    %5821 = vmatpush.msra.mxu0 0.0
    %5822 = vmatpush.msra.mxu0 %v74
    %5823 = vmatpush.msra.mxu0 %v70
    %5824 = vmatpush.msra.mxu0 %v66
    %5825 = vmatpush.msra.mxu0 %v62
    %5826 = vmatmul.f32.gmra.mxu0 %v5808
    %v5827 = vpop.f32.mrf.mxu0
    %v5828 = vadd.f32 %v5713, %v5827
    %5829 = vdwg.mxu0
    %5830 = vmatpush.msra.mxu0 0.0
    %5831 = vmatpush.msra.mxu0 0.0
    %5832 = vmatpush.msra.mxu0 0.0
    %5833 = vmatpush.msra.mxu0 0.0
    %5834 = vmatpush.msra.mxu0 0.0
    %5835 = vmatpush.msra.mxu0 0.0
    %5836 = vmatpush.msra.mxu0 0.0
    %5837 = vmatpush.msra.mxu0 0.0
    %5838 = vmatpush.msra.mxu0 0.0
    %5839 = vmatpush.msra.mxu0 0.0
    %5840 = vmatpush.msra.mxu0 0.0
    %5841 = vmatpush.msra.mxu0 0.0
    %5842 = vmatpush.msra.mxu0 %v75
    %5843 = vmatpush.msra.mxu0 %v71
    %5844 = vmatpush.msra.mxu0 %v67
    %5845 = vmatpush.msra.mxu0 %v63
    %5846 = vmatmul.f32.gmra.mxu0 %v5808
    %v5847 = vpop.f32.mrf.mxu0
    %v5848 = vadd.f32 %v5733, %v5847
    %5849 = vdwg.mxu0
    %5850 = vmatpush.msra.mxu0 0.0
    %5851 = vmatpush.msra.mxu0 0.0
    %5852 = vmatpush.msra.mxu0 0.0
    %5853 = vmatpush.msra.mxu0 0.0
    %5854 = vmatpush.msra.mxu0 0.0
    %5855 = vmatpush.msra.mxu0 0.0
    %5856 = vmatpush.msra.mxu0 0.0
    %5857 = vmatpush.msra.mxu0 0.0
    %5858 = vmatpush.msra.mxu0 0.0
    %5859 = vmatpush.msra.mxu0 0.0
    %5860 = vmatpush.msra.mxu0 0.0
    %5861 = vmatpush.msra.mxu0 0.0
    %5862 = vmatpush.msra.mxu0 %v76
    %5863 = vmatpush.msra.mxu0 %v72
    %5864 = vmatpush.msra.mxu0 %v68
    %5865 = vmatpush.msra.mxu0 %v64
    %5866 = vmatmul.f32.gmra.mxu0 %v5808
    %v5867 = vpop.f32.mrf.mxu0
    %v5868 = vadd.f32 %v5753, %v5867
    %5869 = vdwg.mxu0
    %5870 = vmatpush.msra.mxu0 0.0
    %5871 = vmatpush.msra.mxu0 0.0
    %5872 = vmatpush.msra.mxu0 0.0
    %5873 = vmatpush.msra.mxu0 0.0
    %5874 = vmatpush.msra.mxu0 0.0
    %5875 = vmatpush.msra.mxu0 0.0
    %5876 = vmatpush.msra.mxu0 0.0
    %5877 = vmatpush.msra.mxu0 0.0
    %5878 = vmatpush.msra.mxu0 0.0
    %5879 = vmatpush.msra.mxu0 0.0
    %5880 = vmatpush.msra.mxu0 0.0
    %5881 = vmatpush.msra.mxu0 0.0
    %5882 = vmatpush.msra.mxu0 %v77
    %5883 = vmatpush.msra.mxu0 %v73
    %5884 = vmatpush.msra.mxu0 %v69
    %5885 = vmatpush.msra.mxu0 %v65
    %5886 = vmatmul.f32.gmra.mxu0 %v5808
    %v5887 = vpop.f32.mrf.mxu0
    %v5888 = vadd.f32 %v5773, %v5887
    %5889 = vdwg.mxu0
    %v5890 = vmul.f32 %v2042, %v4407
    %v5891 = vmul.f32 %v2042, %v4408
    %v5892 = vmul.f32 %v2042, %v4409
    %v5893 = vmul.f32 %v2042, %v4410
    %v5894 = vadd.f32 %v5828, %v5890
    %v5895 = vadd.f32 %v5848, %v5891
    %v5896 = vadd.f32 %v5868, %v5892
    %v5897 = vadd.f32 %v5888, %v5893
    %v5898 = vtanh.pop %v5894
    %v5899 = vtanh.pop %v5895
    %v5900 = vtanh.pop %v5896
    %v5901 = vtanh.pop %v5897
    %5902 = vmatpush.msra.mxu0 0.0
    %5903 = vmatpush.msra.mxu0 0.0
    %5904 = vmatpush.msra.mxu0 0.0
    %5905 = vmatpush.msra.mxu0 0.0
    %5906 = vmatpush.msra.mxu0 0.0
    %5907 = vmatpush.msra.mxu0 0.0
    %5908 = vmatpush.msra.mxu0 0.0
    %5909 = vmatpush.msra.mxu0 0.0
    %5910 = vmatpush.msra.mxu0 0.0
    %5911 = vmatpush.msra.mxu0 0.0
    %5912 = vmatpush.msra.mxu0 0.0
    %5913 = vmatpush.msra.mxu0 0.0
    %5914 = vmatpush.msra.mxu0 0.0
    %5915 = vmatpush.msra.mxu0 0.0
    %5916 = vmatpush.msra.mxu0 0.0
    %5917 = vmatpush.msra.mxu0 %v5898
    %5918 = vmatmul.f32.gmra.mxu0 %v2064
    %v5919 = vpop.f32.mrf.mxu0
    %v5920 = vadd.f32 %v2061, %v5919
    %5921 = vdwg.mxu0
    %5922 = vmatpush.msra.mxu0 0.0
    %5923 = vmatpush.msra.mxu0 0.0
    %5924 = vmatpush.msra.mxu0 0.0
    %5925 = vmatpush.msra.mxu0 0.0
    %5926 = vmatpush.msra.mxu0 0.0
    %5927 = vmatpush.msra.mxu0 0.0
    %5928 = vmatpush.msra.mxu0 0.0
    %5929 = vmatpush.msra.mxu0 0.0
    %5930 = vmatpush.msra.mxu0 0.0
    %5931 = vmatpush.msra.mxu0 0.0
    %5932 = vmatpush.msra.mxu0 0.0
    %5933 = vmatpush.msra.mxu0 0.0
    %5934 = vmatpush.msra.mxu0 0.0
    %5935 = vmatpush.msra.mxu0 0.0
    %5936 = vmatpush.msra.mxu0 0.0
    %5937 = vmatpush.msra.mxu0 %v5899
    %5938 = vmatmul.f32.gmra.mxu0 %v2064
    %v5939 = vpop.f32.mrf.mxu0
    %v5940 = vadd.f32 %v2061, %v5939
    %5941 = vdwg.mxu0
    %5942 = vmatpush.msra.mxu0 0.0
    %5943 = vmatpush.msra.mxu0 0.0
    %5944 = vmatpush.msra.mxu0 0.0
    %5945 = vmatpush.msra.mxu0 0.0
    %5946 = vmatpush.msra.mxu0 0.0
    %5947 = vmatpush.msra.mxu0 0.0
    %5948 = vmatpush.msra.mxu0 0.0
    %5949 = vmatpush.msra.mxu0 0.0
    %5950 = vmatpush.msra.mxu0 0.0
    %5951 = vmatpush.msra.mxu0 0.0
    %5952 = vmatpush.msra.mxu0 0.0
    %5953 = vmatpush.msra.mxu0 0.0
    %5954 = vmatpush.msra.mxu0 0.0
    %5955 = vmatpush.msra.mxu0 0.0
    %5956 = vmatpush.msra.mxu0 0.0
    %5957 = vmatpush.msra.mxu0 %v5900
    %5958 = vmatmul.f32.gmra.mxu0 %v2064
    %v5959 = vpop.f32.mrf.mxu0
    %v5960 = vadd.f32 %v2061, %v5959
    %5961 = vdwg.mxu0
    %5962 = vmatpush.msra.mxu0 0.0
    %5963 = vmatpush.msra.mxu0 0.0
    %5964 = vmatpush.msra.mxu0 0.0
    %5965 = vmatpush.msra.mxu0 0.0
    %5966 = vmatpush.msra.mxu0 0.0
    %5967 = vmatpush.msra.mxu0 0.0
    %5968 = vmatpush.msra.mxu0 0.0
    %5969 = vmatpush.msra.mxu0 0.0
    %5970 = vmatpush.msra.mxu0 0.0
    %5971 = vmatpush.msra.mxu0 0.0
    %5972 = vmatpush.msra.mxu0 0.0
    %5973 = vmatpush.msra.mxu0 0.0
    %5974 = vmatpush.msra.mxu0 0.0
    %5975 = vmatpush.msra.mxu0 0.0
    %5976 = vmatpush.msra.mxu0 0.0
    %5977 = vmatpush.msra.mxu0 %v5901
    %5978 = vmatmul.f32.gmra.mxu0 %v2064
    %v5979 = vpop.f32.mrf.mxu0
    %v5980 = vadd.f32 %v2061, %v5979
    %5981 = vdwg.mxu0
    %v5982 = vtanh.pop %v5920
    %v5983 = vtanh.pop %v5940
    %v5984 = vtanh.pop %v5960
    %v5985 = vtanh.pop %v5980
    %5986 = vmatpush.msra.mxu0 0.0
    %5987 = vmatpush.msra.mxu0 0.0
    %5988 = vmatpush.msra.mxu0 0.0
    %5989 = vmatpush.msra.mxu0 0.0
    %5990 = vmatpush.msra.mxu0 0.0
    %5991 = vmatpush.msra.mxu0 0.0
    %5992 = vmatpush.msra.mxu0 0.0
    %5993 = vmatpush.msra.mxu0 0.0
    %5994 = vmatpush.msra.mxu0 0.0
    %5995 = vmatpush.msra.mxu0 0.0
    %5996 = vmatpush.msra.mxu0 0.0
    %5997 = vmatpush.msra.mxu0 0.0
    %5998 = vmatpush.msra.mxu0 0.0
    %5999 = vmatpush.msra.mxu0 0.0
    %6000 = vmatpush.msra.mxu0 0.0
    %6001 = vmatpush.msra.mxu0 %v5982
    %6002 = vmatmul.f32.gmra.mxu0 %v2158
    %v6003 = vpop.f32.mrf.mxu0
    %v6004 = vadd.f32 %v2155, %v6003
    %6005 = vdwg.mxu0
    %6006 = vmatpush.msra.mxu0 0.0
    %6007 = vmatpush.msra.mxu0 0.0
    %6008 = vmatpush.msra.mxu0 0.0
    %6009 = vmatpush.msra.mxu0 0.0
    %6010 = vmatpush.msra.mxu0 0.0
    %6011 = vmatpush.msra.mxu0 0.0
    %6012 = vmatpush.msra.mxu0 0.0
    %6013 = vmatpush.msra.mxu0 0.0
    %6014 = vmatpush.msra.mxu0 0.0
    %6015 = vmatpush.msra.mxu0 0.0
    %6016 = vmatpush.msra.mxu0 0.0
    %6017 = vmatpush.msra.mxu0 0.0
    %6018 = vmatpush.msra.mxu0 0.0
    %6019 = vmatpush.msra.mxu0 0.0
    %6020 = vmatpush.msra.mxu0 0.0
    %6021 = vmatpush.msra.mxu0 %v5983
    %6022 = vmatmul.f32.gmra.mxu0 %v2158
    %v6023 = vpop.f32.mrf.mxu0
    %v6024 = vadd.f32 %v2155, %v6023
    %6025 = vdwg.mxu0
    %6026 = vmatpush.msra.mxu0 0.0
    %6027 = vmatpush.msra.mxu0 0.0
    %6028 = vmatpush.msra.mxu0 0.0
    %6029 = vmatpush.msra.mxu0 0.0
    %6030 = vmatpush.msra.mxu0 0.0
    %6031 = vmatpush.msra.mxu0 0.0
    %6032 = vmatpush.msra.mxu0 0.0
    %6033 = vmatpush.msra.mxu0 0.0
    %6034 = vmatpush.msra.mxu0 0.0
    %6035 = vmatpush.msra.mxu0 0.0
    %6036 = vmatpush.msra.mxu0 0.0
    %6037 = vmatpush.msra.mxu0 0.0
    %6038 = vmatpush.msra.mxu0 0.0
    %6039 = vmatpush.msra.mxu0 0.0
    %6040 = vmatpush.msra.mxu0 0.0
    %6041 = vmatpush.msra.mxu0 %v5984
    %6042 = vmatmul.f32.gmra.mxu0 %v2158
    %v6043 = vpop.f32.mrf.mxu0
    %v6044 = vadd.f32 %v2155, %v6043
    %6045 = vdwg.mxu0
    %6046 = vmatpush.msra.mxu0 0.0
    %6047 = vmatpush.msra.mxu0 0.0
    %6048 = vmatpush.msra.mxu0 0.0
    %6049 = vmatpush.msra.mxu0 0.0
    %6050 = vmatpush.msra.mxu0 0.0
    %6051 = vmatpush.msra.mxu0 0.0
    %6052 = vmatpush.msra.mxu0 0.0
    %6053 = vmatpush.msra.mxu0 0.0
    %6054 = vmatpush.msra.mxu0 0.0
    %6055 = vmatpush.msra.mxu0 0.0
    %6056 = vmatpush.msra.mxu0 0.0
    %6057 = vmatpush.msra.mxu0 0.0
    %6058 = vmatpush.msra.mxu0 0.0
    %6059 = vmatpush.msra.mxu0 0.0
    %6060 = vmatpush.msra.mxu0 0.0
    %6061 = vmatpush.msra.mxu0 %v5985
    %6062 = vmatmul.f32.gmra.mxu0 %v2158
    %v6063 = vpop.f32.mrf.mxu0
    %v6064 = vadd.f32 %v2155, %v6063
    %6065 = vdwg.mxu0
    %v6066 = vtanh.pop %v6004
    %v6067 = vtanh.pop %v6024
    %v6068 = vtanh.pop %v6044
    %v6069 = vtanh.pop %v6064
    %6070 = vmatpush.msra.mxu0 0.0
    %6071 = vmatpush.msra.mxu0 0.0
    %6072 = vmatpush.msra.mxu0 0.0
    %6073 = vmatpush.msra.mxu0 0.0
    %6074 = vmatpush.msra.mxu0 0.0
    %6075 = vmatpush.msra.mxu0 0.0
    %6076 = vmatpush.msra.mxu0 0.0
    %6077 = vmatpush.msra.mxu0 0.0
    %6078 = vmatpush.msra.mxu0 0.0
    %6079 = vmatpush.msra.mxu0 0.0
    %6080 = vmatpush.msra.mxu0 0.0
    %6081 = vmatpush.msra.mxu0 0.0
    %6082 = vmatpush.msra.mxu0 0.0
    %6083 = vmatpush.msra.mxu0 0.0
    %6084 = vmatpush.msra.mxu0 0.0
    %6085 = vmatpush.msra.mxu0 %v6066
    %6086 = vmatmul.f32.gmra.mxu0 %v2252
    %v6087 = vpop.f32.mrf.mxu0
    %v6088 = vadd.f32 %v2249, %v6087
    %6089 = vdwg.mxu0
    %6090 = vmatpush.msra.mxu0 0.0
    %6091 = vmatpush.msra.mxu0 0.0
    %6092 = vmatpush.msra.mxu0 0.0
    %6093 = vmatpush.msra.mxu0 0.0
    %6094 = vmatpush.msra.mxu0 0.0
    %6095 = vmatpush.msra.mxu0 0.0
    %6096 = vmatpush.msra.mxu0 0.0
    %6097 = vmatpush.msra.mxu0 0.0
    %6098 = vmatpush.msra.mxu0 0.0
    %6099 = vmatpush.msra.mxu0 0.0
    %6100 = vmatpush.msra.mxu0 0.0
    %6101 = vmatpush.msra.mxu0 0.0
    %6102 = vmatpush.msra.mxu0 0.0
    %6103 = vmatpush.msra.mxu0 0.0
    %6104 = vmatpush.msra.mxu0 0.0
    %6105 = vmatpush.msra.mxu0 %v6067
    %6106 = vmatmul.f32.gmra.mxu0 %v2252
    %v6107 = vpop.f32.mrf.mxu0
    %v6108 = vadd.f32 %v2249, %v6107
    %6109 = vdwg.mxu0
    %6110 = vmatpush.msra.mxu0 0.0
    %6111 = vmatpush.msra.mxu0 0.0
    %6112 = vmatpush.msra.mxu0 0.0
    %6113 = vmatpush.msra.mxu0 0.0
    %6114 = vmatpush.msra.mxu0 0.0
    %6115 = vmatpush.msra.mxu0 0.0
    %6116 = vmatpush.msra.mxu0 0.0
    %6117 = vmatpush.msra.mxu0 0.0
    %6118 = vmatpush.msra.mxu0 0.0
    %6119 = vmatpush.msra.mxu0 0.0
    %6120 = vmatpush.msra.mxu0 0.0
    %6121 = vmatpush.msra.mxu0 0.0
    %6122 = vmatpush.msra.mxu0 0.0
    %6123 = vmatpush.msra.mxu0 0.0
    %6124 = vmatpush.msra.mxu0 0.0
    %6125 = vmatpush.msra.mxu0 %v6068
    %6126 = vmatmul.f32.gmra.mxu0 %v2252
    %v6127 = vpop.f32.mrf.mxu0
    %v6128 = vadd.f32 %v2249, %v6127
    %6129 = vdwg.mxu0
    %6130 = vmatpush.msra.mxu0 0.0
    %6131 = vmatpush.msra.mxu0 0.0
    %6132 = vmatpush.msra.mxu0 0.0
    %6133 = vmatpush.msra.mxu0 0.0
    %6134 = vmatpush.msra.mxu0 0.0
    %6135 = vmatpush.msra.mxu0 0.0
    %6136 = vmatpush.msra.mxu0 0.0
    %6137 = vmatpush.msra.mxu0 0.0
    %6138 = vmatpush.msra.mxu0 0.0
    %6139 = vmatpush.msra.mxu0 0.0
    %6140 = vmatpush.msra.mxu0 0.0
    %6141 = vmatpush.msra.mxu0 0.0
    %6142 = vmatpush.msra.mxu0 0.0
    %6143 = vmatpush.msra.mxu0 0.0
    %6144 = vmatpush.msra.mxu0 0.0
    %6145 = vmatpush.msra.mxu0 %v6069
    %6146 = vmatmul.f32.gmra.mxu0 %v2252
    %v6147 = vpop.f32.mrf.mxu0
    %v6148 = vadd.f32 %v2249, %v6147
    %6149 = vdwg.mxu0
    %v6150 = vtanh.pop %v6088
    %v6151 = vtanh.pop %v6108
    %v6152 = vtanh.pop %v6128
    %v6153 = vtanh.pop %v6148
    %6154 = vmatpush.msra.mxu0 0.0
    %6155 = vmatpush.msra.mxu0 0.0
    %6156 = vmatpush.msra.mxu0 0.0
    %6157 = vmatpush.msra.mxu0 0.0
    %6158 = vmatpush.msra.mxu0 0.0
    %6159 = vmatpush.msra.mxu0 0.0
    %6160 = vmatpush.msra.mxu0 0.0
    %6161 = vmatpush.msra.mxu0 0.0
    %6162 = vmatpush.msra.mxu0 0.0
    %6163 = vmatpush.msra.mxu0 0.0
    %6164 = vmatpush.msra.mxu0 0.0
    %6165 = vmatpush.msra.mxu0 0.0
    %6166 = vmatpush.msra.mxu0 0.0
    %6167 = vmatpush.msra.mxu0 0.0
    %6168 = vmatpush.msra.mxu0 0.0
    %6169 = vmatpush.msra.mxu0 %v6150
    %6170 = vmatmul.f32.gmra.mxu0 %v2346
    %v6171 = vpop.f32.mrf.mxu0
    %v6172 = vadd.f32 %v2343, %v6171
    %6173 = vdwg.mxu0
    %6174 = vmatpush.msra.mxu0 0.0
    %6175 = vmatpush.msra.mxu0 0.0
    %6176 = vmatpush.msra.mxu0 0.0
    %6177 = vmatpush.msra.mxu0 0.0
    %6178 = vmatpush.msra.mxu0 0.0
    %6179 = vmatpush.msra.mxu0 0.0
    %6180 = vmatpush.msra.mxu0 0.0
    %6181 = vmatpush.msra.mxu0 0.0
    %6182 = vmatpush.msra.mxu0 0.0
    %6183 = vmatpush.msra.mxu0 0.0
    %6184 = vmatpush.msra.mxu0 0.0
    %6185 = vmatpush.msra.mxu0 0.0
    %6186 = vmatpush.msra.mxu0 0.0
    %6187 = vmatpush.msra.mxu0 0.0
    %6188 = vmatpush.msra.mxu0 0.0
    %6189 = vmatpush.msra.mxu0 %v6151
    %6190 = vmatmul.f32.gmra.mxu0 %v2346
    %v6191 = vpop.f32.mrf.mxu0
    %v6192 = vadd.f32 %v2343, %v6191
    %6193 = vdwg.mxu0
    %6194 = vmatpush.msra.mxu0 0.0
    %6195 = vmatpush.msra.mxu0 0.0
    %6196 = vmatpush.msra.mxu0 0.0
    %6197 = vmatpush.msra.mxu0 0.0
    %6198 = vmatpush.msra.mxu0 0.0
    %6199 = vmatpush.msra.mxu0 0.0
    %6200 = vmatpush.msra.mxu0 0.0
    %6201 = vmatpush.msra.mxu0 0.0
    %6202 = vmatpush.msra.mxu0 0.0
    %6203 = vmatpush.msra.mxu0 0.0
    %6204 = vmatpush.msra.mxu0 0.0
    %6205 = vmatpush.msra.mxu0 0.0
    %6206 = vmatpush.msra.mxu0 0.0
    %6207 = vmatpush.msra.mxu0 0.0
    %6208 = vmatpush.msra.mxu0 0.0
    %6209 = vmatpush.msra.mxu0 %v6152
    %6210 = vmatmul.f32.gmra.mxu0 %v2346
    %v6211 = vpop.f32.mrf.mxu0
    %v6212 = vadd.f32 %v2343, %v6211
    %6213 = vdwg.mxu0
    %6214 = vmatpush.msra.mxu0 0.0
    %6215 = vmatpush.msra.mxu0 0.0
    %6216 = vmatpush.msra.mxu0 0.0
    %6217 = vmatpush.msra.mxu0 0.0
    %6218 = vmatpush.msra.mxu0 0.0
    %6219 = vmatpush.msra.mxu0 0.0
    %6220 = vmatpush.msra.mxu0 0.0
    %6221 = vmatpush.msra.mxu0 0.0
    %6222 = vmatpush.msra.mxu0 0.0
    %6223 = vmatpush.msra.mxu0 0.0
    %6224 = vmatpush.msra.mxu0 0.0
    %6225 = vmatpush.msra.mxu0 0.0
    %6226 = vmatpush.msra.mxu0 0.0
    %6227 = vmatpush.msra.mxu0 0.0
    %6228 = vmatpush.msra.mxu0 0.0
    %6229 = vmatpush.msra.mxu0 %v6153
    %6230 = vmatmul.f32.gmra.mxu0 %v2346
    %v6231 = vpop.f32.mrf.mxu0
    %v6232 = vadd.f32 %v2343, %v6231
    %6233 = vdwg.mxu0
    %v6234 = vxor.u32 %v6172, 2147483648
    %v6235 = vxor.u32 %v6192, 2147483648
    %v6236 = vxor.u32 %v6212, 2147483648
    %v6237 = vxor.u32 %v6232, 2147483648
    %v6238 = vmul.f32 %v6234, 1.442695
    %v6239 = vpow.pop %v6238
    %v6240 = vmul.f32 %v6235, 1.442695
    %v6241 = vpow.pop %v6240
    %v6242 = vmul.f32 %v6236, 1.442695
    %v6243 = vpow.pop %v6242
    %v6244 = vmul.f32 %v6237, 1.442695
    %v6245 = vpow.pop %v6244
    %v6246 = vadd.f32 %v6239, 1.0
    %v6247 = vadd.f32 %v6241, 1.0
    %v6248 = vadd.f32 %v6243, 1.0
    %v6249 = vadd.f32 %v6245, 1.0
    %v6250 = vrcp.pop %v6246
    %v6251 = vmul.f32 %v6246, %v6250
    %v6252 = vsub.f32 1.0, %v6251
    %v6253 = vmul.f32 %v6250, %v6252
    %v6254 = vadd.f32 %v6250, %v6253
    %vm6255 = vweird.f32 %v6246
    %vm6256 = vweird.f32 %v6250
    %vm6257 = vmor %vm6255, %vm6256
    %v6258 = vsel %vm6257, %v6250, %v6254
    %v6259 = vand.u32 2147483647, %v6246
    %vm6260 = vcmp.eq.f32.partialorder %v6259, 8.507059e+37
    %v6261 = vand.u32 %v6246, 2147483648
    %v6262 = vor.u32 1.1754944e-38, %v6261
    %v6263 = vsel %vm6260, %v6262, %v6258
    %v6264 = vmul.f32 1.0, %v6263
    %v6265 = vrcp.pop %v6247
    %v6266 = vmul.f32 %v6247, %v6265
    %v6267 = vsub.f32 1.0, %v6266
    %v6268 = vmul.f32 %v6265, %v6267
    %v6269 = vadd.f32 %v6265, %v6268
    %vm6270 = vweird.f32 %v6247
    %vm6271 = vweird.f32 %v6265
    %vm6272 = vmor %vm6270, %vm6271
    %v6273 = vsel %vm6272, %v6265, %v6269
    %v6274 = vand.u32 2147483647, %v6247
    %vm6275 = vcmp.eq.f32.partialorder %v6274, 8.507059e+37
    %v6276 = vand.u32 %v6247, 2147483648
    %v6277 = vor.u32 1.1754944e-38, %v6276
    %v6278 = vsel %vm6275, %v6277, %v6273
    %v6279 = vmul.f32 1.0, %v6278
    %v6280 = vrcp.pop %v6248
    %v6281 = vmul.f32 %v6248, %v6280
    %v6282 = vsub.f32 1.0, %v6281
    %v6283 = vmul.f32 %v6280, %v6282
    %v6284 = vadd.f32 %v6280, %v6283
    %vm6285 = vweird.f32 %v6248
    %vm6286 = vweird.f32 %v6280
    %vm6287 = vmor %vm6285, %vm6286
    %v6288 = vsel %vm6287, %v6280, %v6284
    %v6289 = vand.u32 2147483647, %v6248
    %vm6290 = vcmp.eq.f32.partialorder %v6289, 8.507059e+37
    %v6291 = vand.u32 %v6248, 2147483648
    %v6292 = vor.u32 1.1754944e-38, %v6291
    %v6293 = vsel %vm6290, %v6292, %v6288
    %v6294 = vmul.f32 1.0, %v6293
    %v6295 = vrcp.pop %v6249
    %v6296 = vmul.f32 %v6249, %v6295
    %v6297 = vsub.f32 1.0, %v6296
    %v6298 = vmul.f32 %v6295, %v6297
    %v6299 = vadd.f32 %v6295, %v6298
    %vm6300 = vweird.f32 %v6249
    %vm6301 = vweird.f32 %v6295
    %vm6302 = vmor %vm6300, %vm6301
    %v6303 = vsel %vm6302, %v6295, %v6299
    %v6304 = vand.u32 2147483647, %v6249
    %vm6305 = vcmp.eq.f32.partialorder %v6304, 8.507059e+37
    %v6306 = vand.u32 %v6249, 2147483648
    %v6307 = vor.u32 1.1754944e-38, %v6306
    %v6308 = vsel %vm6305, %v6307, %v6303
    %v6309 = vmul.f32 1.0, %v6308
    %v6310 = vadd.f32 %v5553, %v4740
    %v6311 = vadd.f32 %v5554, %v4741
    %v6312 = vadd.f32 %v5555, %v4742
    %v6313 = vadd.f32 %v5556, %v4743
    %v6314 = vperm.slane %v6264, 0
    %v6315 = vperm.slane %v6279, 0
    %v6316 = vperm.slane %v6294, 0
    %v6317 = vperm.slane %v6309, 0
    %v6318 = vmul.f32 %v62, %v6314
    %v6319 = vmul.f32 %v63, %v6315
    %v6320 = vmul.f32 %v64, %v6316
    %v6321 = vmul.f32 %v65, %v6317
    %v6322 = vmul.f32 %v66, %v6314
    %v6323 = vmul.f32 %v67, %v6315
    %v6324 = vmul.f32 %v68, %v6316
    %v6325 = vmul.f32 %v69, %v6317
    %v6326 = vmul.f32 %v70, %v6314
    %v6327 = vmul.f32 %v71, %v6315
    %v6328 = vmul.f32 %v72, %v6316
    %v6329 = vmul.f32 %v73, %v6317
    %v6330 = vmul.f32 %v74, %v6314
    %v6331 = vmul.f32 %v75, %v6315
    %v6332 = vmul.f32 %v76, %v6316
    %v6333 = vmul.f32 %v77, %v6317
    %6334 = vmatpush.xpose.msra.mxu0 0.0
    %6335 = vmatpush.xpose.msra.mxu0 0.0
    %6336 = vmatpush.xpose.msra.mxu0 0.0
    %6337 = vmatpush.xpose.msra.mxu0 0.0
    %6338 = vmatpush.xpose.msra.mxu0 0.0
    %6339 = vmatpush.xpose.msra.mxu0 0.0
    %6340 = vmatpush.xpose.msra.mxu0 0.0
    %6341 = vmatpush.xpose.msra.mxu0 0.0
    %6342 = vmatpush.xpose.msra.mxu0 0.0
    %6343 = vmatpush.xpose.msra.mxu0 0.0
    %6344 = vmatpush.xpose.msra.mxu0 0.0
    %6345 = vmatpush.xpose.msra.mxu0 0.0
    %6346 = vmatpush.xpose.msra.mxu0 0.0
    %6347 = vmatpush.xpose.msra.mxu0 0.0
    %6348 = vmatpush.xpose.msra.mxu0 %v98
    %6349 = vmatpush.xpose.msra.mxu0 %v94
    %6350 = vmatmul.f32.gmra.mxu0 %v6318
    %v6351 = vpop.f32.mrf.mxu0
    %v6352 = vadd.f32 0.0, %v6351
    %6353 = vmatmul.f32.gmra.mxu0 %v6322
    %v6354 = vpop.f32.mrf.mxu0
    %v6355 = vadd.f32 0.0, %v6354
    %6356 = vmatmul.f32.gmra.mxu0 %v6326
    %v6357 = vpop.f32.mrf.mxu0
    %v6358 = vadd.f32 0.0, %v6357
    %6359 = vmatmul.f32.gmra.mxu0 %v6330
    %v6360 = vpop.f32.mrf.mxu0
    %v6361 = vadd.f32 0.0, %v6360
    %6362 = vdwg.mxu0
    %6363 = vmatpush.xpose.msra.mxu0 0.0
    %6364 = vmatpush.xpose.msra.mxu0 0.0
    %6365 = vmatpush.xpose.msra.mxu0 0.0
    %6366 = vmatpush.xpose.msra.mxu0 0.0
    %6367 = vmatpush.xpose.msra.mxu0 0.0
    %6368 = vmatpush.xpose.msra.mxu0 0.0
    %6369 = vmatpush.xpose.msra.mxu0 0.0
    %6370 = vmatpush.xpose.msra.mxu0 0.0
    %6371 = vmatpush.xpose.msra.mxu0 0.0
    %6372 = vmatpush.xpose.msra.mxu0 0.0
    %6373 = vmatpush.xpose.msra.mxu0 0.0
    %6374 = vmatpush.xpose.msra.mxu0 0.0
    %6375 = vmatpush.xpose.msra.mxu0 0.0
    %6376 = vmatpush.xpose.msra.mxu0 0.0
    %6377 = vmatpush.xpose.msra.mxu0 %v99
    %6378 = vmatpush.xpose.msra.mxu0 %v95
    %6379 = vmatmul.f32.gmra.mxu0 %v6319
    %v6380 = vpop.f32.mrf.mxu0
    %v6381 = vadd.f32 %v6352, %v6380
    %6382 = vmatmul.f32.gmra.mxu0 %v6323
    %v6383 = vpop.f32.mrf.mxu0
    %v6384 = vadd.f32 %v6355, %v6383
    %6385 = vmatmul.f32.gmra.mxu0 %v6327
    %v6386 = vpop.f32.mrf.mxu0
    %v6387 = vadd.f32 %v6358, %v6386
    %6388 = vmatmul.f32.gmra.mxu0 %v6331
    %v6389 = vpop.f32.mrf.mxu0
    %v6390 = vadd.f32 %v6361, %v6389
    %6391 = vdwg.mxu0
    %6392 = vmatpush.xpose.msra.mxu0 0.0
    %6393 = vmatpush.xpose.msra.mxu0 0.0
    %6394 = vmatpush.xpose.msra.mxu0 0.0
    %6395 = vmatpush.xpose.msra.mxu0 0.0
    %6396 = vmatpush.xpose.msra.mxu0 0.0
    %6397 = vmatpush.xpose.msra.mxu0 0.0
    %6398 = vmatpush.xpose.msra.mxu0 0.0
    %6399 = vmatpush.xpose.msra.mxu0 0.0
    %6400 = vmatpush.xpose.msra.mxu0 0.0
    %6401 = vmatpush.xpose.msra.mxu0 0.0
    %6402 = vmatpush.xpose.msra.mxu0 0.0
    %6403 = vmatpush.xpose.msra.mxu0 0.0
    %6404 = vmatpush.xpose.msra.mxu0 0.0
    %6405 = vmatpush.xpose.msra.mxu0 0.0
    %6406 = vmatpush.xpose.msra.mxu0 %v100
    %6407 = vmatpush.xpose.msra.mxu0 %v96
    %6408 = vmatmul.f32.gmra.mxu0 %v6320
    %v6409 = vpop.f32.mrf.mxu0
    %v6410 = vadd.f32 %v6381, %v6409
    %6411 = vmatmul.f32.gmra.mxu0 %v6324
    %v6412 = vpop.f32.mrf.mxu0
    %v6413 = vadd.f32 %v6384, %v6412
    %6414 = vmatmul.f32.gmra.mxu0 %v6328
    %v6415 = vpop.f32.mrf.mxu0
    %v6416 = vadd.f32 %v6387, %v6415
    %6417 = vmatmul.f32.gmra.mxu0 %v6332
    %v6418 = vpop.f32.mrf.mxu0
    %v6419 = vadd.f32 %v6390, %v6418
    %6420 = vdwg.mxu0
    %6421 = vmatpush.xpose.msra.mxu0 0.0
    %6422 = vmatpush.xpose.msra.mxu0 0.0
    %6423 = vmatpush.xpose.msra.mxu0 0.0
    %6424 = vmatpush.xpose.msra.mxu0 0.0
    %6425 = vmatpush.xpose.msra.mxu0 0.0
    %6426 = vmatpush.xpose.msra.mxu0 0.0
    %6427 = vmatpush.xpose.msra.mxu0 0.0
    %6428 = vmatpush.xpose.msra.mxu0 0.0
    %6429 = vmatpush.xpose.msra.mxu0 0.0
    %6430 = vmatpush.xpose.msra.mxu0 0.0
    %6431 = vmatpush.xpose.msra.mxu0 0.0
    %6432 = vmatpush.xpose.msra.mxu0 0.0
    %6433 = vmatpush.xpose.msra.mxu0 0.0
    %6434 = vmatpush.xpose.msra.mxu0 0.0
    %6435 = vmatpush.xpose.msra.mxu0 %v101
    %6436 = vmatpush.xpose.msra.mxu0 %v97
    %6437 = vmatmul.f32.gmra.mxu0 %v6321
    %v6438 = vpop.f32.mrf.mxu0
    %v6439 = vadd.f32 %v6410, %v6438
    %6440 = vmatmul.f32.gmra.mxu0 %v6325
    %v6441 = vpop.f32.mrf.mxu0
    %v6442 = vadd.f32 %v6413, %v6441
    %6443 = vmatmul.f32.gmra.mxu0 %v6329
    %v6444 = vpop.f32.mrf.mxu0
    %v6445 = vadd.f32 %v6416, %v6444
    %6446 = vmatmul.f32.gmra.mxu0 %v6333
    %v6447 = vpop.f32.mrf.mxu0
    %v6448 = vadd.f32 %v6419, %v6447
    %6449 = vdwg.mxu0
    %v6451 = vsel %vm278, %v6439, 0
    %v6454 = vsel %vm278, %v6442, 0
    %v6457 = vsel %vm278, %v6445, 0
    %v6460 = vsel %vm278, %v6448, 0
    %6462 = vmatpush.msra.mxu0 0.0
    %6463 = vmatpush.msra.mxu0 0.0
    %6464 = vmatpush.msra.mxu0 0.0
    %6465 = vmatpush.msra.mxu0 0.0
    %6466 = vmatpush.msra.mxu0 0.0
    %6467 = vmatpush.msra.mxu0 0.0
    %6468 = vmatpush.msra.mxu0 0.0
    %6469 = vmatpush.msra.mxu0 0.0
    %6470 = vmatpush.msra.mxu0 0.0
    %6471 = vmatpush.msra.mxu0 0.0
    %6472 = vmatpush.msra.mxu0 0.0
    %6473 = vmatpush.msra.mxu0 0.0
    %6474 = vmatpush.msra.mxu0 0.0
    %6475 = vmatpush.msra.mxu0 0.0
    %6476 = vmatpush.msra.mxu0 %v104
    %6477 = vmatpush.msra.mxu0 %v103
    %6478 = vmatmul.f32.gmra.mxu0 %v6451
    %v6479 = vpop.f32.mrf.mxu0
    %v6480 = vadd.f32 0.0, %v6479
    %6481 = vmatmul.f32.gmra.mxu0 %v6454
    %v6482 = vpop.f32.mrf.mxu0
    %v6483 = vadd.f32 0.0, %v6482
    %6484 = vmatmul.f32.gmra.mxu0 %v6457
    %v6485 = vpop.f32.mrf.mxu0
    %v6486 = vadd.f32 0.0, %v6485
    %6487 = vmatmul.f32.gmra.mxu0 %v6460
    %v6488 = vpop.f32.mrf.mxu0
    %v6489 = vadd.f32 0.0, %v6488
    %6490 = vdwg.mxu0
    %6491 = vst [vmem:[#allocation8] sm:$0xff] %v6480
    %6492 = vst [vmem:[#allocation8 + $0x8] sm:$0xff] %v6483
    %6493 = vst [vmem:[#allocation8 + $0x10] sm:$0xff] %v6486
    %6494 = vst [vmem:[#allocation8 + $0x18] sm:$0xff] %v6489
    %6495 = vst.msk [vmem:[#allocation8] sm:$0xff] %vm160, %v6310
    %6496 = vst.msk [vmem:[#allocation8 + $0x8] sm:$0xff] %vm160, %v6311
    %6497 = vst.msk [vmem:[#allocation8 + $0x10] sm:$0xff] %vm160, %v6312
    %6498 = vst.msk [vmem:[#allocation8 + $0x18] sm:$0xff] %vm160, %v6313
    // Predicated region
    $region26: #{tpu_custom_call.1} parent=1 // pred_check
      _
    $region27: #{tpu_custom_call.1} parent=1 // pred_check_branch
      %6500 = sbr.rel (0) target = $region29
    $region28: #{tpu_custom_call.1} parent=1 // pred_region
      %6502 = vsyncadd [#allocation4], 0
      %s6503 = sshll.u32 [#allocation8], 4
      %s6504 = int_to_ptr.vmem [resolvable:$true] %s6503
      %s6505 = sshll.u32 %s3, 4
      %s6506 = int_to_ptr.hbm [resolvable:$true] %s6505
      %6511 = dma.vmem_to_hbm [thread:$0]  %s6504, 512, %s6506, [#allocation4], 128, 128, 8
    $region29: #{tpu_custom_call.1} parent=1 // pred_fallthru
      _
    // Predicated region
    $region30: #{tpu_custom_call.1} parent=1 // pred_check
      _
    $region31: #{tpu_custom_call.1} parent=1 // pred_check_branch
      %6513 = sbr.rel (0) target = $region33
    $region32: #{tpu_custom_call.1} parent=1 // pred_region
      %6515 = dma.done [#allocation4], 512
    $region33: #{tpu_custom_call.1} parent=1 // pred_fallthru
      _
    %6516 = vsyncpa [#allocation3], 1
    %6517 = vsyncpa [#allocation6], 1
    %6518 = vsyncpa [#allocation4], 1

</llo_original>
